<compile_context>
chip_gen: v5e
topology: v5e:2x2
jax: 0.10.0
libtpu: 0.0.40
codegen_flags: <defaults>
</compile_context>

<pallas_src>
import jax
import jax.numpy as jnp
import numpy as np
from jax import lax
from jax.experimental import pallas as pl
from jax.experimental.pallas import tpu as pltpu

# Problem sizes (channels as declared in the PyTorch file).
N, CIN, COUT, H, W = 2, 128, 128, 16, 16
KH = KW = 3
PAD = 1
EPS = 1e-5                       # nn.BatchNorm2d default

M = N * H * W                    # 512: batch folded into matmul rows
HW = H * W
KDIM = KH * KW * CIN             # 1152: im2col contraction depth
TM = 128                         # M-chunk for matmul / BN passes
NCHUNK = M // TM


def fused_conv_bn_relu_kernel(x_ref, w_ref, o_ref, xpad_ref, col_ref, y_ref):
    """Fused conv (im2col + one deep-K MXU matmul) + BatchNorm(batch stats) + ReLU.

    x_ref:    (N, H, W, CIN)          bf16 NHWC input
    w_ref:    (KH*KW*CIN, COUT)       bf16 weights, tap-major rows (match im2col cols)
    o_ref:    (M, COUT)               f32 output, rows in NHWC order
    xpad_ref: (N, H+2, W+2, CIN) bf16 scratch: zero-padded input
    col_ref:  (M, KH*KW*CIN)     bf16 scratch: im2col slab
    y_ref:    (M, COUT)          f32  scratch: pre-BN conv output
    """
    # 1) Build the zero-padded input in VMEM (no HBM-side jnp.pad roundtrip).
    xpad_ref[...] = jnp.zeros_like(xpad_ref)
    xpad_ref[:, PAD:PAD + H, PAD:PAD + W, :] = x_ref[...]

    # 2) im2col: one shifted-window copy per (batch, tap). Static, aligned slices.
    for n in range(N):
        for kh in range(KH):
            for kw in range(KW):
                t = kh * KW + kw
                col_ref[n * HW:(n + 1) * HW, t * CIN:(t + 1) * CIN] = (
                    xpad_ref[n, kh:kh + H, kw:kw + W, :].reshape(HW, CIN))

    # 3) Conv as a single deep-K matmul (bf16 operands, f32 accumulate),
    #    chunked over M; accumulate per-channel sum / sum-of-squares for BN.
    s = jnp.zeros((1, COUT), jnp.float32)
    sq = jnp.zeros((1, COUT), jnp.float32)
    for c in range(NCHUNK):
        m0 = c * TM
        y = jnp.dot(col_ref[m0:m0 + TM, :], w_ref[...],
                    preferred_element_type=jnp.float32)        # (TM, COUT) f32
        y_ref[m0:m0 + TM, :] = y
        s = s + jnp.sum(y, axis=0, keepdims=True)
        sq = sq + jnp.sum(y * y, axis=0, keepdims=True)

    # 4) BatchNorm (training-mode batch stats, biased variance, affine=False) + ReLU.
    inv_count = 1.0 / float(M)
    mean = s * inv_count
    var = sq * inv_count - mean * mean
    inv = lax.rsqrt(var + EPS)
    for c in range(NCHUNK):
        m0 = c * TM
        y = y_ref[m0:m0 + TM, :]
        o_ref[m0:m0 + TM, :] = jnp.maximum((y - mean) * inv, 0.0)
    # TODO(synk): on v7x the M dimension could be split across the two TensorCores
    # with per-core partial stats; skipped here (workload is launch-bound at M=512).


def basic_layer(x_nchw, w_oihw):
    """Forward pass of BasicLayer. x_nchw: (N, CIN, H, W); w_oihw: (COUT, CIN, KH, KW)."""
    x = jnp.transpose(x_nchw, (0, 2, 3, 1)).astype(jnp.bfloat16)          # NHWC bf16
    w = (jnp.transpose(w_oihw, (2, 3, 1, 0))                              # (KH,KW,CIN,COUT)
         .reshape(KDIM, COUT).astype(jnp.bfloat16))                       # tap-major rows

    out_flat = pl.pallas_call(
        fused_conv_bn_relu_kernel,
        out_shape=jax.ShapeDtypeStruct((M, COUT), jnp.float32),
        grid_spec=pltpu.PrefetchScalarGridSpec(
            num_scalar_prefetch=0,
            grid=(1,),                                   # everything fits VMEM -> one program
            in_specs=[
                pl.BlockSpec((N, H, W, CIN), lambda i: (0, 0, 0, 0)),
                pl.BlockSpec((KDIM, COUT), lambda i: (0, 0)),
            ],
            out_specs=pl.BlockSpec((M, COUT), lambda i: (0, 0)),
            scratch_shapes=[
                pltpu.VMEM((N, H + 2 * PAD, W + 2 * PAD, CIN), jnp.bfloat16),  # padded x
                pltpu.VMEM((M, KDIM), jnp.bfloat16),                           # im2col slab
                pltpu.VMEM((M, COUT), jnp.float32),                            # conv output
            ]),
        compiler_params=pltpu.CompilerParams(
            dimension_semantics=("arbitrary",)),
    )(x, w)

    out = out_flat.reshape(N, H, W, COUT)
    return jnp.transpose(out, (0, 3, 1, 2))              # back to NCHW, f32


if __name__ == "__main__":
    key = jax.random.PRNGKey(0)
    kx, kw = jax.random.split(key)

    # Deterministic inputs / weights (Kaiming-uniform-like bound = 1/sqrt(fan_in)).
    x = jax.random.normal(kx, (N, CIN, H, W), jnp.float32)
    fan_in = CIN * KH * KW
    bound = 1.0 / float(np.sqrt(fan_in))
    w = jax.random.uniform(kw, (COUT, CIN, KH, KW), jnp.float32, -bound, bound)

    out = jax.block_until_ready(basic_layer(x, w))
    assert out.shape == (N, COUT, H, W)

    # Pure-JAX f32 reference (conv -> BN with batch stats -> ReLU).
    # Tolerance covers bf16 matmul operands (f32 accumulate on the MXU).
    x_nhwc = jnp.transpose(x, (0, 2, 3, 1))
    w_hwio = jnp.transpose(w, (2, 3, 1, 0))
    y_ref = jax.lax.conv_general_dilated(
        x_nhwc, w_hwio, window_strides=(1, 1), padding=((PAD, PAD), (PAD, PAD)),
        dimension_numbers=("NHWC", "HWIO", "NHWC"))
    mean = jnp.mean(y_ref, axis=(0, 1, 2), keepdims=True)
    var = jnp.mean((y_ref - mean) ** 2, axis=(0, 1, 2), keepdims=True)
    ref = jnp.maximum((y_ref - mean) * jax.lax.rsqrt(var + EPS), 0.0)
    ref = jnp.transpose(ref, (0, 3, 1, 2))
    np.testing.assert_allclose(np.asarray(out), np.asarray(ref), atol=2e-2, rtol=2e-2)

    print("KERNEL_OK")
</pallas_src>

<mosaic_0001>
module attributes {stable_mosaic.version = 11 : i64} {
  func.func @fused_conv_bn_relu_kernel(%arg0: i32, %arg1: memref<2x16x16x128xbf16, #tpu.memory_space<vmem>>, %arg2: memref<1152x128xbf16, #tpu.memory_space<vmem>>, %arg3: memref<512x128xf32, #tpu.memory_space<vmem>>, %arg4: memref<2x18x18x128xbf16, #tpu.memory_space<vmem>>, %arg5: memref<512x1152xbf16, #tpu.memory_space<vmem>>, %arg6: memref<512x128xf32, #tpu.memory_space<vmem>>) attributes {dimension_semantics = [#tpu.dimension_semantics<arbitrary>], iteration_bounds = array<i64: 1>, scalar_prefetch = 0 : i64, scratch_operands = 3 : i64, tpu.core_type = #tpu.core_type<tc>, window_params = [{pipeline_mode = #tpu.pipeline_mode<synchronous>, transform_indices = @transform_0, window_bounds = array<i64: 2, 16, 16, 128>}, {pipeline_mode = #tpu.pipeline_mode<synchronous>, transform_indices = @transform_1, window_bounds = array<i64: 1152, 128>}, {pipeline_mode = #tpu.pipeline_mode<synchronous>, transform_indices = @transform_2, window_bounds = array<i64: 512, 128>}]} {
    %cst = arith.constant 0.000000e+00 : bf16
    %0 = vector.broadcast %cst : bf16 to vector<2x18x18x128xbf16>
    %c0 = arith.constant 0 : index
    %c0_0 = arith.constant 0 : index
    %c0_1 = arith.constant 0 : index
    %c0_2 = arith.constant 0 : index
    %1 = vector.load %arg4[%c0, %c0_0, %c0_1, %c0_2] : memref<2x18x18x128xbf16, #tpu.memory_space<vmem>>, vector<2x18x18x128xbf16>
    tpu.vector_store %arg4[%c0, %c0_0, %c0_1, %c0_2], %0 {strides = array<i32>} : memref<2x18x18x128xbf16, #tpu.memory_space<vmem>>, vector<2x18x18x128xbf16>,
    %c0_3 = arith.constant 0 : index
    %c0_4 = arith.constant 0 : index
    %c0_5 = arith.constant 0 : index
    %c0_6 = arith.constant 0 : index
    %2 = vector.load %arg1[%c0_3, %c0_4, %c0_5, %c0_6] : memref<2x16x16x128xbf16, #tpu.memory_space<vmem>>, vector<2x16x16x128xbf16>
    %c0_7 = arith.constant 0 : index
    %c1 = arith.constant 1 : index
    %c1_8 = arith.constant 1 : index
    %c0_9 = arith.constant 0 : index
    %3 = vector.load %arg4[%c0_7, %c1, %c1_8, %c0_9] : memref<2x18x18x128xbf16, #tpu.memory_space<vmem>>, vector<2x16x16x128xbf16>
    tpu.vector_store %arg4[%c0_7, %c1, %c1_8, %c0_9], %2 {strides = array<i32>} : memref<2x18x18x128xbf16, #tpu.memory_space<vmem>>, vector<2x16x16x128xbf16>,
    %c0_10 = arith.constant 0 : index
    %c0_11 = arith.constant 0 : index
    %c0_12 = arith.constant 0 : index
    %c0_13 = arith.constant 0 : index
    %4 = vector.load %arg4[%c0_10, %c0_11, %c0_12, %c0_13] : memref<2x18x18x128xbf16, #tpu.memory_space<vmem>>, vector<1x16x16x128xbf16>
    %5 = vector.shape_cast %4 : vector<1x16x16x128xbf16> to vector<16x16x128xbf16>
    %6 = vector.shape_cast %5 : vector<16x16x128xbf16> to vector<256x128xbf16>
    %c0_14 = arith.constant 0 : index
    %c0_15 = arith.constant 0 : index
    %7 = vector.load %arg5[%c0_14, %c0_15] : memref<512x1152xbf16, #tpu.memory_space<vmem>>, vector<256x128xbf16>
    tpu.vector_store %arg5[%c0_14, %c0_15], %6 {strides = array<i32>} : memref<512x1152xbf16, #tpu.memory_space<vmem>>, vector<256x128xbf16>,
    %c0_16 = arith.constant 0 : index
    %c0_17 = arith.constant 0 : index
    %c1_18 = arith.constant 1 : index
    %c0_19 = arith.constant 0 : index
    %8 = vector.load %arg4[%c0_16, %c0_17, %c1_18, %c0_19] : memref<2x18x18x128xbf16, #tpu.memory_space<vmem>>, vector<1x16x16x128xbf16>
    %9 = vector.shape_cast %8 : vector<1x16x16x128xbf16> to vector<16x16x128xbf16>
    %10 = vector.shape_cast %9 : vector<16x16x128xbf16> to vector<256x128xbf16>
    %c0_20 = arith.constant 0 : index
    %c128 = arith.constant 128 : index
    %11 = vector.load %arg5[%c0_20, %c128] : memref<512x1152xbf16, #tpu.memory_space<vmem>>, vector<256x128xbf16>
    tpu.vector_store %arg5[%c0_20, %c128], %10 {strides = array<i32>} : memref<512x1152xbf16, #tpu.memory_space<vmem>>, vector<256x128xbf16>,
    %c0_21 = arith.constant 0 : index
    %c0_22 = arith.constant 0 : index
    %c2 = arith.constant 2 : index
    %c0_23 = arith.constant 0 : index
    %12 = vector.load %arg4[%c0_21, %c0_22, %c2, %c0_23] : memref<2x18x18x128xbf16, #tpu.memory_space<vmem>>, vector<1x16x16x128xbf16>
    %13 = vector.shape_cast %12 : vector<1x16x16x128xbf16> to vector<16x16x128xbf16>
    %14 = vector.shape_cast %13 : vector<16x16x128xbf16> to vector<256x128xbf16>
    %c0_24 = arith.constant 0 : index
    %c256 = arith.constant 256 : index
    %15 = vector.load %arg5[%c0_24, %c256] : memref<512x1152xbf16, #tpu.memory_space<vmem>>, vector<256x128xbf16>
    tpu.vector_store %arg5[%c0_24, %c256], %14 {strides = array<i32>} : memref<512x1152xbf16, #tpu.memory_space<vmem>>, vector<256x128xbf16>,
    %c0_25 = arith.constant 0 : index
    %c1_26 = arith.constant 1 : index
    %c0_27 = arith.constant 0 : index
    %c0_28 = arith.constant 0 : index
    %16 = vector.load %arg4[%c0_25, %c1_26, %c0_27, %c0_28] : memref<2x18x18x128xbf16, #tpu.memory_space<vmem>>, vector<1x16x16x128xbf16>
    %17 = vector.shape_cast %16 : vector<1x16x16x128xbf16> to vector<16x16x128xbf16>
    %18 = vector.shape_cast %17 : vector<16x16x128xbf16> to vector<256x128xbf16>
    %c0_29 = arith.constant 0 : index
    %c384 = arith.constant 384 : index
    %19 = vector.load %arg5[%c0_29, %c384] : memref<512x1152xbf16, #tpu.memory_space<vmem>>, vector<256x128xbf16>
    tpu.vector_store %arg5[%c0_29, %c384], %18 {strides = array<i32>} : memref<512x1152xbf16, #tpu.memory_space<vmem>>, vector<256x128xbf16>,
    %c0_30 = arith.constant 0 : index
    %c1_31 = arith.constant 1 : index
    %c1_32 = arith.constant 1 : index
    %c0_33 = arith.constant 0 : index
    %20 = vector.load %arg4[%c0_30, %c1_31, %c1_32, %c0_33] : memref<2x18x18x128xbf16, #tpu.memory_space<vmem>>, vector<1x16x16x128xbf16>
    %21 = vector.shape_cast %20 : vector<1x16x16x128xbf16> to vector<16x16x128xbf16>
    %22 = vector.shape_cast %21 : vector<16x16x128xbf16> to vector<256x128xbf16>
    %c0_34 = arith.constant 0 : index
    %c512 = arith.constant 512 : index
    %23 = vector.load %arg5[%c0_34, %c512] : memref<512x1152xbf16, #tpu.memory_space<vmem>>, vector<256x128xbf16>
    tpu.vector_store %arg5[%c0_34, %c512], %22 {strides = array<i32>} : memref<512x1152xbf16, #tpu.memory_space<vmem>>, vector<256x128xbf16>,
    %c0_35 = arith.constant 0 : index
    %c1_36 = arith.constant 1 : index
    %c2_37 = arith.constant 2 : index
    %c0_38 = arith.constant 0 : index
    %24 = vector.load %arg4[%c0_35, %c1_36, %c2_37, %c0_38] : memref<2x18x18x128xbf16, #tpu.memory_space<vmem>>, vector<1x16x16x128xbf16>
    %25 = vector.shape_cast %24 : vector<1x16x16x128xbf16> to vector<16x16x128xbf16>
    %26 = vector.shape_cast %25 : vector<16x16x128xbf16> to vector<256x128xbf16>
    %c0_39 = arith.constant 0 : index
    %c640 = arith.constant 640 : index
    %27 = vector.load %arg5[%c0_39, %c640] : memref<512x1152xbf16, #tpu.memory_space<vmem>>, vector<256x128xbf16>
    tpu.vector_store %arg5[%c0_39, %c640], %26 {strides = array<i32>} : memref<512x1152xbf16, #tpu.memory_space<vmem>>, vector<256x128xbf16>,
    %c0_40 = arith.constant 0 : index
    %c2_41 = arith.constant 2 : index
    %c0_42 = arith.constant 0 : index
    %c0_43 = arith.constant 0 : index
    %28 = vector.load %arg4[%c0_40, %c2_41, %c0_42, %c0_43] : memref<2x18x18x128xbf16, #tpu.memory_space<vmem>>, vector<1x16x16x128xbf16>
    %29 = vector.shape_cast %28 : vector<1x16x16x128xbf16> to vector<16x16x128xbf16>
    %30 = vector.shape_cast %29 : vector<16x16x128xbf16> to vector<256x128xbf16>
    %c0_44 = arith.constant 0 : index
    %c768 = arith.constant 768 : index
    %31 = vector.load %arg5[%c0_44, %c768] : memref<512x1152xbf16, #tpu.memory_space<vmem>>, vector<256x128xbf16>
    tpu.vector_store %arg5[%c0_44, %c768], %30 {strides = array<i32>} : memref<512x1152xbf16, #tpu.memory_space<vmem>>, vector<256x128xbf16>,
    %c0_45 = arith.constant 0 : index
    %c2_46 = arith.constant 2 : index
    %c1_47 = arith.constant 1 : index
    %c0_48 = arith.constant 0 : index
    %32 = vector.load %arg4[%c0_45, %c2_46, %c1_47, %c0_48] : memref<2x18x18x128xbf16, #tpu.memory_space<vmem>>, vector<1x16x16x128xbf16>
    %33 = vector.shape_cast %32 : vector<1x16x16x128xbf16> to vector<16x16x128xbf16>
    %34 = vector.shape_cast %33 : vector<16x16x128xbf16> to vector<256x128xbf16>
    %c0_49 = arith.constant 0 : index
    %c896 = arith.constant 896 : index
    %35 = vector.load %arg5[%c0_49, %c896] : memref<512x1152xbf16, #tpu.memory_space<vmem>>, vector<256x128xbf16>
    tpu.vector_store %arg5[%c0_49, %c896], %34 {strides = array<i32>} : memref<512x1152xbf16, #tpu.memory_space<vmem>>, vector<256x128xbf16>,
    %c0_50 = arith.constant 0 : index
    %c2_51 = arith.constant 2 : index
    %c2_52 = arith.constant 2 : index
    %c0_53 = arith.constant 0 : index
    %36 = vector.load %arg4[%c0_50, %c2_51, %c2_52, %c0_53] : memref<2x18x18x128xbf16, #tpu.memory_space<vmem>>, vector<1x16x16x128xbf16>
    %37 = vector.shape_cast %36 : vector<1x16x16x128xbf16> to vector<16x16x128xbf16>
    %38 = vector.shape_cast %37 : vector<16x16x128xbf16> to vector<256x128xbf16>
    %c0_54 = arith.constant 0 : index
    %c1024 = arith.constant 1024 : index
    %39 = vector.load %arg5[%c0_54, %c1024] : memref<512x1152xbf16, #tpu.memory_space<vmem>>, vector<256x128xbf16>
    tpu.vector_store %arg5[%c0_54, %c1024], %38 {strides = array<i32>} : memref<512x1152xbf16, #tpu.memory_space<vmem>>, vector<256x128xbf16>,
    %c1_55 = arith.constant 1 : index
    %c0_56 = arith.constant 0 : index
    %c0_57 = arith.constant 0 : index
    %c0_58 = arith.constant 0 : index
    %40 = vector.load %arg4[%c1_55, %c0_56, %c0_57, %c0_58] : memref<2x18x18x128xbf16, #tpu.memory_space<vmem>>, vector<1x16x16x128xbf16>
    %41 = vector.shape_cast %40 : vector<1x16x16x128xbf16> to vector<16x16x128xbf16>
    %42 = vector.shape_cast %41 : vector<16x16x128xbf16> to vector<256x128xbf16>
    %c256_59 = arith.constant 256 : index
    %c0_60 = arith.constant 0 : index
    %43 = vector.load %arg5[%c256_59, %c0_60] : memref<512x1152xbf16, #tpu.memory_space<vmem>>, vector<256x128xbf16>
    tpu.vector_store %arg5[%c256_59, %c0_60], %42 {strides = array<i32>} : memref<512x1152xbf16, #tpu.memory_space<vmem>>, vector<256x128xbf16>,
    %c1_61 = arith.constant 1 : index
    %c0_62 = arith.constant 0 : index
    %c1_63 = arith.constant 1 : index
    %c0_64 = arith.constant 0 : index
    %44 = vector.load %arg4[%c1_61, %c0_62, %c1_63, %c0_64] : memref<2x18x18x128xbf16, #tpu.memory_space<vmem>>, vector<1x16x16x128xbf16>
    %45 = vector.shape_cast %44 : vector<1x16x16x128xbf16> to vector<16x16x128xbf16>
    %46 = vector.shape_cast %45 : vector<16x16x128xbf16> to vector<256x128xbf16>
    %c256_65 = arith.constant 256 : index
    %c128_66 = arith.constant 128 : index
    %47 = vector.load %arg5[%c256_65, %c128_66] : memref<512x1152xbf16, #tpu.memory_space<vmem>>, vector<256x128xbf16>
    tpu.vector_store %arg5[%c256_65, %c128_66], %46 {strides = array<i32>} : memref<512x1152xbf16, #tpu.memory_space<vmem>>, vector<256x128xbf16>,
    %c1_67 = arith.constant 1 : index
    %c0_68 = arith.constant 0 : index
    %c2_69 = arith.constant 2 : index
    %c0_70 = arith.constant 0 : index
    %48 = vector.load %arg4[%c1_67, %c0_68, %c2_69, %c0_70] : memref<2x18x18x128xbf16, #tpu.memory_space<vmem>>, vector<1x16x16x128xbf16>
    %49 = vector.shape_cast %48 : vector<1x16x16x128xbf16> to vector<16x16x128xbf16>
    %50 = vector.shape_cast %49 : vector<16x16x128xbf16> to vector<256x128xbf16>
    %c256_71 = arith.constant 256 : index
    %c256_72 = arith.constant 256 : index
    %51 = vector.load %arg5[%c256_71, %c256_72] : memref<512x1152xbf16, #tpu.memory_space<vmem>>, vector<256x128xbf16>
    tpu.vector_store %arg5[%c256_71, %c256_72], %50 {strides = array<i32>} : memref<512x1152xbf16, #tpu.memory_space<vmem>>, vector<256x128xbf16>,
    %c1_73 = arith.constant 1 : index
    %c1_74 = arith.constant 1 : index
    %c0_75 = arith.constant 0 : index
    %c0_76 = arith.constant 0 : index
    %52 = vector.load %arg4[%c1_73, %c1_74, %c0_75, %c0_76] : memref<2x18x18x128xbf16, #tpu.memory_space<vmem>>, vector<1x16x16x128xbf16>
    %53 = vector.shape_cast %52 : vector<1x16x16x128xbf16> to vector<16x16x128xbf16>
    %54 = vector.shape_cast %53 : vector<16x16x128xbf16> to vector<256x128xbf16>
    %c256_77 = arith.constant 256 : index
    %c384_78 = arith.constant 384 : index
    %55 = vector.load %arg5[%c256_77, %c384_78] : memref<512x1152xbf16, #tpu.memory_space<vmem>>, vector<256x128xbf16>
    tpu.vector_store %arg5[%c256_77, %c384_78], %54 {strides = array<i32>} : memref<512x1152xbf16, #tpu.memory_space<vmem>>, vector<256x128xbf16>,
    %c1_79 = arith.constant 1 : index
    %c1_80 = arith.constant 1 : index
    %c1_81 = arith.constant 1 : index
    %c0_82 = arith.constant 0 : index
    %56 = vector.load %arg4[%c1_79, %c1_80, %c1_81, %c0_82] : memref<2x18x18x128xbf16, #tpu.memory_space<vmem>>, vector<1x16x16x128xbf16>
    %57 = vector.shape_cast %56 : vector<1x16x16x128xbf16> to vector<16x16x128xbf16>
    %58 = vector.shape_cast %57 : vector<16x16x128xbf16> to vector<256x128xbf16>
    %c256_83 = arith.constant 256 : index
    %c512_84 = arith.constant 512 : index
    %59 = vector.load %arg5[%c256_83, %c512_84] : memref<512x1152xbf16, #tpu.memory_space<vmem>>, vector<256x128xbf16>
    tpu.vector_store %arg5[%c256_83, %c512_84], %58 {strides = array<i32>} : memref<512x1152xbf16, #tpu.memory_space<vmem>>, vector<256x128xbf16>,
    %c1_85 = arith.constant 1 : index
    %c1_86 = arith.constant 1 : index
    %c2_87 = arith.constant 2 : index
    %c0_88 = arith.constant 0 : index
    %60 = vector.load %arg4[%c1_85, %c1_86, %c2_87, %c0_88] : memref<2x18x18x128xbf16, #tpu.memory_space<vmem>>, vector<1x16x16x128xbf16>
    %61 = vector.shape_cast %60 : vector<1x16x16x128xbf16> to vector<16x16x128xbf16>
    %62 = vector.shape_cast %61 : vector<16x16x128xbf16> to vector<256x128xbf16>
    %c256_89 = arith.constant 256 : index
    %c640_90 = arith.constant 640 : index
    %63 = vector.load %arg5[%c256_89, %c640_90] : memref<512x1152xbf16, #tpu.memory_space<vmem>>, vector<256x128xbf16>
    tpu.vector_store %arg5[%c256_89, %c640_90], %62 {strides = array<i32>} : memref<512x1152xbf16, #tpu.memory_space<vmem>>, vector<256x128xbf16>,
    %c1_91 = arith.constant 1 : index
    %c2_92 = arith.constant 2 : index
    %c0_93 = arith.constant 0 : index
    %c0_94 = arith.constant 0 : index
    %64 = vector.load %arg4[%c1_91, %c2_92, %c0_93, %c0_94] : memref<2x18x18x128xbf16, #tpu.memory_space<vmem>>, vector<1x16x16x128xbf16>
    %65 = vector.shape_cast %64 : vector<1x16x16x128xbf16> to vector<16x16x128xbf16>
    %66 = vector.shape_cast %65 : vector<16x16x128xbf16> to vector<256x128xbf16>
    %c256_95 = arith.constant 256 : index
    %c768_96 = arith.constant 768 : index
    %67 = vector.load %arg5[%c256_95, %c768_96] : memref<512x1152xbf16, #tpu.memory_space<vmem>>, vector<256x128xbf16>
    tpu.vector_store %arg5[%c256_95, %c768_96], %66 {strides = array<i32>} : memref<512x1152xbf16, #tpu.memory_space<vmem>>, vector<256x128xbf16>,
    %c1_97 = arith.constant 1 : index
    %c2_98 = arith.constant 2 : index
    %c1_99 = arith.constant 1 : index
    %c0_100 = arith.constant 0 : index
    %68 = vector.load %arg4[%c1_97, %c2_98, %c1_99, %c0_100] : memref<2x18x18x128xbf16, #tpu.memory_space<vmem>>, vector<1x16x16x128xbf16>
    %69 = vector.shape_cast %68 : vector<1x16x16x128xbf16> to vector<16x16x128xbf16>
    %70 = vector.shape_cast %69 : vector<16x16x128xbf16> to vector<256x128xbf16>
    %c256_101 = arith.constant 256 : index
    %c896_102 = arith.constant 896 : index
    %71 = vector.load %arg5[%c256_101, %c896_102] : memref<512x1152xbf16, #tpu.memory_space<vmem>>, vector<256x128xbf16>
    tpu.vector_store %arg5[%c256_101, %c896_102], %70 {strides = array<i32>} : memref<512x1152xbf16, #tpu.memory_space<vmem>>, vector<256x128xbf16>,
    %c1_103 = arith.constant 1 : index
    %c2_104 = arith.constant 2 : index
    %c2_105 = arith.constant 2 : index
    %c0_106 = arith.constant 0 : index
    %72 = vector.load %arg4[%c1_103, %c2_104, %c2_105, %c0_106] : memref<2x18x18x128xbf16, #tpu.memory_space<vmem>>, vector<1x16x16x128xbf16>
    %73 = vector.shape_cast %72 : vector<1x16x16x128xbf16> to vector<16x16x128xbf16>
    %74 = vector.shape_cast %73 : vector<16x16x128xbf16> to vector<256x128xbf16>
    %c256_107 = arith.constant 256 : index
    %c1024_108 = arith.constant 1024 : index
    %75 = vector.load %arg5[%c256_107, %c1024_108] : memref<512x1152xbf16, #tpu.memory_space<vmem>>, vector<256x128xbf16>
    tpu.vector_store %arg5[%c256_107, %c1024_108], %74 {strides = array<i32>} : memref<512x1152xbf16, #tpu.memory_space<vmem>>, vector<256x128xbf16>,
    %cst_109 = arith.constant 0.000000e+00 : f32
    %76 = vector.broadcast %cst_109 : f32 to vector<1x128xf32>
    %cst_110 = arith.constant 0.000000e+00 : f32
    %77 = vector.broadcast %cst_110 : f32 to vector<1x128xf32>
    %c0_111 = arith.constant 0 : index
    %c0_112 = arith.constant 0 : index
    %78 = vector.load %arg5[%c0_111, %c0_112] : memref<512x1152xbf16, #tpu.memory_space<vmem>>, vector<128x1152xbf16>
    %c0_113 = arith.constant 0 : index
    %c0_114 = arith.constant 0 : index
    %79 = vector.load %arg2[%c0_113, %c0_114] : memref<1152x128xbf16, #tpu.memory_space<vmem>>, vector<1152x128xbf16>
    %cst_115 = arith.constant dense<0.000000e+00> : vector<128x128xf32>
    %80 = tpu.matmul %78, %79, %cst_115 {dimension_numbers = #tpu.dot_dimension_numbers<[1], [0], [0], [1], [0, 0, 1, 1], [], []>} : vector<128x1152xbf16>, vector<1152x128xbf16>, vector<128x128xf32> -> vector<128x128xf32>
    %c0_116 = arith.constant 0 : index
    %c0_117 = arith.constant 0 : index
    %81 = vector.load %arg6[%c0_116, %c0_117] : memref<512x128xf32, #tpu.memory_space<vmem>>, vector<128x128xf32>
    tpu.vector_store %arg6[%c0_116, %c0_117], %80 {strides = array<i32>} : memref<512x128xf32, #tpu.memory_space<vmem>>, vector<128x128xf32>,
    %cst_118 = arith.constant dense<0.000000e+00> : vector<128xf32>
    %82 = vector.multi_reduction <add>, %80, %cst_118 [0] : vector<128x128xf32> to vector<128xf32>
    %83 = vector.shape_cast %82 : vector<128xf32> to vector<1x128xf32>
    %84 = arith.addf %76, %83 : vector<1x128xf32>
    %85 = arith.mulf %80, %80 : vector<128x128xf32>
    %cst_119 = arith.constant dense<0.000000e+00> : vector<128xf32>
    %86 = vector.multi_reduction <add>, %85, %cst_119 [0] : vector<128x128xf32> to vector<128xf32>
    %87 = vector.shape_cast %86 : vector<128xf32> to vector<1x128xf32>
    %88 = arith.addf %77, %87 : vector<1x128xf32>
    %c128_120 = arith.constant 128 : index
    %c0_121 = arith.constant 0 : index
    %89 = vector.load %arg5[%c128_120, %c0_121] : memref<512x1152xbf16, #tpu.memory_space<vmem>>, vector<128x1152xbf16>
    %c0_122 = arith.constant 0 : index
    %c0_123 = arith.constant 0 : index
    %90 = vector.load %arg2[%c0_122, %c0_123] : memref<1152x128xbf16, #tpu.memory_space<vmem>>, vector<1152x128xbf16>
    %cst_124 = arith.constant dense<0.000000e+00> : vector<128x128xf32>
    %91 = tpu.matmul %89, %90, %cst_124 {dimension_numbers = #tpu.dot_dimension_numbers<[1], [0], [0], [1], [0, 0, 1, 1], [], []>} : vector<128x1152xbf16>, vector<1152x128xbf16>, vector<128x128xf32> -> vector<128x128xf32>
    %c128_125 = arith.constant 128 : index
    %c0_126 = arith.constant 0 : index
    %92 = vector.load %arg6[%c128_125, %c0_126] : memref<512x128xf32, #tpu.memory_space<vmem>>, vector<128x128xf32>
    tpu.vector_store %arg6[%c128_125, %c0_126], %91 {strides = array<i32>} : memref<512x128xf32, #tpu.memory_space<vmem>>, vector<128x128xf32>,
    %cst_127 = arith.constant dense<0.000000e+00> : vector<128xf32>
    %93 = vector.multi_reduction <add>, %91, %cst_127 [0] : vector<128x128xf32> to vector<128xf32>
    %94 = vector.shape_cast %93 : vector<128xf32> to vector<1x128xf32>
    %95 = arith.addf %84, %94 : vector<1x128xf32>
    %96 = arith.mulf %91, %91 : vector<128x128xf32>
    %cst_128 = arith.constant dense<0.000000e+00> : vector<128xf32>
    %97 = vector.multi_reduction <add>, %96, %cst_128 [0] : vector<128x128xf32> to vector<128xf32>
    %98 = vector.shape_cast %97 : vector<128xf32> to vector<1x128xf32>
    %99 = arith.addf %88, %98 : vector<1x128xf32>
    %c256_129 = arith.constant 256 : index
    %c0_130 = arith.constant 0 : index
    %100 = vector.load %arg5[%c256_129, %c0_130] : memref<512x1152xbf16, #tpu.memory_space<vmem>>, vector<128x1152xbf16>
    %c0_131 = arith.constant 0 : index
    %c0_132 = arith.constant 0 : index
    %101 = vector.load %arg2[%c0_131, %c0_132] : memref<1152x128xbf16, #tpu.memory_space<vmem>>, vector<1152x128xbf16>
    %cst_133 = arith.constant dense<0.000000e+00> : vector<128x128xf32>
    %102 = tpu.matmul %100, %101, %cst_133 {dimension_numbers = #tpu.dot_dimension_numbers<[1], [0], [0], [1], [0, 0, 1, 1], [], []>} : vector<128x1152xbf16>, vector<1152x128xbf16>, vector<128x128xf32> -> vector<128x128xf32>
    %c256_134 = arith.constant 256 : index
    %c0_135 = arith.constant 0 : index
    %103 = vector.load %arg6[%c256_134, %c0_135] : memref<512x128xf32, #tpu.memory_space<vmem>>, vector<128x128xf32>
    tpu.vector_store %arg6[%c256_134, %c0_135], %102 {strides = array<i32>} : memref<512x128xf32, #tpu.memory_space<vmem>>, vector<128x128xf32>,
    %cst_136 = arith.constant dense<0.000000e+00> : vector<128xf32>
    %104 = vector.multi_reduction <add>, %102, %cst_136 [0] : vector<128x128xf32> to vector<128xf32>
    %105 = vector.shape_cast %104 : vector<128xf32> to vector<1x128xf32>
    %106 = arith.addf %95, %105 : vector<1x128xf32>
    %107 = arith.mulf %102, %102 : vector<128x128xf32>
    %cst_137 = arith.constant dense<0.000000e+00> : vector<128xf32>
    %108 = vector.multi_reduction <add>, %107, %cst_137 [0] : vector<128x128xf32> to vector<128xf32>
    %109 = vector.shape_cast %108 : vector<128xf32> to vector<1x128xf32>
    %110 = arith.addf %99, %109 : vector<1x128xf32>
    %c384_138 = arith.constant 384 : index
    %c0_139 = arith.constant 0 : index
    %111 = vector.load %arg5[%c384_138, %c0_139] : memref<512x1152xbf16, #tpu.memory_space<vmem>>, vector<128x1152xbf16>
    %c0_140 = arith.constant 0 : index
    %c0_141 = arith.constant 0 : index
    %112 = vector.load %arg2[%c0_140, %c0_141] : memref<1152x128xbf16, #tpu.memory_space<vmem>>, vector<1152x128xbf16>
    %cst_142 = arith.constant dense<0.000000e+00> : vector<128x128xf32>
    %113 = tpu.matmul %111, %112, %cst_142 {dimension_numbers = #tpu.dot_dimension_numbers<[1], [0], [0], [1], [0, 0, 1, 1], [], []>} : vector<128x1152xbf16>, vector<1152x128xbf16>, vector<128x128xf32> -> vector<128x128xf32>
    %c384_143 = arith.constant 384 : index
    %c0_144 = arith.constant 0 : index
    %114 = vector.load %arg6[%c384_143, %c0_144] : memref<512x128xf32, #tpu.memory_space<vmem>>, vector<128x128xf32>
    tpu.vector_store %arg6[%c384_143, %c0_144], %113 {strides = array<i32>} : memref<512x128xf32, #tpu.memory_space<vmem>>, vector<128x128xf32>,
    %cst_145 = arith.constant dense<0.000000e+00> : vector<128xf32>
    %115 = vector.multi_reduction <add>, %113, %cst_145 [0] : vector<128x128xf32> to vector<128xf32>
    %116 = vector.shape_cast %115 : vector<128xf32> to vector<1x128xf32>
    %117 = arith.addf %106, %116 : vector<1x128xf32>
    %118 = arith.mulf %113, %113 : vector<128x128xf32>
    %cst_146 = arith.constant dense<0.000000e+00> : vector<128xf32>
    %119 = vector.multi_reduction <add>, %118, %cst_146 [0] : vector<128x128xf32> to vector<128xf32>
    %120 = vector.shape_cast %119 : vector<128xf32> to vector<1x128xf32>
    %121 = arith.addf %110, %120 : vector<1x128xf32>
    %cst_147 = arith.constant 0.001953125 : f32
    %122 = vector.broadcast %cst_147 : f32 to vector<1x128xf32>
    %123 = arith.mulf %117, %122 : vector<1x128xf32>
    %cst_148 = arith.constant 0.001953125 : f32
    %124 = vector.broadcast %cst_148 : f32 to vector<1x128xf32>
    %125 = arith.mulf %121, %124 : vector<1x128xf32>
    %126 = arith.mulf %123, %123 : vector<1x128xf32>
    %127 = arith.subf %125, %126 : vector<1x128xf32>
    %cst_149 = arith.constant 9.99999974E-6 : f32
    %128 = vector.broadcast %cst_149 : f32 to vector<1x128xf32>
    %129 = arith.addf %127, %128 : vector<1x128xf32>
    %130 = math.rsqrt %129 : vector<1x128xf32>
    %c0_150 = arith.constant 0 : index
    %c0_151 = arith.constant 0 : index
    %131 = vector.load %arg6[%c0_150, %c0_151] : memref<512x128xf32, #tpu.memory_space<vmem>>, vector<128x128xf32>
    %132 = vector.broadcast %123 : vector<1x128xf32> to vector<128x128xf32>
    %133 = arith.subf %131, %132 : vector<128x128xf32>
    %134 = vector.broadcast %130 : vector<1x128xf32> to vector<128x128xf32>
    %135 = arith.mulf %133, %134 : vector<128x128xf32>
    %cst_152 = arith.constant 0.000000e+00 : f32
    %136 = vector.broadcast %cst_152 : f32 to vector<128x128xf32>
    %137 = arith.maximumf %135, %136 : vector<128x128xf32>
    %c0_153 = arith.constant 0 : index
    %c0_154 = arith.constant 0 : index
    %138 = vector.load %arg3[%c0_153, %c0_154] : memref<512x128xf32, #tpu.memory_space<vmem>>, vector<128x128xf32>
    tpu.vector_store %arg3[%c0_153, %c0_154], %137 {strides = array<i32>} : memref<512x128xf32, #tpu.memory_space<vmem>>, vector<128x128xf32>,
    %c128_155 = arith.constant 128 : index
    %c0_156 = arith.constant 0 : index
    %139 = vector.load %arg6[%c128_155, %c0_156] : memref<512x128xf32, #tpu.memory_space<vmem>>, vector<128x128xf32>
    %140 = vector.broadcast %123 : vector<1x128xf32> to vector<128x128xf32>
    %141 = arith.subf %139, %140 : vector<128x128xf32>
    %142 = vector.broadcast %130 : vector<1x128xf32> to vector<128x128xf32>
    %143 = arith.mulf %141, %142 : vector<128x128xf32>
    %cst_157 = arith.constant 0.000000e+00 : f32
    %144 = vector.broadcast %cst_157 : f32 to vector<128x128xf32>
    %145 = arith.maximumf %143, %144 : vector<128x128xf32>
    %c128_158 = arith.constant 128 : index
    %c0_159 = arith.constant 0 : index
    %146 = vector.load %arg3[%c128_158, %c0_159] : memref<512x128xf32, #tpu.memory_space<vmem>>, vector<128x128xf32>
    tpu.vector_store %arg3[%c128_158, %c0_159], %145 {strides = array<i32>} : memref<512x128xf32, #tpu.memory_space<vmem>>, vector<128x128xf32>,
    %c256_160 = arith.constant 256 : index
    %c0_161 = arith.constant 0 : index
    %147 = vector.load %arg6[%c256_160, %c0_161] : memref<512x128xf32, #tpu.memory_space<vmem>>, vector<128x128xf32>
    %148 = vector.broadcast %123 : vector<1x128xf32> to vector<128x128xf32>
    %149 = arith.subf %147, %148 : vector<128x128xf32>
    %150 = vector.broadcast %130 : vector<1x128xf32> to vector<128x128xf32>
    %151 = arith.mulf %149, %150 : vector<128x128xf32>
    %cst_162 = arith.constant 0.000000e+00 : f32
    %152 = vector.broadcast %cst_162 : f32 to vector<128x128xf32>
    %153 = arith.maximumf %151, %152 : vector<128x128xf32>
    %c256_163 = arith.constant 256 : index
    %c0_164 = arith.constant 0 : index
    %154 = vector.load %arg3[%c256_163, %c0_164] : memref<512x128xf32, #tpu.memory_space<vmem>>, vector<128x128xf32>
    tpu.vector_store %arg3[%c256_163, %c0_164], %153 {strides = array<i32>} : memref<512x128xf32, #tpu.memory_space<vmem>>, vector<128x128xf32>,
    %c384_165 = arith.constant 384 : index
    %c0_166 = arith.constant 0 : index
    %155 = vector.load %arg6[%c384_165, %c0_166] : memref<512x128xf32, #tpu.memory_space<vmem>>, vector<128x128xf32>
    %156 = vector.broadcast %123 : vector<1x128xf32> to vector<128x128xf32>
    %157 = arith.subf %155, %156 : vector<128x128xf32>
    %158 = vector.broadcast %130 : vector<1x128xf32> to vector<128x128xf32>
    %159 = arith.mulf %157, %158 : vector<128x128xf32>
    %cst_167 = arith.constant 0.000000e+00 : f32
    %160 = vector.broadcast %cst_167 : f32 to vector<128x128xf32>
    %161 = arith.maximumf %159, %160 : vector<128x128xf32>
    %c384_168 = arith.constant 384 : index
    %c0_169 = arith.constant 0 : index
    %162 = vector.load %arg3[%c384_168, %c0_169] : memref<512x128xf32, #tpu.memory_space<vmem>>, vector<128x128xf32>
    tpu.vector_store %arg3[%c384_168, %c0_169], %161 {strides = array<i32>} : memref<512x128xf32, #tpu.memory_space<vmem>>, vector<128x128xf32>,
    return
  }
  func.func @transform_0(%arg0: i32) -> (i32, i32, i32, i32) {
    %c0_i32 = arith.constant 0 : i32
    %c0_i32_0 = arith.constant 0 : i32
    %c0_i32_1 = arith.constant 0 : i32
    %c0_i32_2 = arith.constant 0 : i32
    %c0_i32_3 = arith.constant 0 : i32
    return %c0_i32, %c0_i32_0, %c0_i32_1, %c0_i32_2 : i32, i32, i32, i32
  }
  func.func @transform_1(%arg0: i32) -> (i32, i32) {
    %c0_i32 = arith.constant 0 : i32
    %c0_i32_0 = arith.constant 0 : i32
    %c0_i32_1 = arith.constant 0 : i32
    return %c0_i32, %c0_i32_0 : i32, i32
  }
  func.func @transform_2(%arg0: i32) -> (i32, i32) {
    %c0_i32 = arith.constant 0 : i32
    %c0_i32_0 = arith.constant 0 : i32
    %c0_i32_1 = arith.constant 0 : i32
    return %c0_i32, %c0_i32_0 : i32, i32
  }
}

</mosaic_0001>

<llo_original>
// kernel: tpu_custom_call.1
$region0: #{tpu_custom_call.1}
  #allocation0 [shape = 'u32[]', space=smem, size = 0x4, offset = 0x4, fixed_abs, tag = 'smem constant byte address 0x4 - core index']
  #allocation1 [shape = 'u32[72,128]{1,0:T(1,128)}', space=vmem, size = 0x9000, scoped, tag = 'internal scratch']
  #allocation2 [shape = 'bf16[2,18,18,128]{3,2,1,0:T(8,128)(2,1)}', space=vmem, size = 0x36000, scoped, tag = 'scratch operand']
  #allocation3 [shape = 'bf16[512,1152]{1,0:T(8,128)(2,1)}', space=vmem, size = 0x120000, scoped, tag = 'scratch operand']
  #allocation4 [shape = 'f32[512,128]{1,0:T(8,128)}', space=vmem, size = 0x40000, scoped, tag = 'scratch operand']
  %s0 = inlined_call_operand.hbm [shape: bf16[2,16,16,128], index: 0, kind: input, shape index: {}]
  %s1 = inlined_call_operand.hbm [shape: bf16[1152,128], index: 1, kind: input, shape index: {}]
  %s2 = inlined_call_operand.hbm [shape: f32[512,128], index: 2, kind: output, shape index: {}]
  %s3 = sld [smem:[#allocation0]]
  $region26: #{tpu_custom_call.1} parent=0
    _
  %s5 = ssub.s32 1, %s3
  %s6 = scalar_select 0, %s5, %s3
  $region1: #{tpu_custom_call.1} parent=0
    #allocation5 [shape = 'u8[131072]{0}', space=vmem, size = 0x20000, scoped, tag = 'input window, operand 0, single buffered']
    #allocation6 [shape = 's32[1]{0}', space=sflag, size = 0x4, scoped, tag = 'scoped memory for tpu_custom_call.1']
    #allocation7 [shape = 's32[1]{0}', space=sflag, size = 0x4, scoped, tag = 'scoped memory for tpu_custom_call.1']
    #allocation8 [shape = 'u8[294912]{0}', space=vmem, size = 0x48000, scoped, tag = 'input window, operand 1, single buffered']
    #allocation9 [shape = 's32[1]{0}', space=sflag, size = 0x4, scoped, tag = 'scoped memory for tpu_custom_call.1']
    #allocation10 [shape = 'u8[262144]{0}', space=vmem, size = 0x40000, scoped, tag = 'output window, operand 0, single buffered']
    %7 = vsyncpa [#allocation6], 0
    %8 = vsyncpa [#allocation9], 0
    %9 = vsyncpa [#allocation7], 0
    // Predicated region
    $region2: #{tpu_custom_call.1} parent=1 // pred_check
      _
    $region3: #{tpu_custom_call.1} parent=1 // pred_check_branch
      %11 = sbr.rel (0) target = $region5
    $region4: #{tpu_custom_call.1} parent=1 // pred_region
      %13 = vsyncadd [#allocation6], 0
      %s14 = sshll.u32 %s0, 4
      %s15 = int_to_ptr.hbm [resolvable:$true] %s14
      %s16 = sshll.u32 [#allocation5], 4
      %s17 = int_to_ptr.vmem [resolvable:$true] %s16
      %22 = dma.hbm_to_vmem [thread:$0]  %s15, 4096, %s17, [#allocation6], 64, 64, 4
    $region5: #{tpu_custom_call.1} parent=1 // pred_fallthru
      _
    // Predicated region
    $region6: #{tpu_custom_call.1} parent=1 // pred_check
      _
    $region7: #{tpu_custom_call.1} parent=1 // pred_check_branch
      %24 = sbr.rel (0) target = $region9
    $region8: #{tpu_custom_call.1} parent=1 // pred_region
      %26 = vsyncadd [#allocation9], 0
      %s27 = sshll.u32 %s1, 4
      %s28 = int_to_ptr.hbm [resolvable:$true] %s27
      %s29 = sshll.u32 [#allocation8], 4
      %s30 = int_to_ptr.vmem [resolvable:$true] %s29
      %35 = dma.hbm_to_vmem [thread:$0]  %s28, 9216, %s30, [#allocation9], 64, 64, 4
    $region9: #{tpu_custom_call.1} parent=1 // pred_fallthru
      _
    // Predicated region
    $region10: #{tpu_custom_call.1} parent=1 // pred_check
      _
    $region11: #{tpu_custom_call.1} parent=1 // pred_check_branch
      %37 = sbr.rel (0) target = $region13
    $region12: #{tpu_custom_call.1} parent=1 // pred_region
      %39 = dma.done [#allocation6], 4096
    $region13: #{tpu_custom_call.1} parent=1 // pred_fallthru
      _
    // Predicated region
    $region14: #{tpu_custom_call.1} parent=1 // pred_check
      _
    $region15: #{tpu_custom_call.1} parent=1 // pred_check_branch
      %41 = sbr.rel (0) target = $region17
    $region16: #{tpu_custom_call.1} parent=1 // pred_region
      %43 = dma.done [#allocation9], 9216
    $region17: #{tpu_custom_call.1} parent=1 // pred_fallthru
      _
    %45 = vst [vmem:[#allocation2] sm:$0xf] 0
    %46 = vst [vmem:[#allocation2 + $0x4] sm:$0xf] 0
    %47 = vst [vmem:[#allocation2 + $0x8] sm:$0x1] 0
    %48 = vst [vmem:[#allocation2 + $0xc] sm:$0xf] 0
    %49 = vst [vmem:[#allocation2 + $0x10] sm:$0xf] 0
    %50 = vst [vmem:[#allocation2 + $0x14] sm:$0x1] 0
    %51 = vst [vmem:[#allocation2 + $0x18] sm:$0xf] 0
    %52 = vst [vmem:[#allocation2 + $0x1c] sm:$0xf] 0
    %53 = vst [vmem:[#allocation2 + $0x20] sm:$0x1] 0
    %54 = vst [vmem:[#allocation2 + $0x24] sm:$0xf] 0
    %55 = vst [vmem:[#allocation2 + $0x28] sm:$0xf] 0
    %56 = vst [vmem:[#allocation2 + $0x2c] sm:$0x1] 0
    %57 = vst [vmem:[#allocation2 + $0x30] sm:$0xf] 0
    %58 = vst [vmem:[#allocation2 + $0x34] sm:$0xf] 0
    %59 = vst [vmem:[#allocation2 + $0x38] sm:$0x1] 0
    %60 = vst [vmem:[#allocation2 + $0x3c] sm:$0xf] 0
    %61 = vst [vmem:[#allocation2 + $0x40] sm:$0xf] 0
    %62 = vst [vmem:[#allocation2 + $0x44] sm:$0x1] 0
    %63 = vst [vmem:[#allocation2 + $0x48] sm:$0xf] 0
    %64 = vst [vmem:[#allocation2 + $0x4c] sm:$0xf] 0
    %65 = vst [vmem:[#allocation2 + $0x50] sm:$0x1] 0
    %66 = vst [vmem:[#allocation2 + $0x54] sm:$0xf] 0
    %67 = vst [vmem:[#allocation2 + $0x58] sm:$0xf] 0
    %68 = vst [vmem:[#allocation2 + $0x5c] sm:$0x1] 0
    %69 = vst [vmem:[#allocation2 + $0x60] sm:$0xf] 0
    %70 = vst [vmem:[#allocation2 + $0x64] sm:$0xf] 0
    %71 = vst [vmem:[#allocation2 + $0x68] sm:$0x1] 0
    %72 = vst [vmem:[#allocation2 + $0x6c] sm:$0xf] 0
    %73 = vst [vmem:[#allocation2 + $0x70] sm:$0xf] 0
    %74 = vst [vmem:[#allocation2 + $0x74] sm:$0x1] 0
    %75 = vst [vmem:[#allocation2 + $0x78] sm:$0xf] 0
    %76 = vst [vmem:[#allocation2 + $0x7c] sm:$0xf] 0
    %77 = vst [vmem:[#allocation2 + $0x80] sm:$0x1] 0
    %78 = vst [vmem:[#allocation2 + $0x84] sm:$0xf] 0
    %79 = vst [vmem:[#allocation2 + $0x88] sm:$0xf] 0
    %80 = vst [vmem:[#allocation2 + $0x8c] sm:$0x1] 0
    %81 = vst [vmem:[#allocation2 + $0x90] sm:$0xf] 0
    %82 = vst [vmem:[#allocation2 + $0x94] sm:$0xf] 0
    %83 = vst [vmem:[#allocation2 + $0x98] sm:$0x1] 0
    %84 = vst [vmem:[#allocation2 + $0x9c] sm:$0xf] 0
    %85 = vst [vmem:[#allocation2 + $0xa0] sm:$0xf] 0
    %86 = vst [vmem:[#allocation2 + $0xa4] sm:$0x1] 0
    %87 = vst [vmem:[#allocation2 + $0xa8] sm:$0xf] 0
    %88 = vst [vmem:[#allocation2 + $0xac] sm:$0xf] 0
    %89 = vst [vmem:[#allocation2 + $0xb0] sm:$0x1] 0
    %90 = vst [vmem:[#allocation2 + $0xb4] sm:$0xf] 0
    %91 = vst [vmem:[#allocation2 + $0xb8] sm:$0xf] 0
    %92 = vst [vmem:[#allocation2 + $0xbc] sm:$0x1] 0
    %93 = vst [vmem:[#allocation2 + $0xc0] sm:$0xf] 0
    %94 = vst [vmem:[#allocation2 + $0xc4] sm:$0xf] 0
    %95 = vst [vmem:[#allocation2 + $0xc8] sm:$0x1] 0
    %96 = vst [vmem:[#allocation2 + $0xcc] sm:$0xf] 0
    %97 = vst [vmem:[#allocation2 + $0xd0] sm:$0xf] 0
    %98 = vst [vmem:[#allocation2 + $0xd4] sm:$0x1] 0
    %99 = vst [vmem:[#allocation2 + $0xd8] sm:$0xf] 0
    %100 = vst [vmem:[#allocation2 + $0xdc] sm:$0xf] 0
    %101 = vst [vmem:[#allocation2 + $0xe0] sm:$0x1] 0
    %102 = vst [vmem:[#allocation2 + $0xe4] sm:$0xf] 0
    %103 = vst [vmem:[#allocation2 + $0xe8] sm:$0xf] 0
    %104 = vst [vmem:[#allocation2 + $0xec] sm:$0x1] 0
    %105 = vst [vmem:[#allocation2 + $0xf0] sm:$0xf] 0
    %106 = vst [vmem:[#allocation2 + $0xf4] sm:$0xf] 0
    %107 = vst [vmem:[#allocation2 + $0xf8] sm:$0x1] 0
    %108 = vst [vmem:[#allocation2 + $0xfc] sm:$0xf] 0
    %109 = vst [vmem:[#allocation2 + $0x100] sm:$0xf] 0
    %110 = vst [vmem:[#allocation2 + $0x104] sm:$0x1] 0
    %111 = vst [vmem:[#allocation2 + $0x108] sm:$0xf] 0
    %112 = vst [vmem:[#allocation2 + $0x10c] sm:$0xf] 0
    %113 = vst [vmem:[#allocation2 + $0x110] sm:$0x1] 0
    %114 = vst [vmem:[#allocation2 + $0x114] sm:$0xf] 0
    %115 = vst [vmem:[#allocation2 + $0x118] sm:$0xf] 0
    %116 = vst [vmem:[#allocation2 + $0x11c] sm:$0x1] 0
    %117 = vst [vmem:[#allocation2 + $0x120] sm:$0xf] 0
    %118 = vst [vmem:[#allocation2 + $0x124] sm:$0xf] 0
    %119 = vst [vmem:[#allocation2 + $0x128] sm:$0x1] 0
    %120 = vst [vmem:[#allocation2 + $0x12c] sm:$0xf] 0
    %121 = vst [vmem:[#allocation2 + $0x130] sm:$0xf] 0
    %122 = vst [vmem:[#allocation2 + $0x134] sm:$0x1] 0
    %123 = vst [vmem:[#allocation2 + $0x138] sm:$0xf] 0
    %124 = vst [vmem:[#allocation2 + $0x13c] sm:$0xf] 0
    %125 = vst [vmem:[#allocation2 + $0x140] sm:$0x1] 0
    %126 = vst [vmem:[#allocation2 + $0x144] sm:$0xf] 0
    %127 = vst [vmem:[#allocation2 + $0x148] sm:$0xf] 0
    %128 = vst [vmem:[#allocation2 + $0x14c] sm:$0x1] 0
    %129 = vst [vmem:[#allocation2 + $0x150] sm:$0xf] 0
    %130 = vst [vmem:[#allocation2 + $0x154] sm:$0xf] 0
    %131 = vst [vmem:[#allocation2 + $0x158] sm:$0x1] 0
    %132 = vst [vmem:[#allocation2 + $0x15c] sm:$0xf] 0
    %133 = vst [vmem:[#allocation2 + $0x160] sm:$0xf] 0
    %134 = vst [vmem:[#allocation2 + $0x164] sm:$0x1] 0
    %135 = vst [vmem:[#allocation2 + $0x168] sm:$0xf] 0
    %136 = vst [vmem:[#allocation2 + $0x16c] sm:$0xf] 0
    %137 = vst [vmem:[#allocation2 + $0x170] sm:$0x1] 0
    %138 = vst [vmem:[#allocation2 + $0x174] sm:$0xf] 0
    %139 = vst [vmem:[#allocation2 + $0x178] sm:$0xf] 0
    %140 = vst [vmem:[#allocation2 + $0x17c] sm:$0x1] 0
    %141 = vst [vmem:[#allocation2 + $0x180] sm:$0xf] 0
    %142 = vst [vmem:[#allocation2 + $0x184] sm:$0xf] 0
    %143 = vst [vmem:[#allocation2 + $0x188] sm:$0x1] 0
    %144 = vst [vmem:[#allocation2 + $0x18c] sm:$0xf] 0
    %145 = vst [vmem:[#allocation2 + $0x190] sm:$0xf] 0
    %146 = vst [vmem:[#allocation2 + $0x194] sm:$0x1] 0
    %147 = vst [vmem:[#allocation2 + $0x198] sm:$0xf] 0
    %148 = vst [vmem:[#allocation2 + $0x19c] sm:$0xf] 0
    %149 = vst [vmem:[#allocation2 + $0x1a0] sm:$0x1] 0
    %150 = vst [vmem:[#allocation2 + $0x1a4] sm:$0xf] 0
    %151 = vst [vmem:[#allocation2 + $0x1a8] sm:$0xf] 0
    %152 = vst [vmem:[#allocation2 + $0x1ac] sm:$0x1] 0
    %v153 = vld [vmem:[#allocation5] sm:$0xf]
    %v154 = vld [vmem:[#allocation5 + $0x4] sm:$0xf]
    %v155 = vld [vmem:[#allocation5 + $0x8] sm:$0xf]
    %v156 = vld [vmem:[#allocation5 + $0xc] sm:$0xf]
    %v157 = vld [vmem:[#allocation5 + $0x10] sm:$0xf]
    %v158 = vld [vmem:[#allocation5 + $0x14] sm:$0xf]
    %v159 = vld [vmem:[#allocation5 + $0x18] sm:$0xf]
    %v160 = vld [vmem:[#allocation5 + $0x1c] sm:$0xf]
    %v161 = vld [vmem:[#allocation5 + $0x20] sm:$0xf]
    %v162 = vld [vmem:[#allocation5 + $0x24] sm:$0xf]
    %v163 = vld [vmem:[#allocation5 + $0x28] sm:$0xf]
    %v164 = vld [vmem:[#allocation5 + $0x2c] sm:$0xf]
    %v165 = vld [vmem:[#allocation5 + $0x30] sm:$0xf]
    %v166 = vld [vmem:[#allocation5 + $0x34] sm:$0xf]
    %v167 = vld [vmem:[#allocation5 + $0x38] sm:$0xf]
    %v168 = vld [vmem:[#allocation5 + $0x3c] sm:$0xf]
    %v169 = vld [vmem:[#allocation5 + $0x40] sm:$0xf]
    %v170 = vld [vmem:[#allocation5 + $0x44] sm:$0xf]
    %v171 = vld [vmem:[#allocation5 + $0x48] sm:$0xf]
    %v172 = vld [vmem:[#allocation5 + $0x4c] sm:$0xf]
    %v173 = vld [vmem:[#allocation5 + $0x50] sm:$0xf]
    %v174 = vld [vmem:[#allocation5 + $0x54] sm:$0xf]
    %v175 = vld [vmem:[#allocation5 + $0x58] sm:$0xf]
    %v176 = vld [vmem:[#allocation5 + $0x5c] sm:$0xf]
    %v177 = vld [vmem:[#allocation5 + $0x60] sm:$0xf]
    %v178 = vld [vmem:[#allocation5 + $0x64] sm:$0xf]
    %v179 = vld [vmem:[#allocation5 + $0x68] sm:$0xf]
    %v180 = vld [vmem:[#allocation5 + $0x6c] sm:$0xf]
    %v181 = vld [vmem:[#allocation5 + $0x70] sm:$0xf]
    %v182 = vld [vmem:[#allocation5 + $0x74] sm:$0xf]
    %v183 = vld [vmem:[#allocation5 + $0x78] sm:$0xf]
    %v184 = vld [vmem:[#allocation5 + $0x7c] sm:$0xf]
    %v185 = vld [vmem:[#allocation5 + $0x80] sm:$0xf]
    %v186 = vld [vmem:[#allocation5 + $0x84] sm:$0xf]
    %v187 = vld [vmem:[#allocation5 + $0x88] sm:$0xf]
    %v188 = vld [vmem:[#allocation5 + $0x8c] sm:$0xf]
    %v189 = vld [vmem:[#allocation5 + $0x90] sm:$0xf]
    %v190 = vld [vmem:[#allocation5 + $0x94] sm:$0xf]
    %v191 = vld [vmem:[#allocation5 + $0x98] sm:$0xf]
    %v192 = vld [vmem:[#allocation5 + $0x9c] sm:$0xf]
    %v193 = vld [vmem:[#allocation5 + $0xa0] sm:$0xf]
    %v194 = vld [vmem:[#allocation5 + $0xa4] sm:$0xf]
    %v195 = vld [vmem:[#allocation5 + $0xa8] sm:$0xf]
    %v196 = vld [vmem:[#allocation5 + $0xac] sm:$0xf]
    %v197 = vld [vmem:[#allocation5 + $0xb0] sm:$0xf]
    %v198 = vld [vmem:[#allocation5 + $0xb4] sm:$0xf]
    %v199 = vld [vmem:[#allocation5 + $0xb8] sm:$0xf]
    %v200 = vld [vmem:[#allocation5 + $0xbc] sm:$0xf]
    %v201 = vld [vmem:[#allocation5 + $0xc0] sm:$0xf]
    %v202 = vld [vmem:[#allocation5 + $0xc4] sm:$0xf]
    %v203 = vld [vmem:[#allocation5 + $0xc8] sm:$0xf]
    %v204 = vld [vmem:[#allocation5 + $0xcc] sm:$0xf]
    %v205 = vld [vmem:[#allocation5 + $0xd0] sm:$0xf]
    %v206 = vld [vmem:[#allocation5 + $0xd4] sm:$0xf]
    %v207 = vld [vmem:[#allocation5 + $0xd8] sm:$0xf]
    %v208 = vld [vmem:[#allocation5 + $0xdc] sm:$0xf]
    %v209 = vld [vmem:[#allocation5 + $0xe0] sm:$0xf]
    %v210 = vld [vmem:[#allocation5 + $0xe4] sm:$0xf]
    %v211 = vld [vmem:[#allocation5 + $0xe8] sm:$0xf]
    %v212 = vld [vmem:[#allocation5 + $0xec] sm:$0xf]
    %v213 = vld [vmem:[#allocation5 + $0xf0] sm:$0xf]
    %v214 = vld [vmem:[#allocation5 + $0xf4] sm:$0xf]
    %v215 = vld [vmem:[#allocation5 + $0xf8] sm:$0xf]
    %v216 = vld [vmem:[#allocation5 + $0xfc] sm:$0xf]
    %vm217 = vsmask.f32 256
    %vm218 = vsmask.f32 4368
    %vm219 = vmor %vm217, %vm218
    %v221 = vshrl.u32 %v153, 16
    %v223 = vrot.slane %v221, 7
    %v224 = vshll.u32 %v153, 16
    %v226 = vor.u32 %v223, %v224
    %v227 = vrot.slane %v223, 4
    %v229 = vshrl.u32 %v154, 16
    %v231 = vrot.slane %v229, 7
    %v232 = vshll.u32 %v154, 16
    %v234 = vor.u32 %v231, %v232
    %v235 = vsel %vm219, %v227, %v234
    %v236 = vrot.slane %v231, 4
    %v238 = vshrl.u32 %v155, 16
    %v240 = vrot.slane %v238, 7
    %v241 = vshll.u32 %v155, 16
    %v243 = vor.u32 %v240, %v241
    %v244 = vrot.slane %v240, 4
    %v246 = vshrl.u32 %v156, 16
    %v248 = vrot.slane %v246, 7
    %v249 = vshll.u32 %v156, 16
    %v251 = vor.u32 %v248, %v249
    %v252 = vsel %vm219, %v244, %v251
    %v253 = vrot.slane %v248, 4
    %v255 = vshrl.u32 %v157, 16
    %v257 = vrot.slane %v255, 7
    %v258 = vshll.u32 %v157, 16
    %v260 = vor.u32 %v257, %v258
    %v261 = vrot.slane %v257, 4
    %v263 = vshrl.u32 %v158, 16
    %v265 = vrot.slane %v263, 7
    %v266 = vshll.u32 %v158, 16
    %v268 = vor.u32 %v265, %v266
    %v269 = vsel %vm219, %v261, %v268
    %v270 = vrot.slane %v265, 4
    %v272 = vshrl.u32 %v159, 16
    %v274 = vrot.slane %v272, 7
    %v275 = vshll.u32 %v159, 16
    %v277 = vor.u32 %v274, %v275
    %v278 = vrot.slane %v274, 4
    %v280 = vshrl.u32 %v160, 16
    %v282 = vrot.slane %v280, 7
    %v283 = vshll.u32 %v160, 16
    %v285 = vor.u32 %v282, %v283
    %v286 = vsel %vm219, %v278, %v285
    %v287 = vrot.slane %v282, 4
    %v289 = vshrl.u32 %v161, 16
    %v291 = vrot.slane %v289, 7
    %v292 = vshll.u32 %v161, 16
    %v294 = vor.u32 %v291, %v292
    %v295 = vrot.slane %v291, 4
    %v297 = vshrl.u32 %v162, 16
    %v299 = vrot.slane %v297, 7
    %v300 = vshll.u32 %v162, 16
    %v302 = vor.u32 %v299, %v300
    %v303 = vsel %vm219, %v295, %v302
    %v304 = vrot.slane %v299, 4
    %v306 = vshrl.u32 %v163, 16
    %v308 = vrot.slane %v306, 7
    %v309 = vshll.u32 %v163, 16
    %v311 = vor.u32 %v308, %v309
    %v312 = vrot.slane %v308, 4
    %v314 = vshrl.u32 %v164, 16
    %v316 = vrot.slane %v314, 7
    %v317 = vshll.u32 %v164, 16
    %v319 = vor.u32 %v316, %v317
    %v320 = vsel %vm219, %v312, %v319
    %v321 = vrot.slane %v316, 4
    %v323 = vshrl.u32 %v165, 16
    %v325 = vrot.slane %v323, 7
    %v326 = vshll.u32 %v165, 16
    %v328 = vor.u32 %v325, %v326
    %v329 = vrot.slane %v325, 4
    %v331 = vshrl.u32 %v166, 16
    %v333 = vrot.slane %v331, 7
    %v334 = vshll.u32 %v166, 16
    %v336 = vor.u32 %v333, %v334
    %v337 = vsel %vm219, %v329, %v336
    %v338 = vrot.slane %v333, 4
    %v340 = vshrl.u32 %v167, 16
    %v342 = vrot.slane %v340, 7
    %v343 = vshll.u32 %v167, 16
    %v345 = vor.u32 %v342, %v343
    %v346 = vrot.slane %v342, 4
    %v348 = vshrl.u32 %v168, 16
    %v350 = vrot.slane %v348, 7
    %v351 = vshll.u32 %v168, 16
    %v353 = vor.u32 %v350, %v351
    %v354 = vsel %vm219, %v346, %v353
    %v355 = vrot.slane %v350, 4
    %v357 = vshrl.u32 %v169, 16
    %v359 = vrot.slane %v357, 7
    %v360 = vshll.u32 %v169, 16
    %v362 = vor.u32 %v359, %v360
    %v363 = vrot.slane %v359, 4
    %v365 = vshrl.u32 %v170, 16
    %v367 = vrot.slane %v365, 7
    %v368 = vshll.u32 %v170, 16
    %v370 = vor.u32 %v367, %v368
    %v371 = vsel %vm219, %v363, %v370
    %v372 = vrot.slane %v367, 4
    %v374 = vshrl.u32 %v171, 16
    %v376 = vrot.slane %v374, 7
    %v377 = vshll.u32 %v171, 16
    %v379 = vor.u32 %v376, %v377
    %v380 = vrot.slane %v376, 4
    %v382 = vshrl.u32 %v172, 16
    %v384 = vrot.slane %v382, 7
    %v385 = vshll.u32 %v172, 16
    %v387 = vor.u32 %v384, %v385
    %v388 = vsel %vm219, %v380, %v387
    %v389 = vrot.slane %v384, 4
    %v391 = vshrl.u32 %v173, 16
    %v393 = vrot.slane %v391, 7
    %v394 = vshll.u32 %v173, 16
    %v396 = vor.u32 %v393, %v394
    %v397 = vrot.slane %v393, 4
    %v399 = vshrl.u32 %v174, 16
    %v401 = vrot.slane %v399, 7
    %v402 = vshll.u32 %v174, 16
    %v404 = vor.u32 %v401, %v402
    %v405 = vsel %vm219, %v397, %v404
    %v406 = vrot.slane %v401, 4
    %v408 = vshrl.u32 %v175, 16
    %v410 = vrot.slane %v408, 7
    %v411 = vshll.u32 %v175, 16
    %v413 = vor.u32 %v410, %v411
    %v414 = vrot.slane %v410, 4
    %v416 = vshrl.u32 %v176, 16
    %v418 = vrot.slane %v416, 7
    %v419 = vshll.u32 %v176, 16
    %v421 = vor.u32 %v418, %v419
    %v422 = vsel %vm219, %v414, %v421
    %v423 = vrot.slane %v418, 4
    %v425 = vshrl.u32 %v177, 16
    %v427 = vrot.slane %v425, 7
    %v428 = vshll.u32 %v177, 16
    %v430 = vor.u32 %v427, %v428
    %v431 = vrot.slane %v427, 4
    %v433 = vshrl.u32 %v178, 16
    %v435 = vrot.slane %v433, 7
    %v436 = vshll.u32 %v178, 16
    %v438 = vor.u32 %v435, %v436
    %v439 = vsel %vm219, %v431, %v438
    %v440 = vrot.slane %v435, 4
    %v442 = vshrl.u32 %v179, 16
    %v444 = vrot.slane %v442, 7
    %v445 = vshll.u32 %v179, 16
    %v447 = vor.u32 %v444, %v445
    %v448 = vrot.slane %v444, 4
    %v450 = vshrl.u32 %v180, 16
    %v452 = vrot.slane %v450, 7
    %v453 = vshll.u32 %v180, 16
    %v455 = vor.u32 %v452, %v453
    %v456 = vsel %vm219, %v448, %v455
    %v457 = vrot.slane %v452, 4
    %v459 = vshrl.u32 %v181, 16
    %v461 = vrot.slane %v459, 7
    %v462 = vshll.u32 %v181, 16
    %v464 = vor.u32 %v461, %v462
    %v465 = vrot.slane %v461, 4
    %v467 = vshrl.u32 %v182, 16
    %v469 = vrot.slane %v467, 7
    %v470 = vshll.u32 %v182, 16
    %v472 = vor.u32 %v469, %v470
    %v473 = vsel %vm219, %v465, %v472
    %v474 = vrot.slane %v469, 4
    %v476 = vshrl.u32 %v183, 16
    %v478 = vrot.slane %v476, 7
    %v479 = vshll.u32 %v183, 16
    %v481 = vor.u32 %v478, %v479
    %v482 = vrot.slane %v478, 4
    %v484 = vshrl.u32 %v184, 16
    %v486 = vrot.slane %v484, 7
    %v487 = vshll.u32 %v184, 16
    %v489 = vor.u32 %v486, %v487
    %v490 = vsel %vm219, %v482, %v489
    %v491 = vrot.slane %v486, 4
    %v493 = vshrl.u32 %v185, 16
    %v495 = vrot.slane %v493, 7
    %v496 = vshll.u32 %v185, 16
    %v498 = vor.u32 %v495, %v496
    %v499 = vrot.slane %v495, 4
    %v501 = vshrl.u32 %v186, 16
    %v503 = vrot.slane %v501, 7
    %v504 = vshll.u32 %v186, 16
    %v506 = vor.u32 %v503, %v504
    %v507 = vsel %vm219, %v499, %v506
    %v508 = vrot.slane %v503, 4
    %v510 = vshrl.u32 %v187, 16
    %v512 = vrot.slane %v510, 7
    %v513 = vshll.u32 %v187, 16
    %v515 = vor.u32 %v512, %v513
    %v516 = vrot.slane %v512, 4
    %v518 = vshrl.u32 %v188, 16
    %v520 = vrot.slane %v518, 7
    %v521 = vshll.u32 %v188, 16
    %v523 = vor.u32 %v520, %v521
    %v524 = vsel %vm219, %v516, %v523
    %v525 = vrot.slane %v520, 4
    %v527 = vshrl.u32 %v189, 16
    %v529 = vrot.slane %v527, 7
    %v530 = vshll.u32 %v189, 16
    %v532 = vor.u32 %v529, %v530
    %v533 = vrot.slane %v529, 4
    %v535 = vshrl.u32 %v190, 16
    %v537 = vrot.slane %v535, 7
    %v538 = vshll.u32 %v190, 16
    %v540 = vor.u32 %v537, %v538
    %v541 = vsel %vm219, %v533, %v540
    %v542 = vrot.slane %v537, 4
    %v544 = vshrl.u32 %v191, 16
    %v546 = vrot.slane %v544, 7
    %v547 = vshll.u32 %v191, 16
    %v549 = vor.u32 %v546, %v547
    %v550 = vrot.slane %v546, 4
    %v552 = vshrl.u32 %v192, 16
    %v554 = vrot.slane %v552, 7
    %v555 = vshll.u32 %v192, 16
    %v557 = vor.u32 %v554, %v555
    %v558 = vsel %vm219, %v550, %v557
    %v559 = vrot.slane %v554, 4
    %v561 = vshrl.u32 %v193, 16
    %v563 = vrot.slane %v561, 7
    %v564 = vshll.u32 %v193, 16
    %v566 = vor.u32 %v563, %v564
    %v567 = vrot.slane %v563, 4
    %v569 = vshrl.u32 %v194, 16
    %v571 = vrot.slane %v569, 7
    %v572 = vshll.u32 %v194, 16
    %v574 = vor.u32 %v571, %v572
    %v575 = vsel %vm219, %v567, %v574
    %v576 = vrot.slane %v571, 4
    %v578 = vshrl.u32 %v195, 16
    %v580 = vrot.slane %v578, 7
    %v581 = vshll.u32 %v195, 16
    %v583 = vor.u32 %v580, %v581
    %v584 = vrot.slane %v580, 4
    %v586 = vshrl.u32 %v196, 16
    %v588 = vrot.slane %v586, 7
    %v589 = vshll.u32 %v196, 16
    %v591 = vor.u32 %v588, %v589
    %v592 = vsel %vm219, %v584, %v591
    %v593 = vrot.slane %v588, 4
    %v595 = vshrl.u32 %v197, 16
    %v597 = vrot.slane %v595, 7
    %v598 = vshll.u32 %v197, 16
    %v600 = vor.u32 %v597, %v598
    %v601 = vrot.slane %v597, 4
    %v603 = vshrl.u32 %v198, 16
    %v605 = vrot.slane %v603, 7
    %v606 = vshll.u32 %v198, 16
    %v608 = vor.u32 %v605, %v606
    %v609 = vsel %vm219, %v601, %v608
    %v610 = vrot.slane %v605, 4
    %v612 = vshrl.u32 %v199, 16
    %v614 = vrot.slane %v612, 7
    %v615 = vshll.u32 %v199, 16
    %v617 = vor.u32 %v614, %v615
    %v618 = vrot.slane %v614, 4
    %v620 = vshrl.u32 %v200, 16
    %v622 = vrot.slane %v620, 7
    %v623 = vshll.u32 %v200, 16
    %v625 = vor.u32 %v622, %v623
    %v626 = vsel %vm219, %v618, %v625
    %v627 = vrot.slane %v622, 4
    %v629 = vshrl.u32 %v201, 16
    %v631 = vrot.slane %v629, 7
    %v632 = vshll.u32 %v201, 16
    %v634 = vor.u32 %v631, %v632
    %v635 = vrot.slane %v631, 4
    %v637 = vshrl.u32 %v202, 16
    %v639 = vrot.slane %v637, 7
    %v640 = vshll.u32 %v202, 16
    %v642 = vor.u32 %v639, %v640
    %v643 = vsel %vm219, %v635, %v642
    %v644 = vrot.slane %v639, 4
    %v646 = vshrl.u32 %v203, 16
    %v648 = vrot.slane %v646, 7
    %v649 = vshll.u32 %v203, 16
    %v651 = vor.u32 %v648, %v649
    %v652 = vrot.slane %v648, 4
    %v654 = vshrl.u32 %v204, 16
    %v656 = vrot.slane %v654, 7
    %v657 = vshll.u32 %v204, 16
    %v659 = vor.u32 %v656, %v657
    %v660 = vsel %vm219, %v652, %v659
    %v661 = vrot.slane %v656, 4
    %v663 = vshrl.u32 %v205, 16
    %v665 = vrot.slane %v663, 7
    %v666 = vshll.u32 %v205, 16
    %v668 = vor.u32 %v665, %v666
    %v669 = vrot.slane %v665, 4
    %v671 = vshrl.u32 %v206, 16
    %v673 = vrot.slane %v671, 7
    %v674 = vshll.u32 %v206, 16
    %v676 = vor.u32 %v673, %v674
    %v677 = vsel %vm219, %v669, %v676
    %v678 = vrot.slane %v673, 4
    %v680 = vshrl.u32 %v207, 16
    %v682 = vrot.slane %v680, 7
    %v683 = vshll.u32 %v207, 16
    %v685 = vor.u32 %v682, %v683
    %v686 = vrot.slane %v682, 4
    %v688 = vshrl.u32 %v208, 16
    %v690 = vrot.slane %v688, 7
    %v691 = vshll.u32 %v208, 16
    %v693 = vor.u32 %v690, %v691
    %v694 = vsel %vm219, %v686, %v693
    %v695 = vrot.slane %v690, 4
    %v697 = vshrl.u32 %v209, 16
    %v699 = vrot.slane %v697, 7
    %v700 = vshll.u32 %v209, 16
    %v702 = vor.u32 %v699, %v700
    %v703 = vrot.slane %v699, 4
    %v705 = vshrl.u32 %v210, 16
    %v707 = vrot.slane %v705, 7
    %v708 = vshll.u32 %v210, 16
    %v710 = vor.u32 %v707, %v708
    %v711 = vsel %vm219, %v703, %v710
    %v712 = vrot.slane %v707, 4
    %v714 = vshrl.u32 %v211, 16
    %v716 = vrot.slane %v714, 7
    %v717 = vshll.u32 %v211, 16
    %v719 = vor.u32 %v716, %v717
    %v720 = vrot.slane %v716, 4
    %v722 = vshrl.u32 %v212, 16
    %v724 = vrot.slane %v722, 7
    %v725 = vshll.u32 %v212, 16
    %v727 = vor.u32 %v724, %v725
    %v728 = vsel %vm219, %v720, %v727
    %v729 = vrot.slane %v724, 4
    %v731 = vshrl.u32 %v213, 16
    %v733 = vrot.slane %v731, 7
    %v734 = vshll.u32 %v213, 16
    %v736 = vor.u32 %v733, %v734
    %v737 = vrot.slane %v733, 4
    %v739 = vshrl.u32 %v214, 16
    %v741 = vrot.slane %v739, 7
    %v742 = vshll.u32 %v214, 16
    %v744 = vor.u32 %v741, %v742
    %v745 = vsel %vm219, %v737, %v744
    %v746 = vrot.slane %v741, 4
    %v748 = vshrl.u32 %v215, 16
    %v750 = vrot.slane %v748, 7
    %v751 = vshll.u32 %v215, 16
    %v753 = vor.u32 %v750, %v751
    %v754 = vrot.slane %v750, 4
    %v756 = vshrl.u32 %v216, 16
    %v758 = vrot.slane %v756, 7
    %v759 = vshll.u32 %v216, 16
    %v761 = vor.u32 %v758, %v759
    %v762 = vsel %vm219, %v754, %v761
    %v763 = vrot.slane %v758, 4
    %s860 = scalar_lea.vmem [#allocation2], 12
    %vm861 = vcmask 1043456
    %vm862 = vsmask.f32 7938
    %vm863 = vmand %vm861, %vm862
    %v864 = vld [vmem:[%s860] sm:$0xf]
    %v865 = vsel %vm863, %v226, %v864
    %866 = vst [vmem:[%s860] sm:$0xf] %v865
    %867 = vst [vmem:[%s860 + $0x4] sm:$0xf] %v235
    %vm868 = vcmask 1040384
    %vm869 = vmand %vm868, %vm217
    %v870 = vld [vmem:[%s860 + $0x8] sm:$0x1]
    %v871 = vsel %vm869, %v236, %v870
    %872 = vst [vmem:[%s860 + $0x8] sm:$0x1] %v871
    %v873 = vld [vmem:[%s860 + $0xc] sm:$0xf]
    %v874 = vsel %vm863, %v243, %v873
    %875 = vst [vmem:[%s860 + $0xc] sm:$0xf] %v874
    %876 = vst [vmem:[%s860 + $0x10] sm:$0xf] %v252
    %v877 = vld [vmem:[%s860 + $0x14] sm:$0x1]
    %v878 = vsel %vm869, %v253, %v877
    %879 = vst [vmem:[%s860 + $0x14] sm:$0x1] %v878
    %v880 = vld [vmem:[%s860 + $0x18] sm:$0xf]
    %v881 = vsel %vm863, %v260, %v880
    %882 = vst [vmem:[%s860 + $0x18] sm:$0xf] %v881
    %883 = vst [vmem:[%s860 + $0x1c] sm:$0xf] %v269
    %v884 = vld [vmem:[%s860 + $0x20] sm:$0x1]
    %v885 = vsel %vm869, %v270, %v884
    %886 = vst [vmem:[%s860 + $0x20] sm:$0x1] %v885
    %v887 = vld [vmem:[%s860 + $0x24] sm:$0xf]
    %v888 = vsel %vm863, %v277, %v887
    %889 = vst [vmem:[%s860 + $0x24] sm:$0xf] %v888
    %890 = vst [vmem:[%s860 + $0x28] sm:$0xf] %v286
    %v891 = vld [vmem:[%s860 + $0x2c] sm:$0x1]
    %v892 = vsel %vm869, %v287, %v891
    %893 = vst [vmem:[%s860 + $0x2c] sm:$0x1] %v892
    %v894 = vld [vmem:[%s860 + $0x30] sm:$0xf]
    %v895 = vsel %vm863, %v294, %v894
    %896 = vst [vmem:[%s860 + $0x30] sm:$0xf] %v895
    %897 = vst [vmem:[%s860 + $0x34] sm:$0xf] %v303
    %v898 = vld [vmem:[%s860 + $0x38] sm:$0x1]
    %v899 = vsel %vm869, %v304, %v898
    %900 = vst [vmem:[%s860 + $0x38] sm:$0x1] %v899
    %v901 = vld [vmem:[%s860 + $0x3c] sm:$0xf]
    %v902 = vsel %vm863, %v311, %v901
    %903 = vst [vmem:[%s860 + $0x3c] sm:$0xf] %v902
    %904 = vst [vmem:[%s860 + $0x40] sm:$0xf] %v320
    %v905 = vld [vmem:[%s860 + $0x44] sm:$0x1]
    %v906 = vsel %vm869, %v321, %v905
    %907 = vst [vmem:[%s860 + $0x44] sm:$0x1] %v906
    %v908 = vld [vmem:[%s860 + $0x48] sm:$0xf]
    %v909 = vsel %vm863, %v328, %v908
    %910 = vst [vmem:[%s860 + $0x48] sm:$0xf] %v909
    %911 = vst [vmem:[%s860 + $0x4c] sm:$0xf] %v337
    %v912 = vld [vmem:[%s860 + $0x50] sm:$0x1]
    %v913 = vsel %vm869, %v338, %v912
    %914 = vst [vmem:[%s860 + $0x50] sm:$0x1] %v913
    %v915 = vld [vmem:[%s860 + $0x54] sm:$0xf]
    %v916 = vsel %vm863, %v345, %v915
    %917 = vst [vmem:[%s860 + $0x54] sm:$0xf] %v916
    %918 = vst [vmem:[%s860 + $0x58] sm:$0xf] %v354
    %v919 = vld [vmem:[%s860 + $0x5c] sm:$0x1]
    %v920 = vsel %vm869, %v355, %v919
    %921 = vst [vmem:[%s860 + $0x5c] sm:$0x1] %v920
    %v922 = vld [vmem:[%s860 + $0x60] sm:$0xf]
    %v923 = vsel %vm863, %v362, %v922
    %924 = vst [vmem:[%s860 + $0x60] sm:$0xf] %v923
    %925 = vst [vmem:[%s860 + $0x64] sm:$0xf] %v371
    %v926 = vld [vmem:[%s860 + $0x68] sm:$0x1]
    %v927 = vsel %vm869, %v372, %v926
    %928 = vst [vmem:[%s860 + $0x68] sm:$0x1] %v927
    %v929 = vld [vmem:[%s860 + $0x6c] sm:$0xf]
    %v930 = vsel %vm863, %v379, %v929
    %931 = vst [vmem:[%s860 + $0x6c] sm:$0xf] %v930
    %932 = vst [vmem:[%s860 + $0x70] sm:$0xf] %v388
    %v933 = vld [vmem:[%s860 + $0x74] sm:$0x1]
    %v934 = vsel %vm869, %v389, %v933
    %935 = vst [vmem:[%s860 + $0x74] sm:$0x1] %v934
    %v936 = vld [vmem:[%s860 + $0x78] sm:$0xf]
    %v937 = vsel %vm863, %v396, %v936
    %938 = vst [vmem:[%s860 + $0x78] sm:$0xf] %v937
    %939 = vst [vmem:[%s860 + $0x7c] sm:$0xf] %v405
    %v940 = vld [vmem:[%s860 + $0x80] sm:$0x1]
    %v941 = vsel %vm869, %v406, %v940
    %942 = vst [vmem:[%s860 + $0x80] sm:$0x1] %v941
    %v943 = vld [vmem:[%s860 + $0x84] sm:$0xf]
    %v944 = vsel %vm863, %v413, %v943
    %945 = vst [vmem:[%s860 + $0x84] sm:$0xf] %v944
    %946 = vst [vmem:[%s860 + $0x88] sm:$0xf] %v422
    %v947 = vld [vmem:[%s860 + $0x8c] sm:$0x1]
    %v948 = vsel %vm869, %v423, %v947
    %949 = vst [vmem:[%s860 + $0x8c] sm:$0x1] %v948
    %v950 = vld [vmem:[%s860 + $0x90] sm:$0xf]
    %v951 = vsel %vm863, %v430, %v950
    %952 = vst [vmem:[%s860 + $0x90] sm:$0xf] %v951
    %953 = vst [vmem:[%s860 + $0x94] sm:$0xf] %v439
    %v954 = vld [vmem:[%s860 + $0x98] sm:$0x1]
    %v955 = vsel %vm869, %v440, %v954
    %956 = vst [vmem:[%s860 + $0x98] sm:$0x1] %v955
    %v957 = vld [vmem:[%s860 + $0x9c] sm:$0xf]
    %v958 = vsel %vm863, %v447, %v957
    %959 = vst [vmem:[%s860 + $0x9c] sm:$0xf] %v958
    %960 = vst [vmem:[%s860 + $0xa0] sm:$0xf] %v456
    %v961 = vld [vmem:[%s860 + $0xa4] sm:$0x1]
    %v962 = vsel %vm869, %v457, %v961
    %963 = vst [vmem:[%s860 + $0xa4] sm:$0x1] %v962
    %v964 = vld [vmem:[%s860 + $0xa8] sm:$0xf]
    %v965 = vsel %vm863, %v464, %v964
    %966 = vst [vmem:[%s860 + $0xa8] sm:$0xf] %v965
    %967 = vst [vmem:[%s860 + $0xac] sm:$0xf] %v473
    %v968 = vld [vmem:[%s860 + $0xb0] sm:$0x1]
    %v969 = vsel %vm869, %v474, %v968
    %970 = vst [vmem:[%s860 + $0xb0] sm:$0x1] %v969
    %v971 = vld [vmem:[%s860 + $0xb4] sm:$0xf]
    %v972 = vsel %vm863, %v481, %v971
    %973 = vst [vmem:[%s860 + $0xb4] sm:$0xf] %v972
    %974 = vst [vmem:[%s860 + $0xb8] sm:$0xf] %v490
    %v975 = vld [vmem:[%s860 + $0xbc] sm:$0x1]
    %v976 = vsel %vm869, %v491, %v975
    %977 = vst [vmem:[%s860 + $0xbc] sm:$0x1] %v976
    %v978 = vld [vmem:[%s860 + $0xd8] sm:$0xf]
    %v979 = vsel %vm863, %v498, %v978
    %980 = vst [vmem:[%s860 + $0xd8] sm:$0xf] %v979
    %981 = vst [vmem:[%s860 + $0xdc] sm:$0xf] %v507
    %v982 = vld [vmem:[%s860 + $0xe0] sm:$0x1]
    %v983 = vsel %vm869, %v508, %v982
    %984 = vst [vmem:[%s860 + $0xe0] sm:$0x1] %v983
    %v985 = vld [vmem:[%s860 + $0xe4] sm:$0xf]
    %v986 = vsel %vm863, %v515, %v985
    %987 = vst [vmem:[%s860 + $0xe4] sm:$0xf] %v986
    %988 = vst [vmem:[%s860 + $0xe8] sm:$0xf] %v524
    %v989 = vld [vmem:[%s860 + $0xec] sm:$0x1]
    %v990 = vsel %vm869, %v525, %v989
    %991 = vst [vmem:[%s860 + $0xec] sm:$0x1] %v990
    %v992 = vld [vmem:[%s860 + $0xf0] sm:$0xf]
    %v993 = vsel %vm863, %v532, %v992
    %994 = vst [vmem:[%s860 + $0xf0] sm:$0xf] %v993
    %995 = vst [vmem:[%s860 + $0xf4] sm:$0xf] %v541
    %v996 = vld [vmem:[%s860 + $0xf8] sm:$0x1]
    %v997 = vsel %vm869, %v542, %v996
    %998 = vst [vmem:[%s860 + $0xf8] sm:$0x1] %v997
    %v999 = vld [vmem:[%s860 + $0xfc] sm:$0xf]
    %v1000 = vsel %vm863, %v549, %v999
    %1001 = vst [vmem:[%s860 + $0xfc] sm:$0xf] %v1000
    %1002 = vst [vmem:[%s860 + $0x100] sm:$0xf] %v558
    %v1003 = vld [vmem:[%s860 + $0x104] sm:$0x1]
    %v1004 = vsel %vm869, %v559, %v1003
    %1005 = vst [vmem:[%s860 + $0x104] sm:$0x1] %v1004
    %v1006 = vld [vmem:[%s860 + $0x108] sm:$0xf]
    %v1007 = vsel %vm863, %v566, %v1006
    %1008 = vst [vmem:[%s860 + $0x108] sm:$0xf] %v1007
    %1009 = vst [vmem:[%s860 + $0x10c] sm:$0xf] %v575
    %v1010 = vld [vmem:[%s860 + $0x110] sm:$0x1]
    %v1011 = vsel %vm869, %v576, %v1010
    %1012 = vst [vmem:[%s860 + $0x110] sm:$0x1] %v1011
    %v1013 = vld [vmem:[%s860 + $0x114] sm:$0xf]
    %v1014 = vsel %vm863, %v583, %v1013
    %1015 = vst [vmem:[%s860 + $0x114] sm:$0xf] %v1014
    %1016 = vst [vmem:[%s860 + $0x118] sm:$0xf] %v592
    %v1017 = vld [vmem:[%s860 + $0x11c] sm:$0x1]
    %v1018 = vsel %vm869, %v593, %v1017
    %1019 = vst [vmem:[%s860 + $0x11c] sm:$0x1] %v1018
    %v1020 = vld [vmem:[%s860 + $0x120] sm:$0xf]
    %v1021 = vsel %vm863, %v600, %v1020
    %1022 = vst [vmem:[%s860 + $0x120] sm:$0xf] %v1021
    %1023 = vst [vmem:[%s860 + $0x124] sm:$0xf] %v609
    %v1024 = vld [vmem:[%s860 + $0x128] sm:$0x1]
    %v1025 = vsel %vm869, %v610, %v1024
    %1026 = vst [vmem:[%s860 + $0x128] sm:$0x1] %v1025
    %v1027 = vld [vmem:[%s860 + $0x12c] sm:$0xf]
    %v1028 = vsel %vm863, %v617, %v1027
    %1029 = vst [vmem:[%s860 + $0x12c] sm:$0xf] %v1028
    %1030 = vst [vmem:[%s860 + $0x130] sm:$0xf] %v626
    %v1031 = vld [vmem:[%s860 + $0x134] sm:$0x1]
    %v1032 = vsel %vm869, %v627, %v1031
    %1033 = vst [vmem:[%s860 + $0x134] sm:$0x1] %v1032
    %v1034 = vld [vmem:[%s860 + $0x138] sm:$0xf]
    %v1035 = vsel %vm863, %v634, %v1034
    %1036 = vst [vmem:[%s860 + $0x138] sm:$0xf] %v1035
    %1037 = vst [vmem:[%s860 + $0x13c] sm:$0xf] %v643
    %v1038 = vld [vmem:[%s860 + $0x140] sm:$0x1]
    %v1039 = vsel %vm869, %v644, %v1038
    %1040 = vst [vmem:[%s860 + $0x140] sm:$0x1] %v1039
    %v1041 = vld [vmem:[%s860 + $0x144] sm:$0xf]
    %v1042 = vsel %vm863, %v651, %v1041
    %1043 = vst [vmem:[%s860 + $0x144] sm:$0xf] %v1042
    %1044 = vst [vmem:[%s860 + $0x148] sm:$0xf] %v660
    %v1045 = vld [vmem:[%s860 + $0x14c] sm:$0x1]
    %v1046 = vsel %vm869, %v661, %v1045
    %1047 = vst [vmem:[%s860 + $0x14c] sm:$0x1] %v1046
    %v1048 = vld [vmem:[%s860 + $0x150] sm:$0xf]
    %v1049 = vsel %vm863, %v668, %v1048
    %1050 = vst [vmem:[%s860 + $0x150] sm:$0xf] %v1049
    %1051 = vst [vmem:[%s860 + $0x154] sm:$0xf] %v677
    %v1052 = vld [vmem:[%s860 + $0x158] sm:$0x1]
    %v1053 = vsel %vm869, %v678, %v1052
    %1054 = vst [vmem:[%s860 + $0x158] sm:$0x1] %v1053
    %v1055 = vld [vmem:[%s860 + $0x15c] sm:$0xf]
    %v1056 = vsel %vm863, %v685, %v1055
    %1057 = vst [vmem:[%s860 + $0x15c] sm:$0xf] %v1056
    %1058 = vst [vmem:[%s860 + $0x160] sm:$0xf] %v694
    %v1059 = vld [vmem:[%s860 + $0x164] sm:$0x1]
    %v1060 = vsel %vm869, %v695, %v1059
    %1061 = vst [vmem:[%s860 + $0x164] sm:$0x1] %v1060
    %v1062 = vld [vmem:[%s860 + $0x168] sm:$0xf]
    %v1063 = vsel %vm863, %v702, %v1062
    %1064 = vst [vmem:[%s860 + $0x168] sm:$0xf] %v1063
    %1065 = vst [vmem:[%s860 + $0x16c] sm:$0xf] %v711
    %v1066 = vld [vmem:[%s860 + $0x170] sm:$0x1]
    %v1067 = vsel %vm869, %v712, %v1066
    %1068 = vst [vmem:[%s860 + $0x170] sm:$0x1] %v1067
    %v1069 = vld [vmem:[%s860 + $0x174] sm:$0xf]
    %v1070 = vsel %vm863, %v719, %v1069
    %1071 = vst [vmem:[%s860 + $0x174] sm:$0xf] %v1070
    %1072 = vst [vmem:[%s860 + $0x178] sm:$0xf] %v728
    %v1073 = vld [vmem:[%s860 + $0x17c] sm:$0x1]
    %v1074 = vsel %vm869, %v729, %v1073
    %1075 = vst [vmem:[%s860 + $0x17c] sm:$0x1] %v1074
    %v1076 = vld [vmem:[%s860 + $0x180] sm:$0xf]
    %v1077 = vsel %vm863, %v736, %v1076
    %1078 = vst [vmem:[%s860 + $0x180] sm:$0xf] %v1077
    %1079 = vst [vmem:[%s860 + $0x184] sm:$0xf] %v745
    %v1080 = vld [vmem:[%s860 + $0x188] sm:$0x1]
    %v1081 = vsel %vm869, %v746, %v1080
    %1082 = vst [vmem:[%s860 + $0x188] sm:$0x1] %v1081
    %v1083 = vld [vmem:[%s860 + $0x18c] sm:$0xf]
    %v1084 = vsel %vm863, %v753, %v1083
    %1085 = vst [vmem:[%s860 + $0x18c] sm:$0xf] %v1084
    %1086 = vst [vmem:[%s860 + $0x190] sm:$0xf] %v762
    %v1087 = vld [vmem:[%s860 + $0x194] sm:$0x1]
    %v1088 = vsel %vm869, %v763, %v1087
    %1089 = vst [vmem:[%s860 + $0x194] sm:$0x1] %v1088
    %v1090 = vld [vmem:[#allocation2] sm:$0xf]
    %v1091 = vld [vmem:[#allocation2 + $0x4] sm:$0xf]
    %v1092 = vld [vmem:[#allocation2 + $0xc] sm:$0xf]
    %v1093 = vld [vmem:[#allocation2 + $0x10] sm:$0xf]
    %v1094 = vld [vmem:[#allocation2 + $0x18] sm:$0xf]
    %v1095 = vld [vmem:[#allocation2 + $0x1c] sm:$0xf]
    %v1096 = vld [vmem:[#allocation2 + $0x24] sm:$0xf]
    %v1097 = vld [vmem:[#allocation2 + $0x28] sm:$0xf]
    %v1098 = vld [vmem:[#allocation2 + $0x30] sm:$0xf]
    %v1099 = vld [vmem:[#allocation2 + $0x34] sm:$0xf]
    %v1100 = vld [vmem:[#allocation2 + $0x3c] sm:$0xf]
    %v1101 = vld [vmem:[#allocation2 + $0x40] sm:$0xf]
    %v1102 = vld [vmem:[#allocation2 + $0x48] sm:$0xf]
    %v1103 = vld [vmem:[#allocation2 + $0x4c] sm:$0xf]
    %v1104 = vld [vmem:[#allocation2 + $0x54] sm:$0xf]
    %v1105 = vld [vmem:[#allocation2 + $0x58] sm:$0xf]
    %v1106 = vld [vmem:[#allocation2 + $0x60] sm:$0xf]
    %v1107 = vld [vmem:[#allocation2 + $0x64] sm:$0xf]
    %v1108 = vld [vmem:[#allocation2 + $0x6c] sm:$0xf]
    %v1109 = vld [vmem:[#allocation2 + $0x70] sm:$0xf]
    %v1110 = vld [vmem:[#allocation2 + $0x78] sm:$0xf]
    %v1111 = vld [vmem:[#allocation2 + $0x7c] sm:$0xf]
    %v1112 = vld [vmem:[#allocation2 + $0x84] sm:$0xf]
    %v1113 = vld [vmem:[#allocation2 + $0x88] sm:$0xf]
    %v1114 = vld [vmem:[#allocation2 + $0x90] sm:$0xf]
    %v1115 = vld [vmem:[#allocation2 + $0x94] sm:$0xf]
    %v1116 = vld [vmem:[#allocation2 + $0x9c] sm:$0xf]
    %v1117 = vld [vmem:[#allocation2 + $0xa0] sm:$0xf]
    %v1118 = vld [vmem:[#allocation2 + $0xa8] sm:$0xf]
    %v1119 = vld [vmem:[#allocation2 + $0xac] sm:$0xf]
    %v1120 = vld [vmem:[#allocation2 + $0xb4] sm:$0xf]
    %v1121 = vld [vmem:[#allocation2 + $0xb8] sm:$0xf]
    %1122 = vst [vmem:[#allocation3] sm:$0xf] %v1090
    %1123 = vst [vmem:[#allocation3 + $0x24] sm:$0xf] %v1091
    %1124 = vst [vmem:[#allocation3 + $0x48] sm:$0xf] %v1092
    %1125 = vst [vmem:[#allocation3 + $0x6c] sm:$0xf] %v1093
    %1126 = vst [vmem:[#allocation3 + $0x90] sm:$0xf] %v1094
    %1127 = vst [vmem:[#allocation3 + $0xb4] sm:$0xf] %v1095
    %1128 = vst [vmem:[#allocation3 + $0xd8] sm:$0xf] %v1096
    %1129 = vst [vmem:[#allocation3 + $0xfc] sm:$0xf] %v1097
    %1130 = vst [vmem:[#allocation3 + $0x120] sm:$0xf] %v1098
    %1131 = vst [vmem:[#allocation3 + $0x144] sm:$0xf] %v1099
    %1132 = vst [vmem:[#allocation3 + $0x168] sm:$0xf] %v1100
    %1133 = vst [vmem:[#allocation3 + $0x18c] sm:$0xf] %v1101
    %1134 = vst [vmem:[#allocation3 + $0x1b0] sm:$0xf] %v1102
    %1135 = vst [vmem:[#allocation3 + $0x1d4] sm:$0xf] %v1103
    %1136 = vst [vmem:[#allocation3 + $0x1f8] sm:$0xf] %v1104
    %1137 = vst [vmem:[#allocation3 + $0x21c] sm:$0xf] %v1105
    %1138 = vst [vmem:[#allocation3 + $0x240] sm:$0xf] %v1106
    %1139 = vst [vmem:[#allocation3 + $0x264] sm:$0xf] %v1107
    %1140 = vst [vmem:[#allocation3 + $0x288] sm:$0xf] %v1108
    %1141 = vst [vmem:[#allocation3 + $0x2ac] sm:$0xf] %v1109
    %1142 = vst [vmem:[#allocation3 + $0x2d0] sm:$0xf] %v1110
    %1143 = vst [vmem:[#allocation3 + $0x2f4] sm:$0xf] %v1111
    %1144 = vst [vmem:[#allocation3 + $0x318] sm:$0xf] %v1112
    %1145 = vst [vmem:[#allocation3 + $0x33c] sm:$0xf] %v1113
    %1146 = vst [vmem:[#allocation3 + $0x360] sm:$0xf] %v1114
    %1147 = vst [vmem:[#allocation3 + $0x384] sm:$0xf] %v1115
    %1148 = vst [vmem:[#allocation3 + $0x3a8] sm:$0xf] %v1116
    %1149 = vst [vmem:[#allocation3 + $0x3cc] sm:$0xf] %v1117
    %1150 = vst [vmem:[#allocation3 + $0x3f0] sm:$0xf] %v1118
    %1151 = vst [vmem:[#allocation3 + $0x414] sm:$0xf] %v1119
    %1152 = vst [vmem:[#allocation3 + $0x438] sm:$0xf] %v1120
    %1153 = vst [vmem:[#allocation3 + $0x45c] sm:$0xf] %v1121
    %v1154 = vld [vmem:[#allocation2] sm:$0xf]
    %v1155 = vld [vmem:[#allocation2 + $0x4] sm:$0xf]
    %v1156 = vld [vmem:[#allocation2 + $0x8] sm:$0x1]
    %v1157 = vld [vmem:[#allocation2 + $0xc] sm:$0xf]
    %v1158 = vld [vmem:[#allocation2 + $0x10] sm:$0xf]
    %v1159 = vld [vmem:[#allocation2 + $0x14] sm:$0x1]
    %v1160 = vld [vmem:[#allocation2 + $0x18] sm:$0xf]
    %v1161 = vld [vmem:[#allocation2 + $0x1c] sm:$0xf]
    %v1162 = vld [vmem:[#allocation2 + $0x20] sm:$0x1]
    %v1163 = vld [vmem:[#allocation2 + $0x24] sm:$0xf]
    %v1164 = vld [vmem:[#allocation2 + $0x28] sm:$0xf]
    %v1165 = vld [vmem:[#allocation2 + $0x2c] sm:$0x1]
    %v1166 = vld [vmem:[#allocation2 + $0x30] sm:$0xf]
    %v1167 = vld [vmem:[#allocation2 + $0x34] sm:$0xf]
    %v1168 = vld [vmem:[#allocation2 + $0x38] sm:$0x1]
    %v1169 = vld [vmem:[#allocation2 + $0x3c] sm:$0xf]
    %v1170 = vld [vmem:[#allocation2 + $0x40] sm:$0xf]
    %v1171 = vld [vmem:[#allocation2 + $0x44] sm:$0x1]
    %v1172 = vld [vmem:[#allocation2 + $0x48] sm:$0xf]
    %v1173 = vld [vmem:[#allocation2 + $0x4c] sm:$0xf]
    %v1174 = vld [vmem:[#allocation2 + $0x50] sm:$0x1]
    %v1175 = vld [vmem:[#allocation2 + $0x54] sm:$0xf]
    %v1176 = vld [vmem:[#allocation2 + $0x58] sm:$0xf]
    %v1177 = vld [vmem:[#allocation2 + $0x5c] sm:$0x1]
    %v1178 = vld [vmem:[#allocation2 + $0x60] sm:$0xf]
    %v1179 = vld [vmem:[#allocation2 + $0x64] sm:$0xf]
    %v1180 = vld [vmem:[#allocation2 + $0x68] sm:$0x1]
    %v1181 = vld [vmem:[#allocation2 + $0x6c] sm:$0xf]
    %v1182 = vld [vmem:[#allocation2 + $0x70] sm:$0xf]
    %v1183 = vld [vmem:[#allocation2 + $0x74] sm:$0x1]
    %v1184 = vld [vmem:[#allocation2 + $0x78] sm:$0xf]
    %v1185 = vld [vmem:[#allocation2 + $0x7c] sm:$0xf]
    %v1186 = vld [vmem:[#allocation2 + $0x80] sm:$0x1]
    %v1187 = vld [vmem:[#allocation2 + $0x84] sm:$0xf]
    %v1188 = vld [vmem:[#allocation2 + $0x88] sm:$0xf]
    %v1189 = vld [vmem:[#allocation2 + $0x8c] sm:$0x1]
    %v1190 = vld [vmem:[#allocation2 + $0x90] sm:$0xf]
    %v1191 = vld [vmem:[#allocation2 + $0x94] sm:$0xf]
    %v1192 = vld [vmem:[#allocation2 + $0x98] sm:$0x1]
    %v1193 = vld [vmem:[#allocation2 + $0x9c] sm:$0xf]
    %v1194 = vld [vmem:[#allocation2 + $0xa0] sm:$0xf]
    %v1195 = vld [vmem:[#allocation2 + $0xa4] sm:$0x1]
    %v1196 = vld [vmem:[#allocation2 + $0xa8] sm:$0xf]
    %v1197 = vld [vmem:[#allocation2 + $0xac] sm:$0xf]
    %v1198 = vld [vmem:[#allocation2 + $0xb0] sm:$0x1]
    %v1199 = vld [vmem:[#allocation2 + $0xb4] sm:$0xf]
    %v1200 = vld [vmem:[#allocation2 + $0xb8] sm:$0xf]
    %v1201 = vld [vmem:[#allocation2 + $0xbc] sm:$0x1]
    %vm1202 = vsmask.f32 3328
    %vm1203 = vsmask.f32 7440
    %vm1204 = vmor %vm1202, %vm1203
    %v1206 = vshrl.u32 %v1154, 16
    %v1208 = vrot.slane %v1206, 4
    %v1209 = vshll.u32 %v1154, 16
    %v1211 = vrot.slane %v1209, 5
    %v1212 = vor.u32 %v1208, %v1211
    %v1213 = vrot.slane %v1212, 4
    %v1215 = vshll.u32 %v1155, 16
    %v1217 = vrot.slane %v1215, 5
    %v1218 = vsel %vm1204, %v1213, %v1217
    %v1219 = vshrl.u32 %v1155, 16
    %v1221 = vrot.slane %v1219, 4
    %v1222 = vor.u32 %v1221, %v1217
    %v1223 = vrot.slane %v1222, 4
    %v1225 = vshll.u32 %v1156, 16
    %v1227 = vrot.slane %v1225, 5
    %v1228 = vsel %vm1204, %v1223, %v1227
    %v1230 = vshrl.u32 %v1157, 16
    %v1232 = vrot.slane %v1230, 4
    %v1233 = vshll.u32 %v1157, 16
    %v1235 = vrot.slane %v1233, 5
    %v1236 = vor.u32 %v1232, %v1235
    %v1237 = vrot.slane %v1236, 4
    %v1239 = vshll.u32 %v1158, 16
    %v1241 = vrot.slane %v1239, 5
    %v1242 = vsel %vm1204, %v1237, %v1241
    %v1243 = vshrl.u32 %v1158, 16
    %v1245 = vrot.slane %v1243, 4
    %v1246 = vor.u32 %v1245, %v1241
    %v1247 = vrot.slane %v1246, 4
    %v1249 = vshll.u32 %v1159, 16
    %v1251 = vrot.slane %v1249, 5
    %v1252 = vsel %vm1204, %v1247, %v1251
    %v1254 = vshrl.u32 %v1160, 16
    %v1256 = vrot.slane %v1254, 4
    %v1257 = vshll.u32 %v1160, 16
    %v1259 = vrot.slane %v1257, 5
    %v1260 = vor.u32 %v1256, %v1259
    %v1261 = vrot.slane %v1260, 4
    %v1263 = vshll.u32 %v1161, 16
    %v1265 = vrot.slane %v1263, 5
    %v1266 = vsel %vm1204, %v1261, %v1265
    %v1267 = vshrl.u32 %v1161, 16
    %v1269 = vrot.slane %v1267, 4
    %v1270 = vor.u32 %v1269, %v1265
    %v1271 = vrot.slane %v1270, 4
    %v1273 = vshll.u32 %v1162, 16
    %v1275 = vrot.slane %v1273, 5
    %v1276 = vsel %vm1204, %v1271, %v1275
    %v1278 = vshrl.u32 %v1163, 16
    %v1280 = vrot.slane %v1278, 4
    %v1281 = vshll.u32 %v1163, 16
    %v1283 = vrot.slane %v1281, 5
    %v1284 = vor.u32 %v1280, %v1283
    %v1285 = vrot.slane %v1284, 4
    %v1287 = vshll.u32 %v1164, 16
    %v1289 = vrot.slane %v1287, 5
    %v1290 = vsel %vm1204, %v1285, %v1289
    %v1291 = vshrl.u32 %v1164, 16
    %v1293 = vrot.slane %v1291, 4
    %v1294 = vor.u32 %v1293, %v1289
    %v1295 = vrot.slane %v1294, 4
    %v1297 = vshll.u32 %v1165, 16
    %v1299 = vrot.slane %v1297, 5
    %v1300 = vsel %vm1204, %v1295, %v1299
    %v1302 = vshrl.u32 %v1166, 16
    %v1304 = vrot.slane %v1302, 4
    %v1305 = vshll.u32 %v1166, 16
    %v1307 = vrot.slane %v1305, 5
    %v1308 = vor.u32 %v1304, %v1307
    %v1309 = vrot.slane %v1308, 4
    %v1311 = vshll.u32 %v1167, 16
    %v1313 = vrot.slane %v1311, 5
    %v1314 = vsel %vm1204, %v1309, %v1313
    %v1315 = vshrl.u32 %v1167, 16
    %v1317 = vrot.slane %v1315, 4
    %v1318 = vor.u32 %v1317, %v1313
    %v1319 = vrot.slane %v1318, 4
    %v1321 = vshll.u32 %v1168, 16
    %v1323 = vrot.slane %v1321, 5
    %v1324 = vsel %vm1204, %v1319, %v1323
    %v1326 = vshrl.u32 %v1169, 16
    %v1328 = vrot.slane %v1326, 4
    %v1329 = vshll.u32 %v1169, 16
    %v1331 = vrot.slane %v1329, 5
    %v1332 = vor.u32 %v1328, %v1331
    %v1333 = vrot.slane %v1332, 4
    %v1335 = vshll.u32 %v1170, 16
    %v1337 = vrot.slane %v1335, 5
    %v1338 = vsel %vm1204, %v1333, %v1337
    %v1339 = vshrl.u32 %v1170, 16
    %v1341 = vrot.slane %v1339, 4
    %v1342 = vor.u32 %v1341, %v1337
    %v1343 = vrot.slane %v1342, 4
    %v1345 = vshll.u32 %v1171, 16
    %v1347 = vrot.slane %v1345, 5
    %v1348 = vsel %vm1204, %v1343, %v1347
    %v1350 = vshrl.u32 %v1172, 16
    %v1352 = vrot.slane %v1350, 4
    %v1353 = vshll.u32 %v1172, 16
    %v1355 = vrot.slane %v1353, 5
    %v1356 = vor.u32 %v1352, %v1355
    %v1357 = vrot.slane %v1356, 4
    %v1359 = vshll.u32 %v1173, 16
    %v1361 = vrot.slane %v1359, 5
    %v1362 = vsel %vm1204, %v1357, %v1361
    %v1363 = vshrl.u32 %v1173, 16
    %v1365 = vrot.slane %v1363, 4
    %v1366 = vor.u32 %v1365, %v1361
    %v1367 = vrot.slane %v1366, 4
    %v1369 = vshll.u32 %v1174, 16
    %v1371 = vrot.slane %v1369, 5
    %v1372 = vsel %vm1204, %v1367, %v1371
    %v1374 = vshrl.u32 %v1175, 16
    %v1376 = vrot.slane %v1374, 4
    %v1377 = vshll.u32 %v1175, 16
    %v1379 = vrot.slane %v1377, 5
    %v1380 = vor.u32 %v1376, %v1379
    %v1381 = vrot.slane %v1380, 4
    %v1383 = vshll.u32 %v1176, 16
    %v1385 = vrot.slane %v1383, 5
    %v1386 = vsel %vm1204, %v1381, %v1385
    %v1387 = vshrl.u32 %v1176, 16
    %v1389 = vrot.slane %v1387, 4
    %v1390 = vor.u32 %v1389, %v1385
    %v1391 = vrot.slane %v1390, 4
    %v1393 = vshll.u32 %v1177, 16
    %v1395 = vrot.slane %v1393, 5
    %v1396 = vsel %vm1204, %v1391, %v1395
    %v1398 = vshrl.u32 %v1178, 16
    %v1400 = vrot.slane %v1398, 4
    %v1401 = vshll.u32 %v1178, 16
    %v1403 = vrot.slane %v1401, 5
    %v1404 = vor.u32 %v1400, %v1403
    %v1405 = vrot.slane %v1404, 4
    %v1407 = vshll.u32 %v1179, 16
    %v1409 = vrot.slane %v1407, 5
    %v1410 = vsel %vm1204, %v1405, %v1409
    %v1411 = vshrl.u32 %v1179, 16
    %v1413 = vrot.slane %v1411, 4
    %v1414 = vor.u32 %v1413, %v1409
    %v1415 = vrot.slane %v1414, 4
    %v1417 = vshll.u32 %v1180, 16
    %v1419 = vrot.slane %v1417, 5
    %v1420 = vsel %vm1204, %v1415, %v1419
    %v1422 = vshrl.u32 %v1181, 16
    %v1424 = vrot.slane %v1422, 4
    %v1425 = vshll.u32 %v1181, 16
    %v1427 = vrot.slane %v1425, 5
    %v1428 = vor.u32 %v1424, %v1427
    %v1429 = vrot.slane %v1428, 4
    %v1431 = vshll.u32 %v1182, 16
    %v1433 = vrot.slane %v1431, 5
    %v1434 = vsel %vm1204, %v1429, %v1433
    %v1435 = vshrl.u32 %v1182, 16
    %v1437 = vrot.slane %v1435, 4
    %v1438 = vor.u32 %v1437, %v1433
    %v1439 = vrot.slane %v1438, 4
    %v1441 = vshll.u32 %v1183, 16
    %v1443 = vrot.slane %v1441, 5
    %v1444 = vsel %vm1204, %v1439, %v1443
    %v1446 = vshrl.u32 %v1184, 16
    %v1448 = vrot.slane %v1446, 4
    %v1449 = vshll.u32 %v1184, 16
    %v1451 = vrot.slane %v1449, 5
    %v1452 = vor.u32 %v1448, %v1451
    %v1453 = vrot.slane %v1452, 4
    %v1455 = vshll.u32 %v1185, 16
    %v1457 = vrot.slane %v1455, 5
    %v1458 = vsel %vm1204, %v1453, %v1457
    %v1459 = vshrl.u32 %v1185, 16
    %v1461 = vrot.slane %v1459, 4
    %v1462 = vor.u32 %v1461, %v1457
    %v1463 = vrot.slane %v1462, 4
    %v1465 = vshll.u32 %v1186, 16
    %v1467 = vrot.slane %v1465, 5
    %v1468 = vsel %vm1204, %v1463, %v1467
    %v1470 = vshrl.u32 %v1187, 16
    %v1472 = vrot.slane %v1470, 4
    %v1473 = vshll.u32 %v1187, 16
    %v1475 = vrot.slane %v1473, 5
    %v1476 = vor.u32 %v1472, %v1475
    %v1477 = vrot.slane %v1476, 4
    %v1479 = vshll.u32 %v1188, 16
    %v1481 = vrot.slane %v1479, 5
    %v1482 = vsel %vm1204, %v1477, %v1481
    %v1483 = vshrl.u32 %v1188, 16
    %v1485 = vrot.slane %v1483, 4
    %v1486 = vor.u32 %v1485, %v1481
    %v1487 = vrot.slane %v1486, 4
    %v1489 = vshll.u32 %v1189, 16
    %v1491 = vrot.slane %v1489, 5
    %v1492 = vsel %vm1204, %v1487, %v1491
    %v1494 = vshrl.u32 %v1190, 16
    %v1496 = vrot.slane %v1494, 4
    %v1497 = vshll.u32 %v1190, 16
    %v1499 = vrot.slane %v1497, 5
    %v1500 = vor.u32 %v1496, %v1499
    %v1501 = vrot.slane %v1500, 4
    %v1503 = vshll.u32 %v1191, 16
    %v1505 = vrot.slane %v1503, 5
    %v1506 = vsel %vm1204, %v1501, %v1505
    %v1507 = vshrl.u32 %v1191, 16
    %v1509 = vrot.slane %v1507, 4
    %v1510 = vor.u32 %v1509, %v1505
    %v1511 = vrot.slane %v1510, 4
    %v1513 = vshll.u32 %v1192, 16
    %v1515 = vrot.slane %v1513, 5
    %v1516 = vsel %vm1204, %v1511, %v1515
    %v1518 = vshrl.u32 %v1193, 16
    %v1520 = vrot.slane %v1518, 4
    %v1521 = vshll.u32 %v1193, 16
    %v1523 = vrot.slane %v1521, 5
    %v1524 = vor.u32 %v1520, %v1523
    %v1525 = vrot.slane %v1524, 4
    %v1527 = vshll.u32 %v1194, 16
    %v1529 = vrot.slane %v1527, 5
    %v1530 = vsel %vm1204, %v1525, %v1529
    %v1531 = vshrl.u32 %v1194, 16
    %v1533 = vrot.slane %v1531, 4
    %v1534 = vor.u32 %v1533, %v1529
    %v1535 = vrot.slane %v1534, 4
    %v1537 = vshll.u32 %v1195, 16
    %v1539 = vrot.slane %v1537, 5
    %v1540 = vsel %vm1204, %v1535, %v1539
    %v1542 = vshrl.u32 %v1196, 16
    %v1544 = vrot.slane %v1542, 4
    %v1545 = vshll.u32 %v1196, 16
    %v1547 = vrot.slane %v1545, 5
    %v1548 = vor.u32 %v1544, %v1547
    %v1549 = vrot.slane %v1548, 4
    %v1551 = vshll.u32 %v1197, 16
    %v1553 = vrot.slane %v1551, 5
    %v1554 = vsel %vm1204, %v1549, %v1553
    %v1555 = vshrl.u32 %v1197, 16
    %v1557 = vrot.slane %v1555, 4
    %v1558 = vor.u32 %v1557, %v1553
    %v1559 = vrot.slane %v1558, 4
    %v1561 = vshll.u32 %v1198, 16
    %v1563 = vrot.slane %v1561, 5
    %v1564 = vsel %vm1204, %v1559, %v1563
    %v1566 = vshrl.u32 %v1199, 16
    %v1568 = vrot.slane %v1566, 4
    %v1569 = vshll.u32 %v1199, 16
    %v1571 = vrot.slane %v1569, 5
    %v1572 = vor.u32 %v1568, %v1571
    %v1573 = vrot.slane %v1572, 4
    %v1575 = vshll.u32 %v1200, 16
    %v1577 = vrot.slane %v1575, 5
    %v1578 = vsel %vm1204, %v1573, %v1577
    %v1579 = vshrl.u32 %v1200, 16
    %v1581 = vrot.slane %v1579, 4
    %v1582 = vor.u32 %v1581, %v1577
    %v1583 = vrot.slane %v1582, 4
    %v1585 = vshll.u32 %v1201, 16
    %v1587 = vrot.slane %v1585, 5
    %v1588 = vsel %vm1204, %v1583, %v1587
    %1621 = vst [vmem:[#allocation3 + $0x4] sm:$0xf] %v1218
    %1622 = vst [vmem:[#allocation3 + $0x28] sm:$0xf] %v1228
    %1623 = vst [vmem:[#allocation3 + $0x4c] sm:$0xf] %v1242
    %1624 = vst [vmem:[#allocation3 + $0x70] sm:$0xf] %v1252
    %1625 = vst [vmem:[#allocation3 + $0x94] sm:$0xf] %v1266
    %1626 = vst [vmem:[#allocation3 + $0xb8] sm:$0xf] %v1276
    %1627 = vst [vmem:[#allocation3 + $0xdc] sm:$0xf] %v1290
    %1628 = vst [vmem:[#allocation3 + $0x100] sm:$0xf] %v1300
    %1629 = vst [vmem:[#allocation3 + $0x124] sm:$0xf] %v1314
    %1630 = vst [vmem:[#allocation3 + $0x148] sm:$0xf] %v1324
    %1631 = vst [vmem:[#allocation3 + $0x16c] sm:$0xf] %v1338
    %1632 = vst [vmem:[#allocation3 + $0x190] sm:$0xf] %v1348
    %1633 = vst [vmem:[#allocation3 + $0x1b4] sm:$0xf] %v1362
    %1634 = vst [vmem:[#allocation3 + $0x1d8] sm:$0xf] %v1372
    %1635 = vst [vmem:[#allocation3 + $0x1fc] sm:$0xf] %v1386
    %1636 = vst [vmem:[#allocation3 + $0x220] sm:$0xf] %v1396
    %1637 = vst [vmem:[#allocation3 + $0x244] sm:$0xf] %v1410
    %1638 = vst [vmem:[#allocation3 + $0x268] sm:$0xf] %v1420
    %1639 = vst [vmem:[#allocation3 + $0x28c] sm:$0xf] %v1434
    %1640 = vst [vmem:[#allocation3 + $0x2b0] sm:$0xf] %v1444
    %1641 = vst [vmem:[#allocation3 + $0x2d4] sm:$0xf] %v1458
    %1642 = vst [vmem:[#allocation3 + $0x2f8] sm:$0xf] %v1468
    %1643 = vst [vmem:[#allocation3 + $0x31c] sm:$0xf] %v1482
    %1644 = vst [vmem:[#allocation3 + $0x340] sm:$0xf] %v1492
    %1645 = vst [vmem:[#allocation3 + $0x364] sm:$0xf] %v1506
    %1646 = vst [vmem:[#allocation3 + $0x388] sm:$0xf] %v1516
    %1647 = vst [vmem:[#allocation3 + $0x3ac] sm:$0xf] %v1530
    %1648 = vst [vmem:[#allocation3 + $0x3d0] sm:$0xf] %v1540
    %1649 = vst [vmem:[#allocation3 + $0x3f4] sm:$0xf] %v1554
    %1650 = vst [vmem:[#allocation3 + $0x418] sm:$0xf] %v1564
    %1651 = vst [vmem:[#allocation3 + $0x43c] sm:$0xf] %v1578
    %1652 = vst [vmem:[#allocation3 + $0x460] sm:$0xf] %v1588
    %v1653 = vld [vmem:[#allocation2] sm:$0xe]
    %v1654 = vld [vmem:[#allocation2 + $0x4] sm:$0xf]
    %v1655 = vld [vmem:[#allocation2 + $0x8] sm:$0x1]
    %v1656 = vld [vmem:[#allocation2 + $0xc] sm:$0xe]
    %v1657 = vld [vmem:[#allocation2 + $0x10] sm:$0xf]
    %v1658 = vld [vmem:[#allocation2 + $0x14] sm:$0x1]
    %v1659 = vld [vmem:[#allocation2 + $0x18] sm:$0xe]
    %v1660 = vld [vmem:[#allocation2 + $0x1c] sm:$0xf]
    %v1661 = vld [vmem:[#allocation2 + $0x20] sm:$0x1]
    %v1662 = vld [vmem:[#allocation2 + $0x24] sm:$0xe]
    %v1663 = vld [vmem:[#allocation2 + $0x28] sm:$0xf]
    %v1664 = vld [vmem:[#allocation2 + $0x2c] sm:$0x1]
    %v1665 = vld [vmem:[#allocation2 + $0x30] sm:$0xe]
    %v1666 = vld [vmem:[#allocation2 + $0x34] sm:$0xf]
    %v1667 = vld [vmem:[#allocation2 + $0x38] sm:$0x1]
    %v1668 = vld [vmem:[#allocation2 + $0x3c] sm:$0xe]
    %v1669 = vld [vmem:[#allocation2 + $0x40] sm:$0xf]
    %v1670 = vld [vmem:[#allocation2 + $0x44] sm:$0x1]
    %v1671 = vld [vmem:[#allocation2 + $0x48] sm:$0xe]
    %v1672 = vld [vmem:[#allocation2 + $0x4c] sm:$0xf]
    %v1673 = vld [vmem:[#allocation2 + $0x50] sm:$0x1]
    %v1674 = vld [vmem:[#allocation2 + $0x54] sm:$0xe]
    %v1675 = vld [vmem:[#allocation2 + $0x58] sm:$0xf]
    %v1676 = vld [vmem:[#allocation2 + $0x5c] sm:$0x1]
    %v1677 = vld [vmem:[#allocation2 + $0x60] sm:$0xe]
    %v1678 = vld [vmem:[#allocation2 + $0x64] sm:$0xf]
    %v1679 = vld [vmem:[#allocation2 + $0x68] sm:$0x1]
    %v1680 = vld [vmem:[#allocation2 + $0x6c] sm:$0xe]
    %v1681 = vld [vmem:[#allocation2 + $0x70] sm:$0xf]
    %v1682 = vld [vmem:[#allocation2 + $0x74] sm:$0x1]
    %v1683 = vld [vmem:[#allocation2 + $0x78] sm:$0xe]
    %v1684 = vld [vmem:[#allocation2 + $0x7c] sm:$0xf]
    %v1685 = vld [vmem:[#allocation2 + $0x80] sm:$0x1]
    %v1686 = vld [vmem:[#allocation2 + $0x84] sm:$0xe]
    %v1687 = vld [vmem:[#allocation2 + $0x88] sm:$0xf]
    %v1688 = vld [vmem:[#allocation2 + $0x8c] sm:$0x1]
    %v1689 = vld [vmem:[#allocation2 + $0x90] sm:$0xe]
    %v1690 = vld [vmem:[#allocation2 + $0x94] sm:$0xf]
    %v1691 = vld [vmem:[#allocation2 + $0x98] sm:$0x1]
    %v1692 = vld [vmem:[#allocation2 + $0x9c] sm:$0xe]
    %v1693 = vld [vmem:[#allocation2 + $0xa0] sm:$0xf]
    %v1694 = vld [vmem:[#allocation2 + $0xa4] sm:$0x1]
    %v1695 = vld [vmem:[#allocation2 + $0xa8] sm:$0xe]
    %v1696 = vld [vmem:[#allocation2 + $0xac] sm:$0xf]
    %v1697 = vld [vmem:[#allocation2 + $0xb0] sm:$0x1]
    %v1698 = vld [vmem:[#allocation2 + $0xb4] sm:$0xe]
    %v1699 = vld [vmem:[#allocation2 + $0xb8] sm:$0xf]
    %v1700 = vld [vmem:[#allocation2 + $0xbc] sm:$0x1]
    %vm1749 = vcmask 1042432
    %vm1750 = vcmask 1046532
    %vm1751 = vmor %vm1749, %vm1750
    %v1752 = vrot.slane %v1653, 5
    %v1753 = vrot.slane %v1752, 4
    %v1754 = vrot.slane %v1654, 5
    %v1755 = vsel %vm1751, %v1753, %v1754
    %v1756 = vrot.slane %v1754, 4
    %v1757 = vrot.slane %v1655, 5
    %v1758 = vsel %vm1751, %v1756, %v1757
    %v1759 = vrot.slane %v1656, 5
    %v1760 = vrot.slane %v1759, 4
    %v1761 = vrot.slane %v1657, 5
    %v1762 = vsel %vm1751, %v1760, %v1761
    %v1763 = vrot.slane %v1761, 4
    %v1764 = vrot.slane %v1658, 5
    %v1765 = vsel %vm1751, %v1763, %v1764
    %v1766 = vrot.slane %v1659, 5
    %v1767 = vrot.slane %v1766, 4
    %v1768 = vrot.slane %v1660, 5
    %v1769 = vsel %vm1751, %v1767, %v1768
    %v1770 = vrot.slane %v1768, 4
    %v1771 = vrot.slane %v1661, 5
    %v1772 = vsel %vm1751, %v1770, %v1771
    %v1773 = vrot.slane %v1662, 5
    %v1774 = vrot.slane %v1773, 4
    %v1775 = vrot.slane %v1663, 5
    %v1776 = vsel %vm1751, %v1774, %v1775
    %v1777 = vrot.slane %v1775, 4
    %v1778 = vrot.slane %v1664, 5
    %v1779 = vsel %vm1751, %v1777, %v1778
    %v1780 = vrot.slane %v1665, 5
    %v1781 = vrot.slane %v1780, 4
    %v1782 = vrot.slane %v1666, 5
    %v1783 = vsel %vm1751, %v1781, %v1782
    %v1784 = vrot.slane %v1782, 4
    %v1785 = vrot.slane %v1667, 5
    %v1786 = vsel %vm1751, %v1784, %v1785
    %v1787 = vrot.slane %v1668, 5
    %v1788 = vrot.slane %v1787, 4
    %v1789 = vrot.slane %v1669, 5
    %v1790 = vsel %vm1751, %v1788, %v1789
    %v1791 = vrot.slane %v1789, 4
    %v1792 = vrot.slane %v1670, 5
    %v1793 = vsel %vm1751, %v1791, %v1792
    %v1794 = vrot.slane %v1671, 5
    %v1795 = vrot.slane %v1794, 4
    %v1796 = vrot.slane %v1672, 5
    %v1797 = vsel %vm1751, %v1795, %v1796
    %v1798 = vrot.slane %v1796, 4
    %v1799 = vrot.slane %v1673, 5
    %v1800 = vsel %vm1751, %v1798, %v1799
    %v1801 = vrot.slane %v1674, 5
    %v1802 = vrot.slane %v1801, 4
    %v1803 = vrot.slane %v1675, 5
    %v1804 = vsel %vm1751, %v1802, %v1803
    %v1805 = vrot.slane %v1803, 4
    %v1806 = vrot.slane %v1676, 5
    %v1807 = vsel %vm1751, %v1805, %v1806
    %v1808 = vrot.slane %v1677, 5
    %v1809 = vrot.slane %v1808, 4
    %v1810 = vrot.slane %v1678, 5
    %v1811 = vsel %vm1751, %v1809, %v1810
    %v1812 = vrot.slane %v1810, 4
    %v1813 = vrot.slane %v1679, 5
    %v1814 = vsel %vm1751, %v1812, %v1813
    %v1815 = vrot.slane %v1680, 5
    %v1816 = vrot.slane %v1815, 4
    %v1817 = vrot.slane %v1681, 5
    %v1818 = vsel %vm1751, %v1816, %v1817
    %v1819 = vrot.slane %v1817, 4
    %v1820 = vrot.slane %v1682, 5
    %v1821 = vsel %vm1751, %v1819, %v1820
    %v1822 = vrot.slane %v1683, 5
    %v1823 = vrot.slane %v1822, 4
    %v1824 = vrot.slane %v1684, 5
    %v1825 = vsel %vm1751, %v1823, %v1824
    %v1826 = vrot.slane %v1824, 4
    %v1827 = vrot.slane %v1685, 5
    %v1828 = vsel %vm1751, %v1826, %v1827
    %v1829 = vrot.slane %v1686, 5
    %v1830 = vrot.slane %v1829, 4
    %v1831 = vrot.slane %v1687, 5
    %v1832 = vsel %vm1751, %v1830, %v1831
    %v1833 = vrot.slane %v1831, 4
    %v1834 = vrot.slane %v1688, 5
    %v1835 = vsel %vm1751, %v1833, %v1834
    %v1836 = vrot.slane %v1689, 5
    %v1837 = vrot.slane %v1836, 4
    %v1838 = vrot.slane %v1690, 5
    %v1839 = vsel %vm1751, %v1837, %v1838
    %v1840 = vrot.slane %v1838, 4
    %v1841 = vrot.slane %v1691, 5
    %v1842 = vsel %vm1751, %v1840, %v1841
    %v1843 = vrot.slane %v1692, 5
    %v1844 = vrot.slane %v1843, 4
    %v1845 = vrot.slane %v1693, 5
    %v1846 = vsel %vm1751, %v1844, %v1845
    %v1847 = vrot.slane %v1845, 4
    %v1848 = vrot.slane %v1694, 5
    %v1849 = vsel %vm1751, %v1847, %v1848
    %v1850 = vrot.slane %v1695, 5
    %v1851 = vrot.slane %v1850, 4
    %v1852 = vrot.slane %v1696, 5
    %v1853 = vsel %vm1751, %v1851, %v1852
    %v1854 = vrot.slane %v1852, 4
    %v1855 = vrot.slane %v1697, 5
    %v1856 = vsel %vm1751, %v1854, %v1855
    %v1857 = vrot.slane %v1698, 5
    %v1858 = vrot.slane %v1857, 4
    %v1859 = vrot.slane %v1699, 5
    %v1860 = vsel %vm1751, %v1858, %v1859
    %v1861 = vrot.slane %v1859, 4
    %v1862 = vrot.slane %v1700, 5
    %v1863 = vsel %vm1751, %v1861, %v1862
    %1896 = vst [vmem:[#allocation3 + $0x8] sm:$0xf] %v1755
    %1897 = vst [vmem:[#allocation3 + $0x2c] sm:$0xf] %v1758
    %1898 = vst [vmem:[#allocation3 + $0x50] sm:$0xf] %v1762
    %1899 = vst [vmem:[#allocation3 + $0x74] sm:$0xf] %v1765
    %1900 = vst [vmem:[#allocation3 + $0x98] sm:$0xf] %v1769
    %1901 = vst [vmem:[#allocation3 + $0xbc] sm:$0xf] %v1772
    %1902 = vst [vmem:[#allocation3 + $0xe0] sm:$0xf] %v1776
    %1903 = vst [vmem:[#allocation3 + $0x104] sm:$0xf] %v1779
    %1904 = vst [vmem:[#allocation3 + $0x128] sm:$0xf] %v1783
    %1905 = vst [vmem:[#allocation3 + $0x14c] sm:$0xf] %v1786
    %1906 = vst [vmem:[#allocation3 + $0x170] sm:$0xf] %v1790
    %1907 = vst [vmem:[#allocation3 + $0x194] sm:$0xf] %v1793
    %1908 = vst [vmem:[#allocation3 + $0x1b8] sm:$0xf] %v1797
    %1909 = vst [vmem:[#allocation3 + $0x1dc] sm:$0xf] %v1800
    %1910 = vst [vmem:[#allocation3 + $0x200] sm:$0xf] %v1804
    %1911 = vst [vmem:[#allocation3 + $0x224] sm:$0xf] %v1807
    %1912 = vst [vmem:[#allocation3 + $0x248] sm:$0xf] %v1811
    %1913 = vst [vmem:[#allocation3 + $0x26c] sm:$0xf] %v1814
    %1914 = vst [vmem:[#allocation3 + $0x290] sm:$0xf] %v1818
    %1915 = vst [vmem:[#allocation3 + $0x2b4] sm:$0xf] %v1821
    %1916 = vst [vmem:[#allocation3 + $0x2d8] sm:$0xf] %v1825
    %1917 = vst [vmem:[#allocation3 + $0x2fc] sm:$0xf] %v1828
    %1918 = vst [vmem:[#allocation3 + $0x320] sm:$0xf] %v1832
    %1919 = vst [vmem:[#allocation3 + $0x344] sm:$0xf] %v1835
    %1920 = vst [vmem:[#allocation3 + $0x368] sm:$0xf] %v1839
    %1921 = vst [vmem:[#allocation3 + $0x38c] sm:$0xf] %v1842
    %1922 = vst [vmem:[#allocation3 + $0x3b0] sm:$0xf] %v1846
    %1923 = vst [vmem:[#allocation3 + $0x3d4] sm:$0xf] %v1849
    %1924 = vst [vmem:[#allocation3 + $0x3f8] sm:$0xf] %v1853
    %1925 = vst [vmem:[#allocation3 + $0x41c] sm:$0xf] %v1856
    %1926 = vst [vmem:[#allocation3 + $0x440] sm:$0xf] %v1860
    %1927 = vst [vmem:[#allocation3 + $0x464] sm:$0xf] %v1863
    %v1928 = vld [vmem:[%s860] sm:$0xf]
    %v1929 = vld [vmem:[%s860 + $0x4] sm:$0xf]
    %v1930 = vld [vmem:[%s860 + $0xc] sm:$0xf]
    %v1931 = vld [vmem:[%s860 + $0x10] sm:$0xf]
    %v1932 = vld [vmem:[%s860 + $0x18] sm:$0xf]
    %v1933 = vld [vmem:[%s860 + $0x1c] sm:$0xf]
    %v1934 = vld [vmem:[%s860 + $0x24] sm:$0xf]
    %v1935 = vld [vmem:[%s860 + $0x28] sm:$0xf]
    %v1936 = vld [vmem:[%s860 + $0x30] sm:$0xf]
    %v1937 = vld [vmem:[%s860 + $0x34] sm:$0xf]
    %v1938 = vld [vmem:[%s860 + $0x3c] sm:$0xf]
    %v1939 = vld [vmem:[%s860 + $0x40] sm:$0xf]
    %v1940 = vld [vmem:[%s860 + $0x48] sm:$0xf]
    %v1941 = vld [vmem:[%s860 + $0x4c] sm:$0xf]
    %v1942 = vld [vmem:[%s860 + $0x54] sm:$0xf]
    %v1943 = vld [vmem:[%s860 + $0x58] sm:$0xf]
    %v1944 = vld [vmem:[%s860 + $0x60] sm:$0xf]
    %v1945 = vld [vmem:[%s860 + $0x64] sm:$0xf]
    %v1946 = vld [vmem:[%s860 + $0x6c] sm:$0xf]
    %v1947 = vld [vmem:[%s860 + $0x70] sm:$0xf]
    %v1948 = vld [vmem:[%s860 + $0x78] sm:$0xf]
    %v1949 = vld [vmem:[%s860 + $0x7c] sm:$0xf]
    %v1950 = vld [vmem:[%s860 + $0x84] sm:$0xf]
    %v1951 = vld [vmem:[%s860 + $0x88] sm:$0xf]
    %v1952 = vld [vmem:[%s860 + $0x90] sm:$0xf]
    %v1953 = vld [vmem:[%s860 + $0x94] sm:$0xf]
    %v1954 = vld [vmem:[%s860 + $0x9c] sm:$0xf]
    %v1955 = vld [vmem:[%s860 + $0xa0] sm:$0xf]
    %v1956 = vld [vmem:[%s860 + $0xa8] sm:$0xf]
    %v1957 = vld [vmem:[%s860 + $0xac] sm:$0xf]
    %v1958 = vld [vmem:[%s860 + $0xb4] sm:$0xf]
    %v1959 = vld [vmem:[%s860 + $0xb8] sm:$0xf]
    %1960 = vst [vmem:[#allocation3 + $0xc] sm:$0xf] %v1928
    %1961 = vst [vmem:[#allocation3 + $0x30] sm:$0xf] %v1929
    %1962 = vst [vmem:[#allocation3 + $0x54] sm:$0xf] %v1930
    %1963 = vst [vmem:[#allocation3 + $0x78] sm:$0xf] %v1931
    %1964 = vst [vmem:[#allocation3 + $0x9c] sm:$0xf] %v1932
    %1965 = vst [vmem:[#allocation3 + $0xc0] sm:$0xf] %v1933
    %1966 = vst [vmem:[#allocation3 + $0xe4] sm:$0xf] %v1934
    %1967 = vst [vmem:[#allocation3 + $0x108] sm:$0xf] %v1935
    %1968 = vst [vmem:[#allocation3 + $0x12c] sm:$0xf] %v1936
    %1969 = vst [vmem:[#allocation3 + $0x150] sm:$0xf] %v1937
    %1970 = vst [vmem:[#allocation3 + $0x174] sm:$0xf] %v1938
    %1971 = vst [vmem:[#allocation3 + $0x198] sm:$0xf] %v1939
    %1972 = vst [vmem:[#allocation3 + $0x1bc] sm:$0xf] %v1940
    %1973 = vst [vmem:[#allocation3 + $0x1e0] sm:$0xf] %v1941
    %1974 = vst [vmem:[#allocation3 + $0x204] sm:$0xf] %v1942
    %1975 = vst [vmem:[#allocation3 + $0x228] sm:$0xf] %v1943
    %1976 = vst [vmem:[#allocation3 + $0x24c] sm:$0xf] %v1944
    %1977 = vst [vmem:[#allocation3 + $0x270] sm:$0xf] %v1945
    %1978 = vst [vmem:[#allocation3 + $0x294] sm:$0xf] %v1946
    %1979 = vst [vmem:[#allocation3 + $0x2b8] sm:$0xf] %v1947
    %1980 = vst [vmem:[#allocation3 + $0x2dc] sm:$0xf] %v1948
    %1981 = vst [vmem:[#allocation3 + $0x300] sm:$0xf] %v1949
    %1982 = vst [vmem:[#allocation3 + $0x324] sm:$0xf] %v1950
    %1983 = vst [vmem:[#allocation3 + $0x348] sm:$0xf] %v1951
    %1984 = vst [vmem:[#allocation3 + $0x36c] sm:$0xf] %v1952
    %1985 = vst [vmem:[#allocation3 + $0x390] sm:$0xf] %v1953
    %1986 = vst [vmem:[#allocation3 + $0x3b4] sm:$0xf] %v1954
    %1987 = vst [vmem:[#allocation3 + $0x3d8] sm:$0xf] %v1955
    %1988 = vst [vmem:[#allocation3 + $0x3fc] sm:$0xf] %v1956
    %1989 = vst [vmem:[#allocation3 + $0x420] sm:$0xf] %v1957
    %1990 = vst [vmem:[#allocation3 + $0x444] sm:$0xf] %v1958
    %1991 = vst [vmem:[#allocation3 + $0x468] sm:$0xf] %v1959
    %v1992 = vld [vmem:[%s860] sm:$0xf]
    %v1993 = vld [vmem:[%s860 + $0x4] sm:$0xf]
    %v1994 = vld [vmem:[%s860 + $0x8] sm:$0x1]
    %v1995 = vld [vmem:[%s860 + $0xc] sm:$0xf]
    %v1996 = vld [vmem:[%s860 + $0x10] sm:$0xf]
    %v1997 = vld [vmem:[%s860 + $0x14] sm:$0x1]
    %v1998 = vld [vmem:[%s860 + $0x18] sm:$0xf]
    %v1999 = vld [vmem:[%s860 + $0x1c] sm:$0xf]
    %v2000 = vld [vmem:[%s860 + $0x20] sm:$0x1]
    %v2001 = vld [vmem:[%s860 + $0x24] sm:$0xf]
    %v2002 = vld [vmem:[%s860 + $0x28] sm:$0xf]
    %v2003 = vld [vmem:[%s860 + $0x2c] sm:$0x1]
    %v2004 = vld [vmem:[%s860 + $0x30] sm:$0xf]
    %v2005 = vld [vmem:[%s860 + $0x34] sm:$0xf]
    %v2006 = vld [vmem:[%s860 + $0x38] sm:$0x1]
    %v2007 = vld [vmem:[%s860 + $0x3c] sm:$0xf]
    %v2008 = vld [vmem:[%s860 + $0x40] sm:$0xf]
    %v2009 = vld [vmem:[%s860 + $0x44] sm:$0x1]
    %v2010 = vld [vmem:[%s860 + $0x48] sm:$0xf]
    %v2011 = vld [vmem:[%s860 + $0x4c] sm:$0xf]
    %v2012 = vld [vmem:[%s860 + $0x50] sm:$0x1]
    %v2013 = vld [vmem:[%s860 + $0x54] sm:$0xf]
    %v2014 = vld [vmem:[%s860 + $0x58] sm:$0xf]
    %v2015 = vld [vmem:[%s860 + $0x5c] sm:$0x1]
    %v2016 = vld [vmem:[%s860 + $0x60] sm:$0xf]
    %v2017 = vld [vmem:[%s860 + $0x64] sm:$0xf]
    %v2018 = vld [vmem:[%s860 + $0x68] sm:$0x1]
    %v2019 = vld [vmem:[%s860 + $0x6c] sm:$0xf]
    %v2020 = vld [vmem:[%s860 + $0x70] sm:$0xf]
    %v2021 = vld [vmem:[%s860 + $0x74] sm:$0x1]
    %v2022 = vld [vmem:[%s860 + $0x78] sm:$0xf]
    %v2023 = vld [vmem:[%s860 + $0x7c] sm:$0xf]
    %v2024 = vld [vmem:[%s860 + $0x80] sm:$0x1]
    %v2025 = vld [vmem:[%s860 + $0x84] sm:$0xf]
    %v2026 = vld [vmem:[%s860 + $0x88] sm:$0xf]
    %v2027 = vld [vmem:[%s860 + $0x8c] sm:$0x1]
    %v2028 = vld [vmem:[%s860 + $0x90] sm:$0xf]
    %v2029 = vld [vmem:[%s860 + $0x94] sm:$0xf]
    %v2030 = vld [vmem:[%s860 + $0x98] sm:$0x1]
    %v2031 = vld [vmem:[%s860 + $0x9c] sm:$0xf]
    %v2032 = vld [vmem:[%s860 + $0xa0] sm:$0xf]
    %v2033 = vld [vmem:[%s860 + $0xa4] sm:$0x1]
    %v2034 = vld [vmem:[%s860 + $0xa8] sm:$0xf]
    %v2035 = vld [vmem:[%s860 + $0xac] sm:$0xf]
    %v2036 = vld [vmem:[%s860 + $0xb0] sm:$0x1]
    %v2037 = vld [vmem:[%s860 + $0xb4] sm:$0xf]
    %v2038 = vld [vmem:[%s860 + $0xb8] sm:$0xf]
    %v2039 = vld [vmem:[%s860 + $0xbc] sm:$0x1]
    %v2041 = vshrl.u32 %v1992, 16
    %v2043 = vrot.slane %v2041, 4
    %v2044 = vshll.u32 %v1992, 16
    %v2046 = vrot.slane %v2044, 5
    %v2047 = vor.u32 %v2043, %v2046
    %v2048 = vrot.slane %v2047, 4
    %v2050 = vshll.u32 %v1993, 16
    %v2052 = vrot.slane %v2050, 5
    %v2053 = vsel %vm1204, %v2048, %v2052
    %v2054 = vshrl.u32 %v1993, 16
    %v2056 = vrot.slane %v2054, 4
    %v2057 = vor.u32 %v2056, %v2052
    %v2058 = vrot.slane %v2057, 4
    %v2060 = vshll.u32 %v1994, 16
    %v2062 = vrot.slane %v2060, 5
    %v2063 = vsel %vm1204, %v2058, %v2062
    %v2065 = vshrl.u32 %v1995, 16
    %v2067 = vrot.slane %v2065, 4
    %v2068 = vshll.u32 %v1995, 16
    %v2070 = vrot.slane %v2068, 5
    %v2071 = vor.u32 %v2067, %v2070
    %v2072 = vrot.slane %v2071, 4
    %v2074 = vshll.u32 %v1996, 16
    %v2076 = vrot.slane %v2074, 5
    %v2077 = vsel %vm1204, %v2072, %v2076
    %v2078 = vshrl.u32 %v1996, 16
    %v2080 = vrot.slane %v2078, 4
    %v2081 = vor.u32 %v2080, %v2076
    %v2082 = vrot.slane %v2081, 4
    %v2084 = vshll.u32 %v1997, 16
    %v2086 = vrot.slane %v2084, 5
    %v2087 = vsel %vm1204, %v2082, %v2086
    %v2089 = vshrl.u32 %v1998, 16
    %v2091 = vrot.slane %v2089, 4
    %v2092 = vshll.u32 %v1998, 16
    %v2094 = vrot.slane %v2092, 5
    %v2095 = vor.u32 %v2091, %v2094
    %v2096 = vrot.slane %v2095, 4
    %v2098 = vshll.u32 %v1999, 16
    %v2100 = vrot.slane %v2098, 5
    %v2101 = vsel %vm1204, %v2096, %v2100
    %v2102 = vshrl.u32 %v1999, 16
    %v2104 = vrot.slane %v2102, 4
    %v2105 = vor.u32 %v2104, %v2100
    %v2106 = vrot.slane %v2105, 4
    %v2108 = vshll.u32 %v2000, 16
    %v2110 = vrot.slane %v2108, 5
    %v2111 = vsel %vm1204, %v2106, %v2110
    %v2113 = vshrl.u32 %v2001, 16
    %v2115 = vrot.slane %v2113, 4
    %v2116 = vshll.u32 %v2001, 16
    %v2118 = vrot.slane %v2116, 5
    %v2119 = vor.u32 %v2115, %v2118
    %v2120 = vrot.slane %v2119, 4
    %v2122 = vshll.u32 %v2002, 16
    %v2124 = vrot.slane %v2122, 5
    %v2125 = vsel %vm1204, %v2120, %v2124
    %v2126 = vshrl.u32 %v2002, 16
    %v2128 = vrot.slane %v2126, 4
    %v2129 = vor.u32 %v2128, %v2124
    %v2130 = vrot.slane %v2129, 4
    %v2132 = vshll.u32 %v2003, 16
    %v2134 = vrot.slane %v2132, 5
    %v2135 = vsel %vm1204, %v2130, %v2134
    %v2137 = vshrl.u32 %v2004, 16
    %v2139 = vrot.slane %v2137, 4
    %v2140 = vshll.u32 %v2004, 16
    %v2142 = vrot.slane %v2140, 5
    %v2143 = vor.u32 %v2139, %v2142
    %v2144 = vrot.slane %v2143, 4
    %v2146 = vshll.u32 %v2005, 16
    %v2148 = vrot.slane %v2146, 5
    %v2149 = vsel %vm1204, %v2144, %v2148
    %v2150 = vshrl.u32 %v2005, 16
    %v2152 = vrot.slane %v2150, 4
    %v2153 = vor.u32 %v2152, %v2148
    %v2154 = vrot.slane %v2153, 4
    %v2156 = vshll.u32 %v2006, 16
    %v2158 = vrot.slane %v2156, 5
    %v2159 = vsel %vm1204, %v2154, %v2158
    %v2161 = vshrl.u32 %v2007, 16
    %v2163 = vrot.slane %v2161, 4
    %v2164 = vshll.u32 %v2007, 16
    %v2166 = vrot.slane %v2164, 5
    %v2167 = vor.u32 %v2163, %v2166
    %v2168 = vrot.slane %v2167, 4
    %v2170 = vshll.u32 %v2008, 16
    %v2172 = vrot.slane %v2170, 5
    %v2173 = vsel %vm1204, %v2168, %v2172
    %v2174 = vshrl.u32 %v2008, 16
    %v2176 = vrot.slane %v2174, 4
    %v2177 = vor.u32 %v2176, %v2172
    %v2178 = vrot.slane %v2177, 4
    %v2180 = vshll.u32 %v2009, 16
    %v2182 = vrot.slane %v2180, 5
    %v2183 = vsel %vm1204, %v2178, %v2182
    %v2185 = vshrl.u32 %v2010, 16
    %v2187 = vrot.slane %v2185, 4
    %v2188 = vshll.u32 %v2010, 16
    %v2190 = vrot.slane %v2188, 5
    %v2191 = vor.u32 %v2187, %v2190
    %v2192 = vrot.slane %v2191, 4
    %v2194 = vshll.u32 %v2011, 16
    %v2196 = vrot.slane %v2194, 5
    %v2197 = vsel %vm1204, %v2192, %v2196
    %v2198 = vshrl.u32 %v2011, 16
    %v2200 = vrot.slane %v2198, 4
    %v2201 = vor.u32 %v2200, %v2196
    %v2202 = vrot.slane %v2201, 4
    %v2204 = vshll.u32 %v2012, 16
    %v2206 = vrot.slane %v2204, 5
    %v2207 = vsel %vm1204, %v2202, %v2206
    %v2209 = vshrl.u32 %v2013, 16
    %v2211 = vrot.slane %v2209, 4
    %v2212 = vshll.u32 %v2013, 16
    %v2214 = vrot.slane %v2212, 5
    %v2215 = vor.u32 %v2211, %v2214
    %v2216 = vrot.slane %v2215, 4
    %v2218 = vshll.u32 %v2014, 16
    %v2220 = vrot.slane %v2218, 5
    %v2221 = vsel %vm1204, %v2216, %v2220
    %v2222 = vshrl.u32 %v2014, 16
    %v2224 = vrot.slane %v2222, 4
    %v2225 = vor.u32 %v2224, %v2220
    %v2226 = vrot.slane %v2225, 4
    %v2228 = vshll.u32 %v2015, 16
    %v2230 = vrot.slane %v2228, 5
    %v2231 = vsel %vm1204, %v2226, %v2230
    %v2233 = vshrl.u32 %v2016, 16
    %v2235 = vrot.slane %v2233, 4
    %v2236 = vshll.u32 %v2016, 16
    %v2238 = vrot.slane %v2236, 5
    %v2239 = vor.u32 %v2235, %v2238
    %v2240 = vrot.slane %v2239, 4
    %v2242 = vshll.u32 %v2017, 16
    %v2244 = vrot.slane %v2242, 5
    %v2245 = vsel %vm1204, %v2240, %v2244
    %v2246 = vshrl.u32 %v2017, 16
    %v2248 = vrot.slane %v2246, 4
    %v2249 = vor.u32 %v2248, %v2244
    %v2250 = vrot.slane %v2249, 4
    %v2252 = vshll.u32 %v2018, 16
    %v2254 = vrot.slane %v2252, 5
    %v2255 = vsel %vm1204, %v2250, %v2254
    %v2257 = vshrl.u32 %v2019, 16
    %v2259 = vrot.slane %v2257, 4
    %v2260 = vshll.u32 %v2019, 16
    %v2262 = vrot.slane %v2260, 5
    %v2263 = vor.u32 %v2259, %v2262
    %v2264 = vrot.slane %v2263, 4
    %v2266 = vshll.u32 %v2020, 16
    %v2268 = vrot.slane %v2266, 5
    %v2269 = vsel %vm1204, %v2264, %v2268
    %v2270 = vshrl.u32 %v2020, 16
    %v2272 = vrot.slane %v2270, 4
    %v2273 = vor.u32 %v2272, %v2268
    %v2274 = vrot.slane %v2273, 4
    %v2276 = vshll.u32 %v2021, 16
    %v2278 = vrot.slane %v2276, 5
    %v2279 = vsel %vm1204, %v2274, %v2278
    %v2281 = vshrl.u32 %v2022, 16
    %v2283 = vrot.slane %v2281, 4
    %v2284 = vshll.u32 %v2022, 16
    %v2286 = vrot.slane %v2284, 5
    %v2287 = vor.u32 %v2283, %v2286
    %v2288 = vrot.slane %v2287, 4
    %v2290 = vshll.u32 %v2023, 16
    %v2292 = vrot.slane %v2290, 5
    %v2293 = vsel %vm1204, %v2288, %v2292
    %v2294 = vshrl.u32 %v2023, 16
    %v2296 = vrot.slane %v2294, 4
    %v2297 = vor.u32 %v2296, %v2292
    %v2298 = vrot.slane %v2297, 4
    %v2300 = vshll.u32 %v2024, 16
    %v2302 = vrot.slane %v2300, 5
    %v2303 = vsel %vm1204, %v2298, %v2302
    %v2305 = vshrl.u32 %v2025, 16
    %v2307 = vrot.slane %v2305, 4
    %v2308 = vshll.u32 %v2025, 16
    %v2310 = vrot.slane %v2308, 5
    %v2311 = vor.u32 %v2307, %v2310
    %v2312 = vrot.slane %v2311, 4
    %v2314 = vshll.u32 %v2026, 16
    %v2316 = vrot.slane %v2314, 5
    %v2317 = vsel %vm1204, %v2312, %v2316
    %v2318 = vshrl.u32 %v2026, 16
    %v2320 = vrot.slane %v2318, 4
    %v2321 = vor.u32 %v2320, %v2316
    %v2322 = vrot.slane %v2321, 4
    %v2324 = vshll.u32 %v2027, 16
    %v2326 = vrot.slane %v2324, 5
    %v2327 = vsel %vm1204, %v2322, %v2326
    %v2329 = vshrl.u32 %v2028, 16
    %v2331 = vrot.slane %v2329, 4
    %v2332 = vshll.u32 %v2028, 16
    %v2334 = vrot.slane %v2332, 5
    %v2335 = vor.u32 %v2331, %v2334
    %v2336 = vrot.slane %v2335, 4
    %v2338 = vshll.u32 %v2029, 16
    %v2340 = vrot.slane %v2338, 5
    %v2341 = vsel %vm1204, %v2336, %v2340
    %v2342 = vshrl.u32 %v2029, 16
    %v2344 = vrot.slane %v2342, 4
    %v2345 = vor.u32 %v2344, %v2340
    %v2346 = vrot.slane %v2345, 4
    %v2348 = vshll.u32 %v2030, 16
    %v2350 = vrot.slane %v2348, 5
    %v2351 = vsel %vm1204, %v2346, %v2350
    %v2353 = vshrl.u32 %v2031, 16
    %v2355 = vrot.slane %v2353, 4
    %v2356 = vshll.u32 %v2031, 16
    %v2358 = vrot.slane %v2356, 5
    %v2359 = vor.u32 %v2355, %v2358
    %v2360 = vrot.slane %v2359, 4
    %v2362 = vshll.u32 %v2032, 16
    %v2364 = vrot.slane %v2362, 5
    %v2365 = vsel %vm1204, %v2360, %v2364
    %v2366 = vshrl.u32 %v2032, 16
    %v2368 = vrot.slane %v2366, 4
    %v2369 = vor.u32 %v2368, %v2364
    %v2370 = vrot.slane %v2369, 4
    %v2372 = vshll.u32 %v2033, 16
    %v2374 = vrot.slane %v2372, 5
    %v2375 = vsel %vm1204, %v2370, %v2374
    %v2377 = vshrl.u32 %v2034, 16
    %v2379 = vrot.slane %v2377, 4
    %v2380 = vshll.u32 %v2034, 16
    %v2382 = vrot.slane %v2380, 5
    %v2383 = vor.u32 %v2379, %v2382
    %v2384 = vrot.slane %v2383, 4
    %v2386 = vshll.u32 %v2035, 16
    %v2388 = vrot.slane %v2386, 5
    %v2389 = vsel %vm1204, %v2384, %v2388
    %v2390 = vshrl.u32 %v2035, 16
    %v2392 = vrot.slane %v2390, 4
    %v2393 = vor.u32 %v2392, %v2388
    %v2394 = vrot.slane %v2393, 4
    %v2396 = vshll.u32 %v2036, 16
    %v2398 = vrot.slane %v2396, 5
    %v2399 = vsel %vm1204, %v2394, %v2398
    %v2401 = vshrl.u32 %v2037, 16
    %v2403 = vrot.slane %v2401, 4
    %v2404 = vshll.u32 %v2037, 16
    %v2406 = vrot.slane %v2404, 5
    %v2407 = vor.u32 %v2403, %v2406
    %v2408 = vrot.slane %v2407, 4
    %v2410 = vshll.u32 %v2038, 16
    %v2412 = vrot.slane %v2410, 5
    %v2413 = vsel %vm1204, %v2408, %v2412
    %v2414 = vshrl.u32 %v2038, 16
    %v2416 = vrot.slane %v2414, 4
    %v2417 = vor.u32 %v2416, %v2412
    %v2418 = vrot.slane %v2417, 4
    %v2420 = vshll.u32 %v2039, 16
    %v2422 = vrot.slane %v2420, 5
    %v2423 = vsel %vm1204, %v2418, %v2422
    %2456 = vst [vmem:[#allocation3 + $0x10] sm:$0xf] %v2053
    %2457 = vst [vmem:[#allocation3 + $0x34] sm:$0xf] %v2063
    %2458 = vst [vmem:[#allocation3 + $0x58] sm:$0xf] %v2077
    %2459 = vst [vmem:[#allocation3 + $0x7c] sm:$0xf] %v2087
    %2460 = vst [vmem:[#allocation3 + $0xa0] sm:$0xf] %v2101
    %2461 = vst [vmem:[#allocation3 + $0xc4] sm:$0xf] %v2111
    %2462 = vst [vmem:[#allocation3 + $0xe8] sm:$0xf] %v2125
    %2463 = vst [vmem:[#allocation3 + $0x10c] sm:$0xf] %v2135
    %2464 = vst [vmem:[#allocation3 + $0x130] sm:$0xf] %v2149
    %2465 = vst [vmem:[#allocation3 + $0x154] sm:$0xf] %v2159
    %2466 = vst [vmem:[#allocation3 + $0x178] sm:$0xf] %v2173
    %2467 = vst [vmem:[#allocation3 + $0x19c] sm:$0xf] %v2183
    %2468 = vst [vmem:[#allocation3 + $0x1c0] sm:$0xf] %v2197
    %2469 = vst [vmem:[#allocation3 + $0x1e4] sm:$0xf] %v2207
    %2470 = vst [vmem:[#allocation3 + $0x208] sm:$0xf] %v2221
    %2471 = vst [vmem:[#allocation3 + $0x22c] sm:$0xf] %v2231
    %2472 = vst [vmem:[#allocation3 + $0x250] sm:$0xf] %v2245
    %2473 = vst [vmem:[#allocation3 + $0x274] sm:$0xf] %v2255
    %2474 = vst [vmem:[#allocation3 + $0x298] sm:$0xf] %v2269
    %2475 = vst [vmem:[#allocation3 + $0x2bc] sm:$0xf] %v2279
    %2476 = vst [vmem:[#allocation3 + $0x2e0] sm:$0xf] %v2293
    %2477 = vst [vmem:[#allocation3 + $0x304] sm:$0xf] %v2303
    %2478 = vst [vmem:[#allocation3 + $0x328] sm:$0xf] %v2317
    %2479 = vst [vmem:[#allocation3 + $0x34c] sm:$0xf] %v2327
    %2480 = vst [vmem:[#allocation3 + $0x370] sm:$0xf] %v2341
    %2481 = vst [vmem:[#allocation3 + $0x394] sm:$0xf] %v2351
    %2482 = vst [vmem:[#allocation3 + $0x3b8] sm:$0xf] %v2365
    %2483 = vst [vmem:[#allocation3 + $0x3dc] sm:$0xf] %v2375
    %2484 = vst [vmem:[#allocation3 + $0x400] sm:$0xf] %v2389
    %2485 = vst [vmem:[#allocation3 + $0x424] sm:$0xf] %v2399
    %2486 = vst [vmem:[#allocation3 + $0x448] sm:$0xf] %v2413
    %2487 = vst [vmem:[#allocation3 + $0x46c] sm:$0xf] %v2423
    %v2488 = vld [vmem:[%s860] sm:$0xe]
    %v2489 = vld [vmem:[%s860 + $0x4] sm:$0xf]
    %v2490 = vld [vmem:[%s860 + $0x8] sm:$0x1]
    %v2491 = vld [vmem:[%s860 + $0xc] sm:$0xe]
    %v2492 = vld [vmem:[%s860 + $0x10] sm:$0xf]
    %v2493 = vld [vmem:[%s860 + $0x14] sm:$0x1]
    %v2494 = vld [vmem:[%s860 + $0x18] sm:$0xe]
    %v2495 = vld [vmem:[%s860 + $0x1c] sm:$0xf]
    %v2496 = vld [vmem:[%s860 + $0x20] sm:$0x1]
    %v2497 = vld [vmem:[%s860 + $0x24] sm:$0xe]
    %v2498 = vld [vmem:[%s860 + $0x28] sm:$0xf]
    %v2499 = vld [vmem:[%s860 + $0x2c] sm:$0x1]
    %v2500 = vld [vmem:[%s860 + $0x30] sm:$0xe]
    %v2501 = vld [vmem:[%s860 + $0x34] sm:$0xf]
    %v2502 = vld [vmem:[%s860 + $0x38] sm:$0x1]
    %v2503 = vld [vmem:[%s860 + $0x3c] sm:$0xe]
    %v2504 = vld [vmem:[%s860 + $0x40] sm:$0xf]
    %v2505 = vld [vmem:[%s860 + $0x44] sm:$0x1]
    %v2506 = vld [vmem:[%s860 + $0x48] sm:$0xe]
    %v2507 = vld [vmem:[%s860 + $0x4c] sm:$0xf]
    %v2508 = vld [vmem:[%s860 + $0x50] sm:$0x1]
    %v2509 = vld [vmem:[%s860 + $0x54] sm:$0xe]
    %v2510 = vld [vmem:[%s860 + $0x58] sm:$0xf]
    %v2511 = vld [vmem:[%s860 + $0x5c] sm:$0x1]
    %v2512 = vld [vmem:[%s860 + $0x60] sm:$0xe]
    %v2513 = vld [vmem:[%s860 + $0x64] sm:$0xf]
    %v2514 = vld [vmem:[%s860 + $0x68] sm:$0x1]
    %v2515 = vld [vmem:[%s860 + $0x6c] sm:$0xe]
    %v2516 = vld [vmem:[%s860 + $0x70] sm:$0xf]
    %v2517 = vld [vmem:[%s860 + $0x74] sm:$0x1]
    %v2518 = vld [vmem:[%s860 + $0x78] sm:$0xe]
    %v2519 = vld [vmem:[%s860 + $0x7c] sm:$0xf]
    %v2520 = vld [vmem:[%s860 + $0x80] sm:$0x1]
    %v2521 = vld [vmem:[%s860 + $0x84] sm:$0xe]
    %v2522 = vld [vmem:[%s860 + $0x88] sm:$0xf]
    %v2523 = vld [vmem:[%s860 + $0x8c] sm:$0x1]
    %v2524 = vld [vmem:[%s860 + $0x90] sm:$0xe]
    %v2525 = vld [vmem:[%s860 + $0x94] sm:$0xf]
    %v2526 = vld [vmem:[%s860 + $0x98] sm:$0x1]
    %v2527 = vld [vmem:[%s860 + $0x9c] sm:$0xe]
    %v2528 = vld [vmem:[%s860 + $0xa0] sm:$0xf]
    %v2529 = vld [vmem:[%s860 + $0xa4] sm:$0x1]
    %v2530 = vld [vmem:[%s860 + $0xa8] sm:$0xe]
    %v2531 = vld [vmem:[%s860 + $0xac] sm:$0xf]
    %v2532 = vld [vmem:[%s860 + $0xb0] sm:$0x1]
    %v2533 = vld [vmem:[%s860 + $0xb4] sm:$0xe]
    %v2534 = vld [vmem:[%s860 + $0xb8] sm:$0xf]
    %v2535 = vld [vmem:[%s860 + $0xbc] sm:$0x1]
    %v2584 = vrot.slane %v2488, 5
    %v2585 = vrot.slane %v2584, 4
    %v2586 = vrot.slane %v2489, 5
    %v2587 = vsel %vm1751, %v2585, %v2586
    %v2588 = vrot.slane %v2586, 4
    %v2589 = vrot.slane %v2490, 5
    %v2590 = vsel %vm1751, %v2588, %v2589
    %v2591 = vrot.slane %v2491, 5
    %v2592 = vrot.slane %v2591, 4
    %v2593 = vrot.slane %v2492, 5
    %v2594 = vsel %vm1751, %v2592, %v2593
    %v2595 = vrot.slane %v2593, 4
    %v2596 = vrot.slane %v2493, 5
    %v2597 = vsel %vm1751, %v2595, %v2596
    %v2598 = vrot.slane %v2494, 5
    %v2599 = vrot.slane %v2598, 4
    %v2600 = vrot.slane %v2495, 5
    %v2601 = vsel %vm1751, %v2599, %v2600
    %v2602 = vrot.slane %v2600, 4
    %v2603 = vrot.slane %v2496, 5
    %v2604 = vsel %vm1751, %v2602, %v2603
    %v2605 = vrot.slane %v2497, 5
    %v2606 = vrot.slane %v2605, 4
    %v2607 = vrot.slane %v2498, 5
    %v2608 = vsel %vm1751, %v2606, %v2607
    %v2609 = vrot.slane %v2607, 4
    %v2610 = vrot.slane %v2499, 5
    %v2611 = vsel %vm1751, %v2609, %v2610
    %v2612 = vrot.slane %v2500, 5
    %v2613 = vrot.slane %v2612, 4
    %v2614 = vrot.slane %v2501, 5
    %v2615 = vsel %vm1751, %v2613, %v2614
    %v2616 = vrot.slane %v2614, 4
    %v2617 = vrot.slane %v2502, 5
    %v2618 = vsel %vm1751, %v2616, %v2617
    %v2619 = vrot.slane %v2503, 5
    %v2620 = vrot.slane %v2619, 4
    %v2621 = vrot.slane %v2504, 5
    %v2622 = vsel %vm1751, %v2620, %v2621
    %v2623 = vrot.slane %v2621, 4
    %v2624 = vrot.slane %v2505, 5
    %v2625 = vsel %vm1751, %v2623, %v2624
    %v2626 = vrot.slane %v2506, 5
    %v2627 = vrot.slane %v2626, 4
    %v2628 = vrot.slane %v2507, 5
    %v2629 = vsel %vm1751, %v2627, %v2628
    %v2630 = vrot.slane %v2628, 4
    %v2631 = vrot.slane %v2508, 5
    %v2632 = vsel %vm1751, %v2630, %v2631
    %v2633 = vrot.slane %v2509, 5
    %v2634 = vrot.slane %v2633, 4
    %v2635 = vrot.slane %v2510, 5
    %v2636 = vsel %vm1751, %v2634, %v2635
    %v2637 = vrot.slane %v2635, 4
    %v2638 = vrot.slane %v2511, 5
    %v2639 = vsel %vm1751, %v2637, %v2638
    %v2640 = vrot.slane %v2512, 5
    %v2641 = vrot.slane %v2640, 4
    %v2642 = vrot.slane %v2513, 5
    %v2643 = vsel %vm1751, %v2641, %v2642
    %v2644 = vrot.slane %v2642, 4
    %v2645 = vrot.slane %v2514, 5
    %v2646 = vsel %vm1751, %v2644, %v2645
    %v2647 = vrot.slane %v2515, 5
    %v2648 = vrot.slane %v2647, 4
    %v2649 = vrot.slane %v2516, 5
    %v2650 = vsel %vm1751, %v2648, %v2649
    %v2651 = vrot.slane %v2649, 4
    %v2652 = vrot.slane %v2517, 5
    %v2653 = vsel %vm1751, %v2651, %v2652
    %v2654 = vrot.slane %v2518, 5
    %v2655 = vrot.slane %v2654, 4
    %v2656 = vrot.slane %v2519, 5
    %v2657 = vsel %vm1751, %v2655, %v2656
    %v2658 = vrot.slane %v2656, 4
    %v2659 = vrot.slane %v2520, 5
    %v2660 = vsel %vm1751, %v2658, %v2659
    %v2661 = vrot.slane %v2521, 5
    %v2662 = vrot.slane %v2661, 4
    %v2663 = vrot.slane %v2522, 5
    %v2664 = vsel %vm1751, %v2662, %v2663
    %v2665 = vrot.slane %v2663, 4
    %v2666 = vrot.slane %v2523, 5
    %v2667 = vsel %vm1751, %v2665, %v2666
    %v2668 = vrot.slane %v2524, 5
    %v2669 = vrot.slane %v2668, 4
    %v2670 = vrot.slane %v2525, 5
    %v2671 = vsel %vm1751, %v2669, %v2670
    %v2672 = vrot.slane %v2670, 4
    %v2673 = vrot.slane %v2526, 5
    %v2674 = vsel %vm1751, %v2672, %v2673
    %v2675 = vrot.slane %v2527, 5
    %v2676 = vrot.slane %v2675, 4
    %v2677 = vrot.slane %v2528, 5
    %v2678 = vsel %vm1751, %v2676, %v2677
    %v2679 = vrot.slane %v2677, 4
    %v2680 = vrot.slane %v2529, 5
    %v2681 = vsel %vm1751, %v2679, %v2680
    %v2682 = vrot.slane %v2530, 5
    %v2683 = vrot.slane %v2682, 4
    %v2684 = vrot.slane %v2531, 5
    %v2685 = vsel %vm1751, %v2683, %v2684
    %v2686 = vrot.slane %v2684, 4
    %v2687 = vrot.slane %v2532, 5
    %v2688 = vsel %vm1751, %v2686, %v2687
    %v2689 = vrot.slane %v2533, 5
    %v2690 = vrot.slane %v2689, 4
    %v2691 = vrot.slane %v2534, 5
    %v2692 = vsel %vm1751, %v2690, %v2691
    %v2693 = vrot.slane %v2691, 4
    %v2694 = vrot.slane %v2535, 5
    %v2695 = vsel %vm1751, %v2693, %v2694
    %2728 = vst [vmem:[#allocation3 + $0x14] sm:$0xf] %v2587
    %2729 = vst [vmem:[#allocation3 + $0x38] sm:$0xf] %v2590
    %2730 = vst [vmem:[#allocation3 + $0x5c] sm:$0xf] %v2594
    %2731 = vst [vmem:[#allocation3 + $0x80] sm:$0xf] %v2597
    %2732 = vst [vmem:[#allocation3 + $0xa4] sm:$0xf] %v2601
    %2733 = vst [vmem:[#allocation3 + $0xc8] sm:$0xf] %v2604
    %2734 = vst [vmem:[#allocation3 + $0xec] sm:$0xf] %v2608
    %2735 = vst [vmem:[#allocation3 + $0x110] sm:$0xf] %v2611
    %2736 = vst [vmem:[#allocation3 + $0x134] sm:$0xf] %v2615
    %2737 = vst [vmem:[#allocation3 + $0x158] sm:$0xf] %v2618
    %2738 = vst [vmem:[#allocation3 + $0x17c] sm:$0xf] %v2622
    %2739 = vst [vmem:[#allocation3 + $0x1a0] sm:$0xf] %v2625
    %2740 = vst [vmem:[#allocation3 + $0x1c4] sm:$0xf] %v2629
    %2741 = vst [vmem:[#allocation3 + $0x1e8] sm:$0xf] %v2632
    %2742 = vst [vmem:[#allocation3 + $0x20c] sm:$0xf] %v2636
    %2743 = vst [vmem:[#allocation3 + $0x230] sm:$0xf] %v2639
    %2744 = vst [vmem:[#allocation3 + $0x254] sm:$0xf] %v2643
    %2745 = vst [vmem:[#allocation3 + $0x278] sm:$0xf] %v2646
    %2746 = vst [vmem:[#allocation3 + $0x29c] sm:$0xf] %v2650
    %2747 = vst [vmem:[#allocation3 + $0x2c0] sm:$0xf] %v2653
    %2748 = vst [vmem:[#allocation3 + $0x2e4] sm:$0xf] %v2657
    %2749 = vst [vmem:[#allocation3 + $0x308] sm:$0xf] %v2660
    %2750 = vst [vmem:[#allocation3 + $0x32c] sm:$0xf] %v2664
    %2751 = vst [vmem:[#allocation3 + $0x350] sm:$0xf] %v2667
    %2752 = vst [vmem:[#allocation3 + $0x374] sm:$0xf] %v2671
    %2753 = vst [vmem:[#allocation3 + $0x398] sm:$0xf] %v2674
    %2754 = vst [vmem:[#allocation3 + $0x3bc] sm:$0xf] %v2678
    %2755 = vst [vmem:[#allocation3 + $0x3e0] sm:$0xf] %v2681
    %2756 = vst [vmem:[#allocation3 + $0x404] sm:$0xf] %v2685
    %2757 = vst [vmem:[#allocation3 + $0x428] sm:$0xf] %v2688
    %2758 = vst [vmem:[#allocation3 + $0x44c] sm:$0xf] %v2692
    %2759 = vst [vmem:[#allocation3 + $0x470] sm:$0xf] %v2695
    %s2760 = scalar_lea.vmem [#allocation2], 24
    %v2761 = vld [vmem:[%s2760] sm:$0xf]
    %v2762 = vld [vmem:[%s2760 + $0x4] sm:$0xf]
    %v2763 = vld [vmem:[%s2760 + $0xc] sm:$0xf]
    %v2764 = vld [vmem:[%s2760 + $0x10] sm:$0xf]
    %v2765 = vld [vmem:[%s2760 + $0x18] sm:$0xf]
    %v2766 = vld [vmem:[%s2760 + $0x1c] sm:$0xf]
    %v2767 = vld [vmem:[%s2760 + $0x24] sm:$0xf]
    %v2768 = vld [vmem:[%s2760 + $0x28] sm:$0xf]
    %v2769 = vld [vmem:[%s2760 + $0x30] sm:$0xf]
    %v2770 = vld [vmem:[%s2760 + $0x34] sm:$0xf]
    %v2771 = vld [vmem:[%s2760 + $0x3c] sm:$0xf]
    %v2772 = vld [vmem:[%s2760 + $0x40] sm:$0xf]
    %v2773 = vld [vmem:[%s2760 + $0x48] sm:$0xf]
    %v2774 = vld [vmem:[%s2760 + $0x4c] sm:$0xf]
    %v2775 = vld [vmem:[%s2760 + $0x54] sm:$0xf]
    %v2776 = vld [vmem:[%s2760 + $0x58] sm:$0xf]
    %v2777 = vld [vmem:[%s2760 + $0x60] sm:$0xf]
    %v2778 = vld [vmem:[%s2760 + $0x64] sm:$0xf]
    %v2779 = vld [vmem:[%s2760 + $0x6c] sm:$0xf]
    %v2780 = vld [vmem:[%s2760 + $0x70] sm:$0xf]
    %v2781 = vld [vmem:[%s2760 + $0x78] sm:$0xf]
    %v2782 = vld [vmem:[%s2760 + $0x7c] sm:$0xf]
    %v2783 = vld [vmem:[%s2760 + $0x84] sm:$0xf]
    %v2784 = vld [vmem:[%s2760 + $0x88] sm:$0xf]
    %v2785 = vld [vmem:[%s2760 + $0x90] sm:$0xf]
    %v2786 = vld [vmem:[%s2760 + $0x94] sm:$0xf]
    %v2787 = vld [vmem:[%s2760 + $0x9c] sm:$0xf]
    %v2788 = vld [vmem:[%s2760 + $0xa0] sm:$0xf]
    %v2789 = vld [vmem:[%s2760 + $0xa8] sm:$0xf]
    %v2790 = vld [vmem:[%s2760 + $0xac] sm:$0xf]
    %v2791 = vld [vmem:[%s2760 + $0xb4] sm:$0xf]
    %v2792 = vld [vmem:[%s2760 + $0xb8] sm:$0xf]
    %2793 = vst [vmem:[#allocation3 + $0x18] sm:$0xf] %v2761
    %2794 = vst [vmem:[#allocation3 + $0x3c] sm:$0xf] %v2762
    %2795 = vst [vmem:[#allocation3 + $0x60] sm:$0xf] %v2763
    %2796 = vst [vmem:[#allocation3 + $0x84] sm:$0xf] %v2764
    %2797 = vst [vmem:[#allocation3 + $0xa8] sm:$0xf] %v2765
    %2798 = vst [vmem:[#allocation3 + $0xcc] sm:$0xf] %v2766
    %2799 = vst [vmem:[#allocation3 + $0xf0] sm:$0xf] %v2767
    %2800 = vst [vmem:[#allocation3 + $0x114] sm:$0xf] %v2768
    %2801 = vst [vmem:[#allocation3 + $0x138] sm:$0xf] %v2769
    %2802 = vst [vmem:[#allocation3 + $0x15c] sm:$0xf] %v2770
    %2803 = vst [vmem:[#allocation3 + $0x180] sm:$0xf] %v2771
    %2804 = vst [vmem:[#allocation3 + $0x1a4] sm:$0xf] %v2772
    %2805 = vst [vmem:[#allocation3 + $0x1c8] sm:$0xf] %v2773
    %2806 = vst [vmem:[#allocation3 + $0x1ec] sm:$0xf] %v2774
    %2807 = vst [vmem:[#allocation3 + $0x210] sm:$0xf] %v2775
    %2808 = vst [vmem:[#allocation3 + $0x234] sm:$0xf] %v2776
    %2809 = vst [vmem:[#allocation3 + $0x258] sm:$0xf] %v2777
    %2810 = vst [vmem:[#allocation3 + $0x27c] sm:$0xf] %v2778
    %2811 = vst [vmem:[#allocation3 + $0x2a0] sm:$0xf] %v2779
    %2812 = vst [vmem:[#allocation3 + $0x2c4] sm:$0xf] %v2780
    %2813 = vst [vmem:[#allocation3 + $0x2e8] sm:$0xf] %v2781
    %2814 = vst [vmem:[#allocation3 + $0x30c] sm:$0xf] %v2782
    %2815 = vst [vmem:[#allocation3 + $0x330] sm:$0xf] %v2783
    %2816 = vst [vmem:[#allocation3 + $0x354] sm:$0xf] %v2784
    %2817 = vst [vmem:[#allocation3 + $0x378] sm:$0xf] %v2785
    %2818 = vst [vmem:[#allocation3 + $0x39c] sm:$0xf] %v2786
    %2819 = vst [vmem:[#allocation3 + $0x3c0] sm:$0xf] %v2787
    %2820 = vst [vmem:[#allocation3 + $0x3e4] sm:$0xf] %v2788
    %2821 = vst [vmem:[#allocation3 + $0x408] sm:$0xf] %v2789
    %2822 = vst [vmem:[#allocation3 + $0x42c] sm:$0xf] %v2790
    %2823 = vst [vmem:[#allocation3 + $0x450] sm:$0xf] %v2791
    %2824 = vst [vmem:[#allocation3 + $0x474] sm:$0xf] %v2792
    %v2825 = vld [vmem:[%s2760] sm:$0xf]
    %v2826 = vld [vmem:[%s2760 + $0x4] sm:$0xf]
    %v2827 = vld [vmem:[%s2760 + $0x8] sm:$0x1]
    %v2828 = vld [vmem:[%s2760 + $0xc] sm:$0xf]
    %v2829 = vld [vmem:[%s2760 + $0x10] sm:$0xf]
    %v2830 = vld [vmem:[%s2760 + $0x14] sm:$0x1]
    %v2831 = vld [vmem:[%s2760 + $0x18] sm:$0xf]
    %v2832 = vld [vmem:[%s2760 + $0x1c] sm:$0xf]
    %v2833 = vld [vmem:[%s2760 + $0x20] sm:$0x1]
    %v2834 = vld [vmem:[%s2760 + $0x24] sm:$0xf]
    %v2835 = vld [vmem:[%s2760 + $0x28] sm:$0xf]
    %v2836 = vld [vmem:[%s2760 + $0x2c] sm:$0x1]
    %v2837 = vld [vmem:[%s2760 + $0x30] sm:$0xf]
    %v2838 = vld [vmem:[%s2760 + $0x34] sm:$0xf]
    %v2839 = vld [vmem:[%s2760 + $0x38] sm:$0x1]
    %v2840 = vld [vmem:[%s2760 + $0x3c] sm:$0xf]
    %v2841 = vld [vmem:[%s2760 + $0x40] sm:$0xf]
    %v2842 = vld [vmem:[%s2760 + $0x44] sm:$0x1]
    %v2843 = vld [vmem:[%s2760 + $0x48] sm:$0xf]
    %v2844 = vld [vmem:[%s2760 + $0x4c] sm:$0xf]
    %v2845 = vld [vmem:[%s2760 + $0x50] sm:$0x1]
    %v2846 = vld [vmem:[%s2760 + $0x54] sm:$0xf]
    %v2847 = vld [vmem:[%s2760 + $0x58] sm:$0xf]
    %v2848 = vld [vmem:[%s2760 + $0x5c] sm:$0x1]
    %v2849 = vld [vmem:[%s2760 + $0x60] sm:$0xf]
    %v2850 = vld [vmem:[%s2760 + $0x64] sm:$0xf]
    %v2851 = vld [vmem:[%s2760 + $0x68] sm:$0x1]
    %v2852 = vld [vmem:[%s2760 + $0x6c] sm:$0xf]
    %v2853 = vld [vmem:[%s2760 + $0x70] sm:$0xf]
    %v2854 = vld [vmem:[%s2760 + $0x74] sm:$0x1]
    %v2855 = vld [vmem:[%s2760 + $0x78] sm:$0xf]
    %v2856 = vld [vmem:[%s2760 + $0x7c] sm:$0xf]
    %v2857 = vld [vmem:[%s2760 + $0x80] sm:$0x1]
    %v2858 = vld [vmem:[%s2760 + $0x84] sm:$0xf]
    %v2859 = vld [vmem:[%s2760 + $0x88] sm:$0xf]
    %v2860 = vld [vmem:[%s2760 + $0x8c] sm:$0x1]
    %v2861 = vld [vmem:[%s2760 + $0x90] sm:$0xf]
    %v2862 = vld [vmem:[%s2760 + $0x94] sm:$0xf]
    %v2863 = vld [vmem:[%s2760 + $0x98] sm:$0x1]
    %v2864 = vld [vmem:[%s2760 + $0x9c] sm:$0xf]
    %v2865 = vld [vmem:[%s2760 + $0xa0] sm:$0xf]
    %v2866 = vld [vmem:[%s2760 + $0xa4] sm:$0x1]
    %v2867 = vld [vmem:[%s2760 + $0xa8] sm:$0xf]
    %v2868 = vld [vmem:[%s2760 + $0xac] sm:$0xf]
    %v2869 = vld [vmem:[%s2760 + $0xb0] sm:$0x1]
    %v2870 = vld [vmem:[%s2760 + $0xb4] sm:$0xf]
    %v2871 = vld [vmem:[%s2760 + $0xb8] sm:$0xf]
    %v2872 = vld [vmem:[%s2760 + $0xbc] sm:$0x1]
    %v2874 = vshrl.u32 %v2825, 16
    %v2876 = vrot.slane %v2874, 4
    %v2877 = vshll.u32 %v2825, 16
    %v2879 = vrot.slane %v2877, 5
    %v2880 = vor.u32 %v2876, %v2879
    %v2881 = vrot.slane %v2880, 4
    %v2883 = vshll.u32 %v2826, 16
    %v2885 = vrot.slane %v2883, 5
    %v2886 = vsel %vm1204, %v2881, %v2885
    %v2887 = vshrl.u32 %v2826, 16
    %v2889 = vrot.slane %v2887, 4
    %v2890 = vor.u32 %v2889, %v2885
    %v2891 = vrot.slane %v2890, 4
    %v2893 = vshll.u32 %v2827, 16
    %v2895 = vrot.slane %v2893, 5
    %v2896 = vsel %vm1204, %v2891, %v2895
    %v2898 = vshrl.u32 %v2828, 16
    %v2900 = vrot.slane %v2898, 4
    %v2901 = vshll.u32 %v2828, 16
    %v2903 = vrot.slane %v2901, 5
    %v2904 = vor.u32 %v2900, %v2903
    %v2905 = vrot.slane %v2904, 4
    %v2907 = vshll.u32 %v2829, 16
    %v2909 = vrot.slane %v2907, 5
    %v2910 = vsel %vm1204, %v2905, %v2909
    %v2911 = vshrl.u32 %v2829, 16
    %v2913 = vrot.slane %v2911, 4
    %v2914 = vor.u32 %v2913, %v2909
    %v2915 = vrot.slane %v2914, 4
    %v2917 = vshll.u32 %v2830, 16
    %v2919 = vrot.slane %v2917, 5
    %v2920 = vsel %vm1204, %v2915, %v2919
    %v2922 = vshrl.u32 %v2831, 16
    %v2924 = vrot.slane %v2922, 4
    %v2925 = vshll.u32 %v2831, 16
    %v2927 = vrot.slane %v2925, 5
    %v2928 = vor.u32 %v2924, %v2927
    %v2929 = vrot.slane %v2928, 4
    %v2931 = vshll.u32 %v2832, 16
    %v2933 = vrot.slane %v2931, 5
    %v2934 = vsel %vm1204, %v2929, %v2933
    %v2935 = vshrl.u32 %v2832, 16
    %v2937 = vrot.slane %v2935, 4
    %v2938 = vor.u32 %v2937, %v2933
    %v2939 = vrot.slane %v2938, 4
    %v2941 = vshll.u32 %v2833, 16
    %v2943 = vrot.slane %v2941, 5
    %v2944 = vsel %vm1204, %v2939, %v2943
    %v2946 = vshrl.u32 %v2834, 16
    %v2948 = vrot.slane %v2946, 4
    %v2949 = vshll.u32 %v2834, 16
    %v2951 = vrot.slane %v2949, 5
    %v2952 = vor.u32 %v2948, %v2951
    %v2953 = vrot.slane %v2952, 4
    %v2955 = vshll.u32 %v2835, 16
    %v2957 = vrot.slane %v2955, 5
    %v2958 = vsel %vm1204, %v2953, %v2957
    %v2959 = vshrl.u32 %v2835, 16
    %v2961 = vrot.slane %v2959, 4
    %v2962 = vor.u32 %v2961, %v2957
    %v2963 = vrot.slane %v2962, 4
    %v2965 = vshll.u32 %v2836, 16
    %v2967 = vrot.slane %v2965, 5
    %v2968 = vsel %vm1204, %v2963, %v2967
    %v2970 = vshrl.u32 %v2837, 16
    %v2972 = vrot.slane %v2970, 4
    %v2973 = vshll.u32 %v2837, 16
    %v2975 = vrot.slane %v2973, 5
    %v2976 = vor.u32 %v2972, %v2975
    %v2977 = vrot.slane %v2976, 4
    %v2979 = vshll.u32 %v2838, 16
    %v2981 = vrot.slane %v2979, 5
    %v2982 = vsel %vm1204, %v2977, %v2981
    %v2983 = vshrl.u32 %v2838, 16
    %v2985 = vrot.slane %v2983, 4
    %v2986 = vor.u32 %v2985, %v2981
    %v2987 = vrot.slane %v2986, 4
    %v2989 = vshll.u32 %v2839, 16
    %v2991 = vrot.slane %v2989, 5
    %v2992 = vsel %vm1204, %v2987, %v2991
    %v2994 = vshrl.u32 %v2840, 16
    %v2996 = vrot.slane %v2994, 4
    %v2997 = vshll.u32 %v2840, 16
    %v2999 = vrot.slane %v2997, 5
    %v3000 = vor.u32 %v2996, %v2999
    %v3001 = vrot.slane %v3000, 4
    %v3003 = vshll.u32 %v2841, 16
    %v3005 = vrot.slane %v3003, 5
    %v3006 = vsel %vm1204, %v3001, %v3005
    %v3007 = vshrl.u32 %v2841, 16
    %v3009 = vrot.slane %v3007, 4
    %v3010 = vor.u32 %v3009, %v3005
    %v3011 = vrot.slane %v3010, 4
    %v3013 = vshll.u32 %v2842, 16
    %v3015 = vrot.slane %v3013, 5
    %v3016 = vsel %vm1204, %v3011, %v3015
    %v3018 = vshrl.u32 %v2843, 16
    %v3020 = vrot.slane %v3018, 4
    %v3021 = vshll.u32 %v2843, 16
    %v3023 = vrot.slane %v3021, 5
    %v3024 = vor.u32 %v3020, %v3023
    %v3025 = vrot.slane %v3024, 4
    %v3027 = vshll.u32 %v2844, 16
    %v3029 = vrot.slane %v3027, 5
    %v3030 = vsel %vm1204, %v3025, %v3029
    %v3031 = vshrl.u32 %v2844, 16
    %v3033 = vrot.slane %v3031, 4
    %v3034 = vor.u32 %v3033, %v3029
    %v3035 = vrot.slane %v3034, 4
    %v3037 = vshll.u32 %v2845, 16
    %v3039 = vrot.slane %v3037, 5
    %v3040 = vsel %vm1204, %v3035, %v3039
    %v3042 = vshrl.u32 %v2846, 16
    %v3044 = vrot.slane %v3042, 4
    %v3045 = vshll.u32 %v2846, 16
    %v3047 = vrot.slane %v3045, 5
    %v3048 = vor.u32 %v3044, %v3047
    %v3049 = vrot.slane %v3048, 4
    %v3051 = vshll.u32 %v2847, 16
    %v3053 = vrot.slane %v3051, 5
    %v3054 = vsel %vm1204, %v3049, %v3053
    %v3055 = vshrl.u32 %v2847, 16
    %v3057 = vrot.slane %v3055, 4
    %v3058 = vor.u32 %v3057, %v3053
    %v3059 = vrot.slane %v3058, 4
    %v3061 = vshll.u32 %v2848, 16
    %v3063 = vrot.slane %v3061, 5
    %v3064 = vsel %vm1204, %v3059, %v3063
    %v3066 = vshrl.u32 %v2849, 16
    %v3068 = vrot.slane %v3066, 4
    %v3069 = vshll.u32 %v2849, 16
    %v3071 = vrot.slane %v3069, 5
    %v3072 = vor.u32 %v3068, %v3071
    %v3073 = vrot.slane %v3072, 4
    %v3075 = vshll.u32 %v2850, 16
    %v3077 = vrot.slane %v3075, 5
    %v3078 = vsel %vm1204, %v3073, %v3077
    %v3079 = vshrl.u32 %v2850, 16
    %v3081 = vrot.slane %v3079, 4
    %v3082 = vor.u32 %v3081, %v3077
    %v3083 = vrot.slane %v3082, 4
    %v3085 = vshll.u32 %v2851, 16
    %v3087 = vrot.slane %v3085, 5
    %v3088 = vsel %vm1204, %v3083, %v3087
    %v3090 = vshrl.u32 %v2852, 16
    %v3092 = vrot.slane %v3090, 4
    %v3093 = vshll.u32 %v2852, 16
    %v3095 = vrot.slane %v3093, 5
    %v3096 = vor.u32 %v3092, %v3095
    %v3097 = vrot.slane %v3096, 4
    %v3099 = vshll.u32 %v2853, 16
    %v3101 = vrot.slane %v3099, 5
    %v3102 = vsel %vm1204, %v3097, %v3101
    %v3103 = vshrl.u32 %v2853, 16
    %v3105 = vrot.slane %v3103, 4
    %v3106 = vor.u32 %v3105, %v3101
    %v3107 = vrot.slane %v3106, 4
    %v3109 = vshll.u32 %v2854, 16
    %v3111 = vrot.slane %v3109, 5
    %v3112 = vsel %vm1204, %v3107, %v3111
    %v3114 = vshrl.u32 %v2855, 16
    %v3116 = vrot.slane %v3114, 4
    %v3117 = vshll.u32 %v2855, 16
    %v3119 = vrot.slane %v3117, 5
    %v3120 = vor.u32 %v3116, %v3119
    %v3121 = vrot.slane %v3120, 4
    %v3123 = vshll.u32 %v2856, 16
    %v3125 = vrot.slane %v3123, 5
    %v3126 = vsel %vm1204, %v3121, %v3125
    %v3127 = vshrl.u32 %v2856, 16
    %v3129 = vrot.slane %v3127, 4
    %v3130 = vor.u32 %v3129, %v3125
    %v3131 = vrot.slane %v3130, 4
    %v3133 = vshll.u32 %v2857, 16
    %v3135 = vrot.slane %v3133, 5
    %v3136 = vsel %vm1204, %v3131, %v3135
    %v3138 = vshrl.u32 %v2858, 16
    %v3140 = vrot.slane %v3138, 4
    %v3141 = vshll.u32 %v2858, 16
    %v3143 = vrot.slane %v3141, 5
    %v3144 = vor.u32 %v3140, %v3143
    %v3145 = vrot.slane %v3144, 4
    %v3147 = vshll.u32 %v2859, 16
    %v3149 = vrot.slane %v3147, 5
    %v3150 = vsel %vm1204, %v3145, %v3149
    %v3151 = vshrl.u32 %v2859, 16
    %v3153 = vrot.slane %v3151, 4
    %v3154 = vor.u32 %v3153, %v3149
    %v3155 = vrot.slane %v3154, 4
    %v3157 = vshll.u32 %v2860, 16
    %v3159 = vrot.slane %v3157, 5
    %v3160 = vsel %vm1204, %v3155, %v3159
    %v3162 = vshrl.u32 %v2861, 16
    %v3164 = vrot.slane %v3162, 4
    %v3165 = vshll.u32 %v2861, 16
    %v3167 = vrot.slane %v3165, 5
    %v3168 = vor.u32 %v3164, %v3167
    %v3169 = vrot.slane %v3168, 4
    %v3171 = vshll.u32 %v2862, 16
    %v3173 = vrot.slane %v3171, 5
    %v3174 = vsel %vm1204, %v3169, %v3173
    %v3175 = vshrl.u32 %v2862, 16
    %v3177 = vrot.slane %v3175, 4
    %v3178 = vor.u32 %v3177, %v3173
    %v3179 = vrot.slane %v3178, 4
    %v3181 = vshll.u32 %v2863, 16
    %v3183 = vrot.slane %v3181, 5
    %v3184 = vsel %vm1204, %v3179, %v3183
    %v3186 = vshrl.u32 %v2864, 16
    %v3188 = vrot.slane %v3186, 4
    %v3189 = vshll.u32 %v2864, 16
    %v3191 = vrot.slane %v3189, 5
    %v3192 = vor.u32 %v3188, %v3191
    %v3193 = vrot.slane %v3192, 4
    %v3195 = vshll.u32 %v2865, 16
    %v3197 = vrot.slane %v3195, 5
    %v3198 = vsel %vm1204, %v3193, %v3197
    %v3199 = vshrl.u32 %v2865, 16
    %v3201 = vrot.slane %v3199, 4
    %v3202 = vor.u32 %v3201, %v3197
    %v3203 = vrot.slane %v3202, 4
    %v3205 = vshll.u32 %v2866, 16
    %v3207 = vrot.slane %v3205, 5
    %v3208 = vsel %vm1204, %v3203, %v3207
    %v3210 = vshrl.u32 %v2867, 16
    %v3212 = vrot.slane %v3210, 4
    %v3213 = vshll.u32 %v2867, 16
    %v3215 = vrot.slane %v3213, 5
    %v3216 = vor.u32 %v3212, %v3215
    %v3217 = vrot.slane %v3216, 4
    %v3219 = vshll.u32 %v2868, 16
    %v3221 = vrot.slane %v3219, 5
    %v3222 = vsel %vm1204, %v3217, %v3221
    %v3223 = vshrl.u32 %v2868, 16
    %v3225 = vrot.slane %v3223, 4
    %v3226 = vor.u32 %v3225, %v3221
    %v3227 = vrot.slane %v3226, 4
    %v3229 = vshll.u32 %v2869, 16
    %v3231 = vrot.slane %v3229, 5
    %v3232 = vsel %vm1204, %v3227, %v3231
    %v3234 = vshrl.u32 %v2870, 16
    %v3236 = vrot.slane %v3234, 4
    %v3237 = vshll.u32 %v2870, 16
    %v3239 = vrot.slane %v3237, 5
    %v3240 = vor.u32 %v3236, %v3239
    %v3241 = vrot.slane %v3240, 4
    %v3243 = vshll.u32 %v2871, 16
    %v3245 = vrot.slane %v3243, 5
    %v3246 = vsel %vm1204, %v3241, %v3245
    %v3247 = vshrl.u32 %v2871, 16
    %v3249 = vrot.slane %v3247, 4
    %v3250 = vor.u32 %v3249, %v3245
    %v3251 = vrot.slane %v3250, 4
    %v3253 = vshll.u32 %v2872, 16
    %v3255 = vrot.slane %v3253, 5
    %v3256 = vsel %vm1204, %v3251, %v3255
    %3289 = vst [vmem:[#allocation3 + $0x1c] sm:$0xf] %v2886
    %3290 = vst [vmem:[#allocation3 + $0x40] sm:$0xf] %v2896
    %3291 = vst [vmem:[#allocation3 + $0x64] sm:$0xf] %v2910
    %3292 = vst [vmem:[#allocation3 + $0x88] sm:$0xf] %v2920
    %3293 = vst [vmem:[#allocation3 + $0xac] sm:$0xf] %v2934
    %3294 = vst [vmem:[#allocation3 + $0xd0] sm:$0xf] %v2944
    %3295 = vst [vmem:[#allocation3 + $0xf4] sm:$0xf] %v2958
    %3296 = vst [vmem:[#allocation3 + $0x118] sm:$0xf] %v2968
    %3297 = vst [vmem:[#allocation3 + $0x13c] sm:$0xf] %v2982
    %3298 = vst [vmem:[#allocation3 + $0x160] sm:$0xf] %v2992
    %3299 = vst [vmem:[#allocation3 + $0x184] sm:$0xf] %v3006
    %3300 = vst [vmem:[#allocation3 + $0x1a8] sm:$0xf] %v3016
    %3301 = vst [vmem:[#allocation3 + $0x1cc] sm:$0xf] %v3030
    %3302 = vst [vmem:[#allocation3 + $0x1f0] sm:$0xf] %v3040
    %3303 = vst [vmem:[#allocation3 + $0x214] sm:$0xf] %v3054
    %3304 = vst [vmem:[#allocation3 + $0x238] sm:$0xf] %v3064
    %3305 = vst [vmem:[#allocation3 + $0x25c] sm:$0xf] %v3078
    %3306 = vst [vmem:[#allocation3 + $0x280] sm:$0xf] %v3088
    %3307 = vst [vmem:[#allocation3 + $0x2a4] sm:$0xf] %v3102
    %3308 = vst [vmem:[#allocation3 + $0x2c8] sm:$0xf] %v3112
    %3309 = vst [vmem:[#allocation3 + $0x2ec] sm:$0xf] %v3126
    %3310 = vst [vmem:[#allocation3 + $0x310] sm:$0xf] %v3136
    %3311 = vst [vmem:[#allocation3 + $0x334] sm:$0xf] %v3150
    %3312 = vst [vmem:[#allocation3 + $0x358] sm:$0xf] %v3160
    %3313 = vst [vmem:[#allocation3 + $0x37c] sm:$0xf] %v3174
    %3314 = vst [vmem:[#allocation3 + $0x3a0] sm:$0xf] %v3184
    %3315 = vst [vmem:[#allocation3 + $0x3c4] sm:$0xf] %v3198
    %3316 = vst [vmem:[#allocation3 + $0x3e8] sm:$0xf] %v3208
    %3317 = vst [vmem:[#allocation3 + $0x40c] sm:$0xf] %v3222
    %3318 = vst [vmem:[#allocation3 + $0x430] sm:$0xf] %v3232
    %3319 = vst [vmem:[#allocation3 + $0x454] sm:$0xf] %v3246
    %3320 = vst [vmem:[#allocation3 + $0x478] sm:$0xf] %v3256
    %v3321 = vld [vmem:[%s2760] sm:$0xe]
    %v3322 = vld [vmem:[%s2760 + $0x4] sm:$0xf]
    %v3323 = vld [vmem:[%s2760 + $0x8] sm:$0x1]
    %v3324 = vld [vmem:[%s2760 + $0xc] sm:$0xe]
    %v3325 = vld [vmem:[%s2760 + $0x10] sm:$0xf]
    %v3326 = vld [vmem:[%s2760 + $0x14] sm:$0x1]
    %v3327 = vld [vmem:[%s2760 + $0x18] sm:$0xe]
    %v3328 = vld [vmem:[%s2760 + $0x1c] sm:$0xf]
    %v3329 = vld [vmem:[%s2760 + $0x20] sm:$0x1]
    %v3330 = vld [vmem:[%s2760 + $0x24] sm:$0xe]
    %v3331 = vld [vmem:[%s2760 + $0x28] sm:$0xf]
    %v3332 = vld [vmem:[%s2760 + $0x2c] sm:$0x1]
    %v3333 = vld [vmem:[%s2760 + $0x30] sm:$0xe]
    %v3334 = vld [vmem:[%s2760 + $0x34] sm:$0xf]
    %v3335 = vld [vmem:[%s2760 + $0x38] sm:$0x1]
    %v3336 = vld [vmem:[%s2760 + $0x3c] sm:$0xe]
    %v3337 = vld [vmem:[%s2760 + $0x40] sm:$0xf]
    %v3338 = vld [vmem:[%s2760 + $0x44] sm:$0x1]
    %v3339 = vld [vmem:[%s2760 + $0x48] sm:$0xe]
    %v3340 = vld [vmem:[%s2760 + $0x4c] sm:$0xf]
    %v3341 = vld [vmem:[%s2760 + $0x50] sm:$0x1]
    %v3342 = vld [vmem:[%s2760 + $0x54] sm:$0xe]
    %v3343 = vld [vmem:[%s2760 + $0x58] sm:$0xf]
    %v3344 = vld [vmem:[%s2760 + $0x5c] sm:$0x1]
    %v3345 = vld [vmem:[%s2760 + $0x60] sm:$0xe]
    %v3346 = vld [vmem:[%s2760 + $0x64] sm:$0xf]
    %v3347 = vld [vmem:[%s2760 + $0x68] sm:$0x1]
    %v3348 = vld [vmem:[%s2760 + $0x6c] sm:$0xe]
    %v3349 = vld [vmem:[%s2760 + $0x70] sm:$0xf]
    %v3350 = vld [vmem:[%s2760 + $0x74] sm:$0x1]
    %v3351 = vld [vmem:[%s2760 + $0x78] sm:$0xe]
    %v3352 = vld [vmem:[%s2760 + $0x7c] sm:$0xf]
    %v3353 = vld [vmem:[%s2760 + $0x80] sm:$0x1]
    %v3354 = vld [vmem:[%s2760 + $0x84] sm:$0xe]
    %v3355 = vld [vmem:[%s2760 + $0x88] sm:$0xf]
    %v3356 = vld [vmem:[%s2760 + $0x8c] sm:$0x1]
    %v3357 = vld [vmem:[%s2760 + $0x90] sm:$0xe]
    %v3358 = vld [vmem:[%s2760 + $0x94] sm:$0xf]
    %v3359 = vld [vmem:[%s2760 + $0x98] sm:$0x1]
    %v3360 = vld [vmem:[%s2760 + $0x9c] sm:$0xe]
    %v3361 = vld [vmem:[%s2760 + $0xa0] sm:$0xf]
    %v3362 = vld [vmem:[%s2760 + $0xa4] sm:$0x1]
    %v3363 = vld [vmem:[%s2760 + $0xa8] sm:$0xe]
    %v3364 = vld [vmem:[%s2760 + $0xac] sm:$0xf]
    %v3365 = vld [vmem:[%s2760 + $0xb0] sm:$0x1]
    %v3366 = vld [vmem:[%s2760 + $0xb4] sm:$0xe]
    %v3367 = vld [vmem:[%s2760 + $0xb8] sm:$0xf]
    %v3368 = vld [vmem:[%s2760 + $0xbc] sm:$0x1]
    %v3417 = vrot.slane %v3321, 5
    %v3418 = vrot.slane %v3417, 4
    %v3419 = vrot.slane %v3322, 5
    %v3420 = vsel %vm1751, %v3418, %v3419
    %v3421 = vrot.slane %v3419, 4
    %v3422 = vrot.slane %v3323, 5
    %v3423 = vsel %vm1751, %v3421, %v3422
    %v3424 = vrot.slane %v3324, 5
    %v3425 = vrot.slane %v3424, 4
    %v3426 = vrot.slane %v3325, 5
    %v3427 = vsel %vm1751, %v3425, %v3426
    %v3428 = vrot.slane %v3426, 4
    %v3429 = vrot.slane %v3326, 5
    %v3430 = vsel %vm1751, %v3428, %v3429
    %v3431 = vrot.slane %v3327, 5
    %v3432 = vrot.slane %v3431, 4
    %v3433 = vrot.slane %v3328, 5
    %v3434 = vsel %vm1751, %v3432, %v3433
    %v3435 = vrot.slane %v3433, 4
    %v3436 = vrot.slane %v3329, 5
    %v3437 = vsel %vm1751, %v3435, %v3436
    %v3438 = vrot.slane %v3330, 5
    %v3439 = vrot.slane %v3438, 4
    %v3440 = vrot.slane %v3331, 5
    %v3441 = vsel %vm1751, %v3439, %v3440
    %v3442 = vrot.slane %v3440, 4
    %v3443 = vrot.slane %v3332, 5
    %v3444 = vsel %vm1751, %v3442, %v3443
    %v3445 = vrot.slane %v3333, 5
    %v3446 = vrot.slane %v3445, 4
    %v3447 = vrot.slane %v3334, 5
    %v3448 = vsel %vm1751, %v3446, %v3447
    %v3449 = vrot.slane %v3447, 4
    %v3450 = vrot.slane %v3335, 5
    %v3451 = vsel %vm1751, %v3449, %v3450
    %v3452 = vrot.slane %v3336, 5
    %v3453 = vrot.slane %v3452, 4
    %v3454 = vrot.slane %v3337, 5
    %v3455 = vsel %vm1751, %v3453, %v3454
    %v3456 = vrot.slane %v3454, 4
    %v3457 = vrot.slane %v3338, 5
    %v3458 = vsel %vm1751, %v3456, %v3457
    %v3459 = vrot.slane %v3339, 5
    %v3460 = vrot.slane %v3459, 4
    %v3461 = vrot.slane %v3340, 5
    %v3462 = vsel %vm1751, %v3460, %v3461
    %v3463 = vrot.slane %v3461, 4
    %v3464 = vrot.slane %v3341, 5
    %v3465 = vsel %vm1751, %v3463, %v3464
    %v3466 = vrot.slane %v3342, 5
    %v3467 = vrot.slane %v3466, 4
    %v3468 = vrot.slane %v3343, 5
    %v3469 = vsel %vm1751, %v3467, %v3468
    %v3470 = vrot.slane %v3468, 4
    %v3471 = vrot.slane %v3344, 5
    %v3472 = vsel %vm1751, %v3470, %v3471
    %v3473 = vrot.slane %v3345, 5
    %v3474 = vrot.slane %v3473, 4
    %v3475 = vrot.slane %v3346, 5
    %v3476 = vsel %vm1751, %v3474, %v3475
    %v3477 = vrot.slane %v3475, 4
    %v3478 = vrot.slane %v3347, 5
    %v3479 = vsel %vm1751, %v3477, %v3478
    %v3480 = vrot.slane %v3348, 5
    %v3481 = vrot.slane %v3480, 4
    %v3482 = vrot.slane %v3349, 5
    %v3483 = vsel %vm1751, %v3481, %v3482
    %v3484 = vrot.slane %v3482, 4
    %v3485 = vrot.slane %v3350, 5
    %v3486 = vsel %vm1751, %v3484, %v3485
    %v3487 = vrot.slane %v3351, 5
    %v3488 = vrot.slane %v3487, 4
    %v3489 = vrot.slane %v3352, 5
    %v3490 = vsel %vm1751, %v3488, %v3489
    %v3491 = vrot.slane %v3489, 4
    %v3492 = vrot.slane %v3353, 5
    %v3493 = vsel %vm1751, %v3491, %v3492
    %v3494 = vrot.slane %v3354, 5
    %v3495 = vrot.slane %v3494, 4
    %v3496 = vrot.slane %v3355, 5
    %v3497 = vsel %vm1751, %v3495, %v3496
    %v3498 = vrot.slane %v3496, 4
    %v3499 = vrot.slane %v3356, 5
    %v3500 = vsel %vm1751, %v3498, %v3499
    %v3501 = vrot.slane %v3357, 5
    %v3502 = vrot.slane %v3501, 4
    %v3503 = vrot.slane %v3358, 5
    %v3504 = vsel %vm1751, %v3502, %v3503
    %v3505 = vrot.slane %v3503, 4
    %v3506 = vrot.slane %v3359, 5
    %v3507 = vsel %vm1751, %v3505, %v3506
    %v3508 = vrot.slane %v3360, 5
    %v3509 = vrot.slane %v3508, 4
    %v3510 = vrot.slane %v3361, 5
    %v3511 = vsel %vm1751, %v3509, %v3510
    %v3512 = vrot.slane %v3510, 4
    %v3513 = vrot.slane %v3362, 5
    %v3514 = vsel %vm1751, %v3512, %v3513
    %v3515 = vrot.slane %v3363, 5
    %v3516 = vrot.slane %v3515, 4
    %v3517 = vrot.slane %v3364, 5
    %v3518 = vsel %vm1751, %v3516, %v3517
    %v3519 = vrot.slane %v3517, 4
    %v3520 = vrot.slane %v3365, 5
    %v3521 = vsel %vm1751, %v3519, %v3520
    %v3522 = vrot.slane %v3366, 5
    %v3523 = vrot.slane %v3522, 4
    %v3524 = vrot.slane %v3367, 5
    %v3525 = vsel %vm1751, %v3523, %v3524
    %v3526 = vrot.slane %v3524, 4
    %v3527 = vrot.slane %v3368, 5
    %v3528 = vsel %vm1751, %v3526, %v3527
    %3561 = vst [vmem:[#allocation3 + $0x20] sm:$0xf] %v3420
    %3562 = vst [vmem:[#allocation3 + $0x44] sm:$0xf] %v3423
    %3563 = vst [vmem:[#allocation3 + $0x68] sm:$0xf] %v3427
    %3564 = vst [vmem:[#allocation3 + $0x8c] sm:$0xf] %v3430
    %3565 = vst [vmem:[#allocation3 + $0xb0] sm:$0xf] %v3434
    %3566 = vst [vmem:[#allocation3 + $0xd4] sm:$0xf] %v3437
    %3567 = vst [vmem:[#allocation3 + $0xf8] sm:$0xf] %v3441
    %3568 = vst [vmem:[#allocation3 + $0x11c] sm:$0xf] %v3444
    %3569 = vst [vmem:[#allocation3 + $0x140] sm:$0xf] %v3448
    %3570 = vst [vmem:[#allocation3 + $0x164] sm:$0xf] %v3451
    %3571 = vst [vmem:[#allocation3 + $0x188] sm:$0xf] %v3455
    %3572 = vst [vmem:[#allocation3 + $0x1ac] sm:$0xf] %v3458
    %3573 = vst [vmem:[#allocation3 + $0x1d0] sm:$0xf] %v3462
    %3574 = vst [vmem:[#allocation3 + $0x1f4] sm:$0xf] %v3465
    %3575 = vst [vmem:[#allocation3 + $0x218] sm:$0xf] %v3469
    %3576 = vst [vmem:[#allocation3 + $0x23c] sm:$0xf] %v3472
    %3577 = vst [vmem:[#allocation3 + $0x260] sm:$0xf] %v3476
    %3578 = vst [vmem:[#allocation3 + $0x284] sm:$0xf] %v3479
    %3579 = vst [vmem:[#allocation3 + $0x2a8] sm:$0xf] %v3483
    %3580 = vst [vmem:[#allocation3 + $0x2cc] sm:$0xf] %v3486
    %3581 = vst [vmem:[#allocation3 + $0x2f0] sm:$0xf] %v3490
    %3582 = vst [vmem:[#allocation3 + $0x314] sm:$0xf] %v3493
    %3583 = vst [vmem:[#allocation3 + $0x338] sm:$0xf] %v3497
    %3584 = vst [vmem:[#allocation3 + $0x35c] sm:$0xf] %v3500
    %3585 = vst [vmem:[#allocation3 + $0x380] sm:$0xf] %v3504
    %3586 = vst [vmem:[#allocation3 + $0x3a4] sm:$0xf] %v3507
    %3587 = vst [vmem:[#allocation3 + $0x3c8] sm:$0xf] %v3511
    %3588 = vst [vmem:[#allocation3 + $0x3ec] sm:$0xf] %v3514
    %3589 = vst [vmem:[#allocation3 + $0x410] sm:$0xf] %v3518
    %3590 = vst [vmem:[#allocation3 + $0x434] sm:$0xf] %v3521
    %3591 = vst [vmem:[#allocation3 + $0x458] sm:$0xf] %v3525
    %3592 = vst [vmem:[#allocation3 + $0x47c] sm:$0xf] %v3528
    %s3593 = scalar_lea.vmem [#allocation2], 216
    %v3594 = vld [vmem:[%s3593] sm:$0xf]
    %v3595 = vld [vmem:[%s3593 + $0x4] sm:$0xf]
    %v3596 = vld [vmem:[%s3593 + $0xc] sm:$0xf]
    %v3597 = vld [vmem:[%s3593 + $0x10] sm:$0xf]
    %v3598 = vld [vmem:[%s3593 + $0x18] sm:$0xf]
    %v3599 = vld [vmem:[%s3593 + $0x1c] sm:$0xf]
    %v3600 = vld [vmem:[%s3593 + $0x24] sm:$0xf]
    %v3601 = vld [vmem:[%s3593 + $0x28] sm:$0xf]
    %v3602 = vld [vmem:[%s3593 + $0x30] sm:$0xf]
    %v3603 = vld [vmem:[%s3593 + $0x34] sm:$0xf]
    %v3604 = vld [vmem:[%s3593 + $0x3c] sm:$0xf]
    %v3605 = vld [vmem:[%s3593 + $0x40] sm:$0xf]
    %v3606 = vld [vmem:[%s3593 + $0x48] sm:$0xf]
    %v3607 = vld [vmem:[%s3593 + $0x4c] sm:$0xf]
    %v3608 = vld [vmem:[%s3593 + $0x54] sm:$0xf]
    %v3609 = vld [vmem:[%s3593 + $0x58] sm:$0xf]
    %v3610 = vld [vmem:[%s3593 + $0x60] sm:$0xf]
    %v3611 = vld [vmem:[%s3593 + $0x64] sm:$0xf]
    %v3612 = vld [vmem:[%s3593 + $0x6c] sm:$0xf]
    %v3613 = vld [vmem:[%s3593 + $0x70] sm:$0xf]
    %v3614 = vld [vmem:[%s3593 + $0x78] sm:$0xf]
    %v3615 = vld [vmem:[%s3593 + $0x7c] sm:$0xf]
    %v3616 = vld [vmem:[%s3593 + $0x84] sm:$0xf]
    %v3617 = vld [vmem:[%s3593 + $0x88] sm:$0xf]
    %v3618 = vld [vmem:[%s3593 + $0x90] sm:$0xf]
    %v3619 = vld [vmem:[%s3593 + $0x94] sm:$0xf]
    %v3620 = vld [vmem:[%s3593 + $0x9c] sm:$0xf]
    %v3621 = vld [vmem:[%s3593 + $0xa0] sm:$0xf]
    %v3622 = vld [vmem:[%s3593 + $0xa8] sm:$0xf]
    %v3623 = vld [vmem:[%s3593 + $0xac] sm:$0xf]
    %v3624 = vld [vmem:[%s3593 + $0xb4] sm:$0xf]
    %v3625 = vld [vmem:[%s3593 + $0xb8] sm:$0xf]
    %3626 = vst [vmem:[#allocation3 + $0x480] sm:$0xf] %v3594
    %3627 = vst [vmem:[#allocation3 + $0x4a4] sm:$0xf] %v3595
    %3628 = vst [vmem:[#allocation3 + $0x4c8] sm:$0xf] %v3596
    %3629 = vst [vmem:[#allocation3 + $0x4ec] sm:$0xf] %v3597
    %3630 = vst [vmem:[#allocation3 + $0x510] sm:$0xf] %v3598
    %3631 = vst [vmem:[#allocation3 + $0x534] sm:$0xf] %v3599
    %3632 = vst [vmem:[#allocation3 + $0x558] sm:$0xf] %v3600
    %3633 = vst [vmem:[#allocation3 + $0x57c] sm:$0xf] %v3601
    %3634 = vst [vmem:[#allocation3 + $0x5a0] sm:$0xf] %v3602
    %3635 = vst [vmem:[#allocation3 + $0x5c4] sm:$0xf] %v3603
    %3636 = vst [vmem:[#allocation3 + $0x5e8] sm:$0xf] %v3604
    %3637 = vst [vmem:[#allocation3 + $0x60c] sm:$0xf] %v3605
    %3638 = vst [vmem:[#allocation3 + $0x630] sm:$0xf] %v3606
    %3639 = vst [vmem:[#allocation3 + $0x654] sm:$0xf] %v3607
    %3640 = vst [vmem:[#allocation3 + $0x678] sm:$0xf] %v3608
    %3641 = vst [vmem:[#allocation3 + $0x69c] sm:$0xf] %v3609
    %3642 = vst [vmem:[#allocation3 + $0x6c0] sm:$0xf] %v3610
    %3643 = vst [vmem:[#allocation3 + $0x6e4] sm:$0xf] %v3611
    %3644 = vst [vmem:[#allocation3 + $0x708] sm:$0xf] %v3612
    %3645 = vst [vmem:[#allocation3 + $0x72c] sm:$0xf] %v3613
    %3646 = vst [vmem:[#allocation3 + $0x750] sm:$0xf] %v3614
    %3647 = vst [vmem:[#allocation3 + $0x774] sm:$0xf] %v3615
    %3648 = vst [vmem:[#allocation3 + $0x798] sm:$0xf] %v3616
    %3649 = vst [vmem:[#allocation3 + $0x7bc] sm:$0xf] %v3617
    %3650 = vst [vmem:[#allocation3 + $0x7e0] sm:$0xf] %v3618
    %3651 = vst [vmem:[#allocation3 + $0x804] sm:$0xf] %v3619
    %3652 = vst [vmem:[#allocation3 + $0x828] sm:$0xf] %v3620
    %3653 = vst [vmem:[#allocation3 + $0x84c] sm:$0xf] %v3621
    %3654 = vst [vmem:[#allocation3 + $0x870] sm:$0xf] %v3622
    %3655 = vst [vmem:[#allocation3 + $0x894] sm:$0xf] %v3623
    %3656 = vst [vmem:[#allocation3 + $0x8b8] sm:$0xf] %v3624
    %3657 = vst [vmem:[#allocation3 + $0x8dc] sm:$0xf] %v3625
    %v3658 = vld [vmem:[%s3593] sm:$0xf]
    %v3659 = vld [vmem:[%s3593 + $0x4] sm:$0xf]
    %v3660 = vld [vmem:[%s3593 + $0x8] sm:$0x1]
    %v3661 = vld [vmem:[%s3593 + $0xc] sm:$0xf]
    %v3662 = vld [vmem:[%s3593 + $0x10] sm:$0xf]
    %v3663 = vld [vmem:[%s3593 + $0x14] sm:$0x1]
    %v3664 = vld [vmem:[%s3593 + $0x18] sm:$0xf]
    %v3665 = vld [vmem:[%s3593 + $0x1c] sm:$0xf]
    %v3666 = vld [vmem:[%s3593 + $0x20] sm:$0x1]
    %v3667 = vld [vmem:[%s3593 + $0x24] sm:$0xf]
    %v3668 = vld [vmem:[%s3593 + $0x28] sm:$0xf]
    %v3669 = vld [vmem:[%s3593 + $0x2c] sm:$0x1]
    %v3670 = vld [vmem:[%s3593 + $0x30] sm:$0xf]
    %v3671 = vld [vmem:[%s3593 + $0x34] sm:$0xf]
    %v3672 = vld [vmem:[%s3593 + $0x38] sm:$0x1]
    %v3673 = vld [vmem:[%s3593 + $0x3c] sm:$0xf]
    %v3674 = vld [vmem:[%s3593 + $0x40] sm:$0xf]
    %v3675 = vld [vmem:[%s3593 + $0x44] sm:$0x1]
    %v3676 = vld [vmem:[%s3593 + $0x48] sm:$0xf]
    %v3677 = vld [vmem:[%s3593 + $0x4c] sm:$0xf]
    %v3678 = vld [vmem:[%s3593 + $0x50] sm:$0x1]
    %v3679 = vld [vmem:[%s3593 + $0x54] sm:$0xf]
    %v3680 = vld [vmem:[%s3593 + $0x58] sm:$0xf]
    %v3681 = vld [vmem:[%s3593 + $0x5c] sm:$0x1]
    %v3682 = vld [vmem:[%s3593 + $0x60] sm:$0xf]
    %v3683 = vld [vmem:[%s3593 + $0x64] sm:$0xf]
    %v3684 = vld [vmem:[%s3593 + $0x68] sm:$0x1]
    %v3685 = vld [vmem:[%s3593 + $0x6c] sm:$0xf]
    %v3686 = vld [vmem:[%s3593 + $0x70] sm:$0xf]
    %v3687 = vld [vmem:[%s3593 + $0x74] sm:$0x1]
    %v3688 = vld [vmem:[%s3593 + $0x78] sm:$0xf]
    %v3689 = vld [vmem:[%s3593 + $0x7c] sm:$0xf]
    %v3690 = vld [vmem:[%s3593 + $0x80] sm:$0x1]
    %v3691 = vld [vmem:[%s3593 + $0x84] sm:$0xf]
    %v3692 = vld [vmem:[%s3593 + $0x88] sm:$0xf]
    %v3693 = vld [vmem:[%s3593 + $0x8c] sm:$0x1]
    %v3694 = vld [vmem:[%s3593 + $0x90] sm:$0xf]
    %v3695 = vld [vmem:[%s3593 + $0x94] sm:$0xf]
    %v3696 = vld [vmem:[%s3593 + $0x98] sm:$0x1]
    %v3697 = vld [vmem:[%s3593 + $0x9c] sm:$0xf]
    %v3698 = vld [vmem:[%s3593 + $0xa0] sm:$0xf]
    %v3699 = vld [vmem:[%s3593 + $0xa4] sm:$0x1]
    %v3700 = vld [vmem:[%s3593 + $0xa8] sm:$0xf]
    %v3701 = vld [vmem:[%s3593 + $0xac] sm:$0xf]
    %v3702 = vld [vmem:[%s3593 + $0xb0] sm:$0x1]
    %v3703 = vld [vmem:[%s3593 + $0xb4] sm:$0xf]
    %v3704 = vld [vmem:[%s3593 + $0xb8] sm:$0xf]
    %v3705 = vld [vmem:[%s3593 + $0xbc] sm:$0x1]
    %v3707 = vshrl.u32 %v3658, 16
    %v3709 = vrot.slane %v3707, 4
    %v3710 = vshll.u32 %v3658, 16
    %v3712 = vrot.slane %v3710, 5
    %v3713 = vor.u32 %v3709, %v3712
    %v3714 = vrot.slane %v3713, 4
    %v3716 = vshll.u32 %v3659, 16
    %v3718 = vrot.slane %v3716, 5
    %v3719 = vsel %vm1204, %v3714, %v3718
    %v3720 = vshrl.u32 %v3659, 16
    %v3722 = vrot.slane %v3720, 4
    %v3723 = vor.u32 %v3722, %v3718
    %v3724 = vrot.slane %v3723, 4
    %v3726 = vshll.u32 %v3660, 16
    %v3728 = vrot.slane %v3726, 5
    %v3729 = vsel %vm1204, %v3724, %v3728
    %v3731 = vshrl.u32 %v3661, 16
    %v3733 = vrot.slane %v3731, 4
    %v3734 = vshll.u32 %v3661, 16
    %v3736 = vrot.slane %v3734, 5
    %v3737 = vor.u32 %v3733, %v3736
    %v3738 = vrot.slane %v3737, 4
    %v3740 = vshll.u32 %v3662, 16
    %v3742 = vrot.slane %v3740, 5
    %v3743 = vsel %vm1204, %v3738, %v3742
    %v3744 = vshrl.u32 %v3662, 16
    %v3746 = vrot.slane %v3744, 4
    %v3747 = vor.u32 %v3746, %v3742
    %v3748 = vrot.slane %v3747, 4
    %v3750 = vshll.u32 %v3663, 16
    %v3752 = vrot.slane %v3750, 5
    %v3753 = vsel %vm1204, %v3748, %v3752
    %v3755 = vshrl.u32 %v3664, 16
    %v3757 = vrot.slane %v3755, 4
    %v3758 = vshll.u32 %v3664, 16
    %v3760 = vrot.slane %v3758, 5
    %v3761 = vor.u32 %v3757, %v3760
    %v3762 = vrot.slane %v3761, 4
    %v3764 = vshll.u32 %v3665, 16
    %v3766 = vrot.slane %v3764, 5
    %v3767 = vsel %vm1204, %v3762, %v3766
    %v3768 = vshrl.u32 %v3665, 16
    %v3770 = vrot.slane %v3768, 4
    %v3771 = vor.u32 %v3770, %v3766
    %v3772 = vrot.slane %v3771, 4
    %v3774 = vshll.u32 %v3666, 16
    %v3776 = vrot.slane %v3774, 5
    %v3777 = vsel %vm1204, %v3772, %v3776
    %v3779 = vshrl.u32 %v3667, 16
    %v3781 = vrot.slane %v3779, 4
    %v3782 = vshll.u32 %v3667, 16
    %v3784 = vrot.slane %v3782, 5
    %v3785 = vor.u32 %v3781, %v3784
    %v3786 = vrot.slane %v3785, 4
    %v3788 = vshll.u32 %v3668, 16
    %v3790 = vrot.slane %v3788, 5
    %v3791 = vsel %vm1204, %v3786, %v3790
    %v3792 = vshrl.u32 %v3668, 16
    %v3794 = vrot.slane %v3792, 4
    %v3795 = vor.u32 %v3794, %v3790
    %v3796 = vrot.slane %v3795, 4
    %v3798 = vshll.u32 %v3669, 16
    %v3800 = vrot.slane %v3798, 5
    %v3801 = vsel %vm1204, %v3796, %v3800
    %v3803 = vshrl.u32 %v3670, 16
    %v3805 = vrot.slane %v3803, 4
    %v3806 = vshll.u32 %v3670, 16
    %v3808 = vrot.slane %v3806, 5
    %v3809 = vor.u32 %v3805, %v3808
    %v3810 = vrot.slane %v3809, 4
    %v3812 = vshll.u32 %v3671, 16
    %v3814 = vrot.slane %v3812, 5
    %v3815 = vsel %vm1204, %v3810, %v3814
    %v3816 = vshrl.u32 %v3671, 16
    %v3818 = vrot.slane %v3816, 4
    %v3819 = vor.u32 %v3818, %v3814
    %v3820 = vrot.slane %v3819, 4
    %v3822 = vshll.u32 %v3672, 16
    %v3824 = vrot.slane %v3822, 5
    %v3825 = vsel %vm1204, %v3820, %v3824
    %v3827 = vshrl.u32 %v3673, 16
    %v3829 = vrot.slane %v3827, 4
    %v3830 = vshll.u32 %v3673, 16
    %v3832 = vrot.slane %v3830, 5
    %v3833 = vor.u32 %v3829, %v3832
    %v3834 = vrot.slane %v3833, 4
    %v3836 = vshll.u32 %v3674, 16
    %v3838 = vrot.slane %v3836, 5
    %v3839 = vsel %vm1204, %v3834, %v3838
    %v3840 = vshrl.u32 %v3674, 16
    %v3842 = vrot.slane %v3840, 4
    %v3843 = vor.u32 %v3842, %v3838
    %v3844 = vrot.slane %v3843, 4
    %v3846 = vshll.u32 %v3675, 16
    %v3848 = vrot.slane %v3846, 5
    %v3849 = vsel %vm1204, %v3844, %v3848
    %v3851 = vshrl.u32 %v3676, 16
    %v3853 = vrot.slane %v3851, 4
    %v3854 = vshll.u32 %v3676, 16
    %v3856 = vrot.slane %v3854, 5
    %v3857 = vor.u32 %v3853, %v3856
    %v3858 = vrot.slane %v3857, 4
    %v3860 = vshll.u32 %v3677, 16
    %v3862 = vrot.slane %v3860, 5
    %v3863 = vsel %vm1204, %v3858, %v3862
    %v3864 = vshrl.u32 %v3677, 16
    %v3866 = vrot.slane %v3864, 4
    %v3867 = vor.u32 %v3866, %v3862
    %v3868 = vrot.slane %v3867, 4
    %v3870 = vshll.u32 %v3678, 16
    %v3872 = vrot.slane %v3870, 5
    %v3873 = vsel %vm1204, %v3868, %v3872
    %v3875 = vshrl.u32 %v3679, 16
    %v3877 = vrot.slane %v3875, 4
    %v3878 = vshll.u32 %v3679, 16
    %v3880 = vrot.slane %v3878, 5
    %v3881 = vor.u32 %v3877, %v3880
    %v3882 = vrot.slane %v3881, 4
    %v3884 = vshll.u32 %v3680, 16
    %v3886 = vrot.slane %v3884, 5
    %v3887 = vsel %vm1204, %v3882, %v3886
    %v3888 = vshrl.u32 %v3680, 16
    %v3890 = vrot.slane %v3888, 4
    %v3891 = vor.u32 %v3890, %v3886
    %v3892 = vrot.slane %v3891, 4
    %v3894 = vshll.u32 %v3681, 16
    %v3896 = vrot.slane %v3894, 5
    %v3897 = vsel %vm1204, %v3892, %v3896
    %v3899 = vshrl.u32 %v3682, 16
    %v3901 = vrot.slane %v3899, 4
    %v3902 = vshll.u32 %v3682, 16
    %v3904 = vrot.slane %v3902, 5
    %v3905 = vor.u32 %v3901, %v3904
    %v3906 = vrot.slane %v3905, 4
    %v3908 = vshll.u32 %v3683, 16
    %v3910 = vrot.slane %v3908, 5
    %v3911 = vsel %vm1204, %v3906, %v3910
    %v3912 = vshrl.u32 %v3683, 16
    %v3914 = vrot.slane %v3912, 4
    %v3915 = vor.u32 %v3914, %v3910
    %v3916 = vrot.slane %v3915, 4
    %v3918 = vshll.u32 %v3684, 16
    %v3920 = vrot.slane %v3918, 5
    %v3921 = vsel %vm1204, %v3916, %v3920
    %v3923 = vshrl.u32 %v3685, 16
    %v3925 = vrot.slane %v3923, 4
    %v3926 = vshll.u32 %v3685, 16
    %v3928 = vrot.slane %v3926, 5
    %v3929 = vor.u32 %v3925, %v3928
    %v3930 = vrot.slane %v3929, 4
    %v3932 = vshll.u32 %v3686, 16
    %v3934 = vrot.slane %v3932, 5
    %v3935 = vsel %vm1204, %v3930, %v3934
    %v3936 = vshrl.u32 %v3686, 16
    %v3938 = vrot.slane %v3936, 4
    %v3939 = vor.u32 %v3938, %v3934
    %v3940 = vrot.slane %v3939, 4
    %v3942 = vshll.u32 %v3687, 16
    %v3944 = vrot.slane %v3942, 5
    %v3945 = vsel %vm1204, %v3940, %v3944
    %v3947 = vshrl.u32 %v3688, 16
    %v3949 = vrot.slane %v3947, 4
    %v3950 = vshll.u32 %v3688, 16
    %v3952 = vrot.slane %v3950, 5
    %v3953 = vor.u32 %v3949, %v3952
    %v3954 = vrot.slane %v3953, 4
    %v3956 = vshll.u32 %v3689, 16
    %v3958 = vrot.slane %v3956, 5
    %v3959 = vsel %vm1204, %v3954, %v3958
    %v3960 = vshrl.u32 %v3689, 16
    %v3962 = vrot.slane %v3960, 4
    %v3963 = vor.u32 %v3962, %v3958
    %v3964 = vrot.slane %v3963, 4
    %v3966 = vshll.u32 %v3690, 16
    %v3968 = vrot.slane %v3966, 5
    %v3969 = vsel %vm1204, %v3964, %v3968
    %v3971 = vshrl.u32 %v3691, 16
    %v3973 = vrot.slane %v3971, 4
    %v3974 = vshll.u32 %v3691, 16
    %v3976 = vrot.slane %v3974, 5
    %v3977 = vor.u32 %v3973, %v3976
    %v3978 = vrot.slane %v3977, 4
    %v3980 = vshll.u32 %v3692, 16
    %v3982 = vrot.slane %v3980, 5
    %v3983 = vsel %vm1204, %v3978, %v3982
    %v3984 = vshrl.u32 %v3692, 16
    %v3986 = vrot.slane %v3984, 4
    %v3987 = vor.u32 %v3986, %v3982
    %v3988 = vrot.slane %v3987, 4
    %v3990 = vshll.u32 %v3693, 16
    %v3992 = vrot.slane %v3990, 5
    %v3993 = vsel %vm1204, %v3988, %v3992
    %v3995 = vshrl.u32 %v3694, 16
    %v3997 = vrot.slane %v3995, 4
    %v3998 = vshll.u32 %v3694, 16
    %v4000 = vrot.slane %v3998, 5
    %v4001 = vor.u32 %v3997, %v4000
    %v4002 = vrot.slane %v4001, 4
    %v4004 = vshll.u32 %v3695, 16
    %v4006 = vrot.slane %v4004, 5
    %v4007 = vsel %vm1204, %v4002, %v4006
    %v4008 = vshrl.u32 %v3695, 16
    %v4010 = vrot.slane %v4008, 4
    %v4011 = vor.u32 %v4010, %v4006
    %v4012 = vrot.slane %v4011, 4
    %v4014 = vshll.u32 %v3696, 16
    %v4016 = vrot.slane %v4014, 5
    %v4017 = vsel %vm1204, %v4012, %v4016
    %v4019 = vshrl.u32 %v3697, 16
    %v4021 = vrot.slane %v4019, 4
    %v4022 = vshll.u32 %v3697, 16
    %v4024 = vrot.slane %v4022, 5
    %v4025 = vor.u32 %v4021, %v4024
    %v4026 = vrot.slane %v4025, 4
    %v4028 = vshll.u32 %v3698, 16
    %v4030 = vrot.slane %v4028, 5
    %v4031 = vsel %vm1204, %v4026, %v4030
    %v4032 = vshrl.u32 %v3698, 16
    %v4034 = vrot.slane %v4032, 4
    %v4035 = vor.u32 %v4034, %v4030
    %v4036 = vrot.slane %v4035, 4
    %v4038 = vshll.u32 %v3699, 16
    %v4040 = vrot.slane %v4038, 5
    %v4041 = vsel %vm1204, %v4036, %v4040
    %v4043 = vshrl.u32 %v3700, 16
    %v4045 = vrot.slane %v4043, 4
    %v4046 = vshll.u32 %v3700, 16
    %v4048 = vrot.slane %v4046, 5
    %v4049 = vor.u32 %v4045, %v4048
    %v4050 = vrot.slane %v4049, 4
    %v4052 = vshll.u32 %v3701, 16
    %v4054 = vrot.slane %v4052, 5
    %v4055 = vsel %vm1204, %v4050, %v4054
    %v4056 = vshrl.u32 %v3701, 16
    %v4058 = vrot.slane %v4056, 4
    %v4059 = vor.u32 %v4058, %v4054
    %v4060 = vrot.slane %v4059, 4
    %v4062 = vshll.u32 %v3702, 16
    %v4064 = vrot.slane %v4062, 5
    %v4065 = vsel %vm1204, %v4060, %v4064
    %v4067 = vshrl.u32 %v3703, 16
    %v4069 = vrot.slane %v4067, 4
    %v4070 = vshll.u32 %v3703, 16
    %v4072 = vrot.slane %v4070, 5
    %v4073 = vor.u32 %v4069, %v4072
    %v4074 = vrot.slane %v4073, 4
    %v4076 = vshll.u32 %v3704, 16
    %v4078 = vrot.slane %v4076, 5
    %v4079 = vsel %vm1204, %v4074, %v4078
    %v4080 = vshrl.u32 %v3704, 16
    %v4082 = vrot.slane %v4080, 4
    %v4083 = vor.u32 %v4082, %v4078
    %v4084 = vrot.slane %v4083, 4
    %v4086 = vshll.u32 %v3705, 16
    %v4088 = vrot.slane %v4086, 5
    %v4089 = vsel %vm1204, %v4084, %v4088
    %4122 = vst [vmem:[#allocation3 + $0x484] sm:$0xf] %v3719
    %4123 = vst [vmem:[#allocation3 + $0x4a8] sm:$0xf] %v3729
    %4124 = vst [vmem:[#allocation3 + $0x4cc] sm:$0xf] %v3743
    %4125 = vst [vmem:[#allocation3 + $0x4f0] sm:$0xf] %v3753
    %4126 = vst [vmem:[#allocation3 + $0x514] sm:$0xf] %v3767
    %4127 = vst [vmem:[#allocation3 + $0x538] sm:$0xf] %v3777
    %4128 = vst [vmem:[#allocation3 + $0x55c] sm:$0xf] %v3791
    %4129 = vst [vmem:[#allocation3 + $0x580] sm:$0xf] %v3801
    %4130 = vst [vmem:[#allocation3 + $0x5a4] sm:$0xf] %v3815
    %4131 = vst [vmem:[#allocation3 + $0x5c8] sm:$0xf] %v3825
    %4132 = vst [vmem:[#allocation3 + $0x5ec] sm:$0xf] %v3839
    %4133 = vst [vmem:[#allocation3 + $0x610] sm:$0xf] %v3849
    %4134 = vst [vmem:[#allocation3 + $0x634] sm:$0xf] %v3863
    %4135 = vst [vmem:[#allocation3 + $0x658] sm:$0xf] %v3873
    %4136 = vst [vmem:[#allocation3 + $0x67c] sm:$0xf] %v3887
    %4137 = vst [vmem:[#allocation3 + $0x6a0] sm:$0xf] %v3897
    %4138 = vst [vmem:[#allocation3 + $0x6c4] sm:$0xf] %v3911
    %4139 = vst [vmem:[#allocation3 + $0x6e8] sm:$0xf] %v3921
    %4140 = vst [vmem:[#allocation3 + $0x70c] sm:$0xf] %v3935
    %4141 = vst [vmem:[#allocation3 + $0x730] sm:$0xf] %v3945
    %4142 = vst [vmem:[#allocation3 + $0x754] sm:$0xf] %v3959
    %4143 = vst [vmem:[#allocation3 + $0x778] sm:$0xf] %v3969
    %4144 = vst [vmem:[#allocation3 + $0x79c] sm:$0xf] %v3983
    %4145 = vst [vmem:[#allocation3 + $0x7c0] sm:$0xf] %v3993
    %4146 = vst [vmem:[#allocation3 + $0x7e4] sm:$0xf] %v4007
    %4147 = vst [vmem:[#allocation3 + $0x808] sm:$0xf] %v4017
    %4148 = vst [vmem:[#allocation3 + $0x82c] sm:$0xf] %v4031
    %4149 = vst [vmem:[#allocation3 + $0x850] sm:$0xf] %v4041
    %4150 = vst [vmem:[#allocation3 + $0x874] sm:$0xf] %v4055
    %4151 = vst [vmem:[#allocation3 + $0x898] sm:$0xf] %v4065
    %4152 = vst [vmem:[#allocation3 + $0x8bc] sm:$0xf] %v4079
    %4153 = vst [vmem:[#allocation3 + $0x8e0] sm:$0xf] %v4089
    %v4154 = vld [vmem:[%s3593] sm:$0xe]
    %v4155 = vld [vmem:[%s3593 + $0x4] sm:$0xf]
    %v4156 = vld [vmem:[%s3593 + $0x8] sm:$0x1]
    %v4157 = vld [vmem:[%s3593 + $0xc] sm:$0xe]
    %v4158 = vld [vmem:[%s3593 + $0x10] sm:$0xf]
    %v4159 = vld [vmem:[%s3593 + $0x14] sm:$0x1]
    %v4160 = vld [vmem:[%s3593 + $0x18] sm:$0xe]
    %v4161 = vld [vmem:[%s3593 + $0x1c] sm:$0xf]
    %v4162 = vld [vmem:[%s3593 + $0x20] sm:$0x1]
    %v4163 = vld [vmem:[%s3593 + $0x24] sm:$0xe]
    %v4164 = vld [vmem:[%s3593 + $0x28] sm:$0xf]
    %v4165 = vld [vmem:[%s3593 + $0x2c] sm:$0x1]
    %v4166 = vld [vmem:[%s3593 + $0x30] sm:$0xe]
    %v4167 = vld [vmem:[%s3593 + $0x34] sm:$0xf]
    %v4168 = vld [vmem:[%s3593 + $0x38] sm:$0x1]
    %v4169 = vld [vmem:[%s3593 + $0x3c] sm:$0xe]
    %v4170 = vld [vmem:[%s3593 + $0x40] sm:$0xf]
    %v4171 = vld [vmem:[%s3593 + $0x44] sm:$0x1]
    %v4172 = vld [vmem:[%s3593 + $0x48] sm:$0xe]
    %v4173 = vld [vmem:[%s3593 + $0x4c] sm:$0xf]
    %v4174 = vld [vmem:[%s3593 + $0x50] sm:$0x1]
    %v4175 = vld [vmem:[%s3593 + $0x54] sm:$0xe]
    %v4176 = vld [vmem:[%s3593 + $0x58] sm:$0xf]
    %v4177 = vld [vmem:[%s3593 + $0x5c] sm:$0x1]
    %v4178 = vld [vmem:[%s3593 + $0x60] sm:$0xe]
    %v4179 = vld [vmem:[%s3593 + $0x64] sm:$0xf]
    %v4180 = vld [vmem:[%s3593 + $0x68] sm:$0x1]
    %v4181 = vld [vmem:[%s3593 + $0x6c] sm:$0xe]
    %v4182 = vld [vmem:[%s3593 + $0x70] sm:$0xf]
    %v4183 = vld [vmem:[%s3593 + $0x74] sm:$0x1]
    %v4184 = vld [vmem:[%s3593 + $0x78] sm:$0xe]
    %v4185 = vld [vmem:[%s3593 + $0x7c] sm:$0xf]
    %v4186 = vld [vmem:[%s3593 + $0x80] sm:$0x1]
    %v4187 = vld [vmem:[%s3593 + $0x84] sm:$0xe]
    %v4188 = vld [vmem:[%s3593 + $0x88] sm:$0xf]
    %v4189 = vld [vmem:[%s3593 + $0x8c] sm:$0x1]
    %v4190 = vld [vmem:[%s3593 + $0x90] sm:$0xe]
    %v4191 = vld [vmem:[%s3593 + $0x94] sm:$0xf]
    %v4192 = vld [vmem:[%s3593 + $0x98] sm:$0x1]
    %v4193 = vld [vmem:[%s3593 + $0x9c] sm:$0xe]
    %v4194 = vld [vmem:[%s3593 + $0xa0] sm:$0xf]
    %v4195 = vld [vmem:[%s3593 + $0xa4] sm:$0x1]
    %v4196 = vld [vmem:[%s3593 + $0xa8] sm:$0xe]
    %v4197 = vld [vmem:[%s3593 + $0xac] sm:$0xf]
    %v4198 = vld [vmem:[%s3593 + $0xb0] sm:$0x1]
    %v4199 = vld [vmem:[%s3593 + $0xb4] sm:$0xe]
    %v4200 = vld [vmem:[%s3593 + $0xb8] sm:$0xf]
    %v4201 = vld [vmem:[%s3593 + $0xbc] sm:$0x1]
    %v4250 = vrot.slane %v4154, 5
    %v4251 = vrot.slane %v4250, 4
    %v4252 = vrot.slane %v4155, 5
    %v4253 = vsel %vm1751, %v4251, %v4252
    %v4254 = vrot.slane %v4252, 4
    %v4255 = vrot.slane %v4156, 5
    %v4256 = vsel %vm1751, %v4254, %v4255
    %v4257 = vrot.slane %v4157, 5
    %v4258 = vrot.slane %v4257, 4
    %v4259 = vrot.slane %v4158, 5
    %v4260 = vsel %vm1751, %v4258, %v4259
    %v4261 = vrot.slane %v4259, 4
    %v4262 = vrot.slane %v4159, 5
    %v4263 = vsel %vm1751, %v4261, %v4262
    %v4264 = vrot.slane %v4160, 5
    %v4265 = vrot.slane %v4264, 4
    %v4266 = vrot.slane %v4161, 5
    %v4267 = vsel %vm1751, %v4265, %v4266
    %v4268 = vrot.slane %v4266, 4
    %v4269 = vrot.slane %v4162, 5
    %v4270 = vsel %vm1751, %v4268, %v4269
    %v4271 = vrot.slane %v4163, 5
    %v4272 = vrot.slane %v4271, 4
    %v4273 = vrot.slane %v4164, 5
    %v4274 = vsel %vm1751, %v4272, %v4273
    %v4275 = vrot.slane %v4273, 4
    %v4276 = vrot.slane %v4165, 5
    %v4277 = vsel %vm1751, %v4275, %v4276
    %v4278 = vrot.slane %v4166, 5
    %v4279 = vrot.slane %v4278, 4
    %v4280 = vrot.slane %v4167, 5
    %v4281 = vsel %vm1751, %v4279, %v4280
    %v4282 = vrot.slane %v4280, 4
    %v4283 = vrot.slane %v4168, 5
    %v4284 = vsel %vm1751, %v4282, %v4283
    %v4285 = vrot.slane %v4169, 5
    %v4286 = vrot.slane %v4285, 4
    %v4287 = vrot.slane %v4170, 5
    %v4288 = vsel %vm1751, %v4286, %v4287
    %v4289 = vrot.slane %v4287, 4
    %v4290 = vrot.slane %v4171, 5
    %v4291 = vsel %vm1751, %v4289, %v4290
    %v4292 = vrot.slane %v4172, 5
    %v4293 = vrot.slane %v4292, 4
    %v4294 = vrot.slane %v4173, 5
    %v4295 = vsel %vm1751, %v4293, %v4294
    %v4296 = vrot.slane %v4294, 4
    %v4297 = vrot.slane %v4174, 5
    %v4298 = vsel %vm1751, %v4296, %v4297
    %v4299 = vrot.slane %v4175, 5
    %v4300 = vrot.slane %v4299, 4
    %v4301 = vrot.slane %v4176, 5
    %v4302 = vsel %vm1751, %v4300, %v4301
    %v4303 = vrot.slane %v4301, 4
    %v4304 = vrot.slane %v4177, 5
    %v4305 = vsel %vm1751, %v4303, %v4304
    %v4306 = vrot.slane %v4178, 5
    %v4307 = vrot.slane %v4306, 4
    %v4308 = vrot.slane %v4179, 5
    %v4309 = vsel %vm1751, %v4307, %v4308
    %v4310 = vrot.slane %v4308, 4
    %v4311 = vrot.slane %v4180, 5
    %v4312 = vsel %vm1751, %v4310, %v4311
    %v4313 = vrot.slane %v4181, 5
    %v4314 = vrot.slane %v4313, 4
    %v4315 = vrot.slane %v4182, 5
    %v4316 = vsel %vm1751, %v4314, %v4315
    %v4317 = vrot.slane %v4315, 4
    %v4318 = vrot.slane %v4183, 5
    %v4319 = vsel %vm1751, %v4317, %v4318
    %v4320 = vrot.slane %v4184, 5
    %v4321 = vrot.slane %v4320, 4
    %v4322 = vrot.slane %v4185, 5
    %v4323 = vsel %vm1751, %v4321, %v4322
    %v4324 = vrot.slane %v4322, 4
    %v4325 = vrot.slane %v4186, 5
    %v4326 = vsel %vm1751, %v4324, %v4325
    %v4327 = vrot.slane %v4187, 5
    %v4328 = vrot.slane %v4327, 4
    %v4329 = vrot.slane %v4188, 5
    %v4330 = vsel %vm1751, %v4328, %v4329
    %v4331 = vrot.slane %v4329, 4
    %v4332 = vrot.slane %v4189, 5
    %v4333 = vsel %vm1751, %v4331, %v4332
    %v4334 = vrot.slane %v4190, 5
    %v4335 = vrot.slane %v4334, 4
    %v4336 = vrot.slane %v4191, 5
    %v4337 = vsel %vm1751, %v4335, %v4336
    %v4338 = vrot.slane %v4336, 4
    %v4339 = vrot.slane %v4192, 5
    %v4340 = vsel %vm1751, %v4338, %v4339
    %v4341 = vrot.slane %v4193, 5
    %v4342 = vrot.slane %v4341, 4
    %v4343 = vrot.slane %v4194, 5
    %v4344 = vsel %vm1751, %v4342, %v4343
    %v4345 = vrot.slane %v4343, 4
    %v4346 = vrot.slane %v4195, 5
    %v4347 = vsel %vm1751, %v4345, %v4346
    %v4348 = vrot.slane %v4196, 5
    %v4349 = vrot.slane %v4348, 4
    %v4350 = vrot.slane %v4197, 5
    %v4351 = vsel %vm1751, %v4349, %v4350
    %v4352 = vrot.slane %v4350, 4
    %v4353 = vrot.slane %v4198, 5
    %v4354 = vsel %vm1751, %v4352, %v4353
    %v4355 = vrot.slane %v4199, 5
    %v4356 = vrot.slane %v4355, 4
    %v4357 = vrot.slane %v4200, 5
    %v4358 = vsel %vm1751, %v4356, %v4357
    %v4359 = vrot.slane %v4357, 4
    %v4360 = vrot.slane %v4201, 5
    %v4361 = vsel %vm1751, %v4359, %v4360
    %4394 = vst [vmem:[#allocation3 + $0x488] sm:$0xf] %v4253
    %4395 = vst [vmem:[#allocation3 + $0x4ac] sm:$0xf] %v4256
    %4396 = vst [vmem:[#allocation3 + $0x4d0] sm:$0xf] %v4260
    %4397 = vst [vmem:[#allocation3 + $0x4f4] sm:$0xf] %v4263
    %4398 = vst [vmem:[#allocation3 + $0x518] sm:$0xf] %v4267
    %4399 = vst [vmem:[#allocation3 + $0x53c] sm:$0xf] %v4270
    %4400 = vst [vmem:[#allocation3 + $0x560] sm:$0xf] %v4274
    %4401 = vst [vmem:[#allocation3 + $0x584] sm:$0xf] %v4277
    %4402 = vst [vmem:[#allocation3 + $0x5a8] sm:$0xf] %v4281
    %4403 = vst [vmem:[#allocation3 + $0x5cc] sm:$0xf] %v4284
    %4404 = vst [vmem:[#allocation3 + $0x5f0] sm:$0xf] %v4288
    %4405 = vst [vmem:[#allocation3 + $0x614] sm:$0xf] %v4291
    %4406 = vst [vmem:[#allocation3 + $0x638] sm:$0xf] %v4295
    %4407 = vst [vmem:[#allocation3 + $0x65c] sm:$0xf] %v4298
    %4408 = vst [vmem:[#allocation3 + $0x680] sm:$0xf] %v4302
    %4409 = vst [vmem:[#allocation3 + $0x6a4] sm:$0xf] %v4305
    %4410 = vst [vmem:[#allocation3 + $0x6c8] sm:$0xf] %v4309
    %4411 = vst [vmem:[#allocation3 + $0x6ec] sm:$0xf] %v4312
    %4412 = vst [vmem:[#allocation3 + $0x710] sm:$0xf] %v4316
    %4413 = vst [vmem:[#allocation3 + $0x734] sm:$0xf] %v4319
    %4414 = vst [vmem:[#allocation3 + $0x758] sm:$0xf] %v4323
    %4415 = vst [vmem:[#allocation3 + $0x77c] sm:$0xf] %v4326
    %4416 = vst [vmem:[#allocation3 + $0x7a0] sm:$0xf] %v4330
    %4417 = vst [vmem:[#allocation3 + $0x7c4] sm:$0xf] %v4333
    %4418 = vst [vmem:[#allocation3 + $0x7e8] sm:$0xf] %v4337
    %4419 = vst [vmem:[#allocation3 + $0x80c] sm:$0xf] %v4340
    %4420 = vst [vmem:[#allocation3 + $0x830] sm:$0xf] %v4344
    %4421 = vst [vmem:[#allocation3 + $0x854] sm:$0xf] %v4347
    %4422 = vst [vmem:[#allocation3 + $0x878] sm:$0xf] %v4351
    %4423 = vst [vmem:[#allocation3 + $0x89c] sm:$0xf] %v4354
    %4424 = vst [vmem:[#allocation3 + $0x8c0] sm:$0xf] %v4358
    %4425 = vst [vmem:[#allocation3 + $0x8e4] sm:$0xf] %v4361
    %s4426 = scalar_lea.vmem [#allocation2], 228
    %v4427 = vld [vmem:[%s4426] sm:$0xf]
    %v4428 = vld [vmem:[%s4426 + $0x4] sm:$0xf]
    %v4429 = vld [vmem:[%s4426 + $0xc] sm:$0xf]
    %v4430 = vld [vmem:[%s4426 + $0x10] sm:$0xf]
    %v4431 = vld [vmem:[%s4426 + $0x18] sm:$0xf]
    %v4432 = vld [vmem:[%s4426 + $0x1c] sm:$0xf]
    %v4433 = vld [vmem:[%s4426 + $0x24] sm:$0xf]
    %v4434 = vld [vmem:[%s4426 + $0x28] sm:$0xf]
    %v4435 = vld [vmem:[%s4426 + $0x30] sm:$0xf]
    %v4436 = vld [vmem:[%s4426 + $0x34] sm:$0xf]
    %v4437 = vld [vmem:[%s4426 + $0x3c] sm:$0xf]
    %v4438 = vld [vmem:[%s4426 + $0x40] sm:$0xf]
    %v4439 = vld [vmem:[%s4426 + $0x48] sm:$0xf]
    %v4440 = vld [vmem:[%s4426 + $0x4c] sm:$0xf]
    %v4441 = vld [vmem:[%s4426 + $0x54] sm:$0xf]
    %v4442 = vld [vmem:[%s4426 + $0x58] sm:$0xf]
    %v4443 = vld [vmem:[%s4426 + $0x60] sm:$0xf]
    %v4444 = vld [vmem:[%s4426 + $0x64] sm:$0xf]
    %v4445 = vld [vmem:[%s4426 + $0x6c] sm:$0xf]
    %v4446 = vld [vmem:[%s4426 + $0x70] sm:$0xf]
    %v4447 = vld [vmem:[%s4426 + $0x78] sm:$0xf]
    %v4448 = vld [vmem:[%s4426 + $0x7c] sm:$0xf]
    %v4449 = vld [vmem:[%s4426 + $0x84] sm:$0xf]
    %v4450 = vld [vmem:[%s4426 + $0x88] sm:$0xf]
    %v4451 = vld [vmem:[%s4426 + $0x90] sm:$0xf]
    %v4452 = vld [vmem:[%s4426 + $0x94] sm:$0xf]
    %v4453 = vld [vmem:[%s4426 + $0x9c] sm:$0xf]
    %v4454 = vld [vmem:[%s4426 + $0xa0] sm:$0xf]
    %v4455 = vld [vmem:[%s4426 + $0xa8] sm:$0xf]
    %v4456 = vld [vmem:[%s4426 + $0xac] sm:$0xf]
    %v4457 = vld [vmem:[%s4426 + $0xb4] sm:$0xf]
    %v4458 = vld [vmem:[%s4426 + $0xb8] sm:$0xf]
    %4459 = vst [vmem:[#allocation3 + $0x48c] sm:$0xf] %v4427
    %4460 = vst [vmem:[#allocation3 + $0x4b0] sm:$0xf] %v4428
    %4461 = vst [vmem:[#allocation3 + $0x4d4] sm:$0xf] %v4429
    %4462 = vst [vmem:[#allocation3 + $0x4f8] sm:$0xf] %v4430
    %4463 = vst [vmem:[#allocation3 + $0x51c] sm:$0xf] %v4431
    %4464 = vst [vmem:[#allocation3 + $0x540] sm:$0xf] %v4432
    %4465 = vst [vmem:[#allocation3 + $0x564] sm:$0xf] %v4433
    %4466 = vst [vmem:[#allocation3 + $0x588] sm:$0xf] %v4434
    %4467 = vst [vmem:[#allocation3 + $0x5ac] sm:$0xf] %v4435
    %4468 = vst [vmem:[#allocation3 + $0x5d0] sm:$0xf] %v4436
    %4469 = vst [vmem:[#allocation3 + $0x5f4] sm:$0xf] %v4437
    %4470 = vst [vmem:[#allocation3 + $0x618] sm:$0xf] %v4438
    %4471 = vst [vmem:[#allocation3 + $0x63c] sm:$0xf] %v4439
    %4472 = vst [vmem:[#allocation3 + $0x660] sm:$0xf] %v4440
    %4473 = vst [vmem:[#allocation3 + $0x684] sm:$0xf] %v4441
    %4474 = vst [vmem:[#allocation3 + $0x6a8] sm:$0xf] %v4442
    %4475 = vst [vmem:[#allocation3 + $0x6cc] sm:$0xf] %v4443
    %4476 = vst [vmem:[#allocation3 + $0x6f0] sm:$0xf] %v4444
    %4477 = vst [vmem:[#allocation3 + $0x714] sm:$0xf] %v4445
    %4478 = vst [vmem:[#allocation3 + $0x738] sm:$0xf] %v4446
    %4479 = vst [vmem:[#allocation3 + $0x75c] sm:$0xf] %v4447
    %4480 = vst [vmem:[#allocation3 + $0x780] sm:$0xf] %v4448
    %4481 = vst [vmem:[#allocation3 + $0x7a4] sm:$0xf] %v4449
    %4482 = vst [vmem:[#allocation3 + $0x7c8] sm:$0xf] %v4450
    %4483 = vst [vmem:[#allocation3 + $0x7ec] sm:$0xf] %v4451
    %4484 = vst [vmem:[#allocation3 + $0x810] sm:$0xf] %v4452
    %4485 = vst [vmem:[#allocation3 + $0x834] sm:$0xf] %v4453
    %4486 = vst [vmem:[#allocation3 + $0x858] sm:$0xf] %v4454
    %4487 = vst [vmem:[#allocation3 + $0x87c] sm:$0xf] %v4455
    %4488 = vst [vmem:[#allocation3 + $0x8a0] sm:$0xf] %v4456
    %4489 = vst [vmem:[#allocation3 + $0x8c4] sm:$0xf] %v4457
    %4490 = vst [vmem:[#allocation3 + $0x8e8] sm:$0xf] %v4458
    %v4491 = vld [vmem:[%s4426] sm:$0xf]
    %v4492 = vld [vmem:[%s4426 + $0x4] sm:$0xf]
    %v4493 = vld [vmem:[%s4426 + $0x8] sm:$0x1]
    %v4494 = vld [vmem:[%s4426 + $0xc] sm:$0xf]
    %v4495 = vld [vmem:[%s4426 + $0x10] sm:$0xf]
    %v4496 = vld [vmem:[%s4426 + $0x14] sm:$0x1]
    %v4497 = vld [vmem:[%s4426 + $0x18] sm:$0xf]
    %v4498 = vld [vmem:[%s4426 + $0x1c] sm:$0xf]
    %v4499 = vld [vmem:[%s4426 + $0x20] sm:$0x1]
    %v4500 = vld [vmem:[%s4426 + $0x24] sm:$0xf]
    %v4501 = vld [vmem:[%s4426 + $0x28] sm:$0xf]
    %v4502 = vld [vmem:[%s4426 + $0x2c] sm:$0x1]
    %v4503 = vld [vmem:[%s4426 + $0x30] sm:$0xf]
    %v4504 = vld [vmem:[%s4426 + $0x34] sm:$0xf]
    %v4505 = vld [vmem:[%s4426 + $0x38] sm:$0x1]
    %v4506 = vld [vmem:[%s4426 + $0x3c] sm:$0xf]
    %v4507 = vld [vmem:[%s4426 + $0x40] sm:$0xf]
    %v4508 = vld [vmem:[%s4426 + $0x44] sm:$0x1]
    %v4509 = vld [vmem:[%s4426 + $0x48] sm:$0xf]
    %v4510 = vld [vmem:[%s4426 + $0x4c] sm:$0xf]
    %v4511 = vld [vmem:[%s4426 + $0x50] sm:$0x1]
    %v4512 = vld [vmem:[%s4426 + $0x54] sm:$0xf]
    %v4513 = vld [vmem:[%s4426 + $0x58] sm:$0xf]
    %v4514 = vld [vmem:[%s4426 + $0x5c] sm:$0x1]
    %v4515 = vld [vmem:[%s4426 + $0x60] sm:$0xf]
    %v4516 = vld [vmem:[%s4426 + $0x64] sm:$0xf]
    %v4517 = vld [vmem:[%s4426 + $0x68] sm:$0x1]
    %v4518 = vld [vmem:[%s4426 + $0x6c] sm:$0xf]
    %v4519 = vld [vmem:[%s4426 + $0x70] sm:$0xf]
    %v4520 = vld [vmem:[%s4426 + $0x74] sm:$0x1]
    %v4521 = vld [vmem:[%s4426 + $0x78] sm:$0xf]
    %v4522 = vld [vmem:[%s4426 + $0x7c] sm:$0xf]
    %v4523 = vld [vmem:[%s4426 + $0x80] sm:$0x1]
    %v4524 = vld [vmem:[%s4426 + $0x84] sm:$0xf]
    %v4525 = vld [vmem:[%s4426 + $0x88] sm:$0xf]
    %v4526 = vld [vmem:[%s4426 + $0x8c] sm:$0x1]
    %v4527 = vld [vmem:[%s4426 + $0x90] sm:$0xf]
    %v4528 = vld [vmem:[%s4426 + $0x94] sm:$0xf]
    %v4529 = vld [vmem:[%s4426 + $0x98] sm:$0x1]
    %v4530 = vld [vmem:[%s4426 + $0x9c] sm:$0xf]
    %v4531 = vld [vmem:[%s4426 + $0xa0] sm:$0xf]
    %v4532 = vld [vmem:[%s4426 + $0xa4] sm:$0x1]
    %v4533 = vld [vmem:[%s4426 + $0xa8] sm:$0xf]
    %v4534 = vld [vmem:[%s4426 + $0xac] sm:$0xf]
    %v4535 = vld [vmem:[%s4426 + $0xb0] sm:$0x1]
    %v4536 = vld [vmem:[%s4426 + $0xb4] sm:$0xf]
    %v4537 = vld [vmem:[%s4426 + $0xb8] sm:$0xf]
    %v4538 = vld [vmem:[%s4426 + $0xbc] sm:$0x1]
    %v4540 = vshrl.u32 %v4491, 16
    %v4542 = vrot.slane %v4540, 4
    %v4543 = vshll.u32 %v4491, 16
    %v4545 = vrot.slane %v4543, 5
    %v4546 = vor.u32 %v4542, %v4545
    %v4547 = vrot.slane %v4546, 4
    %v4549 = vshll.u32 %v4492, 16
    %v4551 = vrot.slane %v4549, 5
    %v4552 = vsel %vm1204, %v4547, %v4551
    %v4553 = vshrl.u32 %v4492, 16
    %v4555 = vrot.slane %v4553, 4
    %v4556 = vor.u32 %v4555, %v4551
    %v4557 = vrot.slane %v4556, 4
    %v4559 = vshll.u32 %v4493, 16
    %v4561 = vrot.slane %v4559, 5
    %v4562 = vsel %vm1204, %v4557, %v4561
    %v4564 = vshrl.u32 %v4494, 16
    %v4566 = vrot.slane %v4564, 4
    %v4567 = vshll.u32 %v4494, 16
    %v4569 = vrot.slane %v4567, 5
    %v4570 = vor.u32 %v4566, %v4569
    %v4571 = vrot.slane %v4570, 4
    %v4573 = vshll.u32 %v4495, 16
    %v4575 = vrot.slane %v4573, 5
    %v4576 = vsel %vm1204, %v4571, %v4575
    %v4577 = vshrl.u32 %v4495, 16
    %v4579 = vrot.slane %v4577, 4
    %v4580 = vor.u32 %v4579, %v4575
    %v4581 = vrot.slane %v4580, 4
    %v4583 = vshll.u32 %v4496, 16
    %v4585 = vrot.slane %v4583, 5
    %v4586 = vsel %vm1204, %v4581, %v4585
    %v4588 = vshrl.u32 %v4497, 16
    %v4590 = vrot.slane %v4588, 4
    %v4591 = vshll.u32 %v4497, 16
    %v4593 = vrot.slane %v4591, 5
    %v4594 = vor.u32 %v4590, %v4593
    %v4595 = vrot.slane %v4594, 4
    %v4597 = vshll.u32 %v4498, 16
    %v4599 = vrot.slane %v4597, 5
    %v4600 = vsel %vm1204, %v4595, %v4599
    %v4601 = vshrl.u32 %v4498, 16
    %v4603 = vrot.slane %v4601, 4
    %v4604 = vor.u32 %v4603, %v4599
    %v4605 = vrot.slane %v4604, 4
    %v4607 = vshll.u32 %v4499, 16
    %v4609 = vrot.slane %v4607, 5
    %v4610 = vsel %vm1204, %v4605, %v4609
    %v4612 = vshrl.u32 %v4500, 16
    %v4614 = vrot.slane %v4612, 4
    %v4615 = vshll.u32 %v4500, 16
    %v4617 = vrot.slane %v4615, 5
    %v4618 = vor.u32 %v4614, %v4617
    %v4619 = vrot.slane %v4618, 4
    %v4621 = vshll.u32 %v4501, 16
    %v4623 = vrot.slane %v4621, 5
    %v4624 = vsel %vm1204, %v4619, %v4623
    %v4625 = vshrl.u32 %v4501, 16
    %v4627 = vrot.slane %v4625, 4
    %v4628 = vor.u32 %v4627, %v4623
    %v4629 = vrot.slane %v4628, 4
    %v4631 = vshll.u32 %v4502, 16
    %v4633 = vrot.slane %v4631, 5
    %v4634 = vsel %vm1204, %v4629, %v4633
    %v4636 = vshrl.u32 %v4503, 16
    %v4638 = vrot.slane %v4636, 4
    %v4639 = vshll.u32 %v4503, 16
    %v4641 = vrot.slane %v4639, 5
    %v4642 = vor.u32 %v4638, %v4641
    %v4643 = vrot.slane %v4642, 4
    %v4645 = vshll.u32 %v4504, 16
    %v4647 = vrot.slane %v4645, 5
    %v4648 = vsel %vm1204, %v4643, %v4647
    %v4649 = vshrl.u32 %v4504, 16
    %v4651 = vrot.slane %v4649, 4
    %v4652 = vor.u32 %v4651, %v4647
    %v4653 = vrot.slane %v4652, 4
    %v4655 = vshll.u32 %v4505, 16
    %v4657 = vrot.slane %v4655, 5
    %v4658 = vsel %vm1204, %v4653, %v4657
    %v4660 = vshrl.u32 %v4506, 16
    %v4662 = vrot.slane %v4660, 4
    %v4663 = vshll.u32 %v4506, 16
    %v4665 = vrot.slane %v4663, 5
    %v4666 = vor.u32 %v4662, %v4665
    %v4667 = vrot.slane %v4666, 4
    %v4669 = vshll.u32 %v4507, 16
    %v4671 = vrot.slane %v4669, 5
    %v4672 = vsel %vm1204, %v4667, %v4671
    %v4673 = vshrl.u32 %v4507, 16
    %v4675 = vrot.slane %v4673, 4
    %v4676 = vor.u32 %v4675, %v4671
    %v4677 = vrot.slane %v4676, 4
    %v4679 = vshll.u32 %v4508, 16
    %v4681 = vrot.slane %v4679, 5
    %v4682 = vsel %vm1204, %v4677, %v4681
    %v4684 = vshrl.u32 %v4509, 16
    %v4686 = vrot.slane %v4684, 4
    %v4687 = vshll.u32 %v4509, 16
    %v4689 = vrot.slane %v4687, 5
    %v4690 = vor.u32 %v4686, %v4689
    %v4691 = vrot.slane %v4690, 4
    %v4693 = vshll.u32 %v4510, 16
    %v4695 = vrot.slane %v4693, 5
    %v4696 = vsel %vm1204, %v4691, %v4695
    %v4697 = vshrl.u32 %v4510, 16
    %v4699 = vrot.slane %v4697, 4
    %v4700 = vor.u32 %v4699, %v4695
    %v4701 = vrot.slane %v4700, 4
    %v4703 = vshll.u32 %v4511, 16
    %v4705 = vrot.slane %v4703, 5
    %v4706 = vsel %vm1204, %v4701, %v4705
    %v4708 = vshrl.u32 %v4512, 16
    %v4710 = vrot.slane %v4708, 4
    %v4711 = vshll.u32 %v4512, 16
    %v4713 = vrot.slane %v4711, 5
    %v4714 = vor.u32 %v4710, %v4713
    %v4715 = vrot.slane %v4714, 4
    %v4717 = vshll.u32 %v4513, 16
    %v4719 = vrot.slane %v4717, 5
    %v4720 = vsel %vm1204, %v4715, %v4719
    %v4721 = vshrl.u32 %v4513, 16
    %v4723 = vrot.slane %v4721, 4
    %v4724 = vor.u32 %v4723, %v4719
    %v4725 = vrot.slane %v4724, 4
    %v4727 = vshll.u32 %v4514, 16
    %v4729 = vrot.slane %v4727, 5
    %v4730 = vsel %vm1204, %v4725, %v4729
    %v4732 = vshrl.u32 %v4515, 16
    %v4734 = vrot.slane %v4732, 4
    %v4735 = vshll.u32 %v4515, 16
    %v4737 = vrot.slane %v4735, 5
    %v4738 = vor.u32 %v4734, %v4737
    %v4739 = vrot.slane %v4738, 4
    %v4741 = vshll.u32 %v4516, 16
    %v4743 = vrot.slane %v4741, 5
    %v4744 = vsel %vm1204, %v4739, %v4743
    %v4745 = vshrl.u32 %v4516, 16
    %v4747 = vrot.slane %v4745, 4
    %v4748 = vor.u32 %v4747, %v4743
    %v4749 = vrot.slane %v4748, 4
    %v4751 = vshll.u32 %v4517, 16
    %v4753 = vrot.slane %v4751, 5
    %v4754 = vsel %vm1204, %v4749, %v4753
    %v4756 = vshrl.u32 %v4518, 16
    %v4758 = vrot.slane %v4756, 4
    %v4759 = vshll.u32 %v4518, 16
    %v4761 = vrot.slane %v4759, 5
    %v4762 = vor.u32 %v4758, %v4761
    %v4763 = vrot.slane %v4762, 4
    %v4765 = vshll.u32 %v4519, 16
    %v4767 = vrot.slane %v4765, 5
    %v4768 = vsel %vm1204, %v4763, %v4767
    %v4769 = vshrl.u32 %v4519, 16
    %v4771 = vrot.slane %v4769, 4
    %v4772 = vor.u32 %v4771, %v4767
    %v4773 = vrot.slane %v4772, 4
    %v4775 = vshll.u32 %v4520, 16
    %v4777 = vrot.slane %v4775, 5
    %v4778 = vsel %vm1204, %v4773, %v4777
    %v4780 = vshrl.u32 %v4521, 16
    %v4782 = vrot.slane %v4780, 4
    %v4783 = vshll.u32 %v4521, 16
    %v4785 = vrot.slane %v4783, 5
    %v4786 = vor.u32 %v4782, %v4785
    %v4787 = vrot.slane %v4786, 4
    %v4789 = vshll.u32 %v4522, 16
    %v4791 = vrot.slane %v4789, 5
    %v4792 = vsel %vm1204, %v4787, %v4791
    %v4793 = vshrl.u32 %v4522, 16
    %v4795 = vrot.slane %v4793, 4
    %v4796 = vor.u32 %v4795, %v4791
    %v4797 = vrot.slane %v4796, 4
    %v4799 = vshll.u32 %v4523, 16
    %v4801 = vrot.slane %v4799, 5
    %v4802 = vsel %vm1204, %v4797, %v4801
    %v4804 = vshrl.u32 %v4524, 16
    %v4806 = vrot.slane %v4804, 4
    %v4807 = vshll.u32 %v4524, 16
    %v4809 = vrot.slane %v4807, 5
    %v4810 = vor.u32 %v4806, %v4809
    %v4811 = vrot.slane %v4810, 4
    %v4813 = vshll.u32 %v4525, 16
    %v4815 = vrot.slane %v4813, 5
    %v4816 = vsel %vm1204, %v4811, %v4815
    %v4817 = vshrl.u32 %v4525, 16
    %v4819 = vrot.slane %v4817, 4
    %v4820 = vor.u32 %v4819, %v4815
    %v4821 = vrot.slane %v4820, 4
    %v4823 = vshll.u32 %v4526, 16
    %v4825 = vrot.slane %v4823, 5
    %v4826 = vsel %vm1204, %v4821, %v4825
    %v4828 = vshrl.u32 %v4527, 16
    %v4830 = vrot.slane %v4828, 4
    %v4831 = vshll.u32 %v4527, 16
    %v4833 = vrot.slane %v4831, 5
    %v4834 = vor.u32 %v4830, %v4833
    %v4835 = vrot.slane %v4834, 4
    %v4837 = vshll.u32 %v4528, 16
    %v4839 = vrot.slane %v4837, 5
    %v4840 = vsel %vm1204, %v4835, %v4839
    %v4841 = vshrl.u32 %v4528, 16
    %v4843 = vrot.slane %v4841, 4
    %v4844 = vor.u32 %v4843, %v4839
    %v4845 = vrot.slane %v4844, 4
    %v4847 = vshll.u32 %v4529, 16
    %v4849 = vrot.slane %v4847, 5
    %v4850 = vsel %vm1204, %v4845, %v4849
    %v4852 = vshrl.u32 %v4530, 16
    %v4854 = vrot.slane %v4852, 4
    %v4855 = vshll.u32 %v4530, 16
    %v4857 = vrot.slane %v4855, 5
    %v4858 = vor.u32 %v4854, %v4857
    %v4859 = vrot.slane %v4858, 4
    %v4861 = vshll.u32 %v4531, 16
    %v4863 = vrot.slane %v4861, 5
    %v4864 = vsel %vm1204, %v4859, %v4863
    %v4865 = vshrl.u32 %v4531, 16
    %v4867 = vrot.slane %v4865, 4
    %v4868 = vor.u32 %v4867, %v4863
    %v4869 = vrot.slane %v4868, 4
    %v4871 = vshll.u32 %v4532, 16
    %v4873 = vrot.slane %v4871, 5
    %v4874 = vsel %vm1204, %v4869, %v4873
    %v4876 = vshrl.u32 %v4533, 16
    %v4878 = vrot.slane %v4876, 4
    %v4879 = vshll.u32 %v4533, 16
    %v4881 = vrot.slane %v4879, 5
    %v4882 = vor.u32 %v4878, %v4881
    %v4883 = vrot.slane %v4882, 4
    %v4885 = vshll.u32 %v4534, 16
    %v4887 = vrot.slane %v4885, 5
    %v4888 = vsel %vm1204, %v4883, %v4887
    %v4889 = vshrl.u32 %v4534, 16
    %v4891 = vrot.slane %v4889, 4
    %v4892 = vor.u32 %v4891, %v4887
    %v4893 = vrot.slane %v4892, 4
    %v4895 = vshll.u32 %v4535, 16
    %v4897 = vrot.slane %v4895, 5
    %v4898 = vsel %vm1204, %v4893, %v4897
    %v4900 = vshrl.u32 %v4536, 16
    %v4902 = vrot.slane %v4900, 4
    %v4903 = vshll.u32 %v4536, 16
    %v4905 = vrot.slane %v4903, 5
    %v4906 = vor.u32 %v4902, %v4905
    %v4907 = vrot.slane %v4906, 4
    %v4909 = vshll.u32 %v4537, 16
    %v4911 = vrot.slane %v4909, 5
    %v4912 = vsel %vm1204, %v4907, %v4911
    %v4913 = vshrl.u32 %v4537, 16
    %v4915 = vrot.slane %v4913, 4
    %v4916 = vor.u32 %v4915, %v4911
    %v4917 = vrot.slane %v4916, 4
    %v4919 = vshll.u32 %v4538, 16
    %v4921 = vrot.slane %v4919, 5
    %v4922 = vsel %vm1204, %v4917, %v4921
    %4955 = vst [vmem:[#allocation3 + $0x490] sm:$0xf] %v4552
    %4956 = vst [vmem:[#allocation3 + $0x4b4] sm:$0xf] %v4562
    %4957 = vst [vmem:[#allocation3 + $0x4d8] sm:$0xf] %v4576
    %4958 = vst [vmem:[#allocation3 + $0x4fc] sm:$0xf] %v4586
    %4959 = vst [vmem:[#allocation3 + $0x520] sm:$0xf] %v4600
    %4960 = vst [vmem:[#allocation3 + $0x544] sm:$0xf] %v4610
    %4961 = vst [vmem:[#allocation3 + $0x568] sm:$0xf] %v4624
    %4962 = vst [vmem:[#allocation3 + $0x58c] sm:$0xf] %v4634
    %4963 = vst [vmem:[#allocation3 + $0x5b0] sm:$0xf] %v4648
    %4964 = vst [vmem:[#allocation3 + $0x5d4] sm:$0xf] %v4658
    %4965 = vst [vmem:[#allocation3 + $0x5f8] sm:$0xf] %v4672
    %4966 = vst [vmem:[#allocation3 + $0x61c] sm:$0xf] %v4682
    %4967 = vst [vmem:[#allocation3 + $0x640] sm:$0xf] %v4696
    %4968 = vst [vmem:[#allocation3 + $0x664] sm:$0xf] %v4706
    %4969 = vst [vmem:[#allocation3 + $0x688] sm:$0xf] %v4720
    %4970 = vst [vmem:[#allocation3 + $0x6ac] sm:$0xf] %v4730
    %4971 = vst [vmem:[#allocation3 + $0x6d0] sm:$0xf] %v4744
    %4972 = vst [vmem:[#allocation3 + $0x6f4] sm:$0xf] %v4754
    %4973 = vst [vmem:[#allocation3 + $0x718] sm:$0xf] %v4768
    %4974 = vst [vmem:[#allocation3 + $0x73c] sm:$0xf] %v4778
    %4975 = vst [vmem:[#allocation3 + $0x760] sm:$0xf] %v4792
    %4976 = vst [vmem:[#allocation3 + $0x784] sm:$0xf] %v4802
    %4977 = vst [vmem:[#allocation3 + $0x7a8] sm:$0xf] %v4816
    %4978 = vst [vmem:[#allocation3 + $0x7cc] sm:$0xf] %v4826
    %4979 = vst [vmem:[#allocation3 + $0x7f0] sm:$0xf] %v4840
    %4980 = vst [vmem:[#allocation3 + $0x814] sm:$0xf] %v4850
    %4981 = vst [vmem:[#allocation3 + $0x838] sm:$0xf] %v4864
    %4982 = vst [vmem:[#allocation3 + $0x85c] sm:$0xf] %v4874
    %4983 = vst [vmem:[#allocation3 + $0x880] sm:$0xf] %v4888
    %4984 = vst [vmem:[#allocation3 + $0x8a4] sm:$0xf] %v4898
    %4985 = vst [vmem:[#allocation3 + $0x8c8] sm:$0xf] %v4912
    %4986 = vst [vmem:[#allocation3 + $0x8ec] sm:$0xf] %v4922
    %v4987 = vld [vmem:[%s4426] sm:$0xe]
    %v4988 = vld [vmem:[%s4426 + $0x4] sm:$0xf]
    %v4989 = vld [vmem:[%s4426 + $0x8] sm:$0x1]
    %v4990 = vld [vmem:[%s4426 + $0xc] sm:$0xe]
    %v4991 = vld [vmem:[%s4426 + $0x10] sm:$0xf]
    %v4992 = vld [vmem:[%s4426 + $0x14] sm:$0x1]
    %v4993 = vld [vmem:[%s4426 + $0x18] sm:$0xe]
    %v4994 = vld [vmem:[%s4426 + $0x1c] sm:$0xf]
    %v4995 = vld [vmem:[%s4426 + $0x20] sm:$0x1]
    %v4996 = vld [vmem:[%s4426 + $0x24] sm:$0xe]
    %v4997 = vld [vmem:[%s4426 + $0x28] sm:$0xf]
    %v4998 = vld [vmem:[%s4426 + $0x2c] sm:$0x1]
    %v4999 = vld [vmem:[%s4426 + $0x30] sm:$0xe]
    %v5000 = vld [vmem:[%s4426 + $0x34] sm:$0xf]
    %v5001 = vld [vmem:[%s4426 + $0x38] sm:$0x1]
    %v5002 = vld [vmem:[%s4426 + $0x3c] sm:$0xe]
    %v5003 = vld [vmem:[%s4426 + $0x40] sm:$0xf]
    %v5004 = vld [vmem:[%s4426 + $0x44] sm:$0x1]
    %v5005 = vld [vmem:[%s4426 + $0x48] sm:$0xe]
    %v5006 = vld [vmem:[%s4426 + $0x4c] sm:$0xf]
    %v5007 = vld [vmem:[%s4426 + $0x50] sm:$0x1]
    %v5008 = vld [vmem:[%s4426 + $0x54] sm:$0xe]
    %v5009 = vld [vmem:[%s4426 + $0x58] sm:$0xf]
    %v5010 = vld [vmem:[%s4426 + $0x5c] sm:$0x1]
    %v5011 = vld [vmem:[%s4426 + $0x60] sm:$0xe]
    %v5012 = vld [vmem:[%s4426 + $0x64] sm:$0xf]
    %v5013 = vld [vmem:[%s4426 + $0x68] sm:$0x1]
    %v5014 = vld [vmem:[%s4426 + $0x6c] sm:$0xe]
    %v5015 = vld [vmem:[%s4426 + $0x70] sm:$0xf]
    %v5016 = vld [vmem:[%s4426 + $0x74] sm:$0x1]
    %v5017 = vld [vmem:[%s4426 + $0x78] sm:$0xe]
    %v5018 = vld [vmem:[%s4426 + $0x7c] sm:$0xf]
    %v5019 = vld [vmem:[%s4426 + $0x80] sm:$0x1]
    %v5020 = vld [vmem:[%s4426 + $0x84] sm:$0xe]
    %v5021 = vld [vmem:[%s4426 + $0x88] sm:$0xf]
    %v5022 = vld [vmem:[%s4426 + $0x8c] sm:$0x1]
    %v5023 = vld [vmem:[%s4426 + $0x90] sm:$0xe]
    %v5024 = vld [vmem:[%s4426 + $0x94] sm:$0xf]
    %v5025 = vld [vmem:[%s4426 + $0x98] sm:$0x1]
    %v5026 = vld [vmem:[%s4426 + $0x9c] sm:$0xe]
    %v5027 = vld [vmem:[%s4426 + $0xa0] sm:$0xf]
    %v5028 = vld [vmem:[%s4426 + $0xa4] sm:$0x1]
    %v5029 = vld [vmem:[%s4426 + $0xa8] sm:$0xe]
    %v5030 = vld [vmem:[%s4426 + $0xac] sm:$0xf]
    %v5031 = vld [vmem:[%s4426 + $0xb0] sm:$0x1]
    %v5032 = vld [vmem:[%s4426 + $0xb4] sm:$0xe]
    %v5033 = vld [vmem:[%s4426 + $0xb8] sm:$0xf]
    %v5034 = vld [vmem:[%s4426 + $0xbc] sm:$0x1]
    %v5083 = vrot.slane %v4987, 5
    %v5084 = vrot.slane %v5083, 4
    %v5085 = vrot.slane %v4988, 5
    %v5086 = vsel %vm1751, %v5084, %v5085
    %v5087 = vrot.slane %v5085, 4
    %v5088 = vrot.slane %v4989, 5
    %v5089 = vsel %vm1751, %v5087, %v5088
    %v5090 = vrot.slane %v4990, 5
    %v5091 = vrot.slane %v5090, 4
    %v5092 = vrot.slane %v4991, 5
    %v5093 = vsel %vm1751, %v5091, %v5092
    %v5094 = vrot.slane %v5092, 4
    %v5095 = vrot.slane %v4992, 5
    %v5096 = vsel %vm1751, %v5094, %v5095
    %v5097 = vrot.slane %v4993, 5
    %v5098 = vrot.slane %v5097, 4
    %v5099 = vrot.slane %v4994, 5
    %v5100 = vsel %vm1751, %v5098, %v5099
    %v5101 = vrot.slane %v5099, 4
    %v5102 = vrot.slane %v4995, 5
    %v5103 = vsel %vm1751, %v5101, %v5102
    %v5104 = vrot.slane %v4996, 5
    %v5105 = vrot.slane %v5104, 4
    %v5106 = vrot.slane %v4997, 5
    %v5107 = vsel %vm1751, %v5105, %v5106
    %v5108 = vrot.slane %v5106, 4
    %v5109 = vrot.slane %v4998, 5
    %v5110 = vsel %vm1751, %v5108, %v5109
    %v5111 = vrot.slane %v4999, 5
    %v5112 = vrot.slane %v5111, 4
    %v5113 = vrot.slane %v5000, 5
    %v5114 = vsel %vm1751, %v5112, %v5113
    %v5115 = vrot.slane %v5113, 4
    %v5116 = vrot.slane %v5001, 5
    %v5117 = vsel %vm1751, %v5115, %v5116
    %v5118 = vrot.slane %v5002, 5
    %v5119 = vrot.slane %v5118, 4
    %v5120 = vrot.slane %v5003, 5
    %v5121 = vsel %vm1751, %v5119, %v5120
    %v5122 = vrot.slane %v5120, 4
    %v5123 = vrot.slane %v5004, 5
    %v5124 = vsel %vm1751, %v5122, %v5123
    %v5125 = vrot.slane %v5005, 5
    %v5126 = vrot.slane %v5125, 4
    %v5127 = vrot.slane %v5006, 5
    %v5128 = vsel %vm1751, %v5126, %v5127
    %v5129 = vrot.slane %v5127, 4
    %v5130 = vrot.slane %v5007, 5
    %v5131 = vsel %vm1751, %v5129, %v5130
    %v5132 = vrot.slane %v5008, 5
    %v5133 = vrot.slane %v5132, 4
    %v5134 = vrot.slane %v5009, 5
    %v5135 = vsel %vm1751, %v5133, %v5134
    %v5136 = vrot.slane %v5134, 4
    %v5137 = vrot.slane %v5010, 5
    %v5138 = vsel %vm1751, %v5136, %v5137
    %v5139 = vrot.slane %v5011, 5
    %v5140 = vrot.slane %v5139, 4
    %v5141 = vrot.slane %v5012, 5
    %v5142 = vsel %vm1751, %v5140, %v5141
    %v5143 = vrot.slane %v5141, 4
    %v5144 = vrot.slane %v5013, 5
    %v5145 = vsel %vm1751, %v5143, %v5144
    %v5146 = vrot.slane %v5014, 5
    %v5147 = vrot.slane %v5146, 4
    %v5148 = vrot.slane %v5015, 5
    %v5149 = vsel %vm1751, %v5147, %v5148
    %v5150 = vrot.slane %v5148, 4
    %v5151 = vrot.slane %v5016, 5
    %v5152 = vsel %vm1751, %v5150, %v5151
    %v5153 = vrot.slane %v5017, 5
    %v5154 = vrot.slane %v5153, 4
    %v5155 = vrot.slane %v5018, 5
    %v5156 = vsel %vm1751, %v5154, %v5155
    %v5157 = vrot.slane %v5155, 4
    %v5158 = vrot.slane %v5019, 5
    %v5159 = vsel %vm1751, %v5157, %v5158
    %v5160 = vrot.slane %v5020, 5
    %v5161 = vrot.slane %v5160, 4
    %v5162 = vrot.slane %v5021, 5
    %v5163 = vsel %vm1751, %v5161, %v5162
    %v5164 = vrot.slane %v5162, 4
    %v5165 = vrot.slane %v5022, 5
    %v5166 = vsel %vm1751, %v5164, %v5165
    %v5167 = vrot.slane %v5023, 5
    %v5168 = vrot.slane %v5167, 4
    %v5169 = vrot.slane %v5024, 5
    %v5170 = vsel %vm1751, %v5168, %v5169
    %v5171 = vrot.slane %v5169, 4
    %v5172 = vrot.slane %v5025, 5
    %v5173 = vsel %vm1751, %v5171, %v5172
    %v5174 = vrot.slane %v5026, 5
    %v5175 = vrot.slane %v5174, 4
    %v5176 = vrot.slane %v5027, 5
    %v5177 = vsel %vm1751, %v5175, %v5176
    %v5178 = vrot.slane %v5176, 4
    %v5179 = vrot.slane %v5028, 5
    %v5180 = vsel %vm1751, %v5178, %v5179
    %v5181 = vrot.slane %v5029, 5
    %v5182 = vrot.slane %v5181, 4
    %v5183 = vrot.slane %v5030, 5
    %v5184 = vsel %vm1751, %v5182, %v5183
    %v5185 = vrot.slane %v5183, 4
    %v5186 = vrot.slane %v5031, 5
    %v5187 = vsel %vm1751, %v5185, %v5186
    %v5188 = vrot.slane %v5032, 5
    %v5189 = vrot.slane %v5188, 4
    %v5190 = vrot.slane %v5033, 5
    %v5191 = vsel %vm1751, %v5189, %v5190
    %v5192 = vrot.slane %v5190, 4
    %v5193 = vrot.slane %v5034, 5
    %v5194 = vsel %vm1751, %v5192, %v5193
    %5227 = vst [vmem:[#allocation3 + $0x494] sm:$0xf] %v5086
    %5228 = vst [vmem:[#allocation3 + $0x4b8] sm:$0xf] %v5089
    %5229 = vst [vmem:[#allocation3 + $0x4dc] sm:$0xf] %v5093
    %5230 = vst [vmem:[#allocation3 + $0x500] sm:$0xf] %v5096
    %5231 = vst [vmem:[#allocation3 + $0x524] sm:$0xf] %v5100
    %5232 = vst [vmem:[#allocation3 + $0x548] sm:$0xf] %v5103
    %5233 = vst [vmem:[#allocation3 + $0x56c] sm:$0xf] %v5107
    %5234 = vst [vmem:[#allocation3 + $0x590] sm:$0xf] %v5110
    %5235 = vst [vmem:[#allocation3 + $0x5b4] sm:$0xf] %v5114
    %5236 = vst [vmem:[#allocation3 + $0x5d8] sm:$0xf] %v5117
    %5237 = vst [vmem:[#allocation3 + $0x5fc] sm:$0xf] %v5121
    %5238 = vst [vmem:[#allocation3 + $0x620] sm:$0xf] %v5124
    %5239 = vst [vmem:[#allocation3 + $0x644] sm:$0xf] %v5128
    %5240 = vst [vmem:[#allocation3 + $0x668] sm:$0xf] %v5131
    %5241 = vst [vmem:[#allocation3 + $0x68c] sm:$0xf] %v5135
    %5242 = vst [vmem:[#allocation3 + $0x6b0] sm:$0xf] %v5138
    %5243 = vst [vmem:[#allocation3 + $0x6d4] sm:$0xf] %v5142
    %5244 = vst [vmem:[#allocation3 + $0x6f8] sm:$0xf] %v5145
    %5245 = vst [vmem:[#allocation3 + $0x71c] sm:$0xf] %v5149
    %5246 = vst [vmem:[#allocation3 + $0x740] sm:$0xf] %v5152
    %5247 = vst [vmem:[#allocation3 + $0x764] sm:$0xf] %v5156
    %5248 = vst [vmem:[#allocation3 + $0x788] sm:$0xf] %v5159
    %5249 = vst [vmem:[#allocation3 + $0x7ac] sm:$0xf] %v5163
    %5250 = vst [vmem:[#allocation3 + $0x7d0] sm:$0xf] %v5166
    %5251 = vst [vmem:[#allocation3 + $0x7f4] sm:$0xf] %v5170
    %5252 = vst [vmem:[#allocation3 + $0x818] sm:$0xf] %v5173
    %5253 = vst [vmem:[#allocation3 + $0x83c] sm:$0xf] %v5177
    %5254 = vst [vmem:[#allocation3 + $0x860] sm:$0xf] %v5180
    %5255 = vst [vmem:[#allocation3 + $0x884] sm:$0xf] %v5184
    %5256 = vst [vmem:[#allocation3 + $0x8a8] sm:$0xf] %v5187
    %5257 = vst [vmem:[#allocation3 + $0x8cc] sm:$0xf] %v5191
    %5258 = vst [vmem:[#allocation3 + $0x8f0] sm:$0xf] %v5194
    %s5259 = scalar_lea.vmem [#allocation2], 240
    %v5260 = vld [vmem:[%s5259] sm:$0xf]
    %v5261 = vld [vmem:[%s5259 + $0x4] sm:$0xf]
    %v5262 = vld [vmem:[%s5259 + $0xc] sm:$0xf]
    %v5263 = vld [vmem:[%s5259 + $0x10] sm:$0xf]
    %v5264 = vld [vmem:[%s5259 + $0x18] sm:$0xf]
    %v5265 = vld [vmem:[%s5259 + $0x1c] sm:$0xf]
    %v5266 = vld [vmem:[%s5259 + $0x24] sm:$0xf]
    %v5267 = vld [vmem:[%s5259 + $0x28] sm:$0xf]
    %v5268 = vld [vmem:[%s5259 + $0x30] sm:$0xf]
    %v5269 = vld [vmem:[%s5259 + $0x34] sm:$0xf]
    %v5270 = vld [vmem:[%s5259 + $0x3c] sm:$0xf]
    %v5271 = vld [vmem:[%s5259 + $0x40] sm:$0xf]
    %v5272 = vld [vmem:[%s5259 + $0x48] sm:$0xf]
    %v5273 = vld [vmem:[%s5259 + $0x4c] sm:$0xf]
    %v5274 = vld [vmem:[%s5259 + $0x54] sm:$0xf]
    %v5275 = vld [vmem:[%s5259 + $0x58] sm:$0xf]
    %v5276 = vld [vmem:[%s5259 + $0x60] sm:$0xf]
    %v5277 = vld [vmem:[%s5259 + $0x64] sm:$0xf]
    %v5278 = vld [vmem:[%s5259 + $0x6c] sm:$0xf]
    %v5279 = vld [vmem:[%s5259 + $0x70] sm:$0xf]
    %v5280 = vld [vmem:[%s5259 + $0x78] sm:$0xf]
    %v5281 = vld [vmem:[%s5259 + $0x7c] sm:$0xf]
    %v5282 = vld [vmem:[%s5259 + $0x84] sm:$0xf]
    %v5283 = vld [vmem:[%s5259 + $0x88] sm:$0xf]
    %v5284 = vld [vmem:[%s5259 + $0x90] sm:$0xf]
    %v5285 = vld [vmem:[%s5259 + $0x94] sm:$0xf]
    %v5286 = vld [vmem:[%s5259 + $0x9c] sm:$0xf]
    %v5287 = vld [vmem:[%s5259 + $0xa0] sm:$0xf]
    %v5288 = vld [vmem:[%s5259 + $0xa8] sm:$0xf]
    %v5289 = vld [vmem:[%s5259 + $0xac] sm:$0xf]
    %v5290 = vld [vmem:[%s5259 + $0xb4] sm:$0xf]
    %v5291 = vld [vmem:[%s5259 + $0xb8] sm:$0xf]
    %5292 = vst [vmem:[#allocation3 + $0x498] sm:$0xf] %v5260
    %5293 = vst [vmem:[#allocation3 + $0x4bc] sm:$0xf] %v5261
    %5294 = vst [vmem:[#allocation3 + $0x4e0] sm:$0xf] %v5262
    %5295 = vst [vmem:[#allocation3 + $0x504] sm:$0xf] %v5263
    %5296 = vst [vmem:[#allocation3 + $0x528] sm:$0xf] %v5264
    %5297 = vst [vmem:[#allocation3 + $0x54c] sm:$0xf] %v5265
    %5298 = vst [vmem:[#allocation3 + $0x570] sm:$0xf] %v5266
    %5299 = vst [vmem:[#allocation3 + $0x594] sm:$0xf] %v5267
    %5300 = vst [vmem:[#allocation3 + $0x5b8] sm:$0xf] %v5268
    %5301 = vst [vmem:[#allocation3 + $0x5dc] sm:$0xf] %v5269
    %5302 = vst [vmem:[#allocation3 + $0x600] sm:$0xf] %v5270
    %5303 = vst [vmem:[#allocation3 + $0x624] sm:$0xf] %v5271
    %5304 = vst [vmem:[#allocation3 + $0x648] sm:$0xf] %v5272
    %5305 = vst [vmem:[#allocation3 + $0x66c] sm:$0xf] %v5273
    %5306 = vst [vmem:[#allocation3 + $0x690] sm:$0xf] %v5274
    %5307 = vst [vmem:[#allocation3 + $0x6b4] sm:$0xf] %v5275
    %5308 = vst [vmem:[#allocation3 + $0x6d8] sm:$0xf] %v5276
    %5309 = vst [vmem:[#allocation3 + $0x6fc] sm:$0xf] %v5277
    %5310 = vst [vmem:[#allocation3 + $0x720] sm:$0xf] %v5278
    %5311 = vst [vmem:[#allocation3 + $0x744] sm:$0xf] %v5279
    %5312 = vst [vmem:[#allocation3 + $0x768] sm:$0xf] %v5280
    %5313 = vst [vmem:[#allocation3 + $0x78c] sm:$0xf] %v5281
    %5314 = vst [vmem:[#allocation3 + $0x7b0] sm:$0xf] %v5282
    %5315 = vst [vmem:[#allocation3 + $0x7d4] sm:$0xf] %v5283
    %5316 = vst [vmem:[#allocation3 + $0x7f8] sm:$0xf] %v5284
    %5317 = vst [vmem:[#allocation3 + $0x81c] sm:$0xf] %v5285
    %5318 = vst [vmem:[#allocation3 + $0x840] sm:$0xf] %v5286
    %5319 = vst [vmem:[#allocation3 + $0x864] sm:$0xf] %v5287
    %5320 = vst [vmem:[#allocation3 + $0x888] sm:$0xf] %v5288
    %5321 = vst [vmem:[#allocation3 + $0x8ac] sm:$0xf] %v5289
    %5322 = vst [vmem:[#allocation3 + $0x8d0] sm:$0xf] %v5290
    %5323 = vst [vmem:[#allocation3 + $0x8f4] sm:$0xf] %v5291
    %v5324 = vld [vmem:[%s5259] sm:$0xf]
    %v5325 = vld [vmem:[%s5259 + $0x4] sm:$0xf]
    %v5326 = vld [vmem:[%s5259 + $0x8] sm:$0x1]
    %v5327 = vld [vmem:[%s5259 + $0xc] sm:$0xf]
    %v5328 = vld [vmem:[%s5259 + $0x10] sm:$0xf]
    %v5329 = vld [vmem:[%s5259 + $0x14] sm:$0x1]
    %v5330 = vld [vmem:[%s5259 + $0x18] sm:$0xf]
    %v5331 = vld [vmem:[%s5259 + $0x1c] sm:$0xf]
    %v5332 = vld [vmem:[%s5259 + $0x20] sm:$0x1]
    %v5333 = vld [vmem:[%s5259 + $0x24] sm:$0xf]
    %v5334 = vld [vmem:[%s5259 + $0x28] sm:$0xf]
    %v5335 = vld [vmem:[%s5259 + $0x2c] sm:$0x1]
    %v5336 = vld [vmem:[%s5259 + $0x30] sm:$0xf]
    %v5337 = vld [vmem:[%s5259 + $0x34] sm:$0xf]
    %v5338 = vld [vmem:[%s5259 + $0x38] sm:$0x1]
    %v5339 = vld [vmem:[%s5259 + $0x3c] sm:$0xf]
    %v5340 = vld [vmem:[%s5259 + $0x40] sm:$0xf]
    %v5341 = vld [vmem:[%s5259 + $0x44] sm:$0x1]
    %v5342 = vld [vmem:[%s5259 + $0x48] sm:$0xf]
    %v5343 = vld [vmem:[%s5259 + $0x4c] sm:$0xf]
    %v5344 = vld [vmem:[%s5259 + $0x50] sm:$0x1]
    %v5345 = vld [vmem:[%s5259 + $0x54] sm:$0xf]
    %v5346 = vld [vmem:[%s5259 + $0x58] sm:$0xf]
    %v5347 = vld [vmem:[%s5259 + $0x5c] sm:$0x1]
    %v5348 = vld [vmem:[%s5259 + $0x60] sm:$0xf]
    %v5349 = vld [vmem:[%s5259 + $0x64] sm:$0xf]
    %v5350 = vld [vmem:[%s5259 + $0x68] sm:$0x1]
    %v5351 = vld [vmem:[%s5259 + $0x6c] sm:$0xf]
    %v5352 = vld [vmem:[%s5259 + $0x70] sm:$0xf]
    %v5353 = vld [vmem:[%s5259 + $0x74] sm:$0x1]
    %v5354 = vld [vmem:[%s5259 + $0x78] sm:$0xf]
    %v5355 = vld [vmem:[%s5259 + $0x7c] sm:$0xf]
    %v5356 = vld [vmem:[%s5259 + $0x80] sm:$0x1]
    %v5357 = vld [vmem:[%s5259 + $0x84] sm:$0xf]
    %v5358 = vld [vmem:[%s5259 + $0x88] sm:$0xf]
    %v5359 = vld [vmem:[%s5259 + $0x8c] sm:$0x1]
    %v5360 = vld [vmem:[%s5259 + $0x90] sm:$0xf]
    %v5361 = vld [vmem:[%s5259 + $0x94] sm:$0xf]
    %v5362 = vld [vmem:[%s5259 + $0x98] sm:$0x1]
    %v5363 = vld [vmem:[%s5259 + $0x9c] sm:$0xf]
    %v5364 = vld [vmem:[%s5259 + $0xa0] sm:$0xf]
    %v5365 = vld [vmem:[%s5259 + $0xa4] sm:$0x1]
    %v5366 = vld [vmem:[%s5259 + $0xa8] sm:$0xf]
    %v5367 = vld [vmem:[%s5259 + $0xac] sm:$0xf]
    %v5368 = vld [vmem:[%s5259 + $0xb0] sm:$0x1]
    %v5369 = vld [vmem:[%s5259 + $0xb4] sm:$0xf]
    %v5370 = vld [vmem:[%s5259 + $0xb8] sm:$0xf]
    %v5371 = vld [vmem:[%s5259 + $0xbc] sm:$0x1]
    %v5373 = vshrl.u32 %v5324, 16
    %v5375 = vrot.slane %v5373, 4
    %v5376 = vshll.u32 %v5324, 16
    %v5378 = vrot.slane %v5376, 5
    %v5379 = vor.u32 %v5375, %v5378
    %v5380 = vrot.slane %v5379, 4
    %v5382 = vshll.u32 %v5325, 16
    %v5384 = vrot.slane %v5382, 5
    %v5385 = vsel %vm1204, %v5380, %v5384
    %v5386 = vshrl.u32 %v5325, 16
    %v5388 = vrot.slane %v5386, 4
    %v5389 = vor.u32 %v5388, %v5384
    %v5390 = vrot.slane %v5389, 4
    %v5392 = vshll.u32 %v5326, 16
    %v5394 = vrot.slane %v5392, 5
    %v5395 = vsel %vm1204, %v5390, %v5394
    %v5397 = vshrl.u32 %v5327, 16
    %v5399 = vrot.slane %v5397, 4
    %v5400 = vshll.u32 %v5327, 16
    %v5402 = vrot.slane %v5400, 5
    %v5403 = vor.u32 %v5399, %v5402
    %v5404 = vrot.slane %v5403, 4
    %v5406 = vshll.u32 %v5328, 16
    %v5408 = vrot.slane %v5406, 5
    %v5409 = vsel %vm1204, %v5404, %v5408
    %v5410 = vshrl.u32 %v5328, 16
    %v5412 = vrot.slane %v5410, 4
    %v5413 = vor.u32 %v5412, %v5408
    %v5414 = vrot.slane %v5413, 4
    %v5416 = vshll.u32 %v5329, 16
    %v5418 = vrot.slane %v5416, 5
    %v5419 = vsel %vm1204, %v5414, %v5418
    %v5421 = vshrl.u32 %v5330, 16
    %v5423 = vrot.slane %v5421, 4
    %v5424 = vshll.u32 %v5330, 16
    %v5426 = vrot.slane %v5424, 5
    %v5427 = vor.u32 %v5423, %v5426
    %v5428 = vrot.slane %v5427, 4
    %v5430 = vshll.u32 %v5331, 16
    %v5432 = vrot.slane %v5430, 5
    %v5433 = vsel %vm1204, %v5428, %v5432
    %v5434 = vshrl.u32 %v5331, 16
    %v5436 = vrot.slane %v5434, 4
    %v5437 = vor.u32 %v5436, %v5432
    %v5438 = vrot.slane %v5437, 4
    %v5440 = vshll.u32 %v5332, 16
    %v5442 = vrot.slane %v5440, 5
    %v5443 = vsel %vm1204, %v5438, %v5442
    %v5445 = vshrl.u32 %v5333, 16
    %v5447 = vrot.slane %v5445, 4
    %v5448 = vshll.u32 %v5333, 16
    %v5450 = vrot.slane %v5448, 5
    %v5451 = vor.u32 %v5447, %v5450
    %v5452 = vrot.slane %v5451, 4
    %v5454 = vshll.u32 %v5334, 16
    %v5456 = vrot.slane %v5454, 5
    %v5457 = vsel %vm1204, %v5452, %v5456
    %v5458 = vshrl.u32 %v5334, 16
    %v5460 = vrot.slane %v5458, 4
    %v5461 = vor.u32 %v5460, %v5456
    %v5462 = vrot.slane %v5461, 4
    %v5464 = vshll.u32 %v5335, 16
    %v5466 = vrot.slane %v5464, 5
    %v5467 = vsel %vm1204, %v5462, %v5466
    %v5469 = vshrl.u32 %v5336, 16
    %v5471 = vrot.slane %v5469, 4
    %v5472 = vshll.u32 %v5336, 16
    %v5474 = vrot.slane %v5472, 5
    %v5475 = vor.u32 %v5471, %v5474
    %v5476 = vrot.slane %v5475, 4
    %v5478 = vshll.u32 %v5337, 16
    %v5480 = vrot.slane %v5478, 5
    %v5481 = vsel %vm1204, %v5476, %v5480
    %v5482 = vshrl.u32 %v5337, 16
    %v5484 = vrot.slane %v5482, 4
    %v5485 = vor.u32 %v5484, %v5480
    %v5486 = vrot.slane %v5485, 4
    %v5488 = vshll.u32 %v5338, 16
    %v5490 = vrot.slane %v5488, 5
    %v5491 = vsel %vm1204, %v5486, %v5490
    %v5493 = vshrl.u32 %v5339, 16
    %v5495 = vrot.slane %v5493, 4
    %v5496 = vshll.u32 %v5339, 16
    %v5498 = vrot.slane %v5496, 5
    %v5499 = vor.u32 %v5495, %v5498
    %v5500 = vrot.slane %v5499, 4
    %v5502 = vshll.u32 %v5340, 16
    %v5504 = vrot.slane %v5502, 5
    %v5505 = vsel %vm1204, %v5500, %v5504
    %v5506 = vshrl.u32 %v5340, 16
    %v5508 = vrot.slane %v5506, 4
    %v5509 = vor.u32 %v5508, %v5504
    %v5510 = vrot.slane %v5509, 4
    %v5512 = vshll.u32 %v5341, 16
    %v5514 = vrot.slane %v5512, 5
    %v5515 = vsel %vm1204, %v5510, %v5514
    %v5517 = vshrl.u32 %v5342, 16
    %v5519 = vrot.slane %v5517, 4
    %v5520 = vshll.u32 %v5342, 16
    %v5522 = vrot.slane %v5520, 5
    %v5523 = vor.u32 %v5519, %v5522
    %v5524 = vrot.slane %v5523, 4
    %v5526 = vshll.u32 %v5343, 16
    %v5528 = vrot.slane %v5526, 5
    %v5529 = vsel %vm1204, %v5524, %v5528
    %v5530 = vshrl.u32 %v5343, 16
    %v5532 = vrot.slane %v5530, 4
    %v5533 = vor.u32 %v5532, %v5528
    %v5534 = vrot.slane %v5533, 4
    %v5536 = vshll.u32 %v5344, 16
    %v5538 = vrot.slane %v5536, 5
    %v5539 = vsel %vm1204, %v5534, %v5538
    %v5541 = vshrl.u32 %v5345, 16
    %v5543 = vrot.slane %v5541, 4
    %v5544 = vshll.u32 %v5345, 16
    %v5546 = vrot.slane %v5544, 5
    %v5547 = vor.u32 %v5543, %v5546
    %v5548 = vrot.slane %v5547, 4
    %v5550 = vshll.u32 %v5346, 16
    %v5552 = vrot.slane %v5550, 5
    %v5553 = vsel %vm1204, %v5548, %v5552
    %v5554 = vshrl.u32 %v5346, 16
    %v5556 = vrot.slane %v5554, 4
    %v5557 = vor.u32 %v5556, %v5552
    %v5558 = vrot.slane %v5557, 4
    %v5560 = vshll.u32 %v5347, 16
    %v5562 = vrot.slane %v5560, 5
    %v5563 = vsel %vm1204, %v5558, %v5562
    %v5565 = vshrl.u32 %v5348, 16
    %v5567 = vrot.slane %v5565, 4
    %v5568 = vshll.u32 %v5348, 16
    %v5570 = vrot.slane %v5568, 5
    %v5571 = vor.u32 %v5567, %v5570
    %v5572 = vrot.slane %v5571, 4
    %v5574 = vshll.u32 %v5349, 16
    %v5576 = vrot.slane %v5574, 5
    %v5577 = vsel %vm1204, %v5572, %v5576
    %v5578 = vshrl.u32 %v5349, 16
    %v5580 = vrot.slane %v5578, 4
    %v5581 = vor.u32 %v5580, %v5576
    %v5582 = vrot.slane %v5581, 4
    %v5584 = vshll.u32 %v5350, 16
    %v5586 = vrot.slane %v5584, 5
    %v5587 = vsel %vm1204, %v5582, %v5586
    %v5589 = vshrl.u32 %v5351, 16
    %v5591 = vrot.slane %v5589, 4
    %v5592 = vshll.u32 %v5351, 16
    %v5594 = vrot.slane %v5592, 5
    %v5595 = vor.u32 %v5591, %v5594
    %v5596 = vrot.slane %v5595, 4
    %v5598 = vshll.u32 %v5352, 16
    %v5600 = vrot.slane %v5598, 5
    %v5601 = vsel %vm1204, %v5596, %v5600
    %v5602 = vshrl.u32 %v5352, 16
    %v5604 = vrot.slane %v5602, 4
    %v5605 = vor.u32 %v5604, %v5600
    %v5606 = vrot.slane %v5605, 4
    %v5608 = vshll.u32 %v5353, 16
    %v5610 = vrot.slane %v5608, 5
    %v5611 = vsel %vm1204, %v5606, %v5610
    %v5613 = vshrl.u32 %v5354, 16
    %v5615 = vrot.slane %v5613, 4
    %v5616 = vshll.u32 %v5354, 16
    %v5618 = vrot.slane %v5616, 5
    %v5619 = vor.u32 %v5615, %v5618
    %v5620 = vrot.slane %v5619, 4
    %v5622 = vshll.u32 %v5355, 16
    %v5624 = vrot.slane %v5622, 5
    %v5625 = vsel %vm1204, %v5620, %v5624
    %v5626 = vshrl.u32 %v5355, 16
    %v5628 = vrot.slane %v5626, 4
    %v5629 = vor.u32 %v5628, %v5624
    %v5630 = vrot.slane %v5629, 4
    %v5632 = vshll.u32 %v5356, 16
    %v5634 = vrot.slane %v5632, 5
    %v5635 = vsel %vm1204, %v5630, %v5634
    %v5637 = vshrl.u32 %v5357, 16
    %v5639 = vrot.slane %v5637, 4
    %v5640 = vshll.u32 %v5357, 16
    %v5642 = vrot.slane %v5640, 5
    %v5643 = vor.u32 %v5639, %v5642
    %v5644 = vrot.slane %v5643, 4
    %v5646 = vshll.u32 %v5358, 16
    %v5648 = vrot.slane %v5646, 5
    %v5649 = vsel %vm1204, %v5644, %v5648
    %v5650 = vshrl.u32 %v5358, 16
    %v5652 = vrot.slane %v5650, 4
    %v5653 = vor.u32 %v5652, %v5648
    %v5654 = vrot.slane %v5653, 4
    %v5656 = vshll.u32 %v5359, 16
    %v5658 = vrot.slane %v5656, 5
    %v5659 = vsel %vm1204, %v5654, %v5658
    %v5661 = vshrl.u32 %v5360, 16
    %v5663 = vrot.slane %v5661, 4
    %v5664 = vshll.u32 %v5360, 16
    %v5666 = vrot.slane %v5664, 5
    %v5667 = vor.u32 %v5663, %v5666
    %v5668 = vrot.slane %v5667, 4
    %v5670 = vshll.u32 %v5361, 16
    %v5672 = vrot.slane %v5670, 5
    %v5673 = vsel %vm1204, %v5668, %v5672
    %v5674 = vshrl.u32 %v5361, 16
    %v5676 = vrot.slane %v5674, 4
    %v5677 = vor.u32 %v5676, %v5672
    %v5678 = vrot.slane %v5677, 4
    %v5680 = vshll.u32 %v5362, 16
    %v5682 = vrot.slane %v5680, 5
    %v5683 = vsel %vm1204, %v5678, %v5682
    %v5685 = vshrl.u32 %v5363, 16
    %v5687 = vrot.slane %v5685, 4
    %v5688 = vshll.u32 %v5363, 16
    %v5690 = vrot.slane %v5688, 5
    %v5691 = vor.u32 %v5687, %v5690
    %v5692 = vrot.slane %v5691, 4
    %v5694 = vshll.u32 %v5364, 16
    %v5696 = vrot.slane %v5694, 5
    %v5697 = vsel %vm1204, %v5692, %v5696
    %v5698 = vshrl.u32 %v5364, 16
    %v5700 = vrot.slane %v5698, 4
    %v5701 = vor.u32 %v5700, %v5696
    %v5702 = vrot.slane %v5701, 4
    %v5704 = vshll.u32 %v5365, 16
    %v5706 = vrot.slane %v5704, 5
    %v5707 = vsel %vm1204, %v5702, %v5706
    %v5709 = vshrl.u32 %v5366, 16
    %v5711 = vrot.slane %v5709, 4
    %v5712 = vshll.u32 %v5366, 16
    %v5714 = vrot.slane %v5712, 5
    %v5715 = vor.u32 %v5711, %v5714
    %v5716 = vrot.slane %v5715, 4
    %v5718 = vshll.u32 %v5367, 16
    %v5720 = vrot.slane %v5718, 5
    %v5721 = vsel %vm1204, %v5716, %v5720
    %v5722 = vshrl.u32 %v5367, 16
    %v5724 = vrot.slane %v5722, 4
    %v5725 = vor.u32 %v5724, %v5720
    %v5726 = vrot.slane %v5725, 4
    %v5728 = vshll.u32 %v5368, 16
    %v5730 = vrot.slane %v5728, 5
    %v5731 = vsel %vm1204, %v5726, %v5730
    %v5733 = vshrl.u32 %v5369, 16
    %v5735 = vrot.slane %v5733, 4
    %v5736 = vshll.u32 %v5369, 16
    %v5738 = vrot.slane %v5736, 5
    %v5739 = vor.u32 %v5735, %v5738
    %v5740 = vrot.slane %v5739, 4
    %v5742 = vshll.u32 %v5370, 16
    %v5744 = vrot.slane %v5742, 5
    %v5745 = vsel %vm1204, %v5740, %v5744
    %v5746 = vshrl.u32 %v5370, 16
    %v5748 = vrot.slane %v5746, 4
    %v5749 = vor.u32 %v5748, %v5744
    %v5750 = vrot.slane %v5749, 4
    %v5752 = vshll.u32 %v5371, 16
    %v5754 = vrot.slane %v5752, 5
    %v5755 = vsel %vm1204, %v5750, %v5754
    %5788 = vst [vmem:[#allocation3 + $0x49c] sm:$0xf] %v5385
    %5789 = vst [vmem:[#allocation3 + $0x4c0] sm:$0xf] %v5395
    %5790 = vst [vmem:[#allocation3 + $0x4e4] sm:$0xf] %v5409
    %5791 = vst [vmem:[#allocation3 + $0x508] sm:$0xf] %v5419
    %5792 = vst [vmem:[#allocation3 + $0x52c] sm:$0xf] %v5433
    %5793 = vst [vmem:[#allocation3 + $0x550] sm:$0xf] %v5443
    %5794 = vst [vmem:[#allocation3 + $0x574] sm:$0xf] %v5457
    %5795 = vst [vmem:[#allocation3 + $0x598] sm:$0xf] %v5467
    %5796 = vst [vmem:[#allocation3 + $0x5bc] sm:$0xf] %v5481
    %5797 = vst [vmem:[#allocation3 + $0x5e0] sm:$0xf] %v5491
    %5798 = vst [vmem:[#allocation3 + $0x604] sm:$0xf] %v5505
    %5799 = vst [vmem:[#allocation3 + $0x628] sm:$0xf] %v5515
    %5800 = vst [vmem:[#allocation3 + $0x64c] sm:$0xf] %v5529
    %5801 = vst [vmem:[#allocation3 + $0x670] sm:$0xf] %v5539
    %5802 = vst [vmem:[#allocation3 + $0x694] sm:$0xf] %v5553
    %5803 = vst [vmem:[#allocation3 + $0x6b8] sm:$0xf] %v5563
    %5804 = vst [vmem:[#allocation3 + $0x6dc] sm:$0xf] %v5577
    %5805 = vst [vmem:[#allocation3 + $0x700] sm:$0xf] %v5587
    %5806 = vst [vmem:[#allocation3 + $0x724] sm:$0xf] %v5601
    %5807 = vst [vmem:[#allocation3 + $0x748] sm:$0xf] %v5611
    %5808 = vst [vmem:[#allocation3 + $0x76c] sm:$0xf] %v5625
    %5809 = vst [vmem:[#allocation3 + $0x790] sm:$0xf] %v5635
    %5810 = vst [vmem:[#allocation3 + $0x7b4] sm:$0xf] %v5649
    %5811 = vst [vmem:[#allocation3 + $0x7d8] sm:$0xf] %v5659
    %5812 = vst [vmem:[#allocation3 + $0x7fc] sm:$0xf] %v5673
    %5813 = vst [vmem:[#allocation3 + $0x820] sm:$0xf] %v5683
    %5814 = vst [vmem:[#allocation3 + $0x844] sm:$0xf] %v5697
    %5815 = vst [vmem:[#allocation3 + $0x868] sm:$0xf] %v5707
    %5816 = vst [vmem:[#allocation3 + $0x88c] sm:$0xf] %v5721
    %5817 = vst [vmem:[#allocation3 + $0x8b0] sm:$0xf] %v5731
    %5818 = vst [vmem:[#allocation3 + $0x8d4] sm:$0xf] %v5745
    %5819 = vst [vmem:[#allocation3 + $0x8f8] sm:$0xf] %v5755
    %v5820 = vld [vmem:[%s5259] sm:$0xe]
    %v5821 = vld [vmem:[%s5259 + $0x4] sm:$0xf]
    %v5822 = vld [vmem:[%s5259 + $0x8] sm:$0x1]
    %v5823 = vld [vmem:[%s5259 + $0xc] sm:$0xe]
    %v5824 = vld [vmem:[%s5259 + $0x10] sm:$0xf]
    %v5825 = vld [vmem:[%s5259 + $0x14] sm:$0x1]
    %v5826 = vld [vmem:[%s5259 + $0x18] sm:$0xe]
    %v5827 = vld [vmem:[%s5259 + $0x1c] sm:$0xf]
    %v5828 = vld [vmem:[%s5259 + $0x20] sm:$0x1]
    %v5829 = vld [vmem:[%s5259 + $0x24] sm:$0xe]
    %v5830 = vld [vmem:[%s5259 + $0x28] sm:$0xf]
    %v5831 = vld [vmem:[%s5259 + $0x2c] sm:$0x1]
    %v5832 = vld [vmem:[%s5259 + $0x30] sm:$0xe]
    %v5833 = vld [vmem:[%s5259 + $0x34] sm:$0xf]
    %v5834 = vld [vmem:[%s5259 + $0x38] sm:$0x1]
    %v5835 = vld [vmem:[%s5259 + $0x3c] sm:$0xe]
    %v5836 = vld [vmem:[%s5259 + $0x40] sm:$0xf]
    %v5837 = vld [vmem:[%s5259 + $0x44] sm:$0x1]
    %v5838 = vld [vmem:[%s5259 + $0x48] sm:$0xe]
    %v5839 = vld [vmem:[%s5259 + $0x4c] sm:$0xf]
    %v5840 = vld [vmem:[%s5259 + $0x50] sm:$0x1]
    %v5841 = vld [vmem:[%s5259 + $0x54] sm:$0xe]
    %v5842 = vld [vmem:[%s5259 + $0x58] sm:$0xf]
    %v5843 = vld [vmem:[%s5259 + $0x5c] sm:$0x1]
    %v5844 = vld [vmem:[%s5259 + $0x60] sm:$0xe]
    %v5845 = vld [vmem:[%s5259 + $0x64] sm:$0xf]
    %v5846 = vld [vmem:[%s5259 + $0x68] sm:$0x1]
    %v5847 = vld [vmem:[%s5259 + $0x6c] sm:$0xe]
    %v5848 = vld [vmem:[%s5259 + $0x70] sm:$0xf]
    %v5849 = vld [vmem:[%s5259 + $0x74] sm:$0x1]
    %v5850 = vld [vmem:[%s5259 + $0x78] sm:$0xe]
    %v5851 = vld [vmem:[%s5259 + $0x7c] sm:$0xf]
    %v5852 = vld [vmem:[%s5259 + $0x80] sm:$0x1]
    %v5853 = vld [vmem:[%s5259 + $0x84] sm:$0xe]
    %v5854 = vld [vmem:[%s5259 + $0x88] sm:$0xf]
    %v5855 = vld [vmem:[%s5259 + $0x8c] sm:$0x1]
    %v5856 = vld [vmem:[%s5259 + $0x90] sm:$0xe]
    %v5857 = vld [vmem:[%s5259 + $0x94] sm:$0xf]
    %v5858 = vld [vmem:[%s5259 + $0x98] sm:$0x1]
    %v5859 = vld [vmem:[%s5259 + $0x9c] sm:$0xe]
    %v5860 = vld [vmem:[%s5259 + $0xa0] sm:$0xf]
    %v5861 = vld [vmem:[%s5259 + $0xa4] sm:$0x1]
    %v5862 = vld [vmem:[%s5259 + $0xa8] sm:$0xe]
    %v5863 = vld [vmem:[%s5259 + $0xac] sm:$0xf]
    %v5864 = vld [vmem:[%s5259 + $0xb0] sm:$0x1]
    %v5865 = vld [vmem:[%s5259 + $0xb4] sm:$0xe]
    %v5866 = vld [vmem:[%s5259 + $0xb8] sm:$0xf]
    %v5867 = vld [vmem:[%s5259 + $0xbc] sm:$0x1]
    %v5916 = vrot.slane %v5820, 5
    %v5917 = vrot.slane %v5916, 4
    %v5918 = vrot.slane %v5821, 5
    %v5919 = vsel %vm1751, %v5917, %v5918
    %v5920 = vrot.slane %v5918, 4
    %v5921 = vrot.slane %v5822, 5
    %v5922 = vsel %vm1751, %v5920, %v5921
    %v5923 = vrot.slane %v5823, 5
    %v5924 = vrot.slane %v5923, 4
    %v5925 = vrot.slane %v5824, 5
    %v5926 = vsel %vm1751, %v5924, %v5925
    %v5927 = vrot.slane %v5925, 4
    %v5928 = vrot.slane %v5825, 5
    %v5929 = vsel %vm1751, %v5927, %v5928
    %v5930 = vrot.slane %v5826, 5
    %v5931 = vrot.slane %v5930, 4
    %v5932 = vrot.slane %v5827, 5
    %v5933 = vsel %vm1751, %v5931, %v5932
    %v5934 = vrot.slane %v5932, 4
    %v5935 = vrot.slane %v5828, 5
    %v5936 = vsel %vm1751, %v5934, %v5935
    %v5937 = vrot.slane %v5829, 5
    %v5938 = vrot.slane %v5937, 4
    %v5939 = vrot.slane %v5830, 5
    %v5940 = vsel %vm1751, %v5938, %v5939
    %v5941 = vrot.slane %v5939, 4
    %v5942 = vrot.slane %v5831, 5
    %v5943 = vsel %vm1751, %v5941, %v5942
    %v5944 = vrot.slane %v5832, 5
    %v5945 = vrot.slane %v5944, 4
    %v5946 = vrot.slane %v5833, 5
    %v5947 = vsel %vm1751, %v5945, %v5946
    %v5948 = vrot.slane %v5946, 4
    %v5949 = vrot.slane %v5834, 5
    %v5950 = vsel %vm1751, %v5948, %v5949
    %v5951 = vrot.slane %v5835, 5
    %v5952 = vrot.slane %v5951, 4
    %v5953 = vrot.slane %v5836, 5
    %v5954 = vsel %vm1751, %v5952, %v5953
    %v5955 = vrot.slane %v5953, 4
    %v5956 = vrot.slane %v5837, 5
    %v5957 = vsel %vm1751, %v5955, %v5956
    %v5958 = vrot.slane %v5838, 5
    %v5959 = vrot.slane %v5958, 4
    %v5960 = vrot.slane %v5839, 5
    %v5961 = vsel %vm1751, %v5959, %v5960
    %v5962 = vrot.slane %v5960, 4
    %v5963 = vrot.slane %v5840, 5
    %v5964 = vsel %vm1751, %v5962, %v5963
    %v5965 = vrot.slane %v5841, 5
    %v5966 = vrot.slane %v5965, 4
    %v5967 = vrot.slane %v5842, 5
    %v5968 = vsel %vm1751, %v5966, %v5967
    %v5969 = vrot.slane %v5967, 4
    %v5970 = vrot.slane %v5843, 5
    %v5971 = vsel %vm1751, %v5969, %v5970
    %v5972 = vrot.slane %v5844, 5
    %v5973 = vrot.slane %v5972, 4
    %v5974 = vrot.slane %v5845, 5
    %v5975 = vsel %vm1751, %v5973, %v5974
    %v5976 = vrot.slane %v5974, 4
    %v5977 = vrot.slane %v5846, 5
    %v5978 = vsel %vm1751, %v5976, %v5977
    %v5979 = vrot.slane %v5847, 5
    %v5980 = vrot.slane %v5979, 4
    %v5981 = vrot.slane %v5848, 5
    %v5982 = vsel %vm1751, %v5980, %v5981
    %v5983 = vrot.slane %v5981, 4
    %v5984 = vrot.slane %v5849, 5
    %v5985 = vsel %vm1751, %v5983, %v5984
    %v5986 = vrot.slane %v5850, 5
    %v5987 = vrot.slane %v5986, 4
    %v5988 = vrot.slane %v5851, 5
    %v5989 = vsel %vm1751, %v5987, %v5988
    %v5990 = vrot.slane %v5988, 4
    %v5991 = vrot.slane %v5852, 5
    %v5992 = vsel %vm1751, %v5990, %v5991
    %v5993 = vrot.slane %v5853, 5
    %v5994 = vrot.slane %v5993, 4
    %v5995 = vrot.slane %v5854, 5
    %v5996 = vsel %vm1751, %v5994, %v5995
    %v5997 = vrot.slane %v5995, 4
    %v5998 = vrot.slane %v5855, 5
    %v5999 = vsel %vm1751, %v5997, %v5998
    %v6000 = vrot.slane %v5856, 5
    %v6001 = vrot.slane %v6000, 4
    %v6002 = vrot.slane %v5857, 5
    %v6003 = vsel %vm1751, %v6001, %v6002
    %v6004 = vrot.slane %v6002, 4
    %v6005 = vrot.slane %v5858, 5
    %v6006 = vsel %vm1751, %v6004, %v6005
    %v6007 = vrot.slane %v5859, 5
    %v6008 = vrot.slane %v6007, 4
    %v6009 = vrot.slane %v5860, 5
    %v6010 = vsel %vm1751, %v6008, %v6009
    %v6011 = vrot.slane %v6009, 4
    %v6012 = vrot.slane %v5861, 5
    %v6013 = vsel %vm1751, %v6011, %v6012
    %v6014 = vrot.slane %v5862, 5
    %v6015 = vrot.slane %v6014, 4
    %v6016 = vrot.slane %v5863, 5
    %v6017 = vsel %vm1751, %v6015, %v6016
    %v6018 = vrot.slane %v6016, 4
    %v6019 = vrot.slane %v5864, 5
    %v6020 = vsel %vm1751, %v6018, %v6019
    %v6021 = vrot.slane %v5865, 5
    %v6022 = vrot.slane %v6021, 4
    %v6023 = vrot.slane %v5866, 5
    %v6024 = vsel %vm1751, %v6022, %v6023
    %v6025 = vrot.slane %v6023, 4
    %v6026 = vrot.slane %v5867, 5
    %v6027 = vsel %vm1751, %v6025, %v6026
    %6060 = vst [vmem:[#allocation3 + $0x4a0] sm:$0xf] %v5919
    %6061 = vst [vmem:[#allocation3 + $0x4c4] sm:$0xf] %v5922
    %6062 = vst [vmem:[#allocation3 + $0x4e8] sm:$0xf] %v5926
    %6063 = vst [vmem:[#allocation3 + $0x50c] sm:$0xf] %v5929
    %6064 = vst [vmem:[#allocation3 + $0x530] sm:$0xf] %v5933
    %6065 = vst [vmem:[#allocation3 + $0x554] sm:$0xf] %v5936
    %6066 = vst [vmem:[#allocation3 + $0x578] sm:$0xf] %v5940
    %6067 = vst [vmem:[#allocation3 + $0x59c] sm:$0xf] %v5943
    %6068 = vst [vmem:[#allocation3 + $0x5c0] sm:$0xf] %v5947
    %6069 = vst [vmem:[#allocation3 + $0x5e4] sm:$0xf] %v5950
    %6070 = vst [vmem:[#allocation3 + $0x608] sm:$0xf] %v5954
    %6071 = vst [vmem:[#allocation3 + $0x62c] sm:$0xf] %v5957
    %6072 = vst [vmem:[#allocation3 + $0x650] sm:$0xf] %v5961
    %6073 = vst [vmem:[#allocation3 + $0x674] sm:$0xf] %v5964
    %6074 = vst [vmem:[#allocation3 + $0x698] sm:$0xf] %v5968
    %6075 = vst [vmem:[#allocation3 + $0x6bc] sm:$0xf] %v5971
    %6076 = vst [vmem:[#allocation3 + $0x6e0] sm:$0xf] %v5975
    %6077 = vst [vmem:[#allocation3 + $0x704] sm:$0xf] %v5978
    %6078 = vst [vmem:[#allocation3 + $0x728] sm:$0xf] %v5982
    %6079 = vst [vmem:[#allocation3 + $0x74c] sm:$0xf] %v5985
    %6080 = vst [vmem:[#allocation3 + $0x770] sm:$0xf] %v5989
    %6081 = vst [vmem:[#allocation3 + $0x794] sm:$0xf] %v5992
    %6082 = vst [vmem:[#allocation3 + $0x7b8] sm:$0xf] %v5996
    %6083 = vst [vmem:[#allocation3 + $0x7dc] sm:$0xf] %v5999
    %6084 = vst [vmem:[#allocation3 + $0x800] sm:$0xf] %v6003
    %6085 = vst [vmem:[#allocation3 + $0x824] sm:$0xf] %v6006
    %6086 = vst [vmem:[#allocation3 + $0x848] sm:$0xf] %v6010
    %6087 = vst [vmem:[#allocation3 + $0x86c] sm:$0xf] %v6013
    %6088 = vst [vmem:[#allocation3 + $0x890] sm:$0xf] %v6017
    %6089 = vst [vmem:[#allocation3 + $0x8b4] sm:$0xf] %v6020
    %6090 = vst [vmem:[#allocation3 + $0x8d8] sm:$0xf] %v6024
    %6091 = vst [vmem:[#allocation3 + $0x8fc] sm:$0xf] %v6027
    %v6092 = vld [vmem:[#allocation3] sm:$0xff]
    %v6093 = vld [vmem:[#allocation3 + $0x8] sm:$0xff]
    %v6094 = vld [vmem:[#allocation3 + $0x10] sm:$0xff]
    %v6095 = vld [vmem:[#allocation3 + $0x18] sm:$0xff]
    %v6096 = vld [vmem:[#allocation3 + $0x20] sm:$0xf]
    %v6097 = vld [vmem:[#allocation3 + $0x24] sm:$0xff]
    %v6098 = vld [vmem:[#allocation3 + $0x2c] sm:$0xff]
    %v6099 = vld [vmem:[#allocation3 + $0x34] sm:$0xff]
    %v6100 = vld [vmem:[#allocation3 + $0x3c] sm:$0xff]
    %v6101 = vld [vmem:[#allocation3 + $0x44] sm:$0xf]
    %v6102 = vld [vmem:[#allocation3 + $0x48] sm:$0xff]
    %v6103 = vld [vmem:[#allocation3 + $0x50] sm:$0xff]
    %v6104 = vld [vmem:[#allocation3 + $0x58] sm:$0xff]
    %v6105 = vld [vmem:[#allocation3 + $0x60] sm:$0xff]
    %v6106 = vld [vmem:[#allocation3 + $0x68] sm:$0xf]
    %v6107 = vld [vmem:[#allocation3 + $0x6c] sm:$0xff]
    %v6108 = vld [vmem:[#allocation3 + $0x74] sm:$0xff]
    %v6109 = vld [vmem:[#allocation3 + $0x7c] sm:$0xff]
    %v6110 = vld [vmem:[#allocation3 + $0x84] sm:$0xff]
    %v6111 = vld [vmem:[#allocation3 + $0x8c] sm:$0xf]
    %v6112 = vld [vmem:[#allocation3 + $0x90] sm:$0xff]
    %v6113 = vld [vmem:[#allocation3 + $0x98] sm:$0xff]
    %v6114 = vld [vmem:[#allocation3 + $0xa0] sm:$0xff]
    %v6115 = vld [vmem:[#allocation3 + $0xa8] sm:$0xff]
    %v6116 = vld [vmem:[#allocation3 + $0xb0] sm:$0xf]
    %v6117 = vld [vmem:[#allocation3 + $0xb4] sm:$0xff]
    %v6118 = vld [vmem:[#allocation3 + $0xbc] sm:$0xff]
    %v6119 = vld [vmem:[#allocation3 + $0xc4] sm:$0xff]
    %v6120 = vld [vmem:[#allocation3 + $0xcc] sm:$0xff]
    %v6121 = vld [vmem:[#allocation3 + $0xd4] sm:$0xf]
    %v6122 = vld [vmem:[#allocation3 + $0xd8] sm:$0xff]
    %v6123 = vld [vmem:[#allocation3 + $0xe0] sm:$0xff]
    %v6124 = vld [vmem:[#allocation3 + $0xe8] sm:$0xff]
    %v6125 = vld [vmem:[#allocation3 + $0xf0] sm:$0xff]
    %v6126 = vld [vmem:[#allocation3 + $0xf8] sm:$0xf]
    %v6127 = vld [vmem:[#allocation3 + $0xfc] sm:$0xff]
    %v6128 = vld [vmem:[#allocation3 + $0x104] sm:$0xff]
    %v6129 = vld [vmem:[#allocation3 + $0x10c] sm:$0xff]
    %v6130 = vld [vmem:[#allocation3 + $0x114] sm:$0xff]
    %v6131 = vld [vmem:[#allocation3 + $0x11c] sm:$0xf]
    %v6132 = vld [vmem:[#allocation3 + $0x120] sm:$0xff]
    %v6133 = vld [vmem:[#allocation3 + $0x128] sm:$0xff]
    %v6134 = vld [vmem:[#allocation3 + $0x130] sm:$0xff]
    %v6135 = vld [vmem:[#allocation3 + $0x138] sm:$0xff]
    %v6136 = vld [vmem:[#allocation3 + $0x140] sm:$0xf]
    %v6137 = vld [vmem:[#allocation3 + $0x144] sm:$0xff]
    %v6138 = vld [vmem:[#allocation3 + $0x14c] sm:$0xff]
    %v6139 = vld [vmem:[#allocation3 + $0x154] sm:$0xff]
    %v6140 = vld [vmem:[#allocation3 + $0x15c] sm:$0xff]
    %v6141 = vld [vmem:[#allocation3 + $0x164] sm:$0xf]
    %v6142 = vld [vmem:[#allocation3 + $0x168] sm:$0xff]
    %v6143 = vld [vmem:[#allocation3 + $0x170] sm:$0xff]
    %v6144 = vld [vmem:[#allocation3 + $0x178] sm:$0xff]
    %v6145 = vld [vmem:[#allocation3 + $0x180] sm:$0xff]
    %v6146 = vld [vmem:[#allocation3 + $0x188] sm:$0xf]
    %v6147 = vld [vmem:[#allocation3 + $0x18c] sm:$0xff]
    %v6148 = vld [vmem:[#allocation3 + $0x194] sm:$0xff]
    %v6149 = vld [vmem:[#allocation3 + $0x19c] sm:$0xff]
    %v6150 = vld [vmem:[#allocation3 + $0x1a4] sm:$0xff]
    %v6151 = vld [vmem:[#allocation3 + $0x1ac] sm:$0xf]
    %v6152 = vld [vmem:[#allocation3 + $0x1b0] sm:$0xff]
    %v6153 = vld [vmem:[#allocation3 + $0x1b8] sm:$0xff]
    %v6154 = vld [vmem:[#allocation3 + $0x1c0] sm:$0xff]
    %v6155 = vld [vmem:[#allocation3 + $0x1c8] sm:$0xff]
    %v6156 = vld [vmem:[#allocation3 + $0x1d0] sm:$0xf]
    %v6157 = vld [vmem:[#allocation3 + $0x1d4] sm:$0xff]
    %v6158 = vld [vmem:[#allocation3 + $0x1dc] sm:$0xff]
    %v6159 = vld [vmem:[#allocation3 + $0x1e4] sm:$0xff]
    %v6160 = vld [vmem:[#allocation3 + $0x1ec] sm:$0xff]
    %v6161 = vld [vmem:[#allocation3 + $0x1f4] sm:$0xf]
    %v6162 = vld [vmem:[#allocation3 + $0x1f8] sm:$0xff]
    %v6163 = vld [vmem:[#allocation3 + $0x200] sm:$0xff]
    %v6164 = vld [vmem:[#allocation3 + $0x208] sm:$0xff]
    %v6165 = vld [vmem:[#allocation3 + $0x210] sm:$0xff]
    %v6166 = vld [vmem:[#allocation3 + $0x218] sm:$0xf]
    %v6167 = vld [vmem:[#allocation3 + $0x21c] sm:$0xff]
    %v6168 = vld [vmem:[#allocation3 + $0x224] sm:$0xff]
    %v6169 = vld [vmem:[#allocation3 + $0x22c] sm:$0xff]
    %v6170 = vld [vmem:[#allocation3 + $0x234] sm:$0xff]
    %v6171 = vld [vmem:[#allocation3 + $0x23c] sm:$0xf]
    %v6172 = vld [vmem:[#allocation8] sm:$0xf]
    %v6173 = vld [vmem:[#allocation8 + $0x4] sm:$0xf]
    %v6174 = vld [vmem:[#allocation8 + $0x8] sm:$0xf]
    %v6175 = vld [vmem:[#allocation8 + $0xc] sm:$0xf]
    %v6176 = vld [vmem:[#allocation8 + $0x10] sm:$0xf]
    %v6177 = vld [vmem:[#allocation8 + $0x14] sm:$0xf]
    %v6178 = vld [vmem:[#allocation8 + $0x18] sm:$0xf]
    %v6179 = vld [vmem:[#allocation8 + $0x1c] sm:$0xf]
    %v6180 = vld [vmem:[#allocation8 + $0x20] sm:$0xf]
    %v6181 = vld [vmem:[#allocation8 + $0x24] sm:$0xf]
    %v6182 = vld [vmem:[#allocation8 + $0x28] sm:$0xf]
    %v6183 = vld [vmem:[#allocation8 + $0x2c] sm:$0xf]
    %v6184 = vld [vmem:[#allocation8 + $0x30] sm:$0xf]
    %v6185 = vld [vmem:[#allocation8 + $0x34] sm:$0xf]
    %v6186 = vld [vmem:[#allocation8 + $0x38] sm:$0xf]
    %v6187 = vld [vmem:[#allocation8 + $0x3c] sm:$0xf]
    %v6188 = vld [vmem:[#allocation8 + $0x40] sm:$0xf]
    %v6189 = vld [vmem:[#allocation8 + $0x44] sm:$0xf]
    %v6190 = vld [vmem:[#allocation8 + $0x48] sm:$0xf]
    %v6191 = vld [vmem:[#allocation8 + $0x4c] sm:$0xf]
    %v6192 = vld [vmem:[#allocation8 + $0x50] sm:$0xf]
    %v6193 = vld [vmem:[#allocation8 + $0x54] sm:$0xf]
    %v6194 = vld [vmem:[#allocation8 + $0x58] sm:$0xf]
    %v6195 = vld [vmem:[#allocation8 + $0x5c] sm:$0xf]
    %v6196 = vld [vmem:[#allocation8 + $0x60] sm:$0xf]
    %v6197 = vld [vmem:[#allocation8 + $0x64] sm:$0xf]
    %v6198 = vld [vmem:[#allocation8 + $0x68] sm:$0xf]
    %v6199 = vld [vmem:[#allocation8 + $0x6c] sm:$0xf]
    %v6200 = vld [vmem:[#allocation8 + $0x70] sm:$0xf]
    %v6201 = vld [vmem:[#allocation8 + $0x74] sm:$0xf]
    %v6202 = vld [vmem:[#allocation8 + $0x78] sm:$0xf]
    %v6203 = vld [vmem:[#allocation8 + $0x7c] sm:$0xf]
    %v6204 = vld [vmem:[#allocation8 + $0x80] sm:$0xf]
    %v6205 = vld [vmem:[#allocation8 + $0x84] sm:$0xf]
    %v6206 = vld [vmem:[#allocation8 + $0x88] sm:$0xf]
    %v6207 = vld [vmem:[#allocation8 + $0x8c] sm:$0xf]
    %v6208 = vld [vmem:[#allocation8 + $0x90] sm:$0xf]
    %v6209 = vld [vmem:[#allocation8 + $0x94] sm:$0xf]
    %v6210 = vld [vmem:[#allocation8 + $0x98] sm:$0xf]
    %v6211 = vld [vmem:[#allocation8 + $0x9c] sm:$0xf]
    %v6212 = vld [vmem:[#allocation8 + $0xa0] sm:$0xf]
    %v6213 = vld [vmem:[#allocation8 + $0xa4] sm:$0xf]
    %v6214 = vld [vmem:[#allocation8 + $0xa8] sm:$0xf]
    %v6215 = vld [vmem:[#allocation8 + $0xac] sm:$0xf]
    %v6216 = vld [vmem:[#allocation8 + $0xb0] sm:$0xf]
    %v6217 = vld [vmem:[#allocation8 + $0xb4] sm:$0xf]
    %v6218 = vld [vmem:[#allocation8 + $0xb8] sm:$0xf]
    %v6219 = vld [vmem:[#allocation8 + $0xbc] sm:$0xf]
    %v6220 = vld [vmem:[#allocation8 + $0xc0] sm:$0xf]
    %v6221 = vld [vmem:[#allocation8 + $0xc4] sm:$0xf]
    %v6222 = vld [vmem:[#allocation8 + $0xc8] sm:$0xf]
    %v6223 = vld [vmem:[#allocation8 + $0xcc] sm:$0xf]
    %v6224 = vld [vmem:[#allocation8 + $0xd0] sm:$0xf]
    %v6225 = vld [vmem:[#allocation8 + $0xd4] sm:$0xf]
    %v6226 = vld [vmem:[#allocation8 + $0xd8] sm:$0xf]
    %v6227 = vld [vmem:[#allocation8 + $0xdc] sm:$0xf]
    %v6228 = vld [vmem:[#allocation8 + $0xe0] sm:$0xf]
    %v6229 = vld [vmem:[#allocation8 + $0xe4] sm:$0xf]
    %v6230 = vld [vmem:[#allocation8 + $0xe8] sm:$0xf]
    %v6231 = vld [vmem:[#allocation8 + $0xec] sm:$0xf]
    %v6232 = vld [vmem:[#allocation8 + $0xf0] sm:$0xf]
    %v6233 = vld [vmem:[#allocation8 + $0xf4] sm:$0xf]
    %v6234 = vld [vmem:[#allocation8 + $0xf8] sm:$0xf]
    %v6235 = vld [vmem:[#allocation8 + $0xfc] sm:$0xf]
    %v6236 = vld [vmem:[#allocation8 + $0x100] sm:$0xf]
    %v6237 = vld [vmem:[#allocation8 + $0x104] sm:$0xf]
    %v6238 = vld [vmem:[#allocation8 + $0x108] sm:$0xf]
    %v6239 = vld [vmem:[#allocation8 + $0x10c] sm:$0xf]
    %v6240 = vld [vmem:[#allocation8 + $0x110] sm:$0xf]
    %v6241 = vld [vmem:[#allocation8 + $0x114] sm:$0xf]
    %v6242 = vld [vmem:[#allocation8 + $0x118] sm:$0xf]
    %v6243 = vld [vmem:[#allocation8 + $0x11c] sm:$0xf]
    %v6244 = vld [vmem:[#allocation8 + $0x120] sm:$0xf]
    %v6245 = vld [vmem:[#allocation8 + $0x124] sm:$0xf]
    %v6246 = vld [vmem:[#allocation8 + $0x128] sm:$0xf]
    %v6247 = vld [vmem:[#allocation8 + $0x12c] sm:$0xf]
    %v6248 = vld [vmem:[#allocation8 + $0x130] sm:$0xf]
    %v6249 = vld [vmem:[#allocation8 + $0x134] sm:$0xf]
    %v6250 = vld [vmem:[#allocation8 + $0x138] sm:$0xf]
    %v6251 = vld [vmem:[#allocation8 + $0x13c] sm:$0xf]
    %v6252 = vld [vmem:[#allocation8 + $0x140] sm:$0xf]
    %v6253 = vld [vmem:[#allocation8 + $0x144] sm:$0xf]
    %v6254 = vld [vmem:[#allocation8 + $0x148] sm:$0xf]
    %v6255 = vld [vmem:[#allocation8 + $0x14c] sm:$0xf]
    %v6256 = vld [vmem:[#allocation8 + $0x150] sm:$0xf]
    %v6257 = vld [vmem:[#allocation8 + $0x154] sm:$0xf]
    %v6258 = vld [vmem:[#allocation8 + $0x158] sm:$0xf]
    %v6259 = vld [vmem:[#allocation8 + $0x15c] sm:$0xf]
    %v6260 = vld [vmem:[#allocation8 + $0x160] sm:$0xf]
    %v6261 = vld [vmem:[#allocation8 + $0x164] sm:$0xf]
    %v6262 = vld [vmem:[#allocation8 + $0x168] sm:$0xf]
    %v6263 = vld [vmem:[#allocation8 + $0x16c] sm:$0xf]
    %v6264 = vld [vmem:[#allocation8 + $0x170] sm:$0xf]
    %v6265 = vld [vmem:[#allocation8 + $0x174] sm:$0xf]
    %v6266 = vld [vmem:[#allocation8 + $0x178] sm:$0xf]
    %v6267 = vld [vmem:[#allocation8 + $0x17c] sm:$0xf]
    %v6268 = vld [vmem:[#allocation8 + $0x180] sm:$0xf]
    %v6269 = vld [vmem:[#allocation8 + $0x184] sm:$0xf]
    %v6270 = vld [vmem:[#allocation8 + $0x188] sm:$0xf]
    %v6271 = vld [vmem:[#allocation8 + $0x18c] sm:$0xf]
    %v6272 = vld [vmem:[#allocation8 + $0x190] sm:$0xf]
    %v6273 = vld [vmem:[#allocation8 + $0x194] sm:$0xf]
    %v6274 = vld [vmem:[#allocation8 + $0x198] sm:$0xf]
    %v6275 = vld [vmem:[#allocation8 + $0x19c] sm:$0xf]
    %v6276 = vld [vmem:[#allocation8 + $0x1a0] sm:$0xf]
    %v6277 = vld [vmem:[#allocation8 + $0x1a4] sm:$0xf]
    %v6278 = vld [vmem:[#allocation8 + $0x1a8] sm:$0xf]
    %v6279 = vld [vmem:[#allocation8 + $0x1ac] sm:$0xf]
    %v6280 = vld [vmem:[#allocation8 + $0x1b0] sm:$0xf]
    %v6281 = vld [vmem:[#allocation8 + $0x1b4] sm:$0xf]
    %v6282 = vld [vmem:[#allocation8 + $0x1b8] sm:$0xf]
    %v6283 = vld [vmem:[#allocation8 + $0x1bc] sm:$0xf]
    %v6284 = vld [vmem:[#allocation8 + $0x1c0] sm:$0xf]
    %v6285 = vld [vmem:[#allocation8 + $0x1c4] sm:$0xf]
    %v6286 = vld [vmem:[#allocation8 + $0x1c8] sm:$0xf]
    %v6287 = vld [vmem:[#allocation8 + $0x1cc] sm:$0xf]
    %v6288 = vld [vmem:[#allocation8 + $0x1d0] sm:$0xf]
    %v6289 = vld [vmem:[#allocation8 + $0x1d4] sm:$0xf]
    %v6290 = vld [vmem:[#allocation8 + $0x1d8] sm:$0xf]
    %v6291 = vld [vmem:[#allocation8 + $0x1dc] sm:$0xf]
    %v6292 = vld [vmem:[#allocation8 + $0x1e0] sm:$0xf]
    %v6293 = vld [vmem:[#allocation8 + $0x1e4] sm:$0xf]
    %v6294 = vld [vmem:[#allocation8 + $0x1e8] sm:$0xf]
    %v6295 = vld [vmem:[#allocation8 + $0x1ec] sm:$0xf]
    %v6296 = vld [vmem:[#allocation8 + $0x1f0] sm:$0xf]
    %v6297 = vld [vmem:[#allocation8 + $0x1f4] sm:$0xf]
    %v6298 = vld [vmem:[#allocation8 + $0x1f8] sm:$0xf]
    %v6299 = vld [vmem:[#allocation8 + $0x1fc] sm:$0xf]
    %v6300 = vld [vmem:[#allocation8 + $0x200] sm:$0xf]
    %v6301 = vld [vmem:[#allocation8 + $0x204] sm:$0xf]
    %v6302 = vld [vmem:[#allocation8 + $0x208] sm:$0xf]
    %v6303 = vld [vmem:[#allocation8 + $0x20c] sm:$0xf]
    %v6304 = vld [vmem:[#allocation8 + $0x210] sm:$0xf]
    %v6305 = vld [vmem:[#allocation8 + $0x214] sm:$0xf]
    %v6306 = vld [vmem:[#allocation8 + $0x218] sm:$0xf]
    %v6307 = vld [vmem:[#allocation8 + $0x21c] sm:$0xf]
    %v6308 = vld [vmem:[#allocation8 + $0x220] sm:$0xf]
    %v6309 = vld [vmem:[#allocation8 + $0x224] sm:$0xf]
    %v6310 = vld [vmem:[#allocation8 + $0x228] sm:$0xf]
    %v6311 = vld [vmem:[#allocation8 + $0x22c] sm:$0xf]
    %v6312 = vld [vmem:[#allocation8 + $0x230] sm:$0xf]
    %v6313 = vld [vmem:[#allocation8 + $0x234] sm:$0xf]
    %v6314 = vld [vmem:[#allocation8 + $0x238] sm:$0xf]
    %v6315 = vld [vmem:[#allocation8 + $0x23c] sm:$0xf]
    %v6396 = vunpack.c.l.b16 %v6092
    %v6397 = vunpack.c.h.b16 %v6092
    %v6398 = vunpack.c.l.b16 %v6093
    %v6399 = vunpack.c.h.b16 %v6093
    %v6400 = vunpack.c.l.b16 %v6094
    %v6401 = vunpack.c.h.b16 %v6094
    %v6402 = vunpack.c.l.b16 %v6095
    %v6403 = vunpack.c.h.b16 %v6095
    %v6404 = vunpack.c.l.b16 %v6096
    %v6405 = vunpack.c.l.b16 %v6097
    %v6406 = vunpack.c.h.b16 %v6097
    %v6407 = vunpack.c.l.b16 %v6098
    %v6408 = vunpack.c.h.b16 %v6098
    %v6409 = vunpack.c.l.b16 %v6099
    %v6410 = vunpack.c.h.b16 %v6099
    %v6411 = vunpack.c.l.b16 %v6100
    %v6412 = vunpack.c.h.b16 %v6100
    %v6413 = vunpack.c.l.b16 %v6101
    %v6414 = vunpack.c.l.b16 %v6102
    %v6415 = vunpack.c.h.b16 %v6102
    %v6416 = vunpack.c.l.b16 %v6103
    %v6417 = vunpack.c.h.b16 %v6103
    %v6418 = vunpack.c.l.b16 %v6104
    %v6419 = vunpack.c.h.b16 %v6104
    %v6420 = vunpack.c.l.b16 %v6105
    %v6421 = vunpack.c.h.b16 %v6105
    %v6422 = vunpack.c.l.b16 %v6106
    %v6423 = vunpack.c.l.b16 %v6107
    %v6424 = vunpack.c.h.b16 %v6107
    %v6425 = vunpack.c.l.b16 %v6108
    %v6426 = vunpack.c.h.b16 %v6108
    %v6427 = vunpack.c.l.b16 %v6109
    %v6428 = vunpack.c.h.b16 %v6109
    %v6429 = vunpack.c.l.b16 %v6110
    %v6430 = vunpack.c.h.b16 %v6110
    %v6431 = vunpack.c.l.b16 %v6111
    %v6432 = vunpack.c.l.b16 %v6112
    %v6433 = vunpack.c.h.b16 %v6112
    %v6434 = vunpack.c.l.b16 %v6113
    %v6435 = vunpack.c.h.b16 %v6113
    %v6436 = vunpack.c.l.b16 %v6114
    %v6437 = vunpack.c.h.b16 %v6114
    %v6438 = vunpack.c.l.b16 %v6115
    %v6439 = vunpack.c.h.b16 %v6115
    %v6440 = vunpack.c.l.b16 %v6116
    %v6441 = vunpack.c.l.b16 %v6117
    %v6442 = vunpack.c.h.b16 %v6117
    %v6443 = vunpack.c.l.b16 %v6118
    %v6444 = vunpack.c.h.b16 %v6118
    %v6445 = vunpack.c.l.b16 %v6119
    %v6446 = vunpack.c.h.b16 %v6119
    %v6447 = vunpack.c.l.b16 %v6120
    %v6448 = vunpack.c.h.b16 %v6120
    %v6449 = vunpack.c.l.b16 %v6121
    %v6450 = vunpack.c.l.b16 %v6122
    %v6451 = vunpack.c.h.b16 %v6122
    %v6452 = vunpack.c.l.b16 %v6123
    %v6453 = vunpack.c.h.b16 %v6123
    %v6454 = vunpack.c.l.b16 %v6124
    %v6455 = vunpack.c.h.b16 %v6124
    %v6456 = vunpack.c.l.b16 %v6125
    %v6457 = vunpack.c.h.b16 %v6125
    %v6458 = vunpack.c.l.b16 %v6126
    %v6459 = vunpack.c.l.b16 %v6127
    %v6460 = vunpack.c.h.b16 %v6127
    %v6461 = vunpack.c.l.b16 %v6128
    %v6462 = vunpack.c.h.b16 %v6128
    %v6463 = vunpack.c.l.b16 %v6129
    %v6464 = vunpack.c.h.b16 %v6129
    %v6465 = vunpack.c.l.b16 %v6130
    %v6466 = vunpack.c.h.b16 %v6130
    %v6467 = vunpack.c.l.b16 %v6131
    %v6468 = vunpack.c.l.b16 %v6132
    %v6469 = vunpack.c.h.b16 %v6132
    %v6470 = vunpack.c.l.b16 %v6133
    %v6471 = vunpack.c.h.b16 %v6133
    %v6472 = vunpack.c.l.b16 %v6134
    %v6473 = vunpack.c.h.b16 %v6134
    %v6474 = vunpack.c.l.b16 %v6135
    %v6475 = vunpack.c.h.b16 %v6135
    %v6476 = vunpack.c.l.b16 %v6136
    %v6477 = vunpack.c.l.b16 %v6137
    %v6478 = vunpack.c.h.b16 %v6137
    %v6479 = vunpack.c.l.b16 %v6138
    %v6480 = vunpack.c.h.b16 %v6138
    %v6481 = vunpack.c.l.b16 %v6139
    %v6482 = vunpack.c.h.b16 %v6139
    %v6483 = vunpack.c.l.b16 %v6140
    %v6484 = vunpack.c.h.b16 %v6140
    %v6485 = vunpack.c.l.b16 %v6141
    %v6486 = vunpack.c.l.b16 %v6142
    %v6487 = vunpack.c.h.b16 %v6142
    %v6488 = vunpack.c.l.b16 %v6143
    %v6489 = vunpack.c.h.b16 %v6143
    %v6490 = vunpack.c.l.b16 %v6144
    %v6491 = vunpack.c.h.b16 %v6144
    %v6492 = vunpack.c.l.b16 %v6145
    %v6493 = vunpack.c.h.b16 %v6145
    %v6494 = vunpack.c.l.b16 %v6146
    %v6495 = vunpack.c.l.b16 %v6147
    %v6496 = vunpack.c.h.b16 %v6147
    %v6497 = vunpack.c.l.b16 %v6148
    %v6498 = vunpack.c.h.b16 %v6148
    %v6499 = vunpack.c.l.b16 %v6149
    %v6500 = vunpack.c.h.b16 %v6149
    %v6501 = vunpack.c.l.b16 %v6150
    %v6502 = vunpack.c.h.b16 %v6150
    %v6503 = vunpack.c.l.b16 %v6151
    %v6504 = vunpack.c.l.b16 %v6152
    %v6505 = vunpack.c.h.b16 %v6152
    %v6506 = vunpack.c.l.b16 %v6153
    %v6507 = vunpack.c.h.b16 %v6153
    %v6508 = vunpack.c.l.b16 %v6154
    %v6509 = vunpack.c.h.b16 %v6154
    %v6510 = vunpack.c.l.b16 %v6155
    %v6511 = vunpack.c.h.b16 %v6155
    %v6512 = vunpack.c.l.b16 %v6156
    %v6513 = vunpack.c.l.b16 %v6157
    %v6514 = vunpack.c.h.b16 %v6157
    %v6515 = vunpack.c.l.b16 %v6158
    %v6516 = vunpack.c.h.b16 %v6158
    %v6517 = vunpack.c.l.b16 %v6159
    %v6518 = vunpack.c.h.b16 %v6159
    %v6519 = vunpack.c.l.b16 %v6160
    %v6520 = vunpack.c.h.b16 %v6160
    %v6521 = vunpack.c.l.b16 %v6161
    %v6522 = vunpack.c.l.b16 %v6162
    %v6523 = vunpack.c.h.b16 %v6162
    %v6524 = vunpack.c.l.b16 %v6163
    %v6525 = vunpack.c.h.b16 %v6163
    %v6526 = vunpack.c.l.b16 %v6164
    %v6527 = vunpack.c.h.b16 %v6164
    %v6528 = vunpack.c.l.b16 %v6165
    %v6529 = vunpack.c.h.b16 %v6165
    %v6530 = vunpack.c.l.b16 %v6166
    %v6531 = vunpack.c.l.b16 %v6167
    %v6532 = vunpack.c.h.b16 %v6167
    %v6533 = vunpack.c.l.b16 %v6168
    %v6534 = vunpack.c.h.b16 %v6168
    %v6535 = vunpack.c.l.b16 %v6169
    %v6536 = vunpack.c.h.b16 %v6169
    %v6537 = vunpack.c.l.b16 %v6170
    %v6538 = vunpack.c.h.b16 %v6170
    %v6539 = vunpack.c.l.b16 %v6171
    %v6540 = vpack.c.b16 %v6405, %v6396
    %v6541 = vpack.c.b16 %v6406, %v6397
    %v6542 = vpack.c.b16 %v6407, %v6398
    %v6543 = vpack.c.b16 %v6408, %v6399
    %v6544 = vpack.c.b16 %v6409, %v6400
    %v6545 = vpack.c.b16 %v6410, %v6401
    %v6546 = vpack.c.b16 %v6411, %v6402
    %v6547 = vpack.c.b16 %v6412, %v6403
    %v6548 = vpack.c.b16 %v6413, %v6404
    %v6549 = vpack.c.b16 %v6423, %v6414
    %v6550 = vpack.c.b16 %v6424, %v6415
    %v6551 = vpack.c.b16 %v6425, %v6416
    %v6552 = vpack.c.b16 %v6426, %v6417
    %v6553 = vpack.c.b16 %v6427, %v6418
    %v6554 = vpack.c.b16 %v6428, %v6419
    %v6555 = vpack.c.b16 %v6429, %v6420
    %v6556 = vpack.c.b16 %v6430, %v6421
    %v6557 = vpack.c.b16 %v6431, %v6422
    %v6558 = vpack.c.b16 %v6441, %v6432
    %v6559 = vpack.c.b16 %v6442, %v6433
    %v6560 = vpack.c.b16 %v6443, %v6434
    %v6561 = vpack.c.b16 %v6444, %v6435
    %v6562 = vpack.c.b16 %v6445, %v6436
    %v6563 = vpack.c.b16 %v6446, %v6437
    %v6564 = vpack.c.b16 %v6447, %v6438
    %v6565 = vpack.c.b16 %v6448, %v6439
    %v6566 = vpack.c.b16 %v6449, %v6440
    %v6567 = vpack.c.b16 %v6459, %v6450
    %v6568 = vpack.c.b16 %v6460, %v6451
    %v6569 = vpack.c.b16 %v6461, %v6452
    %v6570 = vpack.c.b16 %v6462, %v6453
    %v6571 = vpack.c.b16 %v6463, %v6454
    %v6572 = vpack.c.b16 %v6464, %v6455
    %v6573 = vpack.c.b16 %v6465, %v6456
    %v6574 = vpack.c.b16 %v6466, %v6457
    %v6575 = vpack.c.b16 %v6467, %v6458
    %v6576 = vpack.c.b16 %v6477, %v6468
    %v6577 = vpack.c.b16 %v6478, %v6469
    %v6578 = vpack.c.b16 %v6479, %v6470
    %v6579 = vpack.c.b16 %v6480, %v6471
    %v6580 = vpack.c.b16 %v6481, %v6472
    %v6581 = vpack.c.b16 %v6482, %v6473
    %v6582 = vpack.c.b16 %v6483, %v6474
    %v6583 = vpack.c.b16 %v6484, %v6475
    %v6584 = vpack.c.b16 %v6485, %v6476
    %v6585 = vpack.c.b16 %v6495, %v6486
    %v6586 = vpack.c.b16 %v6496, %v6487
    %v6587 = vpack.c.b16 %v6497, %v6488
    %v6588 = vpack.c.b16 %v6498, %v6489
    %v6589 = vpack.c.b16 %v6499, %v6490
    %v6590 = vpack.c.b16 %v6500, %v6491
    %v6591 = vpack.c.b16 %v6501, %v6492
    %v6592 = vpack.c.b16 %v6502, %v6493
    %v6593 = vpack.c.b16 %v6503, %v6494
    %v6594 = vpack.c.b16 %v6513, %v6504
    %v6595 = vpack.c.b16 %v6514, %v6505
    %v6596 = vpack.c.b16 %v6515, %v6506
    %v6597 = vpack.c.b16 %v6516, %v6507
    %v6598 = vpack.c.b16 %v6517, %v6508
    %v6599 = vpack.c.b16 %v6518, %v6509
    %v6600 = vpack.c.b16 %v6519, %v6510
    %v6601 = vpack.c.b16 %v6520, %v6511
    %v6602 = vpack.c.b16 %v6521, %v6512
    %v6603 = vpack.c.b16 %v6531, %v6522
    %v6604 = vpack.c.b16 %v6532, %v6523
    %v6605 = vpack.c.b16 %v6533, %v6524
    %v6606 = vpack.c.b16 %v6534, %v6525
    %v6607 = vpack.c.b16 %v6535, %v6526
    %v6608 = vpack.c.b16 %v6536, %v6527
    %v6609 = vpack.c.b16 %v6537, %v6528
    %v6610 = vpack.c.b16 %v6538, %v6529
    %v6611 = vpack.c.b16 %v6539, %v6530
    %v6828 = vunpack.c.l.b16 %v6172
    %v6829 = vunpack.c.l.b16 %v6173
    %v6830 = vunpack.c.l.b16 %v6174
    %v6831 = vunpack.c.l.b16 %v6175
    %v6832 = vunpack.c.l.b16 %v6176
    %v6833 = vunpack.c.l.b16 %v6177
    %v6834 = vunpack.c.l.b16 %v6178
    %v6835 = vunpack.c.l.b16 %v6179
    %v6836 = vunpack.c.l.b16 %v6180
    %v6837 = vunpack.c.l.b16 %v6181
    %v6838 = vunpack.c.l.b16 %v6182
    %v6839 = vunpack.c.l.b16 %v6183
    %v6840 = vunpack.c.l.b16 %v6184
    %v6841 = vunpack.c.l.b16 %v6185
    %v6842 = vunpack.c.l.b16 %v6186
    %v6843 = vunpack.c.l.b16 %v6187
    %v6844 = vunpack.c.l.b16 %v6188
    %v6845 = vunpack.c.l.b16 %v6189
    %v6846 = vunpack.c.l.b16 %v6190
    %v6847 = vunpack.c.l.b16 %v6191
    %v6848 = vunpack.c.l.b16 %v6192
    %v6849 = vunpack.c.l.b16 %v6193
    %v6850 = vunpack.c.l.b16 %v6194
    %v6851 = vunpack.c.l.b16 %v6195
    %v6852 = vunpack.c.l.b16 %v6196
    %v6853 = vunpack.c.l.b16 %v6197
    %v6854 = vunpack.c.l.b16 %v6198
    %v6855 = vunpack.c.l.b16 %v6199
    %v6856 = vunpack.c.l.b16 %v6200
    %v6857 = vunpack.c.l.b16 %v6201
    %v6858 = vunpack.c.l.b16 %v6202
    %v6859 = vunpack.c.l.b16 %v6203
    %v6860 = vunpack.c.l.b16 %v6204
    %v6861 = vunpack.c.l.b16 %v6205
    %v6862 = vunpack.c.l.b16 %v6206
    %v6863 = vunpack.c.l.b16 %v6207
    %v6864 = vunpack.c.l.b16 %v6208
    %v6865 = vunpack.c.l.b16 %v6209
    %v6866 = vunpack.c.l.b16 %v6210
    %v6867 = vunpack.c.l.b16 %v6211
    %v6868 = vunpack.c.l.b16 %v6212
    %v6869 = vunpack.c.l.b16 %v6213
    %v6870 = vunpack.c.l.b16 %v6214
    %v6871 = vunpack.c.l.b16 %v6215
    %v6872 = vunpack.c.l.b16 %v6216
    %v6873 = vunpack.c.l.b16 %v6217
    %v6874 = vunpack.c.l.b16 %v6218
    %v6875 = vunpack.c.l.b16 %v6219
    %v6876 = vunpack.c.l.b16 %v6220
    %v6877 = vunpack.c.l.b16 %v6221
    %v6878 = vunpack.c.l.b16 %v6222
    %v6879 = vunpack.c.l.b16 %v6223
    %v6880 = vunpack.c.l.b16 %v6224
    %v6881 = vunpack.c.l.b16 %v6225
    %v6882 = vunpack.c.l.b16 %v6226
    %v6883 = vunpack.c.l.b16 %v6227
    %v6884 = vunpack.c.l.b16 %v6228
    %v6885 = vunpack.c.l.b16 %v6229
    %v6886 = vunpack.c.l.b16 %v6230
    %v6887 = vunpack.c.l.b16 %v6231
    %v6888 = vunpack.c.l.b16 %v6232
    %v6889 = vunpack.c.l.b16 %v6233
    %v6890 = vunpack.c.l.b16 %v6234
    %v6891 = vunpack.c.l.b16 %v6235
    %v6892 = vunpack.c.l.b16 %v6236
    %v6893 = vunpack.c.l.b16 %v6237
    %v6894 = vunpack.c.l.b16 %v6238
    %v6895 = vunpack.c.l.b16 %v6239
    %v6896 = vunpack.c.l.b16 %v6240
    %v6897 = vunpack.c.l.b16 %v6241
    %v6898 = vunpack.c.l.b16 %v6242
    %v6899 = vunpack.c.l.b16 %v6243
    %v6900 = vunpack.c.l.b16 %v6244
    %v6901 = vunpack.c.l.b16 %v6245
    %v6902 = vunpack.c.l.b16 %v6246
    %v6903 = vunpack.c.l.b16 %v6247
    %v6904 = vunpack.c.l.b16 %v6248
    %v6905 = vunpack.c.l.b16 %v6249
    %v6906 = vunpack.c.l.b16 %v6250
    %v6907 = vunpack.c.l.b16 %v6251
    %v6908 = vunpack.c.l.b16 %v6252
    %v6909 = vunpack.c.l.b16 %v6253
    %v6910 = vunpack.c.l.b16 %v6254
    %v6911 = vunpack.c.l.b16 %v6255
    %v6912 = vunpack.c.l.b16 %v6256
    %v6913 = vunpack.c.l.b16 %v6257
    %v6914 = vunpack.c.l.b16 %v6258
    %v6915 = vunpack.c.l.b16 %v6259
    %v6916 = vunpack.c.l.b16 %v6260
    %v6917 = vunpack.c.l.b16 %v6261
    %v6918 = vunpack.c.l.b16 %v6262
    %v6919 = vunpack.c.l.b16 %v6263
    %v6920 = vunpack.c.l.b16 %v6264
    %v6921 = vunpack.c.l.b16 %v6265
    %v6922 = vunpack.c.l.b16 %v6266
    %v6923 = vunpack.c.l.b16 %v6267
    %v6924 = vunpack.c.l.b16 %v6268
    %v6925 = vunpack.c.l.b16 %v6269
    %v6926 = vunpack.c.l.b16 %v6270
    %v6927 = vunpack.c.l.b16 %v6271
    %v6928 = vunpack.c.l.b16 %v6272
    %v6929 = vunpack.c.l.b16 %v6273
    %v6930 = vunpack.c.l.b16 %v6274
    %v6931 = vunpack.c.l.b16 %v6275
    %v6932 = vunpack.c.l.b16 %v6276
    %v6933 = vunpack.c.l.b16 %v6277
    %v6934 = vunpack.c.l.b16 %v6278
    %v6935 = vunpack.c.l.b16 %v6279
    %v6936 = vunpack.c.l.b16 %v6280
    %v6937 = vunpack.c.l.b16 %v6281
    %v6938 = vunpack.c.l.b16 %v6282
    %v6939 = vunpack.c.l.b16 %v6283
    %v6940 = vunpack.c.l.b16 %v6284
    %v6941 = vunpack.c.l.b16 %v6285
    %v6942 = vunpack.c.l.b16 %v6286
    %v6943 = vunpack.c.l.b16 %v6287
    %v6944 = vunpack.c.l.b16 %v6288
    %v6945 = vunpack.c.l.b16 %v6289
    %v6946 = vunpack.c.l.b16 %v6290
    %v6947 = vunpack.c.l.b16 %v6291
    %v6948 = vunpack.c.l.b16 %v6292
    %v6949 = vunpack.c.l.b16 %v6293
    %v6950 = vunpack.c.l.b16 %v6294
    %v6951 = vunpack.c.l.b16 %v6295
    %v6952 = vunpack.c.l.b16 %v6296
    %v6953 = vunpack.c.l.b16 %v6297
    %v6954 = vunpack.c.l.b16 %v6298
    %v6955 = vunpack.c.l.b16 %v6299
    %v6956 = vunpack.c.l.b16 %v6300
    %v6957 = vunpack.c.l.b16 %v6301
    %v6958 = vunpack.c.l.b16 %v6302
    %v6959 = vunpack.c.l.b16 %v6303
    %v6960 = vunpack.c.l.b16 %v6304
    %v6961 = vunpack.c.l.b16 %v6305
    %v6962 = vunpack.c.l.b16 %v6306
    %v6963 = vunpack.c.l.b16 %v6307
    %v6964 = vunpack.c.l.b16 %v6308
    %v6965 = vunpack.c.l.b16 %v6309
    %v6966 = vunpack.c.l.b16 %v6310
    %v6967 = vunpack.c.l.b16 %v6311
    %v6968 = vunpack.c.l.b16 %v6312
    %v6969 = vunpack.c.l.b16 %v6313
    %v6970 = vunpack.c.l.b16 %v6314
    %v6971 = vunpack.c.l.b16 %v6315
    %v6972 = vpack.c.b16 %v6829, %v6828
    %v6973 = vpack.c.b16 %v6831, %v6830
    %v6974 = vpack.c.b16 %v6833, %v6832
    %v6975 = vpack.c.b16 %v6835, %v6834
    %v6976 = vpack.c.b16 %v6837, %v6836
    %v6977 = vpack.c.b16 %v6839, %v6838
    %v6978 = vpack.c.b16 %v6841, %v6840
    %v6979 = vpack.c.b16 %v6843, %v6842
    %v6980 = vpack.c.b16 %v6845, %v6844
    %v6981 = vpack.c.b16 %v6847, %v6846
    %v6982 = vpack.c.b16 %v6849, %v6848
    %v6983 = vpack.c.b16 %v6851, %v6850
    %v6984 = vpack.c.b16 %v6853, %v6852
    %v6985 = vpack.c.b16 %v6855, %v6854
    %v6986 = vpack.c.b16 %v6857, %v6856
    %v6987 = vpack.c.b16 %v6859, %v6858
    %v6988 = vpack.c.b16 %v6861, %v6860
    %v6989 = vpack.c.b16 %v6863, %v6862
    %v6990 = vpack.c.b16 %v6865, %v6864
    %v6991 = vpack.c.b16 %v6867, %v6866
    %v6992 = vpack.c.b16 %v6869, %v6868
    %v6993 = vpack.c.b16 %v6871, %v6870
    %v6994 = vpack.c.b16 %v6873, %v6872
    %v6995 = vpack.c.b16 %v6875, %v6874
    %v6996 = vpack.c.b16 %v6877, %v6876
    %v6997 = vpack.c.b16 %v6879, %v6878
    %v6998 = vpack.c.b16 %v6881, %v6880
    %v6999 = vpack.c.b16 %v6883, %v6882
    %v7000 = vpack.c.b16 %v6885, %v6884
    %v7001 = vpack.c.b16 %v6887, %v6886
    %v7002 = vpack.c.b16 %v6889, %v6888
    %v7003 = vpack.c.b16 %v6891, %v6890
    %v7004 = vpack.c.b16 %v6893, %v6892
    %v7005 = vpack.c.b16 %v6895, %v6894
    %v7006 = vpack.c.b16 %v6897, %v6896
    %v7007 = vpack.c.b16 %v6899, %v6898
    %v7008 = vpack.c.b16 %v6901, %v6900
    %v7009 = vpack.c.b16 %v6903, %v6902
    %v7010 = vpack.c.b16 %v6905, %v6904
    %v7011 = vpack.c.b16 %v6907, %v6906
    %v7012 = vpack.c.b16 %v6909, %v6908
    %v7013 = vpack.c.b16 %v6911, %v6910
    %v7014 = vpack.c.b16 %v6913, %v6912
    %v7015 = vpack.c.b16 %v6915, %v6914
    %v7016 = vpack.c.b16 %v6917, %v6916
    %v7017 = vpack.c.b16 %v6919, %v6918
    %v7018 = vpack.c.b16 %v6921, %v6920
    %v7019 = vpack.c.b16 %v6923, %v6922
    %v7020 = vpack.c.b16 %v6925, %v6924
    %v7021 = vpack.c.b16 %v6927, %v6926
    %v7022 = vpack.c.b16 %v6929, %v6928
    %v7023 = vpack.c.b16 %v6931, %v6930
    %v7024 = vpack.c.b16 %v6933, %v6932
    %v7025 = vpack.c.b16 %v6935, %v6934
    %v7026 = vpack.c.b16 %v6937, %v6936
    %v7027 = vpack.c.b16 %v6939, %v6938
    %v7028 = vpack.c.b16 %v6941, %v6940
    %v7029 = vpack.c.b16 %v6943, %v6942
    %v7030 = vpack.c.b16 %v6945, %v6944
    %v7031 = vpack.c.b16 %v6947, %v6946
    %v7032 = vpack.c.b16 %v6949, %v6948
    %v7033 = vpack.c.b16 %v6951, %v6950
    %v7034 = vpack.c.b16 %v6953, %v6952
    %v7035 = vpack.c.b16 %v6955, %v6954
    %v7036 = vpack.c.b16 %v6957, %v6956
    %v7037 = vpack.c.b16 %v6959, %v6958
    %v7038 = vpack.c.b16 %v6961, %v6960
    %v7039 = vpack.c.b16 %v6963, %v6962
    %v7040 = vpack.c.b16 %v6965, %v6964
    %v7041 = vpack.c.b16 %v6967, %v6966
    %v7042 = vpack.c.b16 %v6969, %v6968
    %v7043 = vpack.c.b16 %v6971, %v6970
    %7116 = vmatpush.bf16.msra.mxu0 %v6979
    %7117 = vmatpush.bf16.msra.mxu0 %v6978
    %7118 = vmatpush.bf16.msra.mxu0 %v6977
    %7119 = vmatpush.bf16.msra.mxu0 %v6976
    %7120 = vmatpush.bf16.msra.mxu0 %v6975
    %7121 = vmatpush.bf16.msra.mxu0 %v6974
    %7122 = vmatpush.bf16.msra.mxu0 %v6973
    %7123 = vmatpush.bf16.msra.mxu0 %v6972
    %7124 = vmatmul.bf16.gmra.mxu0 %v6540
    %v7125 = vpop.f32.mrf.mxu0
    %v7126 = vadd.f32 0.0, %v7125
    %v7127 = vpop.f32.mrf.mxu0
    %v7128 = vadd.f32 0.0, %v7127
    %7129 = vmatmul.bf16.gmra.mxu0 %v6549
    %v7130 = vpop.f32.mrf.mxu0
    %v7131 = vadd.f32 0.0, %v7130
    %v7132 = vpop.f32.mrf.mxu0
    %v7133 = vadd.f32 0.0, %v7132
    %7134 = vmatmul.bf16.gmra.mxu0 %v6558
    %v7135 = vpop.f32.mrf.mxu0
    %v7136 = vadd.f32 0.0, %v7135
    %v7137 = vpop.f32.mrf.mxu0
    %v7138 = vadd.f32 0.0, %v7137
    %7139 = vmatmul.bf16.gmra.mxu0 %v6567
    %v7140 = vpop.f32.mrf.mxu0
    %v7141 = vadd.f32 0.0, %v7140
    %v7142 = vpop.f32.mrf.mxu0
    %v7143 = vadd.f32 0.0, %v7142
    %7144 = vmatmul.bf16.gmra.mxu0 %v6576
    %v7145 = vpop.f32.mrf.mxu0
    %v7146 = vadd.f32 0.0, %v7145
    %v7147 = vpop.f32.mrf.mxu0
    %v7148 = vadd.f32 0.0, %v7147
    %7149 = vmatmul.bf16.gmra.mxu0 %v6585
    %v7150 = vpop.f32.mrf.mxu0
    %v7151 = vadd.f32 0.0, %v7150
    %v7152 = vpop.f32.mrf.mxu0
    %v7153 = vadd.f32 0.0, %v7152
    %7154 = vmatmul.bf16.gmra.mxu0 %v6594
    %v7155 = vpop.f32.mrf.mxu0
    %v7156 = vadd.f32 0.0, %v7155
    %v7157 = vpop.f32.mrf.mxu0
    %v7158 = vadd.f32 0.0, %v7157
    %7159 = vmatmul.bf16.gmra.mxu0 %v6603
    %v7160 = vpop.f32.mrf.mxu0
    %v7161 = vadd.f32 0.0, %v7160
    %v7162 = vpop.f32.mrf.mxu0
    %v7163 = vadd.f32 0.0, %v7162
    %7164 = vdwg.mxu0
    %7165 = vmatpush.bf16.msra.mxu0 %v6987
    %7166 = vmatpush.bf16.msra.mxu0 %v6986
    %7167 = vmatpush.bf16.msra.mxu0 %v6985
    %7168 = vmatpush.bf16.msra.mxu0 %v6984
    %7169 = vmatpush.bf16.msra.mxu0 %v6983
    %7170 = vmatpush.bf16.msra.mxu0 %v6982
    %7171 = vmatpush.bf16.msra.mxu0 %v6981
    %7172 = vmatpush.bf16.msra.mxu0 %v6980
    %7173 = vmatmul.bf16.gmra.mxu0 %v6541
    %v7174 = vpop.f32.mrf.mxu0
    %v7175 = vadd.f32 %v7126, %v7174
    %v7176 = vpop.f32.mrf.mxu0
    %v7177 = vadd.f32 %v7128, %v7176
    %7178 = vmatmul.bf16.gmra.mxu0 %v6550
    %v7179 = vpop.f32.mrf.mxu0
    %v7180 = vadd.f32 %v7131, %v7179
    %v7181 = vpop.f32.mrf.mxu0
    %v7182 = vadd.f32 %v7133, %v7181
    %7183 = vmatmul.bf16.gmra.mxu0 %v6559
    %v7184 = vpop.f32.mrf.mxu0
    %v7185 = vadd.f32 %v7136, %v7184
    %v7186 = vpop.f32.mrf.mxu0
    %v7187 = vadd.f32 %v7138, %v7186
    %7188 = vmatmul.bf16.gmra.mxu0 %v6568
    %v7189 = vpop.f32.mrf.mxu0
    %v7190 = vadd.f32 %v7141, %v7189
    %v7191 = vpop.f32.mrf.mxu0
    %v7192 = vadd.f32 %v7143, %v7191
    %7193 = vmatmul.bf16.gmra.mxu0 %v6577
    %v7194 = vpop.f32.mrf.mxu0
    %v7195 = vadd.f32 %v7146, %v7194
    %v7196 = vpop.f32.mrf.mxu0
    %v7197 = vadd.f32 %v7148, %v7196
    %7198 = vmatmul.bf16.gmra.mxu0 %v6586
    %v7199 = vpop.f32.mrf.mxu0
    %v7200 = vadd.f32 %v7151, %v7199
    %v7201 = vpop.f32.mrf.mxu0
    %v7202 = vadd.f32 %v7153, %v7201
    %7203 = vmatmul.bf16.gmra.mxu0 %v6595
    %v7204 = vpop.f32.mrf.mxu0
    %v7205 = vadd.f32 %v7156, %v7204
    %v7206 = vpop.f32.mrf.mxu0
    %v7207 = vadd.f32 %v7158, %v7206
    %7208 = vmatmul.bf16.gmra.mxu0 %v6604
    %v7209 = vpop.f32.mrf.mxu0
    %v7210 = vadd.f32 %v7161, %v7209
    %v7211 = vpop.f32.mrf.mxu0
    %v7212 = vadd.f32 %v7163, %v7211
    %7213 = vdwg.mxu0
    %7214 = vmatpush.bf16.msra.mxu0 %v6995
    %7215 = vmatpush.bf16.msra.mxu0 %v6994
    %7216 = vmatpush.bf16.msra.mxu0 %v6993
    %7217 = vmatpush.bf16.msra.mxu0 %v6992
    %7218 = vmatpush.bf16.msra.mxu0 %v6991
    %7219 = vmatpush.bf16.msra.mxu0 %v6990
    %7220 = vmatpush.bf16.msra.mxu0 %v6989
    %7221 = vmatpush.bf16.msra.mxu0 %v6988
    %7222 = vmatmul.bf16.gmra.mxu0 %v6542
    %v7223 = vpop.f32.mrf.mxu0
    %v7224 = vadd.f32 %v7175, %v7223
    %v7225 = vpop.f32.mrf.mxu0
    %v7226 = vadd.f32 %v7177, %v7225
    %7227 = vmatmul.bf16.gmra.mxu0 %v6551
    %v7228 = vpop.f32.mrf.mxu0
    %v7229 = vadd.f32 %v7180, %v7228
    %v7230 = vpop.f32.mrf.mxu0
    %v7231 = vadd.f32 %v7182, %v7230
    %7232 = vmatmul.bf16.gmra.mxu0 %v6560
    %v7233 = vpop.f32.mrf.mxu0
    %v7234 = vadd.f32 %v7185, %v7233
    %v7235 = vpop.f32.mrf.mxu0
    %v7236 = vadd.f32 %v7187, %v7235
    %7237 = vmatmul.bf16.gmra.mxu0 %v6569
    %v7238 = vpop.f32.mrf.mxu0
    %v7239 = vadd.f32 %v7190, %v7238
    %v7240 = vpop.f32.mrf.mxu0
    %v7241 = vadd.f32 %v7192, %v7240
    %7242 = vmatmul.bf16.gmra.mxu0 %v6578
    %v7243 = vpop.f32.mrf.mxu0
    %v7244 = vadd.f32 %v7195, %v7243
    %v7245 = vpop.f32.mrf.mxu0
    %v7246 = vadd.f32 %v7197, %v7245
    %7247 = vmatmul.bf16.gmra.mxu0 %v6587
    %v7248 = vpop.f32.mrf.mxu0
    %v7249 = vadd.f32 %v7200, %v7248
    %v7250 = vpop.f32.mrf.mxu0
    %v7251 = vadd.f32 %v7202, %v7250
    %7252 = vmatmul.bf16.gmra.mxu0 %v6596
    %v7253 = vpop.f32.mrf.mxu0
    %v7254 = vadd.f32 %v7205, %v7253
    %v7255 = vpop.f32.mrf.mxu0
    %v7256 = vadd.f32 %v7207, %v7255
    %7257 = vmatmul.bf16.gmra.mxu0 %v6605
    %v7258 = vpop.f32.mrf.mxu0
    %v7259 = vadd.f32 %v7210, %v7258
    %v7260 = vpop.f32.mrf.mxu0
    %v7261 = vadd.f32 %v7212, %v7260
    %7262 = vdwg.mxu0
    %7263 = vmatpush.bf16.msra.mxu0 %v7003
    %7264 = vmatpush.bf16.msra.mxu0 %v7002
    %7265 = vmatpush.bf16.msra.mxu0 %v7001
    %7266 = vmatpush.bf16.msra.mxu0 %v7000
    %7267 = vmatpush.bf16.msra.mxu0 %v6999
    %7268 = vmatpush.bf16.msra.mxu0 %v6998
    %7269 = vmatpush.bf16.msra.mxu0 %v6997
    %7270 = vmatpush.bf16.msra.mxu0 %v6996
    %7271 = vmatmul.bf16.gmra.mxu0 %v6543
    %v7272 = vpop.f32.mrf.mxu0
    %v7273 = vadd.f32 %v7224, %v7272
    %v7274 = vpop.f32.mrf.mxu0
    %v7275 = vadd.f32 %v7226, %v7274
    %7276 = vmatmul.bf16.gmra.mxu0 %v6552
    %v7277 = vpop.f32.mrf.mxu0
    %v7278 = vadd.f32 %v7229, %v7277
    %v7279 = vpop.f32.mrf.mxu0
    %v7280 = vadd.f32 %v7231, %v7279
    %7281 = vmatmul.bf16.gmra.mxu0 %v6561
    %v7282 = vpop.f32.mrf.mxu0
    %v7283 = vadd.f32 %v7234, %v7282
    %v7284 = vpop.f32.mrf.mxu0
    %v7285 = vadd.f32 %v7236, %v7284
    %7286 = vmatmul.bf16.gmra.mxu0 %v6570
    %v7287 = vpop.f32.mrf.mxu0
    %v7288 = vadd.f32 %v7239, %v7287
    %v7289 = vpop.f32.mrf.mxu0
    %v7290 = vadd.f32 %v7241, %v7289
    %7291 = vmatmul.bf16.gmra.mxu0 %v6579
    %v7292 = vpop.f32.mrf.mxu0
    %v7293 = vadd.f32 %v7244, %v7292
    %v7294 = vpop.f32.mrf.mxu0
    %v7295 = vadd.f32 %v7246, %v7294
    %7296 = vmatmul.bf16.gmra.mxu0 %v6588
    %v7297 = vpop.f32.mrf.mxu0
    %v7298 = vadd.f32 %v7249, %v7297
    %v7299 = vpop.f32.mrf.mxu0
    %v7300 = vadd.f32 %v7251, %v7299
    %7301 = vmatmul.bf16.gmra.mxu0 %v6597
    %v7302 = vpop.f32.mrf.mxu0
    %v7303 = vadd.f32 %v7254, %v7302
    %v7304 = vpop.f32.mrf.mxu0
    %v7305 = vadd.f32 %v7256, %v7304
    %7306 = vmatmul.bf16.gmra.mxu0 %v6606
    %v7307 = vpop.f32.mrf.mxu0
    %v7308 = vadd.f32 %v7259, %v7307
    %v7309 = vpop.f32.mrf.mxu0
    %v7310 = vadd.f32 %v7261, %v7309
    %7311 = vdwg.mxu0
    %7312 = vmatpush.bf16.msra.mxu0 %v7011
    %7313 = vmatpush.bf16.msra.mxu0 %v7010
    %7314 = vmatpush.bf16.msra.mxu0 %v7009
    %7315 = vmatpush.bf16.msra.mxu0 %v7008
    %7316 = vmatpush.bf16.msra.mxu0 %v7007
    %7317 = vmatpush.bf16.msra.mxu0 %v7006
    %7318 = vmatpush.bf16.msra.mxu0 %v7005
    %7319 = vmatpush.bf16.msra.mxu0 %v7004
    %7320 = vmatmul.bf16.gmra.mxu0 %v6544
    %v7321 = vpop.f32.mrf.mxu0
    %v7322 = vadd.f32 %v7273, %v7321
    %v7323 = vpop.f32.mrf.mxu0
    %v7324 = vadd.f32 %v7275, %v7323
    %7325 = vmatmul.bf16.gmra.mxu0 %v6553
    %v7326 = vpop.f32.mrf.mxu0
    %v7327 = vadd.f32 %v7278, %v7326
    %v7328 = vpop.f32.mrf.mxu0
    %v7329 = vadd.f32 %v7280, %v7328
    %7330 = vmatmul.bf16.gmra.mxu0 %v6562
    %v7331 = vpop.f32.mrf.mxu0
    %v7332 = vadd.f32 %v7283, %v7331
    %v7333 = vpop.f32.mrf.mxu0
    %v7334 = vadd.f32 %v7285, %v7333
    %7335 = vmatmul.bf16.gmra.mxu0 %v6571
    %v7336 = vpop.f32.mrf.mxu0
    %v7337 = vadd.f32 %v7288, %v7336
    %v7338 = vpop.f32.mrf.mxu0
    %v7339 = vadd.f32 %v7290, %v7338
    %7340 = vmatmul.bf16.gmra.mxu0 %v6580
    %v7341 = vpop.f32.mrf.mxu0
    %v7342 = vadd.f32 %v7293, %v7341
    %v7343 = vpop.f32.mrf.mxu0
    %v7344 = vadd.f32 %v7295, %v7343
    %7345 = vmatmul.bf16.gmra.mxu0 %v6589
    %v7346 = vpop.f32.mrf.mxu0
    %v7347 = vadd.f32 %v7298, %v7346
    %v7348 = vpop.f32.mrf.mxu0
    %v7349 = vadd.f32 %v7300, %v7348
    %7350 = vmatmul.bf16.gmra.mxu0 %v6598
    %v7351 = vpop.f32.mrf.mxu0
    %v7352 = vadd.f32 %v7303, %v7351
    %v7353 = vpop.f32.mrf.mxu0
    %v7354 = vadd.f32 %v7305, %v7353
    %7355 = vmatmul.bf16.gmra.mxu0 %v6607
    %v7356 = vpop.f32.mrf.mxu0
    %v7357 = vadd.f32 %v7308, %v7356
    %v7358 = vpop.f32.mrf.mxu0
    %v7359 = vadd.f32 %v7310, %v7358
    %7360 = vdwg.mxu0
    %7361 = vmatpush.bf16.msra.mxu0 %v7019
    %7362 = vmatpush.bf16.msra.mxu0 %v7018
    %7363 = vmatpush.bf16.msra.mxu0 %v7017
    %7364 = vmatpush.bf16.msra.mxu0 %v7016
    %7365 = vmatpush.bf16.msra.mxu0 %v7015
    %7366 = vmatpush.bf16.msra.mxu0 %v7014
    %7367 = vmatpush.bf16.msra.mxu0 %v7013
    %7368 = vmatpush.bf16.msra.mxu0 %v7012
    %7369 = vmatmul.bf16.gmra.mxu0 %v6545
    %v7370 = vpop.f32.mrf.mxu0
    %v7371 = vadd.f32 %v7322, %v7370
    %v7372 = vpop.f32.mrf.mxu0
    %v7373 = vadd.f32 %v7324, %v7372
    %7374 = vmatmul.bf16.gmra.mxu0 %v6554
    %v7375 = vpop.f32.mrf.mxu0
    %v7376 = vadd.f32 %v7327, %v7375
    %v7377 = vpop.f32.mrf.mxu0
    %v7378 = vadd.f32 %v7329, %v7377
    %7379 = vmatmul.bf16.gmra.mxu0 %v6563
    %v7380 = vpop.f32.mrf.mxu0
    %v7381 = vadd.f32 %v7332, %v7380
    %v7382 = vpop.f32.mrf.mxu0
    %v7383 = vadd.f32 %v7334, %v7382
    %7384 = vmatmul.bf16.gmra.mxu0 %v6572
    %v7385 = vpop.f32.mrf.mxu0
    %v7386 = vadd.f32 %v7337, %v7385
    %v7387 = vpop.f32.mrf.mxu0
    %v7388 = vadd.f32 %v7339, %v7387
    %7389 = vmatmul.bf16.gmra.mxu0 %v6581
    %v7390 = vpop.f32.mrf.mxu0
    %v7391 = vadd.f32 %v7342, %v7390
    %v7392 = vpop.f32.mrf.mxu0
    %v7393 = vadd.f32 %v7344, %v7392
    %7394 = vmatmul.bf16.gmra.mxu0 %v6590
    %v7395 = vpop.f32.mrf.mxu0
    %v7396 = vadd.f32 %v7347, %v7395
    %v7397 = vpop.f32.mrf.mxu0
    %v7398 = vadd.f32 %v7349, %v7397
    %7399 = vmatmul.bf16.gmra.mxu0 %v6599
    %v7400 = vpop.f32.mrf.mxu0
    %v7401 = vadd.f32 %v7352, %v7400
    %v7402 = vpop.f32.mrf.mxu0
    %v7403 = vadd.f32 %v7354, %v7402
    %7404 = vmatmul.bf16.gmra.mxu0 %v6608
    %v7405 = vpop.f32.mrf.mxu0
    %v7406 = vadd.f32 %v7357, %v7405
    %v7407 = vpop.f32.mrf.mxu0
    %v7408 = vadd.f32 %v7359, %v7407
    %7409 = vdwg.mxu0
    %7410 = vmatpush.bf16.msra.mxu0 %v7027
    %7411 = vmatpush.bf16.msra.mxu0 %v7026
    %7412 = vmatpush.bf16.msra.mxu0 %v7025
    %7413 = vmatpush.bf16.msra.mxu0 %v7024
    %7414 = vmatpush.bf16.msra.mxu0 %v7023
    %7415 = vmatpush.bf16.msra.mxu0 %v7022
    %7416 = vmatpush.bf16.msra.mxu0 %v7021
    %7417 = vmatpush.bf16.msra.mxu0 %v7020
    %7418 = vmatmul.bf16.gmra.mxu0 %v6546
    %v7419 = vpop.f32.mrf.mxu0
    %v7420 = vadd.f32 %v7371, %v7419
    %v7421 = vpop.f32.mrf.mxu0
    %v7422 = vadd.f32 %v7373, %v7421
    %7423 = vmatmul.bf16.gmra.mxu0 %v6555
    %v7424 = vpop.f32.mrf.mxu0
    %v7425 = vadd.f32 %v7376, %v7424
    %v7426 = vpop.f32.mrf.mxu0
    %v7427 = vadd.f32 %v7378, %v7426
    %7428 = vmatmul.bf16.gmra.mxu0 %v6564
    %v7429 = vpop.f32.mrf.mxu0
    %v7430 = vadd.f32 %v7381, %v7429
    %v7431 = vpop.f32.mrf.mxu0
    %v7432 = vadd.f32 %v7383, %v7431
    %7433 = vmatmul.bf16.gmra.mxu0 %v6573
    %v7434 = vpop.f32.mrf.mxu0
    %v7435 = vadd.f32 %v7386, %v7434
    %v7436 = vpop.f32.mrf.mxu0
    %v7437 = vadd.f32 %v7388, %v7436
    %7438 = vmatmul.bf16.gmra.mxu0 %v6582
    %v7439 = vpop.f32.mrf.mxu0
    %v7440 = vadd.f32 %v7391, %v7439
    %v7441 = vpop.f32.mrf.mxu0
    %v7442 = vadd.f32 %v7393, %v7441
    %7443 = vmatmul.bf16.gmra.mxu0 %v6591
    %v7444 = vpop.f32.mrf.mxu0
    %v7445 = vadd.f32 %v7396, %v7444
    %v7446 = vpop.f32.mrf.mxu0
    %v7447 = vadd.f32 %v7398, %v7446
    %7448 = vmatmul.bf16.gmra.mxu0 %v6600
    %v7449 = vpop.f32.mrf.mxu0
    %v7450 = vadd.f32 %v7401, %v7449
    %v7451 = vpop.f32.mrf.mxu0
    %v7452 = vadd.f32 %v7403, %v7451
    %7453 = vmatmul.bf16.gmra.mxu0 %v6609
    %v7454 = vpop.f32.mrf.mxu0
    %v7455 = vadd.f32 %v7406, %v7454
    %v7456 = vpop.f32.mrf.mxu0
    %v7457 = vadd.f32 %v7408, %v7456
    %7458 = vdwg.mxu0
    %7459 = vmatpush.bf16.msra.mxu0 %v7035
    %7460 = vmatpush.bf16.msra.mxu0 %v7034
    %7461 = vmatpush.bf16.msra.mxu0 %v7033
    %7462 = vmatpush.bf16.msra.mxu0 %v7032
    %7463 = vmatpush.bf16.msra.mxu0 %v7031
    %7464 = vmatpush.bf16.msra.mxu0 %v7030
    %7465 = vmatpush.bf16.msra.mxu0 %v7029
    %7466 = vmatpush.bf16.msra.mxu0 %v7028
    %7467 = vmatmul.bf16.gmra.mxu0 %v6547
    %v7468 = vpop.f32.mrf.mxu0
    %v7469 = vadd.f32 %v7420, %v7468
    %v7470 = vpop.f32.mrf.mxu0
    %v7471 = vadd.f32 %v7422, %v7470
    %7472 = vmatmul.bf16.gmra.mxu0 %v6556
    %v7473 = vpop.f32.mrf.mxu0
    %v7474 = vadd.f32 %v7425, %v7473
    %v7475 = vpop.f32.mrf.mxu0
    %v7476 = vadd.f32 %v7427, %v7475
    %7477 = vmatmul.bf16.gmra.mxu0 %v6565
    %v7478 = vpop.f32.mrf.mxu0
    %v7479 = vadd.f32 %v7430, %v7478
    %v7480 = vpop.f32.mrf.mxu0
    %v7481 = vadd.f32 %v7432, %v7480
    %7482 = vmatmul.bf16.gmra.mxu0 %v6574
    %v7483 = vpop.f32.mrf.mxu0
    %v7484 = vadd.f32 %v7435, %v7483
    %v7485 = vpop.f32.mrf.mxu0
    %v7486 = vadd.f32 %v7437, %v7485
    %7487 = vmatmul.bf16.gmra.mxu0 %v6583
    %v7488 = vpop.f32.mrf.mxu0
    %v7489 = vadd.f32 %v7440, %v7488
    %v7490 = vpop.f32.mrf.mxu0
    %v7491 = vadd.f32 %v7442, %v7490
    %7492 = vmatmul.bf16.gmra.mxu0 %v6592
    %v7493 = vpop.f32.mrf.mxu0
    %v7494 = vadd.f32 %v7445, %v7493
    %v7495 = vpop.f32.mrf.mxu0
    %v7496 = vadd.f32 %v7447, %v7495
    %7497 = vmatmul.bf16.gmra.mxu0 %v6601
    %v7498 = vpop.f32.mrf.mxu0
    %v7499 = vadd.f32 %v7450, %v7498
    %v7500 = vpop.f32.mrf.mxu0
    %v7501 = vadd.f32 %v7452, %v7500
    %7502 = vmatmul.bf16.gmra.mxu0 %v6610
    %v7503 = vpop.f32.mrf.mxu0
    %v7504 = vadd.f32 %v7455, %v7503
    %v7505 = vpop.f32.mrf.mxu0
    %v7506 = vadd.f32 %v7457, %v7505
    %7507 = vdwg.mxu0
    %7508 = vmatpush.bf16.msra.mxu0 %v7043
    %7509 = vmatpush.bf16.msra.mxu0 %v7042
    %7510 = vmatpush.bf16.msra.mxu0 %v7041
    %7511 = vmatpush.bf16.msra.mxu0 %v7040
    %7512 = vmatpush.bf16.msra.mxu0 %v7039
    %7513 = vmatpush.bf16.msra.mxu0 %v7038
    %7514 = vmatpush.bf16.msra.mxu0 %v7037
    %7515 = vmatpush.bf16.msra.mxu0 %v7036
    %7516 = vmatmul.bf16.gmra.mxu0 %v6548
    %v7517 = vpop.f32.mrf.mxu0
    %v7518 = vadd.f32 %v7469, %v7517
    %v7519 = vpop.f32.mrf.mxu0
    %v7520 = vadd.f32 %v7471, %v7519
    %7521 = vmatmul.bf16.gmra.mxu0 %v6557
    %v7522 = vpop.f32.mrf.mxu0
    %v7523 = vadd.f32 %v7474, %v7522
    %v7524 = vpop.f32.mrf.mxu0
    %v7525 = vadd.f32 %v7476, %v7524
    %7526 = vmatmul.bf16.gmra.mxu0 %v6566
    %v7527 = vpop.f32.mrf.mxu0
    %v7528 = vadd.f32 %v7479, %v7527
    %v7529 = vpop.f32.mrf.mxu0
    %v7530 = vadd.f32 %v7481, %v7529
    %7531 = vmatmul.bf16.gmra.mxu0 %v6575
    %v7532 = vpop.f32.mrf.mxu0
    %v7533 = vadd.f32 %v7484, %v7532
    %v7534 = vpop.f32.mrf.mxu0
    %v7535 = vadd.f32 %v7486, %v7534
    %7536 = vmatmul.bf16.gmra.mxu0 %v6584
    %v7537 = vpop.f32.mrf.mxu0
    %v7538 = vadd.f32 %v7489, %v7537
    %v7539 = vpop.f32.mrf.mxu0
    %v7540 = vadd.f32 %v7491, %v7539
    %7541 = vmatmul.bf16.gmra.mxu0 %v6593
    %v7542 = vpop.f32.mrf.mxu0
    %v7543 = vadd.f32 %v7494, %v7542
    %v7544 = vpop.f32.mrf.mxu0
    %v7545 = vadd.f32 %v7496, %v7544
    %7546 = vmatmul.bf16.gmra.mxu0 %v6602
    %v7547 = vpop.f32.mrf.mxu0
    %v7548 = vadd.f32 %v7499, %v7547
    %v7549 = vpop.f32.mrf.mxu0
    %v7550 = vadd.f32 %v7501, %v7549
    %7551 = vmatmul.bf16.gmra.mxu0 %v6611
    %v7552 = vpop.f32.mrf.mxu0
    %v7553 = vadd.f32 %v7504, %v7552
    %v7554 = vpop.f32.mrf.mxu0
    %v7555 = vadd.f32 %v7506, %v7554
    %7556 = vdwg.mxu0
    %7557 = vst [vmem:[#allocation4] sm:$0xff] %v7518
    %7558 = vst [vmem:[#allocation4 + $0x8] sm:$0xff] %v7520
    %7559 = vst [vmem:[#allocation4 + $0x10] sm:$0xff] %v7523
    %7560 = vst [vmem:[#allocation4 + $0x18] sm:$0xff] %v7525
    %7561 = vst [vmem:[#allocation4 + $0x20] sm:$0xff] %v7528
    %7562 = vst [vmem:[#allocation4 + $0x28] sm:$0xff] %v7530
    %7563 = vst [vmem:[#allocation4 + $0x30] sm:$0xff] %v7533
    %7564 = vst [vmem:[#allocation4 + $0x38] sm:$0xff] %v7535
    %7565 = vst [vmem:[#allocation4 + $0x40] sm:$0xff] %v7538
    %7566 = vst [vmem:[#allocation4 + $0x48] sm:$0xff] %v7540
    %7567 = vst [vmem:[#allocation4 + $0x50] sm:$0xff] %v7543
    %7568 = vst [vmem:[#allocation4 + $0x58] sm:$0xff] %v7545
    %7569 = vst [vmem:[#allocation4 + $0x60] sm:$0xff] %v7548
    %7570 = vst [vmem:[#allocation4 + $0x68] sm:$0xff] %v7550
    %7571 = vst [vmem:[#allocation4 + $0x70] sm:$0xff] %v7553
    %7572 = vst [vmem:[#allocation4 + $0x78] sm:$0xff] %v7555
    %v7573 = vadd.f32 %v7518, %v7520
    %v7574 = vadd.f32 %v7573, %v7523
    %v7575 = vadd.f32 %v7574, %v7525
    %v7576 = vadd.f32 %v7575, %v7528
    %v7577 = vadd.f32 %v7576, %v7530
    %v7578 = vadd.f32 %v7577, %v7533
    %v7579 = vadd.f32 %v7578, %v7535
    %v7580 = vadd.f32 %v7579, %v7538
    %v7581 = vadd.f32 %v7580, %v7540
    %v7582 = vadd.f32 %v7581, %v7543
    %v7583 = vadd.f32 %v7582, %v7545
    %v7584 = vadd.f32 %v7583, %v7548
    %v7585 = vadd.f32 %v7584, %v7550
    %v7586 = vadd.f32 %v7585, %v7553
    %v7587 = vadd.f32 %v7586, %v7555
    %v7588 = vrot.slane %v7587, 4
    %v7589 = vadd.f32 %v7587, %v7588
    %v7590 = vrot.slane %v7589, 2
    %v7591 = vadd.f32 %v7589, %v7590
    %v7592 = vrot.slane %v7591, 1
    %v7593 = vadd.f32 %v7591, %v7592
    %v7594 = vadd.f32 %v7593, 0.0
    %v7595 = vmul.f32 %v7518, %v7518
    %v7596 = vmul.f32 %v7520, %v7520
    %v7597 = vmul.f32 %v7523, %v7523
    %v7598 = vmul.f32 %v7525, %v7525
    %v7599 = vmul.f32 %v7528, %v7528
    %v7600 = vmul.f32 %v7530, %v7530
    %v7601 = vmul.f32 %v7533, %v7533
    %v7602 = vmul.f32 %v7535, %v7535
    %v7603 = vmul.f32 %v7538, %v7538
    %v7604 = vmul.f32 %v7540, %v7540
    %v7605 = vmul.f32 %v7543, %v7543
    %v7606 = vmul.f32 %v7545, %v7545
    %v7607 = vmul.f32 %v7548, %v7548
    %v7608 = vmul.f32 %v7550, %v7550
    %v7609 = vmul.f32 %v7553, %v7553
    %v7610 = vmul.f32 %v7555, %v7555
    %v7611 = vadd.f32 %v7595, %v7596
    %v7612 = vadd.f32 %v7611, %v7597
    %v7613 = vadd.f32 %v7612, %v7598
    %v7614 = vadd.f32 %v7613, %v7599
    %v7615 = vadd.f32 %v7614, %v7600
    %v7616 = vadd.f32 %v7615, %v7601
    %v7617 = vadd.f32 %v7616, %v7602
    %v7618 = vadd.f32 %v7617, %v7603
    %v7619 = vadd.f32 %v7618, %v7604
    %v7620 = vadd.f32 %v7619, %v7605
    %v7621 = vadd.f32 %v7620, %v7606
    %v7622 = vadd.f32 %v7621, %v7607
    %v7623 = vadd.f32 %v7622, %v7608
    %v7624 = vadd.f32 %v7623, %v7609
    %v7625 = vadd.f32 %v7624, %v7610
    %v7626 = vrot.slane %v7625, 4
    %v7627 = vadd.f32 %v7625, %v7626
    %v7628 = vrot.slane %v7627, 2
    %v7629 = vadd.f32 %v7627, %v7628
    %v7630 = vrot.slane %v7629, 1
    %v7631 = vadd.f32 %v7629, %v7630
    %v7632 = vadd.f32 %v7631, 0.0
    %v7633 = vld [vmem:[#allocation3 + $0x240] sm:$0xff]
    %v7634 = vld [vmem:[#allocation3 + $0x248] sm:$0xff]
    %v7635 = vld [vmem:[#allocation3 + $0x250] sm:$0xff]
    %v7636 = vld [vmem:[#allocation3 + $0x258] sm:$0xff]
    %v7637 = vld [vmem:[#allocation3 + $0x260] sm:$0xf]
    %v7638 = vld [vmem:[#allocation3 + $0x264] sm:$0xff]
    %v7639 = vld [vmem:[#allocation3 + $0x26c] sm:$0xff]
    %v7640 = vld [vmem:[#allocation3 + $0x274] sm:$0xff]
    %v7641 = vld [vmem:[#allocation3 + $0x27c] sm:$0xff]
    %v7642 = vld [vmem:[#allocation3 + $0x284] sm:$0xf]
    %v7643 = vld [vmem:[#allocation3 + $0x288] sm:$0xff]
    %v7644 = vld [vmem:[#allocation3 + $0x290] sm:$0xff]
    %v7645 = vld [vmem:[#allocation3 + $0x298] sm:$0xff]
    %v7646 = vld [vmem:[#allocation3 + $0x2a0] sm:$0xff]
    %v7647 = vld [vmem:[#allocation3 + $0x2a8] sm:$0xf]
    %v7648 = vld [vmem:[#allocation3 + $0x2ac] sm:$0xff]
    %v7649 = vld [vmem:[#allocation3 + $0x2b4] sm:$0xff]
    %v7650 = vld [vmem:[#allocation3 + $0x2bc] sm:$0xff]
    %v7651 = vld [vmem:[#allocation3 + $0x2c4] sm:$0xff]
    %v7652 = vld [vmem:[#allocation3 + $0x2cc] sm:$0xf]
    %v7653 = vld [vmem:[#allocation3 + $0x2d0] sm:$0xff]
    %v7654 = vld [vmem:[#allocation3 + $0x2d8] sm:$0xff]
    %v7655 = vld [vmem:[#allocation3 + $0x2e0] sm:$0xff]
    %v7656 = vld [vmem:[#allocation3 + $0x2e8] sm:$0xff]
    %v7657 = vld [vmem:[#allocation3 + $0x2f0] sm:$0xf]
    %v7658 = vld [vmem:[#allocation3 + $0x2f4] sm:$0xff]
    %v7659 = vld [vmem:[#allocation3 + $0x2fc] sm:$0xff]
    %v7660 = vld [vmem:[#allocation3 + $0x304] sm:$0xff]
    %v7661 = vld [vmem:[#allocation3 + $0x30c] sm:$0xff]
    %v7662 = vld [vmem:[#allocation3 + $0x314] sm:$0xf]
    %v7663 = vld [vmem:[#allocation3 + $0x318] sm:$0xff]
    %v7664 = vld [vmem:[#allocation3 + $0x320] sm:$0xff]
    %v7665 = vld [vmem:[#allocation3 + $0x328] sm:$0xff]
    %v7666 = vld [vmem:[#allocation3 + $0x330] sm:$0xff]
    %v7667 = vld [vmem:[#allocation3 + $0x338] sm:$0xf]
    %v7668 = vld [vmem:[#allocation3 + $0x33c] sm:$0xff]
    %v7669 = vld [vmem:[#allocation3 + $0x344] sm:$0xff]
    %v7670 = vld [vmem:[#allocation3 + $0x34c] sm:$0xff]
    %v7671 = vld [vmem:[#allocation3 + $0x354] sm:$0xff]
    %v7672 = vld [vmem:[#allocation3 + $0x35c] sm:$0xf]
    %v7673 = vld [vmem:[#allocation3 + $0x360] sm:$0xff]
    %v7674 = vld [vmem:[#allocation3 + $0x368] sm:$0xff]
    %v7675 = vld [vmem:[#allocation3 + $0x370] sm:$0xff]
    %v7676 = vld [vmem:[#allocation3 + $0x378] sm:$0xff]
    %v7677 = vld [vmem:[#allocation3 + $0x380] sm:$0xf]
    %v7678 = vld [vmem:[#allocation3 + $0x384] sm:$0xff]
    %v7679 = vld [vmem:[#allocation3 + $0x38c] sm:$0xff]
    %v7680 = vld [vmem:[#allocation3 + $0x394] sm:$0xff]
    %v7681 = vld [vmem:[#allocation3 + $0x39c] sm:$0xff]
    %v7682 = vld [vmem:[#allocation3 + $0x3a4] sm:$0xf]
    %v7683 = vld [vmem:[#allocation3 + $0x3a8] sm:$0xff]
    %v7684 = vld [vmem:[#allocation3 + $0x3b0] sm:$0xff]
    %v7685 = vld [vmem:[#allocation3 + $0x3b8] sm:$0xff]
    %v7686 = vld [vmem:[#allocation3 + $0x3c0] sm:$0xff]
    %v7687 = vld [vmem:[#allocation3 + $0x3c8] sm:$0xf]
    %v7688 = vld [vmem:[#allocation3 + $0x3cc] sm:$0xff]
    %v7689 = vld [vmem:[#allocation3 + $0x3d4] sm:$0xff]
    %v7690 = vld [vmem:[#allocation3 + $0x3dc] sm:$0xff]
    %v7691 = vld [vmem:[#allocation3 + $0x3e4] sm:$0xff]
    %v7692 = vld [vmem:[#allocation3 + $0x3ec] sm:$0xf]
    %v7693 = vld [vmem:[#allocation3 + $0x3f0] sm:$0xff]
    %v7694 = vld [vmem:[#allocation3 + $0x3f8] sm:$0xff]
    %v7695 = vld [vmem:[#allocation3 + $0x400] sm:$0xff]
    %v7696 = vld [vmem:[#allocation3 + $0x408] sm:$0xff]
    %v7697 = vld [vmem:[#allocation3 + $0x410] sm:$0xf]
    %v7698 = vld [vmem:[#allocation3 + $0x414] sm:$0xff]
    %v7699 = vld [vmem:[#allocation3 + $0x41c] sm:$0xff]
    %v7700 = vld [vmem:[#allocation3 + $0x424] sm:$0xff]
    %v7701 = vld [vmem:[#allocation3 + $0x42c] sm:$0xff]
    %v7702 = vld [vmem:[#allocation3 + $0x434] sm:$0xf]
    %v7703 = vld [vmem:[#allocation3 + $0x438] sm:$0xff]
    %v7704 = vld [vmem:[#allocation3 + $0x440] sm:$0xff]
    %v7705 = vld [vmem:[#allocation3 + $0x448] sm:$0xff]
    %v7706 = vld [vmem:[#allocation3 + $0x450] sm:$0xff]
    %v7707 = vld [vmem:[#allocation3 + $0x458] sm:$0xf]
    %v7708 = vld [vmem:[#allocation3 + $0x45c] sm:$0xff]
    %v7709 = vld [vmem:[#allocation3 + $0x464] sm:$0xff]
    %v7710 = vld [vmem:[#allocation3 + $0x46c] sm:$0xff]
    %v7711 = vld [vmem:[#allocation3 + $0x474] sm:$0xff]
    %v7712 = vld [vmem:[#allocation3 + $0x47c] sm:$0xf]
    %v7713 = vld [vmem:[#allocation8] sm:$0xf]
    %v7714 = vld [vmem:[#allocation8 + $0x4] sm:$0xf]
    %v7715 = vld [vmem:[#allocation8 + $0x8] sm:$0xf]
    %v7716 = vld [vmem:[#allocation8 + $0xc] sm:$0xf]
    %v7717 = vld [vmem:[#allocation8 + $0x10] sm:$0xf]
    %v7718 = vld [vmem:[#allocation8 + $0x14] sm:$0xf]
    %v7719 = vld [vmem:[#allocation8 + $0x18] sm:$0xf]
    %v7720 = vld [vmem:[#allocation8 + $0x1c] sm:$0xf]
    %v7721 = vld [vmem:[#allocation8 + $0x20] sm:$0xf]
    %v7722 = vld [vmem:[#allocation8 + $0x24] sm:$0xf]
    %v7723 = vld [vmem:[#allocation8 + $0x28] sm:$0xf]
    %v7724 = vld [vmem:[#allocation8 + $0x2c] sm:$0xf]
    %v7725 = vld [vmem:[#allocation8 + $0x30] sm:$0xf]
    %v7726 = vld [vmem:[#allocation8 + $0x34] sm:$0xf]
    %v7727 = vld [vmem:[#allocation8 + $0x38] sm:$0xf]
    %v7728 = vld [vmem:[#allocation8 + $0x3c] sm:$0xf]
    %v7729 = vld [vmem:[#allocation8 + $0x40] sm:$0xf]
    %v7730 = vld [vmem:[#allocation8 + $0x44] sm:$0xf]
    %v7731 = vld [vmem:[#allocation8 + $0x48] sm:$0xf]
    %v7732 = vld [vmem:[#allocation8 + $0x4c] sm:$0xf]
    %v7733 = vld [vmem:[#allocation8 + $0x50] sm:$0xf]
    %v7734 = vld [vmem:[#allocation8 + $0x54] sm:$0xf]
    %v7735 = vld [vmem:[#allocation8 + $0x58] sm:$0xf]
    %v7736 = vld [vmem:[#allocation8 + $0x5c] sm:$0xf]
    %v7737 = vld [vmem:[#allocation8 + $0x60] sm:$0xf]
    %v7738 = vld [vmem:[#allocation8 + $0x64] sm:$0xf]
    %v7739 = vld [vmem:[#allocation8 + $0x68] sm:$0xf]
    %v7740 = vld [vmem:[#allocation8 + $0x6c] sm:$0xf]
    %v7741 = vld [vmem:[#allocation8 + $0x70] sm:$0xf]
    %v7742 = vld [vmem:[#allocation8 + $0x74] sm:$0xf]
    %v7743 = vld [vmem:[#allocation8 + $0x78] sm:$0xf]
    %v7744 = vld [vmem:[#allocation8 + $0x7c] sm:$0xf]
    %v7745 = vld [vmem:[#allocation8 + $0x80] sm:$0xf]
    %v7746 = vld [vmem:[#allocation8 + $0x84] sm:$0xf]
    %v7747 = vld [vmem:[#allocation8 + $0x88] sm:$0xf]
    %v7748 = vld [vmem:[#allocation8 + $0x8c] sm:$0xf]
    %v7749 = vld [vmem:[#allocation8 + $0x90] sm:$0xf]
    %v7750 = vld [vmem:[#allocation8 + $0x94] sm:$0xf]
    %v7751 = vld [vmem:[#allocation8 + $0x98] sm:$0xf]
    %v7752 = vld [vmem:[#allocation8 + $0x9c] sm:$0xf]
    %v7753 = vld [vmem:[#allocation8 + $0xa0] sm:$0xf]
    %v7754 = vld [vmem:[#allocation8 + $0xa4] sm:$0xf]
    %v7755 = vld [vmem:[#allocation8 + $0xa8] sm:$0xf]
    %v7756 = vld [vmem:[#allocation8 + $0xac] sm:$0xf]
    %v7757 = vld [vmem:[#allocation8 + $0xb0] sm:$0xf]
    %v7758 = vld [vmem:[#allocation8 + $0xb4] sm:$0xf]
    %v7759 = vld [vmem:[#allocation8 + $0xb8] sm:$0xf]
    %v7760 = vld [vmem:[#allocation8 + $0xbc] sm:$0xf]
    %v7761 = vld [vmem:[#allocation8 + $0xc0] sm:$0xf]
    %v7762 = vld [vmem:[#allocation8 + $0xc4] sm:$0xf]
    %v7763 = vld [vmem:[#allocation8 + $0xc8] sm:$0xf]
    %v7764 = vld [vmem:[#allocation8 + $0xcc] sm:$0xf]
    %v7765 = vld [vmem:[#allocation8 + $0xd0] sm:$0xf]
    %v7766 = vld [vmem:[#allocation8 + $0xd4] sm:$0xf]
    %v7767 = vld [vmem:[#allocation8 + $0xd8] sm:$0xf]
    %v7768 = vld [vmem:[#allocation8 + $0xdc] sm:$0xf]
    %v7769 = vld [vmem:[#allocation8 + $0xe0] sm:$0xf]
    %v7770 = vld [vmem:[#allocation8 + $0xe4] sm:$0xf]
    %v7771 = vld [vmem:[#allocation8 + $0xe8] sm:$0xf]
    %v7772 = vld [vmem:[#allocation8 + $0xec] sm:$0xf]
    %v7773 = vld [vmem:[#allocation8 + $0xf0] sm:$0xf]
    %v7774 = vld [vmem:[#allocation8 + $0xf4] sm:$0xf]
    %v7775 = vld [vmem:[#allocation8 + $0xf8] sm:$0xf]
    %v7776 = vld [vmem:[#allocation8 + $0xfc] sm:$0xf]
    %v7777 = vld [vmem:[#allocation8 + $0x100] sm:$0xf]
    %v7778 = vld [vmem:[#allocation8 + $0x104] sm:$0xf]
    %v7779 = vld [vmem:[#allocation8 + $0x108] sm:$0xf]
    %v7780 = vld [vmem:[#allocation8 + $0x10c] sm:$0xf]
    %v7781 = vld [vmem:[#allocation8 + $0x110] sm:$0xf]
    %v7782 = vld [vmem:[#allocation8 + $0x114] sm:$0xf]
    %v7783 = vld [vmem:[#allocation8 + $0x118] sm:$0xf]
    %v7784 = vld [vmem:[#allocation8 + $0x11c] sm:$0xf]
    %v7785 = vld [vmem:[#allocation8 + $0x120] sm:$0xf]
    %v7786 = vld [vmem:[#allocation8 + $0x124] sm:$0xf]
    %v7787 = vld [vmem:[#allocation8 + $0x128] sm:$0xf]
    %v7788 = vld [vmem:[#allocation8 + $0x12c] sm:$0xf]
    %v7789 = vld [vmem:[#allocation8 + $0x130] sm:$0xf]
    %v7790 = vld [vmem:[#allocation8 + $0x134] sm:$0xf]
    %v7791 = vld [vmem:[#allocation8 + $0x138] sm:$0xf]
    %v7792 = vld [vmem:[#allocation8 + $0x13c] sm:$0xf]
    %v7793 = vld [vmem:[#allocation8 + $0x140] sm:$0xf]
    %v7794 = vld [vmem:[#allocation8 + $0x144] sm:$0xf]
    %v7795 = vld [vmem:[#allocation8 + $0x148] sm:$0xf]
    %v7796 = vld [vmem:[#allocation8 + $0x14c] sm:$0xf]
    %v7797 = vld [vmem:[#allocation8 + $0x150] sm:$0xf]
    %v7798 = vld [vmem:[#allocation8 + $0x154] sm:$0xf]
    %v7799 = vld [vmem:[#allocation8 + $0x158] sm:$0xf]
    %v7800 = vld [vmem:[#allocation8 + $0x15c] sm:$0xf]
    %v7801 = vld [vmem:[#allocation8 + $0x160] sm:$0xf]
    %v7802 = vld [vmem:[#allocation8 + $0x164] sm:$0xf]
    %v7803 = vld [vmem:[#allocation8 + $0x168] sm:$0xf]
    %v7804 = vld [vmem:[#allocation8 + $0x16c] sm:$0xf]
    %v7805 = vld [vmem:[#allocation8 + $0x170] sm:$0xf]
    %v7806 = vld [vmem:[#allocation8 + $0x174] sm:$0xf]
    %v7807 = vld [vmem:[#allocation8 + $0x178] sm:$0xf]
    %v7808 = vld [vmem:[#allocation8 + $0x17c] sm:$0xf]
    %v7809 = vld [vmem:[#allocation8 + $0x180] sm:$0xf]
    %v7810 = vld [vmem:[#allocation8 + $0x184] sm:$0xf]
    %v7811 = vld [vmem:[#allocation8 + $0x188] sm:$0xf]
    %v7812 = vld [vmem:[#allocation8 + $0x18c] sm:$0xf]
    %v7813 = vld [vmem:[#allocation8 + $0x190] sm:$0xf]
    %v7814 = vld [vmem:[#allocation8 + $0x194] sm:$0xf]
    %v7815 = vld [vmem:[#allocation8 + $0x198] sm:$0xf]
    %v7816 = vld [vmem:[#allocation8 + $0x19c] sm:$0xf]
    %v7817 = vld [vmem:[#allocation8 + $0x1a0] sm:$0xf]
    %v7818 = vld [vmem:[#allocation8 + $0x1a4] sm:$0xf]
    %v7819 = vld [vmem:[#allocation8 + $0x1a8] sm:$0xf]
    %v7820 = vld [vmem:[#allocation8 + $0x1ac] sm:$0xf]
    %v7821 = vld [vmem:[#allocation8 + $0x1b0] sm:$0xf]
    %v7822 = vld [vmem:[#allocation8 + $0x1b4] sm:$0xf]
    %v7823 = vld [vmem:[#allocation8 + $0x1b8] sm:$0xf]
    %v7824 = vld [vmem:[#allocation8 + $0x1bc] sm:$0xf]
    %v7825 = vld [vmem:[#allocation8 + $0x1c0] sm:$0xf]
    %v7826 = vld [vmem:[#allocation8 + $0x1c4] sm:$0xf]
    %v7827 = vld [vmem:[#allocation8 + $0x1c8] sm:$0xf]
    %v7828 = vld [vmem:[#allocation8 + $0x1cc] sm:$0xf]
    %v7829 = vld [vmem:[#allocation8 + $0x1d0] sm:$0xf]
    %v7830 = vld [vmem:[#allocation8 + $0x1d4] sm:$0xf]
    %v7831 = vld [vmem:[#allocation8 + $0x1d8] sm:$0xf]
    %v7832 = vld [vmem:[#allocation8 + $0x1dc] sm:$0xf]
    %v7833 = vld [vmem:[#allocation8 + $0x1e0] sm:$0xf]
    %v7834 = vld [vmem:[#allocation8 + $0x1e4] sm:$0xf]
    %v7835 = vld [vmem:[#allocation8 + $0x1e8] sm:$0xf]
    %v7836 = vld [vmem:[#allocation8 + $0x1ec] sm:$0xf]
    %v7837 = vld [vmem:[#allocation8 + $0x1f0] sm:$0xf]
    %v7838 = vld [vmem:[#allocation8 + $0x1f4] sm:$0xf]
    %v7839 = vld [vmem:[#allocation8 + $0x1f8] sm:$0xf]
    %v7840 = vld [vmem:[#allocation8 + $0x1fc] sm:$0xf]
    %v7841 = vld [vmem:[#allocation8 + $0x200] sm:$0xf]
    %v7842 = vld [vmem:[#allocation8 + $0x204] sm:$0xf]
    %v7843 = vld [vmem:[#allocation8 + $0x208] sm:$0xf]
    %v7844 = vld [vmem:[#allocation8 + $0x20c] sm:$0xf]
    %v7845 = vld [vmem:[#allocation8 + $0x210] sm:$0xf]
    %v7846 = vld [vmem:[#allocation8 + $0x214] sm:$0xf]
    %v7847 = vld [vmem:[#allocation8 + $0x218] sm:$0xf]
    %v7848 = vld [vmem:[#allocation8 + $0x21c] sm:$0xf]
    %v7849 = vld [vmem:[#allocation8 + $0x220] sm:$0xf]
    %v7850 = vld [vmem:[#allocation8 + $0x224] sm:$0xf]
    %v7851 = vld [vmem:[#allocation8 + $0x228] sm:$0xf]
    %v7852 = vld [vmem:[#allocation8 + $0x22c] sm:$0xf]
    %v7853 = vld [vmem:[#allocation8 + $0x230] sm:$0xf]
    %v7854 = vld [vmem:[#allocation8 + $0x234] sm:$0xf]
    %v7855 = vld [vmem:[#allocation8 + $0x238] sm:$0xf]
    %v7856 = vld [vmem:[#allocation8 + $0x23c] sm:$0xf]
    %v7937 = vunpack.c.l.b16 %v7633
    %v7938 = vunpack.c.h.b16 %v7633
    %v7939 = vunpack.c.l.b16 %v7634
    %v7940 = vunpack.c.h.b16 %v7634
    %v7941 = vunpack.c.l.b16 %v7635
    %v7942 = vunpack.c.h.b16 %v7635
    %v7943 = vunpack.c.l.b16 %v7636
    %v7944 = vunpack.c.h.b16 %v7636
    %v7945 = vunpack.c.l.b16 %v7637
    %v7946 = vunpack.c.l.b16 %v7638
    %v7947 = vunpack.c.h.b16 %v7638
    %v7948 = vunpack.c.l.b16 %v7639
    %v7949 = vunpack.c.h.b16 %v7639
    %v7950 = vunpack.c.l.b16 %v7640
    %v7951 = vunpack.c.h.b16 %v7640
    %v7952 = vunpack.c.l.b16 %v7641
    %v7953 = vunpack.c.h.b16 %v7641
    %v7954 = vunpack.c.l.b16 %v7642
    %v7955 = vunpack.c.l.b16 %v7643
    %v7956 = vunpack.c.h.b16 %v7643
    %v7957 = vunpack.c.l.b16 %v7644
    %v7958 = vunpack.c.h.b16 %v7644
    %v7959 = vunpack.c.l.b16 %v7645
    %v7960 = vunpack.c.h.b16 %v7645
    %v7961 = vunpack.c.l.b16 %v7646
    %v7962 = vunpack.c.h.b16 %v7646
    %v7963 = vunpack.c.l.b16 %v7647
    %v7964 = vunpack.c.l.b16 %v7648
    %v7965 = vunpack.c.h.b16 %v7648
    %v7966 = vunpack.c.l.b16 %v7649
    %v7967 = vunpack.c.h.b16 %v7649
    %v7968 = vunpack.c.l.b16 %v7650
    %v7969 = vunpack.c.h.b16 %v7650
    %v7970 = vunpack.c.l.b16 %v7651
    %v7971 = vunpack.c.h.b16 %v7651
    %v7972 = vunpack.c.l.b16 %v7652
    %v7973 = vunpack.c.l.b16 %v7653
    %v7974 = vunpack.c.h.b16 %v7653
    %v7975 = vunpack.c.l.b16 %v7654
    %v7976 = vunpack.c.h.b16 %v7654
    %v7977 = vunpack.c.l.b16 %v7655
    %v7978 = vunpack.c.h.b16 %v7655
    %v7979 = vunpack.c.l.b16 %v7656
    %v7980 = vunpack.c.h.b16 %v7656
    %v7981 = vunpack.c.l.b16 %v7657
    %v7982 = vunpack.c.l.b16 %v7658
    %v7983 = vunpack.c.h.b16 %v7658
    %v7984 = vunpack.c.l.b16 %v7659
    %v7985 = vunpack.c.h.b16 %v7659
    %v7986 = vunpack.c.l.b16 %v7660
    %v7987 = vunpack.c.h.b16 %v7660
    %v7988 = vunpack.c.l.b16 %v7661
    %v7989 = vunpack.c.h.b16 %v7661
    %v7990 = vunpack.c.l.b16 %v7662
    %v7991 = vunpack.c.l.b16 %v7663
    %v7992 = vunpack.c.h.b16 %v7663
    %v7993 = vunpack.c.l.b16 %v7664
    %v7994 = vunpack.c.h.b16 %v7664
    %v7995 = vunpack.c.l.b16 %v7665
    %v7996 = vunpack.c.h.b16 %v7665
    %v7997 = vunpack.c.l.b16 %v7666
    %v7998 = vunpack.c.h.b16 %v7666
    %v7999 = vunpack.c.l.b16 %v7667
    %v8000 = vunpack.c.l.b16 %v7668
    %v8001 = vunpack.c.h.b16 %v7668
    %v8002 = vunpack.c.l.b16 %v7669
    %v8003 = vunpack.c.h.b16 %v7669
    %v8004 = vunpack.c.l.b16 %v7670
    %v8005 = vunpack.c.h.b16 %v7670
    %v8006 = vunpack.c.l.b16 %v7671
    %v8007 = vunpack.c.h.b16 %v7671
    %v8008 = vunpack.c.l.b16 %v7672
    %v8009 = vunpack.c.l.b16 %v7673
    %v8010 = vunpack.c.h.b16 %v7673
    %v8011 = vunpack.c.l.b16 %v7674
    %v8012 = vunpack.c.h.b16 %v7674
    %v8013 = vunpack.c.l.b16 %v7675
    %v8014 = vunpack.c.h.b16 %v7675
    %v8015 = vunpack.c.l.b16 %v7676
    %v8016 = vunpack.c.h.b16 %v7676
    %v8017 = vunpack.c.l.b16 %v7677
    %v8018 = vunpack.c.l.b16 %v7678
    %v8019 = vunpack.c.h.b16 %v7678
    %v8020 = vunpack.c.l.b16 %v7679
    %v8021 = vunpack.c.h.b16 %v7679
    %v8022 = vunpack.c.l.b16 %v7680
    %v8023 = vunpack.c.h.b16 %v7680
    %v8024 = vunpack.c.l.b16 %v7681
    %v8025 = vunpack.c.h.b16 %v7681
    %v8026 = vunpack.c.l.b16 %v7682
    %v8027 = vunpack.c.l.b16 %v7683
    %v8028 = vunpack.c.h.b16 %v7683
    %v8029 = vunpack.c.l.b16 %v7684
    %v8030 = vunpack.c.h.b16 %v7684
    %v8031 = vunpack.c.l.b16 %v7685
    %v8032 = vunpack.c.h.b16 %v7685
    %v8033 = vunpack.c.l.b16 %v7686
    %v8034 = vunpack.c.h.b16 %v7686
    %v8035 = vunpack.c.l.b16 %v7687
    %v8036 = vunpack.c.l.b16 %v7688
    %v8037 = vunpack.c.h.b16 %v7688
    %v8038 = vunpack.c.l.b16 %v7689
    %v8039 = vunpack.c.h.b16 %v7689
    %v8040 = vunpack.c.l.b16 %v7690
    %v8041 = vunpack.c.h.b16 %v7690
    %v8042 = vunpack.c.l.b16 %v7691
    %v8043 = vunpack.c.h.b16 %v7691
    %v8044 = vunpack.c.l.b16 %v7692
    %v8045 = vunpack.c.l.b16 %v7693
    %v8046 = vunpack.c.h.b16 %v7693
    %v8047 = vunpack.c.l.b16 %v7694
    %v8048 = vunpack.c.h.b16 %v7694
    %v8049 = vunpack.c.l.b16 %v7695
    %v8050 = vunpack.c.h.b16 %v7695
    %v8051 = vunpack.c.l.b16 %v7696
    %v8052 = vunpack.c.h.b16 %v7696
    %v8053 = vunpack.c.l.b16 %v7697
    %v8054 = vunpack.c.l.b16 %v7698
    %v8055 = vunpack.c.h.b16 %v7698
    %v8056 = vunpack.c.l.b16 %v7699
    %v8057 = vunpack.c.h.b16 %v7699
    %v8058 = vunpack.c.l.b16 %v7700
    %v8059 = vunpack.c.h.b16 %v7700
    %v8060 = vunpack.c.l.b16 %v7701
    %v8061 = vunpack.c.h.b16 %v7701
    %v8062 = vunpack.c.l.b16 %v7702
    %v8063 = vunpack.c.l.b16 %v7703
    %v8064 = vunpack.c.h.b16 %v7703
    %v8065 = vunpack.c.l.b16 %v7704
    %v8066 = vunpack.c.h.b16 %v7704
    %v8067 = vunpack.c.l.b16 %v7705
    %v8068 = vunpack.c.h.b16 %v7705
    %v8069 = vunpack.c.l.b16 %v7706
    %v8070 = vunpack.c.h.b16 %v7706
    %v8071 = vunpack.c.l.b16 %v7707
    %v8072 = vunpack.c.l.b16 %v7708
    %v8073 = vunpack.c.h.b16 %v7708
    %v8074 = vunpack.c.l.b16 %v7709
    %v8075 = vunpack.c.h.b16 %v7709
    %v8076 = vunpack.c.l.b16 %v7710
    %v8077 = vunpack.c.h.b16 %v7710
    %v8078 = vunpack.c.l.b16 %v7711
    %v8079 = vunpack.c.h.b16 %v7711
    %v8080 = vunpack.c.l.b16 %v7712
    %v8081 = vpack.c.b16 %v7946, %v7937
    %v8082 = vpack.c.b16 %v7947, %v7938
    %v8083 = vpack.c.b16 %v7948, %v7939
    %v8084 = vpack.c.b16 %v7949, %v7940
    %v8085 = vpack.c.b16 %v7950, %v7941
    %v8086 = vpack.c.b16 %v7951, %v7942
    %v8087 = vpack.c.b16 %v7952, %v7943
    %v8088 = vpack.c.b16 %v7953, %v7944
    %v8089 = vpack.c.b16 %v7954, %v7945
    %v8090 = vpack.c.b16 %v7964, %v7955
    %v8091 = vpack.c.b16 %v7965, %v7956
    %v8092 = vpack.c.b16 %v7966, %v7957
    %v8093 = vpack.c.b16 %v7967, %v7958
    %v8094 = vpack.c.b16 %v7968, %v7959
    %v8095 = vpack.c.b16 %v7969, %v7960
    %v8096 = vpack.c.b16 %v7970, %v7961
    %v8097 = vpack.c.b16 %v7971, %v7962
    %v8098 = vpack.c.b16 %v7972, %v7963
    %v8099 = vpack.c.b16 %v7982, %v7973
    %v8100 = vpack.c.b16 %v7983, %v7974
    %v8101 = vpack.c.b16 %v7984, %v7975
    %v8102 = vpack.c.b16 %v7985, %v7976
    %v8103 = vpack.c.b16 %v7986, %v7977
    %v8104 = vpack.c.b16 %v7987, %v7978
    %v8105 = vpack.c.b16 %v7988, %v7979
    %v8106 = vpack.c.b16 %v7989, %v7980
    %v8107 = vpack.c.b16 %v7990, %v7981
    %v8108 = vpack.c.b16 %v8000, %v7991
    %v8109 = vpack.c.b16 %v8001, %v7992
    %v8110 = vpack.c.b16 %v8002, %v7993
    %v8111 = vpack.c.b16 %v8003, %v7994
    %v8112 = vpack.c.b16 %v8004, %v7995
    %v8113 = vpack.c.b16 %v8005, %v7996
    %v8114 = vpack.c.b16 %v8006, %v7997
    %v8115 = vpack.c.b16 %v8007, %v7998
    %v8116 = vpack.c.b16 %v8008, %v7999
    %v8117 = vpack.c.b16 %v8018, %v8009
    %v8118 = vpack.c.b16 %v8019, %v8010
    %v8119 = vpack.c.b16 %v8020, %v8011
    %v8120 = vpack.c.b16 %v8021, %v8012
    %v8121 = vpack.c.b16 %v8022, %v8013
    %v8122 = vpack.c.b16 %v8023, %v8014
    %v8123 = vpack.c.b16 %v8024, %v8015
    %v8124 = vpack.c.b16 %v8025, %v8016
    %v8125 = vpack.c.b16 %v8026, %v8017
    %v8126 = vpack.c.b16 %v8036, %v8027
    %v8127 = vpack.c.b16 %v8037, %v8028
    %v8128 = vpack.c.b16 %v8038, %v8029
    %v8129 = vpack.c.b16 %v8039, %v8030
    %v8130 = vpack.c.b16 %v8040, %v8031
    %v8131 = vpack.c.b16 %v8041, %v8032
    %v8132 = vpack.c.b16 %v8042, %v8033
    %v8133 = vpack.c.b16 %v8043, %v8034
    %v8134 = vpack.c.b16 %v8044, %v8035
    %v8135 = vpack.c.b16 %v8054, %v8045
    %v8136 = vpack.c.b16 %v8055, %v8046
    %v8137 = vpack.c.b16 %v8056, %v8047
    %v8138 = vpack.c.b16 %v8057, %v8048
    %v8139 = vpack.c.b16 %v8058, %v8049
    %v8140 = vpack.c.b16 %v8059, %v8050
    %v8141 = vpack.c.b16 %v8060, %v8051
    %v8142 = vpack.c.b16 %v8061, %v8052
    %v8143 = vpack.c.b16 %v8062, %v8053
    %v8144 = vpack.c.b16 %v8072, %v8063
    %v8145 = vpack.c.b16 %v8073, %v8064
    %v8146 = vpack.c.b16 %v8074, %v8065
    %v8147 = vpack.c.b16 %v8075, %v8066
    %v8148 = vpack.c.b16 %v8076, %v8067
    %v8149 = vpack.c.b16 %v8077, %v8068
    %v8150 = vpack.c.b16 %v8078, %v8069
    %v8151 = vpack.c.b16 %v8079, %v8070
    %v8152 = vpack.c.b16 %v8080, %v8071
    %v8369 = vunpack.c.l.b16 %v7713
    %v8370 = vunpack.c.l.b16 %v7714
    %v8371 = vunpack.c.l.b16 %v7715
    %v8372 = vunpack.c.l.b16 %v7716
    %v8373 = vunpack.c.l.b16 %v7717
    %v8374 = vunpack.c.l.b16 %v7718
    %v8375 = vunpack.c.l.b16 %v7719
    %v8376 = vunpack.c.l.b16 %v7720
    %v8377 = vunpack.c.l.b16 %v7721
    %v8378 = vunpack.c.l.b16 %v7722
    %v8379 = vunpack.c.l.b16 %v7723
    %v8380 = vunpack.c.l.b16 %v7724
    %v8381 = vunpack.c.l.b16 %v7725
    %v8382 = vunpack.c.l.b16 %v7726
    %v8383 = vunpack.c.l.b16 %v7727
    %v8384 = vunpack.c.l.b16 %v7728
    %v8385 = vunpack.c.l.b16 %v7729
    %v8386 = vunpack.c.l.b16 %v7730
    %v8387 = vunpack.c.l.b16 %v7731
    %v8388 = vunpack.c.l.b16 %v7732
    %v8389 = vunpack.c.l.b16 %v7733
    %v8390 = vunpack.c.l.b16 %v7734
    %v8391 = vunpack.c.l.b16 %v7735
    %v8392 = vunpack.c.l.b16 %v7736
    %v8393 = vunpack.c.l.b16 %v7737
    %v8394 = vunpack.c.l.b16 %v7738
    %v8395 = vunpack.c.l.b16 %v7739
    %v8396 = vunpack.c.l.b16 %v7740
    %v8397 = vunpack.c.l.b16 %v7741
    %v8398 = vunpack.c.l.b16 %v7742
    %v8399 = vunpack.c.l.b16 %v7743
    %v8400 = vunpack.c.l.b16 %v7744
    %v8401 = vunpack.c.l.b16 %v7745
    %v8402 = vunpack.c.l.b16 %v7746
    %v8403 = vunpack.c.l.b16 %v7747
    %v8404 = vunpack.c.l.b16 %v7748
    %v8405 = vunpack.c.l.b16 %v7749
    %v8406 = vunpack.c.l.b16 %v7750
    %v8407 = vunpack.c.l.b16 %v7751
    %v8408 = vunpack.c.l.b16 %v7752
    %v8409 = vunpack.c.l.b16 %v7753
    %v8410 = vunpack.c.l.b16 %v7754
    %v8411 = vunpack.c.l.b16 %v7755
    %v8412 = vunpack.c.l.b16 %v7756
    %v8413 = vunpack.c.l.b16 %v7757
    %v8414 = vunpack.c.l.b16 %v7758
    %v8415 = vunpack.c.l.b16 %v7759
    %v8416 = vunpack.c.l.b16 %v7760
    %v8417 = vunpack.c.l.b16 %v7761
    %v8418 = vunpack.c.l.b16 %v7762
    %v8419 = vunpack.c.l.b16 %v7763
    %v8420 = vunpack.c.l.b16 %v7764
    %v8421 = vunpack.c.l.b16 %v7765
    %v8422 = vunpack.c.l.b16 %v7766
    %v8423 = vunpack.c.l.b16 %v7767
    %v8424 = vunpack.c.l.b16 %v7768
    %v8425 = vunpack.c.l.b16 %v7769
    %v8426 = vunpack.c.l.b16 %v7770
    %v8427 = vunpack.c.l.b16 %v7771
    %v8428 = vunpack.c.l.b16 %v7772
    %v8429 = vunpack.c.l.b16 %v7773
    %v8430 = vunpack.c.l.b16 %v7774
    %v8431 = vunpack.c.l.b16 %v7775
    %v8432 = vunpack.c.l.b16 %v7776
    %v8433 = vunpack.c.l.b16 %v7777
    %v8434 = vunpack.c.l.b16 %v7778
    %v8435 = vunpack.c.l.b16 %v7779
    %v8436 = vunpack.c.l.b16 %v7780
    %v8437 = vunpack.c.l.b16 %v7781
    %v8438 = vunpack.c.l.b16 %v7782
    %v8439 = vunpack.c.l.b16 %v7783
    %v8440 = vunpack.c.l.b16 %v7784
    %v8441 = vunpack.c.l.b16 %v7785
    %v8442 = vunpack.c.l.b16 %v7786
    %v8443 = vunpack.c.l.b16 %v7787
    %v8444 = vunpack.c.l.b16 %v7788
    %v8445 = vunpack.c.l.b16 %v7789
    %v8446 = vunpack.c.l.b16 %v7790
    %v8447 = vunpack.c.l.b16 %v7791
    %v8448 = vunpack.c.l.b16 %v7792
    %v8449 = vunpack.c.l.b16 %v7793
    %v8450 = vunpack.c.l.b16 %v7794
    %v8451 = vunpack.c.l.b16 %v7795
    %v8452 = vunpack.c.l.b16 %v7796
    %v8453 = vunpack.c.l.b16 %v7797
    %v8454 = vunpack.c.l.b16 %v7798
    %v8455 = vunpack.c.l.b16 %v7799
    %v8456 = vunpack.c.l.b16 %v7800
    %v8457 = vunpack.c.l.b16 %v7801
    %v8458 = vunpack.c.l.b16 %v7802
    %v8459 = vunpack.c.l.b16 %v7803
    %v8460 = vunpack.c.l.b16 %v7804
    %v8461 = vunpack.c.l.b16 %v7805
    %v8462 = vunpack.c.l.b16 %v7806
    %v8463 = vunpack.c.l.b16 %v7807
    %v8464 = vunpack.c.l.b16 %v7808
    %v8465 = vunpack.c.l.b16 %v7809
    %v8466 = vunpack.c.l.b16 %v7810
    %v8467 = vunpack.c.l.b16 %v7811
    %v8468 = vunpack.c.l.b16 %v7812
    %v8469 = vunpack.c.l.b16 %v7813
    %v8470 = vunpack.c.l.b16 %v7814
    %v8471 = vunpack.c.l.b16 %v7815
    %v8472 = vunpack.c.l.b16 %v7816
    %v8473 = vunpack.c.l.b16 %v7817
    %v8474 = vunpack.c.l.b16 %v7818
    %v8475 = vunpack.c.l.b16 %v7819
    %v8476 = vunpack.c.l.b16 %v7820
    %v8477 = vunpack.c.l.b16 %v7821
    %v8478 = vunpack.c.l.b16 %v7822
    %v8479 = vunpack.c.l.b16 %v7823
    %v8480 = vunpack.c.l.b16 %v7824
    %v8481 = vunpack.c.l.b16 %v7825
    %v8482 = vunpack.c.l.b16 %v7826
    %v8483 = vunpack.c.l.b16 %v7827
    %v8484 = vunpack.c.l.b16 %v7828
    %v8485 = vunpack.c.l.b16 %v7829
    %v8486 = vunpack.c.l.b16 %v7830
    %v8487 = vunpack.c.l.b16 %v7831
    %v8488 = vunpack.c.l.b16 %v7832
    %v8489 = vunpack.c.l.b16 %v7833
    %v8490 = vunpack.c.l.b16 %v7834
    %v8491 = vunpack.c.l.b16 %v7835
    %v8492 = vunpack.c.l.b16 %v7836
    %v8493 = vunpack.c.l.b16 %v7837
    %v8494 = vunpack.c.l.b16 %v7838
    %v8495 = vunpack.c.l.b16 %v7839
    %v8496 = vunpack.c.l.b16 %v7840
    %v8497 = vunpack.c.l.b16 %v7841
    %v8498 = vunpack.c.l.b16 %v7842
    %v8499 = vunpack.c.l.b16 %v7843
    %v8500 = vunpack.c.l.b16 %v7844
    %v8501 = vunpack.c.l.b16 %v7845
    %v8502 = vunpack.c.l.b16 %v7846
    %v8503 = vunpack.c.l.b16 %v7847
    %v8504 = vunpack.c.l.b16 %v7848
    %v8505 = vunpack.c.l.b16 %v7849
    %v8506 = vunpack.c.l.b16 %v7850
    %v8507 = vunpack.c.l.b16 %v7851
    %v8508 = vunpack.c.l.b16 %v7852
    %v8509 = vunpack.c.l.b16 %v7853
    %v8510 = vunpack.c.l.b16 %v7854
    %v8511 = vunpack.c.l.b16 %v7855
    %v8512 = vunpack.c.l.b16 %v7856
    %v8513 = vpack.c.b16 %v8370, %v8369
    %v8514 = vpack.c.b16 %v8372, %v8371
    %v8515 = vpack.c.b16 %v8374, %v8373
    %v8516 = vpack.c.b16 %v8376, %v8375
    %v8517 = vpack.c.b16 %v8378, %v8377
    %v8518 = vpack.c.b16 %v8380, %v8379
    %v8519 = vpack.c.b16 %v8382, %v8381
    %v8520 = vpack.c.b16 %v8384, %v8383
    %v8521 = vpack.c.b16 %v8386, %v8385
    %v8522 = vpack.c.b16 %v8388, %v8387
    %v8523 = vpack.c.b16 %v8390, %v8389
    %v8524 = vpack.c.b16 %v8392, %v8391
    %v8525 = vpack.c.b16 %v8394, %v8393
    %v8526 = vpack.c.b16 %v8396, %v8395
    %v8527 = vpack.c.b16 %v8398, %v8397
    %v8528 = vpack.c.b16 %v8400, %v8399
    %v8529 = vpack.c.b16 %v8402, %v8401
    %v8530 = vpack.c.b16 %v8404, %v8403
    %v8531 = vpack.c.b16 %v8406, %v8405
    %v8532 = vpack.c.b16 %v8408, %v8407
    %v8533 = vpack.c.b16 %v8410, %v8409
    %v8534 = vpack.c.b16 %v8412, %v8411
    %v8535 = vpack.c.b16 %v8414, %v8413
    %v8536 = vpack.c.b16 %v8416, %v8415
    %v8537 = vpack.c.b16 %v8418, %v8417
    %v8538 = vpack.c.b16 %v8420, %v8419
    %v8539 = vpack.c.b16 %v8422, %v8421
    %v8540 = vpack.c.b16 %v8424, %v8423
    %v8541 = vpack.c.b16 %v8426, %v8425
    %v8542 = vpack.c.b16 %v8428, %v8427
    %v8543 = vpack.c.b16 %v8430, %v8429
    %v8544 = vpack.c.b16 %v8432, %v8431
    %v8545 = vpack.c.b16 %v8434, %v8433
    %v8546 = vpack.c.b16 %v8436, %v8435
    %v8547 = vpack.c.b16 %v8438, %v8437
    %v8548 = vpack.c.b16 %v8440, %v8439
    %v8549 = vpack.c.b16 %v8442, %v8441
    %v8550 = vpack.c.b16 %v8444, %v8443
    %v8551 = vpack.c.b16 %v8446, %v8445
    %v8552 = vpack.c.b16 %v8448, %v8447
    %v8553 = vpack.c.b16 %v8450, %v8449
    %v8554 = vpack.c.b16 %v8452, %v8451
    %v8555 = vpack.c.b16 %v8454, %v8453
    %v8556 = vpack.c.b16 %v8456, %v8455
    %v8557 = vpack.c.b16 %v8458, %v8457
    %v8558 = vpack.c.b16 %v8460, %v8459
    %v8559 = vpack.c.b16 %v8462, %v8461
    %v8560 = vpack.c.b16 %v8464, %v8463
    %v8561 = vpack.c.b16 %v8466, %v8465
    %v8562 = vpack.c.b16 %v8468, %v8467
    %v8563 = vpack.c.b16 %v8470, %v8469
    %v8564 = vpack.c.b16 %v8472, %v8471
    %v8565 = vpack.c.b16 %v8474, %v8473
    %v8566 = vpack.c.b16 %v8476, %v8475
    %v8567 = vpack.c.b16 %v8478, %v8477
    %v8568 = vpack.c.b16 %v8480, %v8479
    %v8569 = vpack.c.b16 %v8482, %v8481
    %v8570 = vpack.c.b16 %v8484, %v8483
    %v8571 = vpack.c.b16 %v8486, %v8485
    %v8572 = vpack.c.b16 %v8488, %v8487
    %v8573 = vpack.c.b16 %v8490, %v8489
    %v8574 = vpack.c.b16 %v8492, %v8491
    %v8575 = vpack.c.b16 %v8494, %v8493
    %v8576 = vpack.c.b16 %v8496, %v8495
    %v8577 = vpack.c.b16 %v8498, %v8497
    %v8578 = vpack.c.b16 %v8500, %v8499
    %v8579 = vpack.c.b16 %v8502, %v8501
    %v8580 = vpack.c.b16 %v8504, %v8503
    %v8581 = vpack.c.b16 %v8506, %v8505
    %v8582 = vpack.c.b16 %v8508, %v8507
    %v8583 = vpack.c.b16 %v8510, %v8509
    %v8584 = vpack.c.b16 %v8512, %v8511
    %8657 = vmatpush.bf16.msra.mxu0 %v8520
    %8658 = vmatpush.bf16.msra.mxu0 %v8519
    %8659 = vmatpush.bf16.msra.mxu0 %v8518
    %8660 = vmatpush.bf16.msra.mxu0 %v8517
    %8661 = vmatpush.bf16.msra.mxu0 %v8516
    %8662 = vmatpush.bf16.msra.mxu0 %v8515
    %8663 = vmatpush.bf16.msra.mxu0 %v8514
    %8664 = vmatpush.bf16.msra.mxu0 %v8513
    %8665 = vmatmul.bf16.gmra.mxu0 %v8081
    %v8666 = vpop.f32.mrf.mxu0
    %v8667 = vadd.f32 0.0, %v8666
    %v8668 = vpop.f32.mrf.mxu0
    %v8669 = vadd.f32 0.0, %v8668
    %8670 = vmatmul.bf16.gmra.mxu0 %v8090
    %v8671 = vpop.f32.mrf.mxu0
    %v8672 = vadd.f32 0.0, %v8671
    %v8673 = vpop.f32.mrf.mxu0
    %v8674 = vadd.f32 0.0, %v8673
    %8675 = vmatmul.bf16.gmra.mxu0 %v8099
    %v8676 = vpop.f32.mrf.mxu0
    %v8677 = vadd.f32 0.0, %v8676
    %v8678 = vpop.f32.mrf.mxu0
    %v8679 = vadd.f32 0.0, %v8678
    %8680 = vmatmul.bf16.gmra.mxu0 %v8108
    %v8681 = vpop.f32.mrf.mxu0
    %v8682 = vadd.f32 0.0, %v8681
    %v8683 = vpop.f32.mrf.mxu0
    %v8684 = vadd.f32 0.0, %v8683
    %8685 = vmatmul.bf16.gmra.mxu0 %v8117
    %v8686 = vpop.f32.mrf.mxu0
    %v8687 = vadd.f32 0.0, %v8686
    %v8688 = vpop.f32.mrf.mxu0
    %v8689 = vadd.f32 0.0, %v8688
    %8690 = vmatmul.bf16.gmra.mxu0 %v8126
    %v8691 = vpop.f32.mrf.mxu0
    %v8692 = vadd.f32 0.0, %v8691
    %v8693 = vpop.f32.mrf.mxu0
    %v8694 = vadd.f32 0.0, %v8693
    %8695 = vmatmul.bf16.gmra.mxu0 %v8135
    %v8696 = vpop.f32.mrf.mxu0
    %v8697 = vadd.f32 0.0, %v8696
    %v8698 = vpop.f32.mrf.mxu0
    %v8699 = vadd.f32 0.0, %v8698
    %8700 = vmatmul.bf16.gmra.mxu0 %v8144
    %v8701 = vpop.f32.mrf.mxu0
    %v8702 = vadd.f32 0.0, %v8701
    %v8703 = vpop.f32.mrf.mxu0
    %v8704 = vadd.f32 0.0, %v8703
    %8705 = vdwg.mxu0
    %8706 = vmatpush.bf16.msra.mxu0 %v8528
    %8707 = vmatpush.bf16.msra.mxu0 %v8527
    %8708 = vmatpush.bf16.msra.mxu0 %v8526
    %8709 = vmatpush.bf16.msra.mxu0 %v8525
    %8710 = vmatpush.bf16.msra.mxu0 %v8524
    %8711 = vmatpush.bf16.msra.mxu0 %v8523
    %8712 = vmatpush.bf16.msra.mxu0 %v8522
    %8713 = vmatpush.bf16.msra.mxu0 %v8521
    %8714 = vmatmul.bf16.gmra.mxu0 %v8082
    %v8715 = vpop.f32.mrf.mxu0
    %v8716 = vadd.f32 %v8667, %v8715
    %v8717 = vpop.f32.mrf.mxu0
    %v8718 = vadd.f32 %v8669, %v8717
    %8719 = vmatmul.bf16.gmra.mxu0 %v8091
    %v8720 = vpop.f32.mrf.mxu0
    %v8721 = vadd.f32 %v8672, %v8720
    %v8722 = vpop.f32.mrf.mxu0
    %v8723 = vadd.f32 %v8674, %v8722
    %8724 = vmatmul.bf16.gmra.mxu0 %v8100
    %v8725 = vpop.f32.mrf.mxu0
    %v8726 = vadd.f32 %v8677, %v8725
    %v8727 = vpop.f32.mrf.mxu0
    %v8728 = vadd.f32 %v8679, %v8727
    %8729 = vmatmul.bf16.gmra.mxu0 %v8109
    %v8730 = vpop.f32.mrf.mxu0
    %v8731 = vadd.f32 %v8682, %v8730
    %v8732 = vpop.f32.mrf.mxu0
    %v8733 = vadd.f32 %v8684, %v8732
    %8734 = vmatmul.bf16.gmra.mxu0 %v8118
    %v8735 = vpop.f32.mrf.mxu0
    %v8736 = vadd.f32 %v8687, %v8735
    %v8737 = vpop.f32.mrf.mxu0
    %v8738 = vadd.f32 %v8689, %v8737
    %8739 = vmatmul.bf16.gmra.mxu0 %v8127
    %v8740 = vpop.f32.mrf.mxu0
    %v8741 = vadd.f32 %v8692, %v8740
    %v8742 = vpop.f32.mrf.mxu0
    %v8743 = vadd.f32 %v8694, %v8742
    %8744 = vmatmul.bf16.gmra.mxu0 %v8136
    %v8745 = vpop.f32.mrf.mxu0
    %v8746 = vadd.f32 %v8697, %v8745
    %v8747 = vpop.f32.mrf.mxu0
    %v8748 = vadd.f32 %v8699, %v8747
    %8749 = vmatmul.bf16.gmra.mxu0 %v8145
    %v8750 = vpop.f32.mrf.mxu0
    %v8751 = vadd.f32 %v8702, %v8750
    %v8752 = vpop.f32.mrf.mxu0
    %v8753 = vadd.f32 %v8704, %v8752
    %8754 = vdwg.mxu0
    %8755 = vmatpush.bf16.msra.mxu0 %v8536
    %8756 = vmatpush.bf16.msra.mxu0 %v8535
    %8757 = vmatpush.bf16.msra.mxu0 %v8534
    %8758 = vmatpush.bf16.msra.mxu0 %v8533
    %8759 = vmatpush.bf16.msra.mxu0 %v8532
    %8760 = vmatpush.bf16.msra.mxu0 %v8531
    %8761 = vmatpush.bf16.msra.mxu0 %v8530
    %8762 = vmatpush.bf16.msra.mxu0 %v8529
    %8763 = vmatmul.bf16.gmra.mxu0 %v8083
    %v8764 = vpop.f32.mrf.mxu0
    %v8765 = vadd.f32 %v8716, %v8764
    %v8766 = vpop.f32.mrf.mxu0
    %v8767 = vadd.f32 %v8718, %v8766
    %8768 = vmatmul.bf16.gmra.mxu0 %v8092
    %v8769 = vpop.f32.mrf.mxu0
    %v8770 = vadd.f32 %v8721, %v8769
    %v8771 = vpop.f32.mrf.mxu0
    %v8772 = vadd.f32 %v8723, %v8771
    %8773 = vmatmul.bf16.gmra.mxu0 %v8101
    %v8774 = vpop.f32.mrf.mxu0
    %v8775 = vadd.f32 %v8726, %v8774
    %v8776 = vpop.f32.mrf.mxu0
    %v8777 = vadd.f32 %v8728, %v8776
    %8778 = vmatmul.bf16.gmra.mxu0 %v8110
    %v8779 = vpop.f32.mrf.mxu0
    %v8780 = vadd.f32 %v8731, %v8779
    %v8781 = vpop.f32.mrf.mxu0
    %v8782 = vadd.f32 %v8733, %v8781
    %8783 = vmatmul.bf16.gmra.mxu0 %v8119
    %v8784 = vpop.f32.mrf.mxu0
    %v8785 = vadd.f32 %v8736, %v8784
    %v8786 = vpop.f32.mrf.mxu0
    %v8787 = vadd.f32 %v8738, %v8786
    %8788 = vmatmul.bf16.gmra.mxu0 %v8128
    %v8789 = vpop.f32.mrf.mxu0
    %v8790 = vadd.f32 %v8741, %v8789
    %v8791 = vpop.f32.mrf.mxu0
    %v8792 = vadd.f32 %v8743, %v8791
    %8793 = vmatmul.bf16.gmra.mxu0 %v8137
    %v8794 = vpop.f32.mrf.mxu0
    %v8795 = vadd.f32 %v8746, %v8794
    %v8796 = vpop.f32.mrf.mxu0
    %v8797 = vadd.f32 %v8748, %v8796
    %8798 = vmatmul.bf16.gmra.mxu0 %v8146
    %v8799 = vpop.f32.mrf.mxu0
    %v8800 = vadd.f32 %v8751, %v8799
    %v8801 = vpop.f32.mrf.mxu0
    %v8802 = vadd.f32 %v8753, %v8801
    %8803 = vdwg.mxu0
    %8804 = vmatpush.bf16.msra.mxu0 %v8544
    %8805 = vmatpush.bf16.msra.mxu0 %v8543
    %8806 = vmatpush.bf16.msra.mxu0 %v8542
    %8807 = vmatpush.bf16.msra.mxu0 %v8541
    %8808 = vmatpush.bf16.msra.mxu0 %v8540
    %8809 = vmatpush.bf16.msra.mxu0 %v8539
    %8810 = vmatpush.bf16.msra.mxu0 %v8538
    %8811 = vmatpush.bf16.msra.mxu0 %v8537
    %8812 = vmatmul.bf16.gmra.mxu0 %v8084
    %v8813 = vpop.f32.mrf.mxu0
    %v8814 = vadd.f32 %v8765, %v8813
    %v8815 = vpop.f32.mrf.mxu0
    %v8816 = vadd.f32 %v8767, %v8815
    %8817 = vmatmul.bf16.gmra.mxu0 %v8093
    %v8818 = vpop.f32.mrf.mxu0
    %v8819 = vadd.f32 %v8770, %v8818
    %v8820 = vpop.f32.mrf.mxu0
    %v8821 = vadd.f32 %v8772, %v8820
    %8822 = vmatmul.bf16.gmra.mxu0 %v8102
    %v8823 = vpop.f32.mrf.mxu0
    %v8824 = vadd.f32 %v8775, %v8823
    %v8825 = vpop.f32.mrf.mxu0
    %v8826 = vadd.f32 %v8777, %v8825
    %8827 = vmatmul.bf16.gmra.mxu0 %v8111
    %v8828 = vpop.f32.mrf.mxu0
    %v8829 = vadd.f32 %v8780, %v8828
    %v8830 = vpop.f32.mrf.mxu0
    %v8831 = vadd.f32 %v8782, %v8830
    %8832 = vmatmul.bf16.gmra.mxu0 %v8120
    %v8833 = vpop.f32.mrf.mxu0
    %v8834 = vadd.f32 %v8785, %v8833
    %v8835 = vpop.f32.mrf.mxu0
    %v8836 = vadd.f32 %v8787, %v8835
    %8837 = vmatmul.bf16.gmra.mxu0 %v8129
    %v8838 = vpop.f32.mrf.mxu0
    %v8839 = vadd.f32 %v8790, %v8838
    %v8840 = vpop.f32.mrf.mxu0
    %v8841 = vadd.f32 %v8792, %v8840
    %8842 = vmatmul.bf16.gmra.mxu0 %v8138
    %v8843 = vpop.f32.mrf.mxu0
    %v8844 = vadd.f32 %v8795, %v8843
    %v8845 = vpop.f32.mrf.mxu0
    %v8846 = vadd.f32 %v8797, %v8845
    %8847 = vmatmul.bf16.gmra.mxu0 %v8147
    %v8848 = vpop.f32.mrf.mxu0
    %v8849 = vadd.f32 %v8800, %v8848
    %v8850 = vpop.f32.mrf.mxu0
    %v8851 = vadd.f32 %v8802, %v8850
    %8852 = vdwg.mxu0
    %8853 = vmatpush.bf16.msra.mxu0 %v8552
    %8854 = vmatpush.bf16.msra.mxu0 %v8551
    %8855 = vmatpush.bf16.msra.mxu0 %v8550
    %8856 = vmatpush.bf16.msra.mxu0 %v8549
    %8857 = vmatpush.bf16.msra.mxu0 %v8548
    %8858 = vmatpush.bf16.msra.mxu0 %v8547
    %8859 = vmatpush.bf16.msra.mxu0 %v8546
    %8860 = vmatpush.bf16.msra.mxu0 %v8545
    %8861 = vmatmul.bf16.gmra.mxu0 %v8085
    %v8862 = vpop.f32.mrf.mxu0
    %v8863 = vadd.f32 %v8814, %v8862
    %v8864 = vpop.f32.mrf.mxu0
    %v8865 = vadd.f32 %v8816, %v8864
    %8866 = vmatmul.bf16.gmra.mxu0 %v8094
    %v8867 = vpop.f32.mrf.mxu0
    %v8868 = vadd.f32 %v8819, %v8867
    %v8869 = vpop.f32.mrf.mxu0
    %v8870 = vadd.f32 %v8821, %v8869
    %8871 = vmatmul.bf16.gmra.mxu0 %v8103
    %v8872 = vpop.f32.mrf.mxu0
    %v8873 = vadd.f32 %v8824, %v8872
    %v8874 = vpop.f32.mrf.mxu0
    %v8875 = vadd.f32 %v8826, %v8874
    %8876 = vmatmul.bf16.gmra.mxu0 %v8112
    %v8877 = vpop.f32.mrf.mxu0
    %v8878 = vadd.f32 %v8829, %v8877
    %v8879 = vpop.f32.mrf.mxu0
    %v8880 = vadd.f32 %v8831, %v8879
    %8881 = vmatmul.bf16.gmra.mxu0 %v8121
    %v8882 = vpop.f32.mrf.mxu0
    %v8883 = vadd.f32 %v8834, %v8882
    %v8884 = vpop.f32.mrf.mxu0
    %v8885 = vadd.f32 %v8836, %v8884
    %8886 = vmatmul.bf16.gmra.mxu0 %v8130
    %v8887 = vpop.f32.mrf.mxu0
    %v8888 = vadd.f32 %v8839, %v8887
    %v8889 = vpop.f32.mrf.mxu0
    %v8890 = vadd.f32 %v8841, %v8889
    %8891 = vmatmul.bf16.gmra.mxu0 %v8139
    %v8892 = vpop.f32.mrf.mxu0
    %v8893 = vadd.f32 %v8844, %v8892
    %v8894 = vpop.f32.mrf.mxu0
    %v8895 = vadd.f32 %v8846, %v8894
    %8896 = vmatmul.bf16.gmra.mxu0 %v8148
    %v8897 = vpop.f32.mrf.mxu0
    %v8898 = vadd.f32 %v8849, %v8897
    %v8899 = vpop.f32.mrf.mxu0
    %v8900 = vadd.f32 %v8851, %v8899
    %8901 = vdwg.mxu0
    %8902 = vmatpush.bf16.msra.mxu0 %v8560
    %8903 = vmatpush.bf16.msra.mxu0 %v8559
    %8904 = vmatpush.bf16.msra.mxu0 %v8558
    %8905 = vmatpush.bf16.msra.mxu0 %v8557
    %8906 = vmatpush.bf16.msra.mxu0 %v8556
    %8907 = vmatpush.bf16.msra.mxu0 %v8555
    %8908 = vmatpush.bf16.msra.mxu0 %v8554
    %8909 = vmatpush.bf16.msra.mxu0 %v8553
    %8910 = vmatmul.bf16.gmra.mxu0 %v8086
    %v8911 = vpop.f32.mrf.mxu0
    %v8912 = vadd.f32 %v8863, %v8911
    %v8913 = vpop.f32.mrf.mxu0
    %v8914 = vadd.f32 %v8865, %v8913
    %8915 = vmatmul.bf16.gmra.mxu0 %v8095
    %v8916 = vpop.f32.mrf.mxu0
    %v8917 = vadd.f32 %v8868, %v8916
    %v8918 = vpop.f32.mrf.mxu0
    %v8919 = vadd.f32 %v8870, %v8918
    %8920 = vmatmul.bf16.gmra.mxu0 %v8104
    %v8921 = vpop.f32.mrf.mxu0
    %v8922 = vadd.f32 %v8873, %v8921
    %v8923 = vpop.f32.mrf.mxu0
    %v8924 = vadd.f32 %v8875, %v8923
    %8925 = vmatmul.bf16.gmra.mxu0 %v8113
    %v8926 = vpop.f32.mrf.mxu0
    %v8927 = vadd.f32 %v8878, %v8926
    %v8928 = vpop.f32.mrf.mxu0
    %v8929 = vadd.f32 %v8880, %v8928
    %8930 = vmatmul.bf16.gmra.mxu0 %v8122
    %v8931 = vpop.f32.mrf.mxu0
    %v8932 = vadd.f32 %v8883, %v8931
    %v8933 = vpop.f32.mrf.mxu0
    %v8934 = vadd.f32 %v8885, %v8933
    %8935 = vmatmul.bf16.gmra.mxu0 %v8131
    %v8936 = vpop.f32.mrf.mxu0
    %v8937 = vadd.f32 %v8888, %v8936
    %v8938 = vpop.f32.mrf.mxu0
    %v8939 = vadd.f32 %v8890, %v8938
    %8940 = vmatmul.bf16.gmra.mxu0 %v8140
    %v8941 = vpop.f32.mrf.mxu0
    %v8942 = vadd.f32 %v8893, %v8941
    %v8943 = vpop.f32.mrf.mxu0
    %v8944 = vadd.f32 %v8895, %v8943
    %8945 = vmatmul.bf16.gmra.mxu0 %v8149
    %v8946 = vpop.f32.mrf.mxu0
    %v8947 = vadd.f32 %v8898, %v8946
    %v8948 = vpop.f32.mrf.mxu0
    %v8949 = vadd.f32 %v8900, %v8948
    %8950 = vdwg.mxu0
    %8951 = vmatpush.bf16.msra.mxu0 %v8568
    %8952 = vmatpush.bf16.msra.mxu0 %v8567
    %8953 = vmatpush.bf16.msra.mxu0 %v8566
    %8954 = vmatpush.bf16.msra.mxu0 %v8565
    %8955 = vmatpush.bf16.msra.mxu0 %v8564
    %8956 = vmatpush.bf16.msra.mxu0 %v8563
    %8957 = vmatpush.bf16.msra.mxu0 %v8562
    %8958 = vmatpush.bf16.msra.mxu0 %v8561
    %8959 = vmatmul.bf16.gmra.mxu0 %v8087
    %v8960 = vpop.f32.mrf.mxu0
    %v8961 = vadd.f32 %v8912, %v8960
    %v8962 = vpop.f32.mrf.mxu0
    %v8963 = vadd.f32 %v8914, %v8962
    %8964 = vmatmul.bf16.gmra.mxu0 %v8096
    %v8965 = vpop.f32.mrf.mxu0
    %v8966 = vadd.f32 %v8917, %v8965
    %v8967 = vpop.f32.mrf.mxu0
    %v8968 = vadd.f32 %v8919, %v8967
    %8969 = vmatmul.bf16.gmra.mxu0 %v8105
    %v8970 = vpop.f32.mrf.mxu0
    %v8971 = vadd.f32 %v8922, %v8970
    %v8972 = vpop.f32.mrf.mxu0
    %v8973 = vadd.f32 %v8924, %v8972
    %8974 = vmatmul.bf16.gmra.mxu0 %v8114
    %v8975 = vpop.f32.mrf.mxu0
    %v8976 = vadd.f32 %v8927, %v8975
    %v8977 = vpop.f32.mrf.mxu0
    %v8978 = vadd.f32 %v8929, %v8977
    %8979 = vmatmul.bf16.gmra.mxu0 %v8123
    %v8980 = vpop.f32.mrf.mxu0
    %v8981 = vadd.f32 %v8932, %v8980
    %v8982 = vpop.f32.mrf.mxu0
    %v8983 = vadd.f32 %v8934, %v8982
    %8984 = vmatmul.bf16.gmra.mxu0 %v8132
    %v8985 = vpop.f32.mrf.mxu0
    %v8986 = vadd.f32 %v8937, %v8985
    %v8987 = vpop.f32.mrf.mxu0
    %v8988 = vadd.f32 %v8939, %v8987
    %8989 = vmatmul.bf16.gmra.mxu0 %v8141
    %v8990 = vpop.f32.mrf.mxu0
    %v8991 = vadd.f32 %v8942, %v8990
    %v8992 = vpop.f32.mrf.mxu0
    %v8993 = vadd.f32 %v8944, %v8992
    %8994 = vmatmul.bf16.gmra.mxu0 %v8150
    %v8995 = vpop.f32.mrf.mxu0
    %v8996 = vadd.f32 %v8947, %v8995
    %v8997 = vpop.f32.mrf.mxu0
    %v8998 = vadd.f32 %v8949, %v8997
    %8999 = vdwg.mxu0
    %9000 = vmatpush.bf16.msra.mxu0 %v8576
    %9001 = vmatpush.bf16.msra.mxu0 %v8575
    %9002 = vmatpush.bf16.msra.mxu0 %v8574
    %9003 = vmatpush.bf16.msra.mxu0 %v8573
    %9004 = vmatpush.bf16.msra.mxu0 %v8572
    %9005 = vmatpush.bf16.msra.mxu0 %v8571
    %9006 = vmatpush.bf16.msra.mxu0 %v8570
    %9007 = vmatpush.bf16.msra.mxu0 %v8569
    %9008 = vmatmul.bf16.gmra.mxu0 %v8088
    %v9009 = vpop.f32.mrf.mxu0
    %v9010 = vadd.f32 %v8961, %v9009
    %v9011 = vpop.f32.mrf.mxu0
    %v9012 = vadd.f32 %v8963, %v9011
    %9013 = vmatmul.bf16.gmra.mxu0 %v8097
    %v9014 = vpop.f32.mrf.mxu0
    %v9015 = vadd.f32 %v8966, %v9014
    %v9016 = vpop.f32.mrf.mxu0
    %v9017 = vadd.f32 %v8968, %v9016
    %9018 = vmatmul.bf16.gmra.mxu0 %v8106
    %v9019 = vpop.f32.mrf.mxu0
    %v9020 = vadd.f32 %v8971, %v9019
    %v9021 = vpop.f32.mrf.mxu0
    %v9022 = vadd.f32 %v8973, %v9021
    %9023 = vmatmul.bf16.gmra.mxu0 %v8115
    %v9024 = vpop.f32.mrf.mxu0
    %v9025 = vadd.f32 %v8976, %v9024
    %v9026 = vpop.f32.mrf.mxu0
    %v9027 = vadd.f32 %v8978, %v9026
    %9028 = vmatmul.bf16.gmra.mxu0 %v8124
    %v9029 = vpop.f32.mrf.mxu0
    %v9030 = vadd.f32 %v8981, %v9029
    %v9031 = vpop.f32.mrf.mxu0
    %v9032 = vadd.f32 %v8983, %v9031
    %9033 = vmatmul.bf16.gmra.mxu0 %v8133
    %v9034 = vpop.f32.mrf.mxu0
    %v9035 = vadd.f32 %v8986, %v9034
    %v9036 = vpop.f32.mrf.mxu0
    %v9037 = vadd.f32 %v8988, %v9036
    %9038 = vmatmul.bf16.gmra.mxu0 %v8142
    %v9039 = vpop.f32.mrf.mxu0
    %v9040 = vadd.f32 %v8991, %v9039
    %v9041 = vpop.f32.mrf.mxu0
    %v9042 = vadd.f32 %v8993, %v9041
    %9043 = vmatmul.bf16.gmra.mxu0 %v8151
    %v9044 = vpop.f32.mrf.mxu0
    %v9045 = vadd.f32 %v8996, %v9044
    %v9046 = vpop.f32.mrf.mxu0
    %v9047 = vadd.f32 %v8998, %v9046
    %9048 = vdwg.mxu0
    %9049 = vmatpush.bf16.msra.mxu0 %v8584
    %9050 = vmatpush.bf16.msra.mxu0 %v8583
    %9051 = vmatpush.bf16.msra.mxu0 %v8582
    %9052 = vmatpush.bf16.msra.mxu0 %v8581
    %9053 = vmatpush.bf16.msra.mxu0 %v8580
    %9054 = vmatpush.bf16.msra.mxu0 %v8579
    %9055 = vmatpush.bf16.msra.mxu0 %v8578
    %9056 = vmatpush.bf16.msra.mxu0 %v8577
    %9057 = vmatmul.bf16.gmra.mxu0 %v8089
    %v9058 = vpop.f32.mrf.mxu0
    %v9059 = vadd.f32 %v9010, %v9058
    %v9060 = vpop.f32.mrf.mxu0
    %v9061 = vadd.f32 %v9012, %v9060
    %9062 = vmatmul.bf16.gmra.mxu0 %v8098
    %v9063 = vpop.f32.mrf.mxu0
    %v9064 = vadd.f32 %v9015, %v9063
    %v9065 = vpop.f32.mrf.mxu0
    %v9066 = vadd.f32 %v9017, %v9065
    %9067 = vmatmul.bf16.gmra.mxu0 %v8107
    %v9068 = vpop.f32.mrf.mxu0
    %v9069 = vadd.f32 %v9020, %v9068
    %v9070 = vpop.f32.mrf.mxu0
    %v9071 = vadd.f32 %v9022, %v9070
    %9072 = vmatmul.bf16.gmra.mxu0 %v8116
    %v9073 = vpop.f32.mrf.mxu0
    %v9074 = vadd.f32 %v9025, %v9073
    %v9075 = vpop.f32.mrf.mxu0
    %v9076 = vadd.f32 %v9027, %v9075
    %9077 = vmatmul.bf16.gmra.mxu0 %v8125
    %v9078 = vpop.f32.mrf.mxu0
    %v9079 = vadd.f32 %v9030, %v9078
    %v9080 = vpop.f32.mrf.mxu0
    %v9081 = vadd.f32 %v9032, %v9080
    %9082 = vmatmul.bf16.gmra.mxu0 %v8134
    %v9083 = vpop.f32.mrf.mxu0
    %v9084 = vadd.f32 %v9035, %v9083
    %v9085 = vpop.f32.mrf.mxu0
    %v9086 = vadd.f32 %v9037, %v9085
    %9087 = vmatmul.bf16.gmra.mxu0 %v8143
    %v9088 = vpop.f32.mrf.mxu0
    %v9089 = vadd.f32 %v9040, %v9088
    %v9090 = vpop.f32.mrf.mxu0
    %v9091 = vadd.f32 %v9042, %v9090
    %9092 = vmatmul.bf16.gmra.mxu0 %v8152
    %v9093 = vpop.f32.mrf.mxu0
    %v9094 = vadd.f32 %v9045, %v9093
    %v9095 = vpop.f32.mrf.mxu0
    %v9096 = vadd.f32 %v9047, %v9095
    %9097 = vdwg.mxu0
    %9098 = vst [vmem:[#allocation4 + $0x80] sm:$0xff] %v9059
    %9099 = vst [vmem:[#allocation4 + $0x88] sm:$0xff] %v9061
    %9100 = vst [vmem:[#allocation4 + $0x90] sm:$0xff] %v9064
    %9101 = vst [vmem:[#allocation4 + $0x98] sm:$0xff] %v9066
    %9102 = vst [vmem:[#allocation4 + $0xa0] sm:$0xff] %v9069
    %9103 = vst [vmem:[#allocation4 + $0xa8] sm:$0xff] %v9071
    %9104 = vst [vmem:[#allocation4 + $0xb0] sm:$0xff] %v9074
    %9105 = vst [vmem:[#allocation4 + $0xb8] sm:$0xff] %v9076
    %9106 = vst [vmem:[#allocation4 + $0xc0] sm:$0xff] %v9079
    %9107 = vst [vmem:[#allocation4 + $0xc8] sm:$0xff] %v9081
    %9108 = vst [vmem:[#allocation4 + $0xd0] sm:$0xff] %v9084
    %9109 = vst [vmem:[#allocation4 + $0xd8] sm:$0xff] %v9086
    %9110 = vst [vmem:[#allocation4 + $0xe0] sm:$0xff] %v9089
    %9111 = vst [vmem:[#allocation4 + $0xe8] sm:$0xff] %v9091
    %9112 = vst [vmem:[#allocation4 + $0xf0] sm:$0xff] %v9094
    %9113 = vst [vmem:[#allocation4 + $0xf8] sm:$0xff] %v9096
    %v9114 = vadd.f32 %v9059, %v9061
    %v9115 = vadd.f32 %v9114, %v9064
    %v9116 = vadd.f32 %v9115, %v9066
    %v9117 = vadd.f32 %v9116, %v9069
    %v9118 = vadd.f32 %v9117, %v9071
    %v9119 = vadd.f32 %v9118, %v9074
    %v9120 = vadd.f32 %v9119, %v9076
    %v9121 = vadd.f32 %v9120, %v9079
    %v9122 = vadd.f32 %v9121, %v9081
    %v9123 = vadd.f32 %v9122, %v9084
    %v9124 = vadd.f32 %v9123, %v9086
    %v9125 = vadd.f32 %v9124, %v9089
    %v9126 = vadd.f32 %v9125, %v9091
    %v9127 = vadd.f32 %v9126, %v9094
    %v9128 = vadd.f32 %v9127, %v9096
    %v9129 = vrot.slane %v9128, 4
    %v9130 = vadd.f32 %v9128, %v9129
    %v9131 = vrot.slane %v9130, 2
    %v9132 = vadd.f32 %v9130, %v9131
    %v9133 = vrot.slane %v9132, 1
    %v9134 = vadd.f32 %v9132, %v9133
    %v9135 = vadd.f32 %v7594, %v9134
    %v9136 = vmul.f32 %v9059, %v9059
    %v9137 = vmul.f32 %v9061, %v9061
    %v9138 = vmul.f32 %v9064, %v9064
    %v9139 = vmul.f32 %v9066, %v9066
    %v9140 = vmul.f32 %v9069, %v9069
    %v9141 = vmul.f32 %v9071, %v9071
    %v9142 = vmul.f32 %v9074, %v9074
    %v9143 = vmul.f32 %v9076, %v9076
    %v9144 = vmul.f32 %v9079, %v9079
    %v9145 = vmul.f32 %v9081, %v9081
    %v9146 = vmul.f32 %v9084, %v9084
    %v9147 = vmul.f32 %v9086, %v9086
    %v9148 = vmul.f32 %v9089, %v9089
    %v9149 = vmul.f32 %v9091, %v9091
    %v9150 = vmul.f32 %v9094, %v9094
    %v9151 = vmul.f32 %v9096, %v9096
    %v9152 = vadd.f32 %v9136, %v9137
    %v9153 = vadd.f32 %v9152, %v9138
    %v9154 = vadd.f32 %v9153, %v9139
    %v9155 = vadd.f32 %v9154, %v9140
    %v9156 = vadd.f32 %v9155, %v9141
    %v9157 = vadd.f32 %v9156, %v9142
    %v9158 = vadd.f32 %v9157, %v9143
    %v9159 = vadd.f32 %v9158, %v9144
    %v9160 = vadd.f32 %v9159, %v9145
    %v9161 = vadd.f32 %v9160, %v9146
    %v9162 = vadd.f32 %v9161, %v9147
    %v9163 = vadd.f32 %v9162, %v9148
    %v9164 = vadd.f32 %v9163, %v9149
    %v9165 = vadd.f32 %v9164, %v9150
    %v9166 = vadd.f32 %v9165, %v9151
    %v9167 = vrot.slane %v9166, 4
    %v9168 = vadd.f32 %v9166, %v9167
    %v9169 = vrot.slane %v9168, 2
    %v9170 = vadd.f32 %v9168, %v9169
    %v9171 = vrot.slane %v9170, 1
    %v9172 = vadd.f32 %v9170, %v9171
    %v9173 = vadd.f32 %v7632, %v9172
    %v9174 = vld [vmem:[#allocation3 + $0x480] sm:$0xff]
    %v9175 = vld [vmem:[#allocation3 + $0x488] sm:$0xff]
    %v9176 = vld [vmem:[#allocation3 + $0x490] sm:$0xff]
    %v9177 = vld [vmem:[#allocation3 + $0x498] sm:$0xff]
    %v9178 = vld [vmem:[#allocation3 + $0x4a0] sm:$0xf]
    %v9179 = vld [vmem:[#allocation3 + $0x4a4] sm:$0xff]
    %v9180 = vld [vmem:[#allocation3 + $0x4ac] sm:$0xff]
    %v9181 = vld [vmem:[#allocation3 + $0x4b4] sm:$0xff]
    %v9182 = vld [vmem:[#allocation3 + $0x4bc] sm:$0xff]
    %v9183 = vld [vmem:[#allocation3 + $0x4c4] sm:$0xf]
    %v9184 = vld [vmem:[#allocation3 + $0x4c8] sm:$0xff]
    %v9185 = vld [vmem:[#allocation3 + $0x4d0] sm:$0xff]
    %v9186 = vld [vmem:[#allocation3 + $0x4d8] sm:$0xff]
    %v9187 = vld [vmem:[#allocation3 + $0x4e0] sm:$0xff]
    %v9188 = vld [vmem:[#allocation3 + $0x4e8] sm:$0xf]
    %v9189 = vld [vmem:[#allocation3 + $0x4ec] sm:$0xff]
    %v9190 = vld [vmem:[#allocation3 + $0x4f4] sm:$0xff]
    %v9191 = vld [vmem:[#allocation3 + $0x4fc] sm:$0xff]
    %v9192 = vld [vmem:[#allocation3 + $0x504] sm:$0xff]
    %v9193 = vld [vmem:[#allocation3 + $0x50c] sm:$0xf]
    %v9194 = vld [vmem:[#allocation3 + $0x510] sm:$0xff]
    %v9195 = vld [vmem:[#allocation3 + $0x518] sm:$0xff]
    %v9196 = vld [vmem:[#allocation3 + $0x520] sm:$0xff]
    %v9197 = vld [vmem:[#allocation3 + $0x528] sm:$0xff]
    %v9198 = vld [vmem:[#allocation3 + $0x530] sm:$0xf]
    %v9199 = vld [vmem:[#allocation3 + $0x534] sm:$0xff]
    %v9200 = vld [vmem:[#allocation3 + $0x53c] sm:$0xff]
    %v9201 = vld [vmem:[#allocation3 + $0x544] sm:$0xff]
    %v9202 = vld [vmem:[#allocation3 + $0x54c] sm:$0xff]
    %v9203 = vld [vmem:[#allocation3 + $0x554] sm:$0xf]
    %v9204 = vld [vmem:[#allocation3 + $0x558] sm:$0xff]
    %v9205 = vld [vmem:[#allocation3 + $0x560] sm:$0xff]
    %v9206 = vld [vmem:[#allocation3 + $0x568] sm:$0xff]
    %v9207 = vld [vmem:[#allocation3 + $0x570] sm:$0xff]
    %v9208 = vld [vmem:[#allocation3 + $0x578] sm:$0xf]
    %v9209 = vld [vmem:[#allocation3 + $0x57c] sm:$0xff]
    %v9210 = vld [vmem:[#allocation3 + $0x584] sm:$0xff]
    %v9211 = vld [vmem:[#allocation3 + $0x58c] sm:$0xff]
    %v9212 = vld [vmem:[#allocation3 + $0x594] sm:$0xff]
    %v9213 = vld [vmem:[#allocation3 + $0x59c] sm:$0xf]
    %v9214 = vld [vmem:[#allocation3 + $0x5a0] sm:$0xff]
    %v9215 = vld [vmem:[#allocation3 + $0x5a8] sm:$0xff]
    %v9216 = vld [vmem:[#allocation3 + $0x5b0] sm:$0xff]
    %v9217 = vld [vmem:[#allocation3 + $0x5b8] sm:$0xff]
    %v9218 = vld [vmem:[#allocation3 + $0x5c0] sm:$0xf]
    %v9219 = vld [vmem:[#allocation3 + $0x5c4] sm:$0xff]
    %v9220 = vld [vmem:[#allocation3 + $0x5cc] sm:$0xff]
    %v9221 = vld [vmem:[#allocation3 + $0x5d4] sm:$0xff]
    %v9222 = vld [vmem:[#allocation3 + $0x5dc] sm:$0xff]
    %v9223 = vld [vmem:[#allocation3 + $0x5e4] sm:$0xf]
    %v9224 = vld [vmem:[#allocation3 + $0x5e8] sm:$0xff]
    %v9225 = vld [vmem:[#allocation3 + $0x5f0] sm:$0xff]
    %v9226 = vld [vmem:[#allocation3 + $0x5f8] sm:$0xff]
    %v9227 = vld [vmem:[#allocation3 + $0x600] sm:$0xff]
    %v9228 = vld [vmem:[#allocation3 + $0x608] sm:$0xf]
    %v9229 = vld [vmem:[#allocation3 + $0x60c] sm:$0xff]
    %v9230 = vld [vmem:[#allocation3 + $0x614] sm:$0xff]
    %v9231 = vld [vmem:[#allocation3 + $0x61c] sm:$0xff]
    %v9232 = vld [vmem:[#allocation3 + $0x624] sm:$0xff]
    %v9233 = vld [vmem:[#allocation3 + $0x62c] sm:$0xf]
    %v9234 = vld [vmem:[#allocation3 + $0x630] sm:$0xff]
    %v9235 = vld [vmem:[#allocation3 + $0x638] sm:$0xff]
    %v9236 = vld [vmem:[#allocation3 + $0x640] sm:$0xff]
    %v9237 = vld [vmem:[#allocation3 + $0x648] sm:$0xff]
    %v9238 = vld [vmem:[#allocation3 + $0x650] sm:$0xf]
    %v9239 = vld [vmem:[#allocation3 + $0x654] sm:$0xff]
    %v9240 = vld [vmem:[#allocation3 + $0x65c] sm:$0xff]
    %v9241 = vld [vmem:[#allocation3 + $0x664] sm:$0xff]
    %v9242 = vld [vmem:[#allocation3 + $0x66c] sm:$0xff]
    %v9243 = vld [vmem:[#allocation3 + $0x674] sm:$0xf]
    %v9244 = vld [vmem:[#allocation3 + $0x678] sm:$0xff]
    %v9245 = vld [vmem:[#allocation3 + $0x680] sm:$0xff]
    %v9246 = vld [vmem:[#allocation3 + $0x688] sm:$0xff]
    %v9247 = vld [vmem:[#allocation3 + $0x690] sm:$0xff]
    %v9248 = vld [vmem:[#allocation3 + $0x698] sm:$0xf]
    %v9249 = vld [vmem:[#allocation3 + $0x69c] sm:$0xff]
    %v9250 = vld [vmem:[#allocation3 + $0x6a4] sm:$0xff]
    %v9251 = vld [vmem:[#allocation3 + $0x6ac] sm:$0xff]
    %v9252 = vld [vmem:[#allocation3 + $0x6b4] sm:$0xff]
    %v9253 = vld [vmem:[#allocation3 + $0x6bc] sm:$0xf]
    %v9254 = vld [vmem:[#allocation8] sm:$0xf]
    %v9255 = vld [vmem:[#allocation8 + $0x4] sm:$0xf]
    %v9256 = vld [vmem:[#allocation8 + $0x8] sm:$0xf]
    %v9257 = vld [vmem:[#allocation8 + $0xc] sm:$0xf]
    %v9258 = vld [vmem:[#allocation8 + $0x10] sm:$0xf]
    %v9259 = vld [vmem:[#allocation8 + $0x14] sm:$0xf]
    %v9260 = vld [vmem:[#allocation8 + $0x18] sm:$0xf]
    %v9261 = vld [vmem:[#allocation8 + $0x1c] sm:$0xf]
    %v9262 = vld [vmem:[#allocation8 + $0x20] sm:$0xf]
    %v9263 = vld [vmem:[#allocation8 + $0x24] sm:$0xf]
    %v9264 = vld [vmem:[#allocation8 + $0x28] sm:$0xf]
    %v9265 = vld [vmem:[#allocation8 + $0x2c] sm:$0xf]
    %v9266 = vld [vmem:[#allocation8 + $0x30] sm:$0xf]
    %v9267 = vld [vmem:[#allocation8 + $0x34] sm:$0xf]
    %v9268 = vld [vmem:[#allocation8 + $0x38] sm:$0xf]
    %v9269 = vld [vmem:[#allocation8 + $0x3c] sm:$0xf]
    %v9270 = vld [vmem:[#allocation8 + $0x40] sm:$0xf]
    %v9271 = vld [vmem:[#allocation8 + $0x44] sm:$0xf]
    %v9272 = vld [vmem:[#allocation8 + $0x48] sm:$0xf]
    %v9273 = vld [vmem:[#allocation8 + $0x4c] sm:$0xf]
    %v9274 = vld [vmem:[#allocation8 + $0x50] sm:$0xf]
    %v9275 = vld [vmem:[#allocation8 + $0x54] sm:$0xf]
    %v9276 = vld [vmem:[#allocation8 + $0x58] sm:$0xf]
    %v9277 = vld [vmem:[#allocation8 + $0x5c] sm:$0xf]
    %v9278 = vld [vmem:[#allocation8 + $0x60] sm:$0xf]
    %v9279 = vld [vmem:[#allocation8 + $0x64] sm:$0xf]
    %v9280 = vld [vmem:[#allocation8 + $0x68] sm:$0xf]
    %v9281 = vld [vmem:[#allocation8 + $0x6c] sm:$0xf]
    %v9282 = vld [vmem:[#allocation8 + $0x70] sm:$0xf]
    %v9283 = vld [vmem:[#allocation8 + $0x74] sm:$0xf]
    %v9284 = vld [vmem:[#allocation8 + $0x78] sm:$0xf]
    %v9285 = vld [vmem:[#allocation8 + $0x7c] sm:$0xf]
    %v9286 = vld [vmem:[#allocation8 + $0x80] sm:$0xf]
    %v9287 = vld [vmem:[#allocation8 + $0x84] sm:$0xf]
    %v9288 = vld [vmem:[#allocation8 + $0x88] sm:$0xf]
    %v9289 = vld [vmem:[#allocation8 + $0x8c] sm:$0xf]
    %v9290 = vld [vmem:[#allocation8 + $0x90] sm:$0xf]
    %v9291 = vld [vmem:[#allocation8 + $0x94] sm:$0xf]
    %v9292 = vld [vmem:[#allocation8 + $0x98] sm:$0xf]
    %v9293 = vld [vmem:[#allocation8 + $0x9c] sm:$0xf]
    %v9294 = vld [vmem:[#allocation8 + $0xa0] sm:$0xf]
    %v9295 = vld [vmem:[#allocation8 + $0xa4] sm:$0xf]
    %v9296 = vld [vmem:[#allocation8 + $0xa8] sm:$0xf]
    %v9297 = vld [vmem:[#allocation8 + $0xac] sm:$0xf]
    %v9298 = vld [vmem:[#allocation8 + $0xb0] sm:$0xf]
    %v9299 = vld [vmem:[#allocation8 + $0xb4] sm:$0xf]
    %v9300 = vld [vmem:[#allocation8 + $0xb8] sm:$0xf]
    %v9301 = vld [vmem:[#allocation8 + $0xbc] sm:$0xf]
    %v9302 = vld [vmem:[#allocation8 + $0xc0] sm:$0xf]
    %v9303 = vld [vmem:[#allocation8 + $0xc4] sm:$0xf]
    %v9304 = vld [vmem:[#allocation8 + $0xc8] sm:$0xf]
    %v9305 = vld [vmem:[#allocation8 + $0xcc] sm:$0xf]
    %v9306 = vld [vmem:[#allocation8 + $0xd0] sm:$0xf]
    %v9307 = vld [vmem:[#allocation8 + $0xd4] sm:$0xf]
    %v9308 = vld [vmem:[#allocation8 + $0xd8] sm:$0xf]
    %v9309 = vld [vmem:[#allocation8 + $0xdc] sm:$0xf]
    %v9310 = vld [vmem:[#allocation8 + $0xe0] sm:$0xf]
    %v9311 = vld [vmem:[#allocation8 + $0xe4] sm:$0xf]
    %v9312 = vld [vmem:[#allocation8 + $0xe8] sm:$0xf]
    %v9313 = vld [vmem:[#allocation8 + $0xec] sm:$0xf]
    %v9314 = vld [vmem:[#allocation8 + $0xf0] sm:$0xf]
    %v9315 = vld [vmem:[#allocation8 + $0xf4] sm:$0xf]
    %v9316 = vld [vmem:[#allocation8 + $0xf8] sm:$0xf]
    %v9317 = vld [vmem:[#allocation8 + $0xfc] sm:$0xf]
    %v9318 = vld [vmem:[#allocation8 + $0x100] sm:$0xf]
    %v9319 = vld [vmem:[#allocation8 + $0x104] sm:$0xf]
    %v9320 = vld [vmem:[#allocation8 + $0x108] sm:$0xf]
    %v9321 = vld [vmem:[#allocation8 + $0x10c] sm:$0xf]
    %v9322 = vld [vmem:[#allocation8 + $0x110] sm:$0xf]
    %v9323 = vld [vmem:[#allocation8 + $0x114] sm:$0xf]
    %v9324 = vld [vmem:[#allocation8 + $0x118] sm:$0xf]
    %v9325 = vld [vmem:[#allocation8 + $0x11c] sm:$0xf]
    %v9326 = vld [vmem:[#allocation8 + $0x120] sm:$0xf]
    %v9327 = vld [vmem:[#allocation8 + $0x124] sm:$0xf]
    %v9328 = vld [vmem:[#allocation8 + $0x128] sm:$0xf]
    %v9329 = vld [vmem:[#allocation8 + $0x12c] sm:$0xf]
    %v9330 = vld [vmem:[#allocation8 + $0x130] sm:$0xf]
    %v9331 = vld [vmem:[#allocation8 + $0x134] sm:$0xf]
    %v9332 = vld [vmem:[#allocation8 + $0x138] sm:$0xf]
    %v9333 = vld [vmem:[#allocation8 + $0x13c] sm:$0xf]
    %v9334 = vld [vmem:[#allocation8 + $0x140] sm:$0xf]
    %v9335 = vld [vmem:[#allocation8 + $0x144] sm:$0xf]
    %v9336 = vld [vmem:[#allocation8 + $0x148] sm:$0xf]
    %v9337 = vld [vmem:[#allocation8 + $0x14c] sm:$0xf]
    %v9338 = vld [vmem:[#allocation8 + $0x150] sm:$0xf]
    %v9339 = vld [vmem:[#allocation8 + $0x154] sm:$0xf]
    %v9340 = vld [vmem:[#allocation8 + $0x158] sm:$0xf]
    %v9341 = vld [vmem:[#allocation8 + $0x15c] sm:$0xf]
    %v9342 = vld [vmem:[#allocation8 + $0x160] sm:$0xf]
    %v9343 = vld [vmem:[#allocation8 + $0x164] sm:$0xf]
    %v9344 = vld [vmem:[#allocation8 + $0x168] sm:$0xf]
    %v9345 = vld [vmem:[#allocation8 + $0x16c] sm:$0xf]
    %v9346 = vld [vmem:[#allocation8 + $0x170] sm:$0xf]
    %v9347 = vld [vmem:[#allocation8 + $0x174] sm:$0xf]
    %v9348 = vld [vmem:[#allocation8 + $0x178] sm:$0xf]
    %v9349 = vld [vmem:[#allocation8 + $0x17c] sm:$0xf]
    %v9350 = vld [vmem:[#allocation8 + $0x180] sm:$0xf]
    %v9351 = vld [vmem:[#allocation8 + $0x184] sm:$0xf]
    %v9352 = vld [vmem:[#allocation8 + $0x188] sm:$0xf]
    %v9353 = vld [vmem:[#allocation8 + $0x18c] sm:$0xf]
    %v9354 = vld [vmem:[#allocation8 + $0x190] sm:$0xf]
    %v9355 = vld [vmem:[#allocation8 + $0x194] sm:$0xf]
    %v9356 = vld [vmem:[#allocation8 + $0x198] sm:$0xf]
    %v9357 = vld [vmem:[#allocation8 + $0x19c] sm:$0xf]
    %v9358 = vld [vmem:[#allocation8 + $0x1a0] sm:$0xf]
    %v9359 = vld [vmem:[#allocation8 + $0x1a4] sm:$0xf]
    %v9360 = vld [vmem:[#allocation8 + $0x1a8] sm:$0xf]
    %v9361 = vld [vmem:[#allocation8 + $0x1ac] sm:$0xf]
    %v9362 = vld [vmem:[#allocation8 + $0x1b0] sm:$0xf]
    %v9363 = vld [vmem:[#allocation8 + $0x1b4] sm:$0xf]
    %v9364 = vld [vmem:[#allocation8 + $0x1b8] sm:$0xf]
    %v9365 = vld [vmem:[#allocation8 + $0x1bc] sm:$0xf]
    %v9366 = vld [vmem:[#allocation8 + $0x1c0] sm:$0xf]
    %v9367 = vld [vmem:[#allocation8 + $0x1c4] sm:$0xf]
    %v9368 = vld [vmem:[#allocation8 + $0x1c8] sm:$0xf]
    %v9369 = vld [vmem:[#allocation8 + $0x1cc] sm:$0xf]
    %v9370 = vld [vmem:[#allocation8 + $0x1d0] sm:$0xf]
    %v9371 = vld [vmem:[#allocation8 + $0x1d4] sm:$0xf]
    %v9372 = vld [vmem:[#allocation8 + $0x1d8] sm:$0xf]
    %v9373 = vld [vmem:[#allocation8 + $0x1dc] sm:$0xf]
    %v9374 = vld [vmem:[#allocation8 + $0x1e0] sm:$0xf]
    %v9375 = vld [vmem:[#allocation8 + $0x1e4] sm:$0xf]
    %v9376 = vld [vmem:[#allocation8 + $0x1e8] sm:$0xf]
    %v9377 = vld [vmem:[#allocation8 + $0x1ec] sm:$0xf]
    %v9378 = vld [vmem:[#allocation8 + $0x1f0] sm:$0xf]
    %v9379 = vld [vmem:[#allocation8 + $0x1f4] sm:$0xf]
    %v9380 = vld [vmem:[#allocation8 + $0x1f8] sm:$0xf]
    %v9381 = vld [vmem:[#allocation8 + $0x1fc] sm:$0xf]
    %v9382 = vld [vmem:[#allocation8 + $0x200] sm:$0xf]
    %v9383 = vld [vmem:[#allocation8 + $0x204] sm:$0xf]
    %v9384 = vld [vmem:[#allocation8 + $0x208] sm:$0xf]
    %v9385 = vld [vmem:[#allocation8 + $0x20c] sm:$0xf]
    %v9386 = vld [vmem:[#allocation8 + $0x210] sm:$0xf]
    %v9387 = vld [vmem:[#allocation8 + $0x214] sm:$0xf]
    %v9388 = vld [vmem:[#allocation8 + $0x218] sm:$0xf]
    %v9389 = vld [vmem:[#allocation8 + $0x21c] sm:$0xf]
    %v9390 = vld [vmem:[#allocation8 + $0x220] sm:$0xf]
    %v9391 = vld [vmem:[#allocation8 + $0x224] sm:$0xf]
    %v9392 = vld [vmem:[#allocation8 + $0x228] sm:$0xf]
    %v9393 = vld [vmem:[#allocation8 + $0x22c] sm:$0xf]
    %v9394 = vld [vmem:[#allocation8 + $0x230] sm:$0xf]
    %v9395 = vld [vmem:[#allocation8 + $0x234] sm:$0xf]
    %v9396 = vld [vmem:[#allocation8 + $0x238] sm:$0xf]
    %v9397 = vld [vmem:[#allocation8 + $0x23c] sm:$0xf]
    %v9478 = vunpack.c.l.b16 %v9174
    %v9479 = vunpack.c.h.b16 %v9174
    %v9480 = vunpack.c.l.b16 %v9175
    %v9481 = vunpack.c.h.b16 %v9175
    %v9482 = vunpack.c.l.b16 %v9176
    %v9483 = vunpack.c.h.b16 %v9176
    %v9484 = vunpack.c.l.b16 %v9177
    %v9485 = vunpack.c.h.b16 %v9177
    %v9486 = vunpack.c.l.b16 %v9178
    %v9487 = vunpack.c.l.b16 %v9179
    %v9488 = vunpack.c.h.b16 %v9179
    %v9489 = vunpack.c.l.b16 %v9180
    %v9490 = vunpack.c.h.b16 %v9180
    %v9491 = vunpack.c.l.b16 %v9181
    %v9492 = vunpack.c.h.b16 %v9181
    %v9493 = vunpack.c.l.b16 %v9182
    %v9494 = vunpack.c.h.b16 %v9182
    %v9495 = vunpack.c.l.b16 %v9183
    %v9496 = vunpack.c.l.b16 %v9184
    %v9497 = vunpack.c.h.b16 %v9184
    %v9498 = vunpack.c.l.b16 %v9185
    %v9499 = vunpack.c.h.b16 %v9185
    %v9500 = vunpack.c.l.b16 %v9186
    %v9501 = vunpack.c.h.b16 %v9186
    %v9502 = vunpack.c.l.b16 %v9187
    %v9503 = vunpack.c.h.b16 %v9187
    %v9504 = vunpack.c.l.b16 %v9188
    %v9505 = vunpack.c.l.b16 %v9189
    %v9506 = vunpack.c.h.b16 %v9189
    %v9507 = vunpack.c.l.b16 %v9190
    %v9508 = vunpack.c.h.b16 %v9190
    %v9509 = vunpack.c.l.b16 %v9191
    %v9510 = vunpack.c.h.b16 %v9191
    %v9511 = vunpack.c.l.b16 %v9192
    %v9512 = vunpack.c.h.b16 %v9192
    %v9513 = vunpack.c.l.b16 %v9193
    %v9514 = vunpack.c.l.b16 %v9194
    %v9515 = vunpack.c.h.b16 %v9194
    %v9516 = vunpack.c.l.b16 %v9195
    %v9517 = vunpack.c.h.b16 %v9195
    %v9518 = vunpack.c.l.b16 %v9196
    %v9519 = vunpack.c.h.b16 %v9196
    %v9520 = vunpack.c.l.b16 %v9197
    %v9521 = vunpack.c.h.b16 %v9197
    %v9522 = vunpack.c.l.b16 %v9198
    %v9523 = vunpack.c.l.b16 %v9199
    %v9524 = vunpack.c.h.b16 %v9199
    %v9525 = vunpack.c.l.b16 %v9200
    %v9526 = vunpack.c.h.b16 %v9200
    %v9527 = vunpack.c.l.b16 %v9201
    %v9528 = vunpack.c.h.b16 %v9201
    %v9529 = vunpack.c.l.b16 %v9202
    %v9530 = vunpack.c.h.b16 %v9202
    %v9531 = vunpack.c.l.b16 %v9203
    %v9532 = vunpack.c.l.b16 %v9204
    %v9533 = vunpack.c.h.b16 %v9204
    %v9534 = vunpack.c.l.b16 %v9205
    %v9535 = vunpack.c.h.b16 %v9205
    %v9536 = vunpack.c.l.b16 %v9206
    %v9537 = vunpack.c.h.b16 %v9206
    %v9538 = vunpack.c.l.b16 %v9207
    %v9539 = vunpack.c.h.b16 %v9207
    %v9540 = vunpack.c.l.b16 %v9208
    %v9541 = vunpack.c.l.b16 %v9209
    %v9542 = vunpack.c.h.b16 %v9209
    %v9543 = vunpack.c.l.b16 %v9210
    %v9544 = vunpack.c.h.b16 %v9210
    %v9545 = vunpack.c.l.b16 %v9211
    %v9546 = vunpack.c.h.b16 %v9211
    %v9547 = vunpack.c.l.b16 %v9212
    %v9548 = vunpack.c.h.b16 %v9212
    %v9549 = vunpack.c.l.b16 %v9213
    %v9550 = vunpack.c.l.b16 %v9214
    %v9551 = vunpack.c.h.b16 %v9214
    %v9552 = vunpack.c.l.b16 %v9215
    %v9553 = vunpack.c.h.b16 %v9215
    %v9554 = vunpack.c.l.b16 %v9216
    %v9555 = vunpack.c.h.b16 %v9216
    %v9556 = vunpack.c.l.b16 %v9217
    %v9557 = vunpack.c.h.b16 %v9217
    %v9558 = vunpack.c.l.b16 %v9218
    %v9559 = vunpack.c.l.b16 %v9219
    %v9560 = vunpack.c.h.b16 %v9219
    %v9561 = vunpack.c.l.b16 %v9220
    %v9562 = vunpack.c.h.b16 %v9220
    %v9563 = vunpack.c.l.b16 %v9221
    %v9564 = vunpack.c.h.b16 %v9221
    %v9565 = vunpack.c.l.b16 %v9222
    %v9566 = vunpack.c.h.b16 %v9222
    %v9567 = vunpack.c.l.b16 %v9223
    %v9568 = vunpack.c.l.b16 %v9224
    %v9569 = vunpack.c.h.b16 %v9224
    %v9570 = vunpack.c.l.b16 %v9225
    %v9571 = vunpack.c.h.b16 %v9225
    %v9572 = vunpack.c.l.b16 %v9226
    %v9573 = vunpack.c.h.b16 %v9226
    %v9574 = vunpack.c.l.b16 %v9227
    %v9575 = vunpack.c.h.b16 %v9227
    %v9576 = vunpack.c.l.b16 %v9228
    %v9577 = vunpack.c.l.b16 %v9229
    %v9578 = vunpack.c.h.b16 %v9229
    %v9579 = vunpack.c.l.b16 %v9230
    %v9580 = vunpack.c.h.b16 %v9230
    %v9581 = vunpack.c.l.b16 %v9231
    %v9582 = vunpack.c.h.b16 %v9231
    %v9583 = vunpack.c.l.b16 %v9232
    %v9584 = vunpack.c.h.b16 %v9232
    %v9585 = vunpack.c.l.b16 %v9233
    %v9586 = vunpack.c.l.b16 %v9234
    %v9587 = vunpack.c.h.b16 %v9234
    %v9588 = vunpack.c.l.b16 %v9235
    %v9589 = vunpack.c.h.b16 %v9235
    %v9590 = vunpack.c.l.b16 %v9236
    %v9591 = vunpack.c.h.b16 %v9236
    %v9592 = vunpack.c.l.b16 %v9237
    %v9593 = vunpack.c.h.b16 %v9237
    %v9594 = vunpack.c.l.b16 %v9238
    %v9595 = vunpack.c.l.b16 %v9239
    %v9596 = vunpack.c.h.b16 %v9239
    %v9597 = vunpack.c.l.b16 %v9240
    %v9598 = vunpack.c.h.b16 %v9240
    %v9599 = vunpack.c.l.b16 %v9241
    %v9600 = vunpack.c.h.b16 %v9241
    %v9601 = vunpack.c.l.b16 %v9242
    %v9602 = vunpack.c.h.b16 %v9242
    %v9603 = vunpack.c.l.b16 %v9243
    %v9604 = vunpack.c.l.b16 %v9244
    %v9605 = vunpack.c.h.b16 %v9244
    %v9606 = vunpack.c.l.b16 %v9245
    %v9607 = vunpack.c.h.b16 %v9245
    %v9608 = vunpack.c.l.b16 %v9246
    %v9609 = vunpack.c.h.b16 %v9246
    %v9610 = vunpack.c.l.b16 %v9247
    %v9611 = vunpack.c.h.b16 %v9247
    %v9612 = vunpack.c.l.b16 %v9248
    %v9613 = vunpack.c.l.b16 %v9249
    %v9614 = vunpack.c.h.b16 %v9249
    %v9615 = vunpack.c.l.b16 %v9250
    %v9616 = vunpack.c.h.b16 %v9250
    %v9617 = vunpack.c.l.b16 %v9251
    %v9618 = vunpack.c.h.b16 %v9251
    %v9619 = vunpack.c.l.b16 %v9252
    %v9620 = vunpack.c.h.b16 %v9252
    %v9621 = vunpack.c.l.b16 %v9253
    %v9622 = vpack.c.b16 %v9487, %v9478
    %v9623 = vpack.c.b16 %v9488, %v9479
    %v9624 = vpack.c.b16 %v9489, %v9480
    %v9625 = vpack.c.b16 %v9490, %v9481
    %v9626 = vpack.c.b16 %v9491, %v9482
    %v9627 = vpack.c.b16 %v9492, %v9483
    %v9628 = vpack.c.b16 %v9493, %v9484
    %v9629 = vpack.c.b16 %v9494, %v9485
    %v9630 = vpack.c.b16 %v9495, %v9486
    %v9631 = vpack.c.b16 %v9505, %v9496
    %v9632 = vpack.c.b16 %v9506, %v9497
    %v9633 = vpack.c.b16 %v9507, %v9498
    %v9634 = vpack.c.b16 %v9508, %v9499
    %v9635 = vpack.c.b16 %v9509, %v9500
    %v9636 = vpack.c.b16 %v9510, %v9501
    %v9637 = vpack.c.b16 %v9511, %v9502
    %v9638 = vpack.c.b16 %v9512, %v9503
    %v9639 = vpack.c.b16 %v9513, %v9504
    %v9640 = vpack.c.b16 %v9523, %v9514
    %v9641 = vpack.c.b16 %v9524, %v9515
    %v9642 = vpack.c.b16 %v9525, %v9516
    %v9643 = vpack.c.b16 %v9526, %v9517
    %v9644 = vpack.c.b16 %v9527, %v9518
    %v9645 = vpack.c.b16 %v9528, %v9519
    %v9646 = vpack.c.b16 %v9529, %v9520
    %v9647 = vpack.c.b16 %v9530, %v9521
    %v9648 = vpack.c.b16 %v9531, %v9522
    %v9649 = vpack.c.b16 %v9541, %v9532
    %v9650 = vpack.c.b16 %v9542, %v9533
    %v9651 = vpack.c.b16 %v9543, %v9534
    %v9652 = vpack.c.b16 %v9544, %v9535
    %v9653 = vpack.c.b16 %v9545, %v9536
    %v9654 = vpack.c.b16 %v9546, %v9537
    %v9655 = vpack.c.b16 %v9547, %v9538
    %v9656 = vpack.c.b16 %v9548, %v9539
    %v9657 = vpack.c.b16 %v9549, %v9540
    %v9658 = vpack.c.b16 %v9559, %v9550
    %v9659 = vpack.c.b16 %v9560, %v9551
    %v9660 = vpack.c.b16 %v9561, %v9552
    %v9661 = vpack.c.b16 %v9562, %v9553
    %v9662 = vpack.c.b16 %v9563, %v9554
    %v9663 = vpack.c.b16 %v9564, %v9555
    %v9664 = vpack.c.b16 %v9565, %v9556
    %v9665 = vpack.c.b16 %v9566, %v9557
    %v9666 = vpack.c.b16 %v9567, %v9558
    %v9667 = vpack.c.b16 %v9577, %v9568
    %v9668 = vpack.c.b16 %v9578, %v9569
    %v9669 = vpack.c.b16 %v9579, %v9570
    %v9670 = vpack.c.b16 %v9580, %v9571
    %v9671 = vpack.c.b16 %v9581, %v9572
    %v9672 = vpack.c.b16 %v9582, %v9573
    %v9673 = vpack.c.b16 %v9583, %v9574
    %v9674 = vpack.c.b16 %v9584, %v9575
    %v9675 = vpack.c.b16 %v9585, %v9576
    %v9676 = vpack.c.b16 %v9595, %v9586
    %v9677 = vpack.c.b16 %v9596, %v9587
    %v9678 = vpack.c.b16 %v9597, %v9588
    %v9679 = vpack.c.b16 %v9598, %v9589
    %v9680 = vpack.c.b16 %v9599, %v9590
    %v9681 = vpack.c.b16 %v9600, %v9591
    %v9682 = vpack.c.b16 %v9601, %v9592
    %v9683 = vpack.c.b16 %v9602, %v9593
    %v9684 = vpack.c.b16 %v9603, %v9594
    %v9685 = vpack.c.b16 %v9613, %v9604
    %v9686 = vpack.c.b16 %v9614, %v9605
    %v9687 = vpack.c.b16 %v9615, %v9606
    %v9688 = vpack.c.b16 %v9616, %v9607
    %v9689 = vpack.c.b16 %v9617, %v9608
    %v9690 = vpack.c.b16 %v9618, %v9609
    %v9691 = vpack.c.b16 %v9619, %v9610
    %v9692 = vpack.c.b16 %v9620, %v9611
    %v9693 = vpack.c.b16 %v9621, %v9612
    %v9910 = vunpack.c.l.b16 %v9254
    %v9911 = vunpack.c.l.b16 %v9255
    %v9912 = vunpack.c.l.b16 %v9256
    %v9913 = vunpack.c.l.b16 %v9257
    %v9914 = vunpack.c.l.b16 %v9258
    %v9915 = vunpack.c.l.b16 %v9259
    %v9916 = vunpack.c.l.b16 %v9260
    %v9917 = vunpack.c.l.b16 %v9261
    %v9918 = vunpack.c.l.b16 %v9262
    %v9919 = vunpack.c.l.b16 %v9263
    %v9920 = vunpack.c.l.b16 %v9264
    %v9921 = vunpack.c.l.b16 %v9265
    %v9922 = vunpack.c.l.b16 %v9266
    %v9923 = vunpack.c.l.b16 %v9267
    %v9924 = vunpack.c.l.b16 %v9268
    %v9925 = vunpack.c.l.b16 %v9269
    %v9926 = vunpack.c.l.b16 %v9270
    %v9927 = vunpack.c.l.b16 %v9271
    %v9928 = vunpack.c.l.b16 %v9272
    %v9929 = vunpack.c.l.b16 %v9273
    %v9930 = vunpack.c.l.b16 %v9274
    %v9931 = vunpack.c.l.b16 %v9275
    %v9932 = vunpack.c.l.b16 %v9276
    %v9933 = vunpack.c.l.b16 %v9277
    %v9934 = vunpack.c.l.b16 %v9278
    %v9935 = vunpack.c.l.b16 %v9279
    %v9936 = vunpack.c.l.b16 %v9280
    %v9937 = vunpack.c.l.b16 %v9281
    %v9938 = vunpack.c.l.b16 %v9282
    %v9939 = vunpack.c.l.b16 %v9283
    %v9940 = vunpack.c.l.b16 %v9284
    %v9941 = vunpack.c.l.b16 %v9285
    %v9942 = vunpack.c.l.b16 %v9286
    %v9943 = vunpack.c.l.b16 %v9287
    %v9944 = vunpack.c.l.b16 %v9288
    %v9945 = vunpack.c.l.b16 %v9289
    %v9946 = vunpack.c.l.b16 %v9290
    %v9947 = vunpack.c.l.b16 %v9291
    %v9948 = vunpack.c.l.b16 %v9292
    %v9949 = vunpack.c.l.b16 %v9293
    %v9950 = vunpack.c.l.b16 %v9294
    %v9951 = vunpack.c.l.b16 %v9295
    %v9952 = vunpack.c.l.b16 %v9296
    %v9953 = vunpack.c.l.b16 %v9297
    %v9954 = vunpack.c.l.b16 %v9298
    %v9955 = vunpack.c.l.b16 %v9299
    %v9956 = vunpack.c.l.b16 %v9300
    %v9957 = vunpack.c.l.b16 %v9301
    %v9958 = vunpack.c.l.b16 %v9302
    %v9959 = vunpack.c.l.b16 %v9303
    %v9960 = vunpack.c.l.b16 %v9304
    %v9961 = vunpack.c.l.b16 %v9305
    %v9962 = vunpack.c.l.b16 %v9306
    %v9963 = vunpack.c.l.b16 %v9307
    %v9964 = vunpack.c.l.b16 %v9308
    %v9965 = vunpack.c.l.b16 %v9309
    %v9966 = vunpack.c.l.b16 %v9310
    %v9967 = vunpack.c.l.b16 %v9311
    %v9968 = vunpack.c.l.b16 %v9312
    %v9969 = vunpack.c.l.b16 %v9313
    %v9970 = vunpack.c.l.b16 %v9314
    %v9971 = vunpack.c.l.b16 %v9315
    %v9972 = vunpack.c.l.b16 %v9316
    %v9973 = vunpack.c.l.b16 %v9317
    %v9974 = vunpack.c.l.b16 %v9318
    %v9975 = vunpack.c.l.b16 %v9319
    %v9976 = vunpack.c.l.b16 %v9320
    %v9977 = vunpack.c.l.b16 %v9321
    %v9978 = vunpack.c.l.b16 %v9322
    %v9979 = vunpack.c.l.b16 %v9323
    %v9980 = vunpack.c.l.b16 %v9324
    %v9981 = vunpack.c.l.b16 %v9325
    %v9982 = vunpack.c.l.b16 %v9326
    %v9983 = vunpack.c.l.b16 %v9327
    %v9984 = vunpack.c.l.b16 %v9328
    %v9985 = vunpack.c.l.b16 %v9329
    %v9986 = vunpack.c.l.b16 %v9330
    %v9987 = vunpack.c.l.b16 %v9331
    %v9988 = vunpack.c.l.b16 %v9332
    %v9989 = vunpack.c.l.b16 %v9333
    %v9990 = vunpack.c.l.b16 %v9334
    %v9991 = vunpack.c.l.b16 %v9335
    %v9992 = vunpack.c.l.b16 %v9336
    %v9993 = vunpack.c.l.b16 %v9337
    %v9994 = vunpack.c.l.b16 %v9338
    %v9995 = vunpack.c.l.b16 %v9339
    %v9996 = vunpack.c.l.b16 %v9340
    %v9997 = vunpack.c.l.b16 %v9341
    %v9998 = vunpack.c.l.b16 %v9342
    %v9999 = vunpack.c.l.b16 %v9343
    %v10000 = vunpack.c.l.b16 %v9344
    %v10001 = vunpack.c.l.b16 %v9345
    %v10002 = vunpack.c.l.b16 %v9346
    %v10003 = vunpack.c.l.b16 %v9347
    %v10004 = vunpack.c.l.b16 %v9348
    %v10005 = vunpack.c.l.b16 %v9349
    %v10006 = vunpack.c.l.b16 %v9350
    %v10007 = vunpack.c.l.b16 %v9351
    %v10008 = vunpack.c.l.b16 %v9352
    %v10009 = vunpack.c.l.b16 %v9353
    %v10010 = vunpack.c.l.b16 %v9354
    %v10011 = vunpack.c.l.b16 %v9355
    %v10012 = vunpack.c.l.b16 %v9356
    %v10013 = vunpack.c.l.b16 %v9357
    %v10014 = vunpack.c.l.b16 %v9358
    %v10015 = vunpack.c.l.b16 %v9359
    %v10016 = vunpack.c.l.b16 %v9360
    %v10017 = vunpack.c.l.b16 %v9361
    %v10018 = vunpack.c.l.b16 %v9362
    %v10019 = vunpack.c.l.b16 %v9363
    %v10020 = vunpack.c.l.b16 %v9364
    %v10021 = vunpack.c.l.b16 %v9365
    %v10022 = vunpack.c.l.b16 %v9366
    %v10023 = vunpack.c.l.b16 %v9367
    %v10024 = vunpack.c.l.b16 %v9368
    %v10025 = vunpack.c.l.b16 %v9369
    %v10026 = vunpack.c.l.b16 %v9370
    %v10027 = vunpack.c.l.b16 %v9371
    %v10028 = vunpack.c.l.b16 %v9372
    %v10029 = vunpack.c.l.b16 %v9373
    %v10030 = vunpack.c.l.b16 %v9374
    %v10031 = vunpack.c.l.b16 %v9375
    %v10032 = vunpack.c.l.b16 %v9376
    %v10033 = vunpack.c.l.b16 %v9377
    %v10034 = vunpack.c.l.b16 %v9378
    %v10035 = vunpack.c.l.b16 %v9379
    %v10036 = vunpack.c.l.b16 %v9380
    %v10037 = vunpack.c.l.b16 %v9381
    %v10038 = vunpack.c.l.b16 %v9382
    %v10039 = vunpack.c.l.b16 %v9383
    %v10040 = vunpack.c.l.b16 %v9384
    %v10041 = vunpack.c.l.b16 %v9385
    %v10042 = vunpack.c.l.b16 %v9386
    %v10043 = vunpack.c.l.b16 %v9387
    %v10044 = vunpack.c.l.b16 %v9388
    %v10045 = vunpack.c.l.b16 %v9389
    %v10046 = vunpack.c.l.b16 %v9390
    %v10047 = vunpack.c.l.b16 %v9391
    %v10048 = vunpack.c.l.b16 %v9392
    %v10049 = vunpack.c.l.b16 %v9393
    %v10050 = vunpack.c.l.b16 %v9394
    %v10051 = vunpack.c.l.b16 %v9395
    %v10052 = vunpack.c.l.b16 %v9396
    %v10053 = vunpack.c.l.b16 %v9397
    %v10054 = vpack.c.b16 %v9911, %v9910
    %v10055 = vpack.c.b16 %v9913, %v9912
    %v10056 = vpack.c.b16 %v9915, %v9914
    %v10057 = vpack.c.b16 %v9917, %v9916
    %v10058 = vpack.c.b16 %v9919, %v9918
    %v10059 = vpack.c.b16 %v9921, %v9920
    %v10060 = vpack.c.b16 %v9923, %v9922
    %v10061 = vpack.c.b16 %v9925, %v9924
    %v10062 = vpack.c.b16 %v9927, %v9926
    %v10063 = vpack.c.b16 %v9929, %v9928
    %v10064 = vpack.c.b16 %v9931, %v9930
    %v10065 = vpack.c.b16 %v9933, %v9932
    %v10066 = vpack.c.b16 %v9935, %v9934
    %v10067 = vpack.c.b16 %v9937, %v9936
    %v10068 = vpack.c.b16 %v9939, %v9938
    %v10069 = vpack.c.b16 %v9941, %v9940
    %v10070 = vpack.c.b16 %v9943, %v9942
    %v10071 = vpack.c.b16 %v9945, %v9944
    %v10072 = vpack.c.b16 %v9947, %v9946
    %v10073 = vpack.c.b16 %v9949, %v9948
    %v10074 = vpack.c.b16 %v9951, %v9950
    %v10075 = vpack.c.b16 %v9953, %v9952
    %v10076 = vpack.c.b16 %v9955, %v9954
    %v10077 = vpack.c.b16 %v9957, %v9956
    %v10078 = vpack.c.b16 %v9959, %v9958
    %v10079 = vpack.c.b16 %v9961, %v9960
    %v10080 = vpack.c.b16 %v9963, %v9962
    %v10081 = vpack.c.b16 %v9965, %v9964
    %v10082 = vpack.c.b16 %v9967, %v9966
    %v10083 = vpack.c.b16 %v9969, %v9968
    %v10084 = vpack.c.b16 %v9971, %v9970
    %v10085 = vpack.c.b16 %v9973, %v9972
    %v10086 = vpack.c.b16 %v9975, %v9974
    %v10087 = vpack.c.b16 %v9977, %v9976
    %v10088 = vpack.c.b16 %v9979, %v9978
    %v10089 = vpack.c.b16 %v9981, %v9980
    %v10090 = vpack.c.b16 %v9983, %v9982
    %v10091 = vpack.c.b16 %v9985, %v9984
    %v10092 = vpack.c.b16 %v9987, %v9986
    %v10093 = vpack.c.b16 %v9989, %v9988
    %v10094 = vpack.c.b16 %v9991, %v9990
    %v10095 = vpack.c.b16 %v9993, %v9992
    %v10096 = vpack.c.b16 %v9995, %v9994
    %v10097 = vpack.c.b16 %v9997, %v9996
    %v10098 = vpack.c.b16 %v9999, %v9998
    %v10099 = vpack.c.b16 %v10001, %v10000
    %v10100 = vpack.c.b16 %v10003, %v10002
    %v10101 = vpack.c.b16 %v10005, %v10004
    %v10102 = vpack.c.b16 %v10007, %v10006
    %v10103 = vpack.c.b16 %v10009, %v10008
    %v10104 = vpack.c.b16 %v10011, %v10010
    %v10105 = vpack.c.b16 %v10013, %v10012
    %v10106 = vpack.c.b16 %v10015, %v10014
    %v10107 = vpack.c.b16 %v10017, %v10016
    %v10108 = vpack.c.b16 %v10019, %v10018
    %v10109 = vpack.c.b16 %v10021, %v10020
    %v10110 = vpack.c.b16 %v10023, %v10022
    %v10111 = vpack.c.b16 %v10025, %v10024
    %v10112 = vpack.c.b16 %v10027, %v10026
    %v10113 = vpack.c.b16 %v10029, %v10028
    %v10114 = vpack.c.b16 %v10031, %v10030
    %v10115 = vpack.c.b16 %v10033, %v10032
    %v10116 = vpack.c.b16 %v10035, %v10034
    %v10117 = vpack.c.b16 %v10037, %v10036
    %v10118 = vpack.c.b16 %v10039, %v10038
    %v10119 = vpack.c.b16 %v10041, %v10040
    %v10120 = vpack.c.b16 %v10043, %v10042
    %v10121 = vpack.c.b16 %v10045, %v10044
    %v10122 = vpack.c.b16 %v10047, %v10046
    %v10123 = vpack.c.b16 %v10049, %v10048
    %v10124 = vpack.c.b16 %v10051, %v10050
    %v10125 = vpack.c.b16 %v10053, %v10052
    %10198 = vmatpush.bf16.msra.mxu0 %v10061
    %10199 = vmatpush.bf16.msra.mxu0 %v10060
    %10200 = vmatpush.bf16.msra.mxu0 %v10059
    %10201 = vmatpush.bf16.msra.mxu0 %v10058
    %10202 = vmatpush.bf16.msra.mxu0 %v10057
    %10203 = vmatpush.bf16.msra.mxu0 %v10056
    %10204 = vmatpush.bf16.msra.mxu0 %v10055
    %10205 = vmatpush.bf16.msra.mxu0 %v10054
    %10206 = vmatmul.bf16.gmra.mxu0 %v9622
    %v10207 = vpop.f32.mrf.mxu0
    %v10208 = vadd.f32 0.0, %v10207
    %v10209 = vpop.f32.mrf.mxu0
    %v10210 = vadd.f32 0.0, %v10209
    %10211 = vmatmul.bf16.gmra.mxu0 %v9631
    %v10212 = vpop.f32.mrf.mxu0
    %v10213 = vadd.f32 0.0, %v10212
    %v10214 = vpop.f32.mrf.mxu0
    %v10215 = vadd.f32 0.0, %v10214
    %10216 = vmatmul.bf16.gmra.mxu0 %v9640
    %v10217 = vpop.f32.mrf.mxu0
    %v10218 = vadd.f32 0.0, %v10217
    %v10219 = vpop.f32.mrf.mxu0
    %v10220 = vadd.f32 0.0, %v10219
    %10221 = vmatmul.bf16.gmra.mxu0 %v9649
    %v10222 = vpop.f32.mrf.mxu0
    %v10223 = vadd.f32 0.0, %v10222
    %v10224 = vpop.f32.mrf.mxu0
    %v10225 = vadd.f32 0.0, %v10224
    %10226 = vmatmul.bf16.gmra.mxu0 %v9658
    %v10227 = vpop.f32.mrf.mxu0
    %v10228 = vadd.f32 0.0, %v10227
    %v10229 = vpop.f32.mrf.mxu0
    %v10230 = vadd.f32 0.0, %v10229
    %10231 = vmatmul.bf16.gmra.mxu0 %v9667
    %v10232 = vpop.f32.mrf.mxu0
    %v10233 = vadd.f32 0.0, %v10232
    %v10234 = vpop.f32.mrf.mxu0
    %v10235 = vadd.f32 0.0, %v10234
    %10236 = vmatmul.bf16.gmra.mxu0 %v9676
    %v10237 = vpop.f32.mrf.mxu0
    %v10238 = vadd.f32 0.0, %v10237
    %v10239 = vpop.f32.mrf.mxu0
    %v10240 = vadd.f32 0.0, %v10239
    %10241 = vmatmul.bf16.gmra.mxu0 %v9685
    %v10242 = vpop.f32.mrf.mxu0
    %v10243 = vadd.f32 0.0, %v10242
    %v10244 = vpop.f32.mrf.mxu0
    %v10245 = vadd.f32 0.0, %v10244
    %10246 = vdwg.mxu0
    %10247 = vmatpush.bf16.msra.mxu0 %v10069
    %10248 = vmatpush.bf16.msra.mxu0 %v10068
    %10249 = vmatpush.bf16.msra.mxu0 %v10067
    %10250 = vmatpush.bf16.msra.mxu0 %v10066
    %10251 = vmatpush.bf16.msra.mxu0 %v10065
    %10252 = vmatpush.bf16.msra.mxu0 %v10064
    %10253 = vmatpush.bf16.msra.mxu0 %v10063
    %10254 = vmatpush.bf16.msra.mxu0 %v10062
    %10255 = vmatmul.bf16.gmra.mxu0 %v9623
    %v10256 = vpop.f32.mrf.mxu0
    %v10257 = vadd.f32 %v10208, %v10256
    %v10258 = vpop.f32.mrf.mxu0
    %v10259 = vadd.f32 %v10210, %v10258
    %10260 = vmatmul.bf16.gmra.mxu0 %v9632
    %v10261 = vpop.f32.mrf.mxu0
    %v10262 = vadd.f32 %v10213, %v10261
    %v10263 = vpop.f32.mrf.mxu0
    %v10264 = vadd.f32 %v10215, %v10263
    %10265 = vmatmul.bf16.gmra.mxu0 %v9641
    %v10266 = vpop.f32.mrf.mxu0
    %v10267 = vadd.f32 %v10218, %v10266
    %v10268 = vpop.f32.mrf.mxu0
    %v10269 = vadd.f32 %v10220, %v10268
    %10270 = vmatmul.bf16.gmra.mxu0 %v9650
    %v10271 = vpop.f32.mrf.mxu0
    %v10272 = vadd.f32 %v10223, %v10271
    %v10273 = vpop.f32.mrf.mxu0
    %v10274 = vadd.f32 %v10225, %v10273
    %10275 = vmatmul.bf16.gmra.mxu0 %v9659
    %v10276 = vpop.f32.mrf.mxu0
    %v10277 = vadd.f32 %v10228, %v10276
    %v10278 = vpop.f32.mrf.mxu0
    %v10279 = vadd.f32 %v10230, %v10278
    %10280 = vmatmul.bf16.gmra.mxu0 %v9668
    %v10281 = vpop.f32.mrf.mxu0
    %v10282 = vadd.f32 %v10233, %v10281
    %v10283 = vpop.f32.mrf.mxu0
    %v10284 = vadd.f32 %v10235, %v10283
    %10285 = vmatmul.bf16.gmra.mxu0 %v9677
    %v10286 = vpop.f32.mrf.mxu0
    %v10287 = vadd.f32 %v10238, %v10286
    %v10288 = vpop.f32.mrf.mxu0
    %v10289 = vadd.f32 %v10240, %v10288
    %10290 = vmatmul.bf16.gmra.mxu0 %v9686
    %v10291 = vpop.f32.mrf.mxu0
    %v10292 = vadd.f32 %v10243, %v10291
    %v10293 = vpop.f32.mrf.mxu0
    %v10294 = vadd.f32 %v10245, %v10293
    %10295 = vdwg.mxu0
    %10296 = vmatpush.bf16.msra.mxu0 %v10077
    %10297 = vmatpush.bf16.msra.mxu0 %v10076
    %10298 = vmatpush.bf16.msra.mxu0 %v10075
    %10299 = vmatpush.bf16.msra.mxu0 %v10074
    %10300 = vmatpush.bf16.msra.mxu0 %v10073
    %10301 = vmatpush.bf16.msra.mxu0 %v10072
    %10302 = vmatpush.bf16.msra.mxu0 %v10071
    %10303 = vmatpush.bf16.msra.mxu0 %v10070
    %10304 = vmatmul.bf16.gmra.mxu0 %v9624
    %v10305 = vpop.f32.mrf.mxu0
    %v10306 = vadd.f32 %v10257, %v10305
    %v10307 = vpop.f32.mrf.mxu0
    %v10308 = vadd.f32 %v10259, %v10307
    %10309 = vmatmul.bf16.gmra.mxu0 %v9633
    %v10310 = vpop.f32.mrf.mxu0
    %v10311 = vadd.f32 %v10262, %v10310
    %v10312 = vpop.f32.mrf.mxu0
    %v10313 = vadd.f32 %v10264, %v10312
    %10314 = vmatmul.bf16.gmra.mxu0 %v9642
    %v10315 = vpop.f32.mrf.mxu0
    %v10316 = vadd.f32 %v10267, %v10315
    %v10317 = vpop.f32.mrf.mxu0
    %v10318 = vadd.f32 %v10269, %v10317
    %10319 = vmatmul.bf16.gmra.mxu0 %v9651
    %v10320 = vpop.f32.mrf.mxu0
    %v10321 = vadd.f32 %v10272, %v10320
    %v10322 = vpop.f32.mrf.mxu0
    %v10323 = vadd.f32 %v10274, %v10322
    %10324 = vmatmul.bf16.gmra.mxu0 %v9660
    %v10325 = vpop.f32.mrf.mxu0
    %v10326 = vadd.f32 %v10277, %v10325
    %v10327 = vpop.f32.mrf.mxu0
    %v10328 = vadd.f32 %v10279, %v10327
    %10329 = vmatmul.bf16.gmra.mxu0 %v9669
    %v10330 = vpop.f32.mrf.mxu0
    %v10331 = vadd.f32 %v10282, %v10330
    %v10332 = vpop.f32.mrf.mxu0
    %v10333 = vadd.f32 %v10284, %v10332
    %10334 = vmatmul.bf16.gmra.mxu0 %v9678
    %v10335 = vpop.f32.mrf.mxu0
    %v10336 = vadd.f32 %v10287, %v10335
    %v10337 = vpop.f32.mrf.mxu0
    %v10338 = vadd.f32 %v10289, %v10337
    %10339 = vmatmul.bf16.gmra.mxu0 %v9687
    %v10340 = vpop.f32.mrf.mxu0
    %v10341 = vadd.f32 %v10292, %v10340
    %v10342 = vpop.f32.mrf.mxu0
    %v10343 = vadd.f32 %v10294, %v10342
    %10344 = vdwg.mxu0
    %10345 = vmatpush.bf16.msra.mxu0 %v10085
    %10346 = vmatpush.bf16.msra.mxu0 %v10084
    %10347 = vmatpush.bf16.msra.mxu0 %v10083
    %10348 = vmatpush.bf16.msra.mxu0 %v10082
    %10349 = vmatpush.bf16.msra.mxu0 %v10081
    %10350 = vmatpush.bf16.msra.mxu0 %v10080
    %10351 = vmatpush.bf16.msra.mxu0 %v10079
    %10352 = vmatpush.bf16.msra.mxu0 %v10078
    %10353 = vmatmul.bf16.gmra.mxu0 %v9625
    %v10354 = vpop.f32.mrf.mxu0
    %v10355 = vadd.f32 %v10306, %v10354
    %v10356 = vpop.f32.mrf.mxu0
    %v10357 = vadd.f32 %v10308, %v10356
    %10358 = vmatmul.bf16.gmra.mxu0 %v9634
    %v10359 = vpop.f32.mrf.mxu0
    %v10360 = vadd.f32 %v10311, %v10359
    %v10361 = vpop.f32.mrf.mxu0
    %v10362 = vadd.f32 %v10313, %v10361
    %10363 = vmatmul.bf16.gmra.mxu0 %v9643
    %v10364 = vpop.f32.mrf.mxu0
    %v10365 = vadd.f32 %v10316, %v10364
    %v10366 = vpop.f32.mrf.mxu0
    %v10367 = vadd.f32 %v10318, %v10366
    %10368 = vmatmul.bf16.gmra.mxu0 %v9652
    %v10369 = vpop.f32.mrf.mxu0
    %v10370 = vadd.f32 %v10321, %v10369
    %v10371 = vpop.f32.mrf.mxu0
    %v10372 = vadd.f32 %v10323, %v10371
    %10373 = vmatmul.bf16.gmra.mxu0 %v9661
    %v10374 = vpop.f32.mrf.mxu0
    %v10375 = vadd.f32 %v10326, %v10374
    %v10376 = vpop.f32.mrf.mxu0
    %v10377 = vadd.f32 %v10328, %v10376
    %10378 = vmatmul.bf16.gmra.mxu0 %v9670
    %v10379 = vpop.f32.mrf.mxu0
    %v10380 = vadd.f32 %v10331, %v10379
    %v10381 = vpop.f32.mrf.mxu0
    %v10382 = vadd.f32 %v10333, %v10381
    %10383 = vmatmul.bf16.gmra.mxu0 %v9679
    %v10384 = vpop.f32.mrf.mxu0
    %v10385 = vadd.f32 %v10336, %v10384
    %v10386 = vpop.f32.mrf.mxu0
    %v10387 = vadd.f32 %v10338, %v10386
    %10388 = vmatmul.bf16.gmra.mxu0 %v9688
    %v10389 = vpop.f32.mrf.mxu0
    %v10390 = vadd.f32 %v10341, %v10389
    %v10391 = vpop.f32.mrf.mxu0
    %v10392 = vadd.f32 %v10343, %v10391
    %10393 = vdwg.mxu0
    %10394 = vmatpush.bf16.msra.mxu0 %v10093
    %10395 = vmatpush.bf16.msra.mxu0 %v10092
    %10396 = vmatpush.bf16.msra.mxu0 %v10091
    %10397 = vmatpush.bf16.msra.mxu0 %v10090
    %10398 = vmatpush.bf16.msra.mxu0 %v10089
    %10399 = vmatpush.bf16.msra.mxu0 %v10088
    %10400 = vmatpush.bf16.msra.mxu0 %v10087
    %10401 = vmatpush.bf16.msra.mxu0 %v10086
    %10402 = vmatmul.bf16.gmra.mxu0 %v9626
    %v10403 = vpop.f32.mrf.mxu0
    %v10404 = vadd.f32 %v10355, %v10403
    %v10405 = vpop.f32.mrf.mxu0
    %v10406 = vadd.f32 %v10357, %v10405
    %10407 = vmatmul.bf16.gmra.mxu0 %v9635
    %v10408 = vpop.f32.mrf.mxu0
    %v10409 = vadd.f32 %v10360, %v10408
    %v10410 = vpop.f32.mrf.mxu0
    %v10411 = vadd.f32 %v10362, %v10410
    %10412 = vmatmul.bf16.gmra.mxu0 %v9644
    %v10413 = vpop.f32.mrf.mxu0
    %v10414 = vadd.f32 %v10365, %v10413
    %v10415 = vpop.f32.mrf.mxu0
    %v10416 = vadd.f32 %v10367, %v10415
    %10417 = vmatmul.bf16.gmra.mxu0 %v9653
    %v10418 = vpop.f32.mrf.mxu0
    %v10419 = vadd.f32 %v10370, %v10418
    %v10420 = vpop.f32.mrf.mxu0
    %v10421 = vadd.f32 %v10372, %v10420
    %10422 = vmatmul.bf16.gmra.mxu0 %v9662
    %v10423 = vpop.f32.mrf.mxu0
    %v10424 = vadd.f32 %v10375, %v10423
    %v10425 = vpop.f32.mrf.mxu0
    %v10426 = vadd.f32 %v10377, %v10425
    %10427 = vmatmul.bf16.gmra.mxu0 %v9671
    %v10428 = vpop.f32.mrf.mxu0
    %v10429 = vadd.f32 %v10380, %v10428
    %v10430 = vpop.f32.mrf.mxu0
    %v10431 = vadd.f32 %v10382, %v10430
    %10432 = vmatmul.bf16.gmra.mxu0 %v9680
    %v10433 = vpop.f32.mrf.mxu0
    %v10434 = vadd.f32 %v10385, %v10433
    %v10435 = vpop.f32.mrf.mxu0
    %v10436 = vadd.f32 %v10387, %v10435
    %10437 = vmatmul.bf16.gmra.mxu0 %v9689
    %v10438 = vpop.f32.mrf.mxu0
    %v10439 = vadd.f32 %v10390, %v10438
    %v10440 = vpop.f32.mrf.mxu0
    %v10441 = vadd.f32 %v10392, %v10440
    %10442 = vdwg.mxu0
    %10443 = vmatpush.bf16.msra.mxu0 %v10101
    %10444 = vmatpush.bf16.msra.mxu0 %v10100
    %10445 = vmatpush.bf16.msra.mxu0 %v10099
    %10446 = vmatpush.bf16.msra.mxu0 %v10098
    %10447 = vmatpush.bf16.msra.mxu0 %v10097
    %10448 = vmatpush.bf16.msra.mxu0 %v10096
    %10449 = vmatpush.bf16.msra.mxu0 %v10095
    %10450 = vmatpush.bf16.msra.mxu0 %v10094
    %10451 = vmatmul.bf16.gmra.mxu0 %v9627
    %v10452 = vpop.f32.mrf.mxu0
    %v10453 = vadd.f32 %v10404, %v10452
    %v10454 = vpop.f32.mrf.mxu0
    %v10455 = vadd.f32 %v10406, %v10454
    %10456 = vmatmul.bf16.gmra.mxu0 %v9636
    %v10457 = vpop.f32.mrf.mxu0
    %v10458 = vadd.f32 %v10409, %v10457
    %v10459 = vpop.f32.mrf.mxu0
    %v10460 = vadd.f32 %v10411, %v10459
    %10461 = vmatmul.bf16.gmra.mxu0 %v9645
    %v10462 = vpop.f32.mrf.mxu0
    %v10463 = vadd.f32 %v10414, %v10462
    %v10464 = vpop.f32.mrf.mxu0
    %v10465 = vadd.f32 %v10416, %v10464
    %10466 = vmatmul.bf16.gmra.mxu0 %v9654
    %v10467 = vpop.f32.mrf.mxu0
    %v10468 = vadd.f32 %v10419, %v10467
    %v10469 = vpop.f32.mrf.mxu0
    %v10470 = vadd.f32 %v10421, %v10469
    %10471 = vmatmul.bf16.gmra.mxu0 %v9663
    %v10472 = vpop.f32.mrf.mxu0
    %v10473 = vadd.f32 %v10424, %v10472
    %v10474 = vpop.f32.mrf.mxu0
    %v10475 = vadd.f32 %v10426, %v10474
    %10476 = vmatmul.bf16.gmra.mxu0 %v9672
    %v10477 = vpop.f32.mrf.mxu0
    %v10478 = vadd.f32 %v10429, %v10477
    %v10479 = vpop.f32.mrf.mxu0
    %v10480 = vadd.f32 %v10431, %v10479
    %10481 = vmatmul.bf16.gmra.mxu0 %v9681
    %v10482 = vpop.f32.mrf.mxu0
    %v10483 = vadd.f32 %v10434, %v10482
    %v10484 = vpop.f32.mrf.mxu0
    %v10485 = vadd.f32 %v10436, %v10484
    %10486 = vmatmul.bf16.gmra.mxu0 %v9690
    %v10487 = vpop.f32.mrf.mxu0
    %v10488 = vadd.f32 %v10439, %v10487
    %v10489 = vpop.f32.mrf.mxu0
    %v10490 = vadd.f32 %v10441, %v10489
    %10491 = vdwg.mxu0
    %10492 = vmatpush.bf16.msra.mxu0 %v10109
    %10493 = vmatpush.bf16.msra.mxu0 %v10108
    %10494 = vmatpush.bf16.msra.mxu0 %v10107
    %10495 = vmatpush.bf16.msra.mxu0 %v10106
    %10496 = vmatpush.bf16.msra.mxu0 %v10105
    %10497 = vmatpush.bf16.msra.mxu0 %v10104
    %10498 = vmatpush.bf16.msra.mxu0 %v10103
    %10499 = vmatpush.bf16.msra.mxu0 %v10102
    %10500 = vmatmul.bf16.gmra.mxu0 %v9628
    %v10501 = vpop.f32.mrf.mxu0
    %v10502 = vadd.f32 %v10453, %v10501
    %v10503 = vpop.f32.mrf.mxu0
    %v10504 = vadd.f32 %v10455, %v10503
    %10505 = vmatmul.bf16.gmra.mxu0 %v9637
    %v10506 = vpop.f32.mrf.mxu0
    %v10507 = vadd.f32 %v10458, %v10506
    %v10508 = vpop.f32.mrf.mxu0
    %v10509 = vadd.f32 %v10460, %v10508
    %10510 = vmatmul.bf16.gmra.mxu0 %v9646
    %v10511 = vpop.f32.mrf.mxu0
    %v10512 = vadd.f32 %v10463, %v10511
    %v10513 = vpop.f32.mrf.mxu0
    %v10514 = vadd.f32 %v10465, %v10513
    %10515 = vmatmul.bf16.gmra.mxu0 %v9655
    %v10516 = vpop.f32.mrf.mxu0
    %v10517 = vadd.f32 %v10468, %v10516
    %v10518 = vpop.f32.mrf.mxu0
    %v10519 = vadd.f32 %v10470, %v10518
    %10520 = vmatmul.bf16.gmra.mxu0 %v9664
    %v10521 = vpop.f32.mrf.mxu0
    %v10522 = vadd.f32 %v10473, %v10521
    %v10523 = vpop.f32.mrf.mxu0
    %v10524 = vadd.f32 %v10475, %v10523
    %10525 = vmatmul.bf16.gmra.mxu0 %v9673
    %v10526 = vpop.f32.mrf.mxu0
    %v10527 = vadd.f32 %v10478, %v10526
    %v10528 = vpop.f32.mrf.mxu0
    %v10529 = vadd.f32 %v10480, %v10528
    %10530 = vmatmul.bf16.gmra.mxu0 %v9682
    %v10531 = vpop.f32.mrf.mxu0
    %v10532 = vadd.f32 %v10483, %v10531
    %v10533 = vpop.f32.mrf.mxu0
    %v10534 = vadd.f32 %v10485, %v10533
    %10535 = vmatmul.bf16.gmra.mxu0 %v9691
    %v10536 = vpop.f32.mrf.mxu0
    %v10537 = vadd.f32 %v10488, %v10536
    %v10538 = vpop.f32.mrf.mxu0
    %v10539 = vadd.f32 %v10490, %v10538
    %10540 = vdwg.mxu0
    %10541 = vmatpush.bf16.msra.mxu0 %v10117
    %10542 = vmatpush.bf16.msra.mxu0 %v10116
    %10543 = vmatpush.bf16.msra.mxu0 %v10115
    %10544 = vmatpush.bf16.msra.mxu0 %v10114
    %10545 = vmatpush.bf16.msra.mxu0 %v10113
    %10546 = vmatpush.bf16.msra.mxu0 %v10112
    %10547 = vmatpush.bf16.msra.mxu0 %v10111
    %10548 = vmatpush.bf16.msra.mxu0 %v10110
    %10549 = vmatmul.bf16.gmra.mxu0 %v9629
    %v10550 = vpop.f32.mrf.mxu0
    %v10551 = vadd.f32 %v10502, %v10550
    %v10552 = vpop.f32.mrf.mxu0
    %v10553 = vadd.f32 %v10504, %v10552
    %10554 = vmatmul.bf16.gmra.mxu0 %v9638
    %v10555 = vpop.f32.mrf.mxu0
    %v10556 = vadd.f32 %v10507, %v10555
    %v10557 = vpop.f32.mrf.mxu0
    %v10558 = vadd.f32 %v10509, %v10557
    %10559 = vmatmul.bf16.gmra.mxu0 %v9647
    %v10560 = vpop.f32.mrf.mxu0
    %v10561 = vadd.f32 %v10512, %v10560
    %v10562 = vpop.f32.mrf.mxu0
    %v10563 = vadd.f32 %v10514, %v10562
    %10564 = vmatmul.bf16.gmra.mxu0 %v9656
    %v10565 = vpop.f32.mrf.mxu0
    %v10566 = vadd.f32 %v10517, %v10565
    %v10567 = vpop.f32.mrf.mxu0
    %v10568 = vadd.f32 %v10519, %v10567
    %10569 = vmatmul.bf16.gmra.mxu0 %v9665
    %v10570 = vpop.f32.mrf.mxu0
    %v10571 = vadd.f32 %v10522, %v10570
    %v10572 = vpop.f32.mrf.mxu0
    %v10573 = vadd.f32 %v10524, %v10572
    %10574 = vmatmul.bf16.gmra.mxu0 %v9674
    %v10575 = vpop.f32.mrf.mxu0
    %v10576 = vadd.f32 %v10527, %v10575
    %v10577 = vpop.f32.mrf.mxu0
    %v10578 = vadd.f32 %v10529, %v10577
    %10579 = vmatmul.bf16.gmra.mxu0 %v9683
    %v10580 = vpop.f32.mrf.mxu0
    %v10581 = vadd.f32 %v10532, %v10580
    %v10582 = vpop.f32.mrf.mxu0
    %v10583 = vadd.f32 %v10534, %v10582
    %10584 = vmatmul.bf16.gmra.mxu0 %v9692
    %v10585 = vpop.f32.mrf.mxu0
    %v10586 = vadd.f32 %v10537, %v10585
    %v10587 = vpop.f32.mrf.mxu0
    %v10588 = vadd.f32 %v10539, %v10587
    %10589 = vdwg.mxu0
    %10590 = vmatpush.bf16.msra.mxu0 %v10125
    %10591 = vmatpush.bf16.msra.mxu0 %v10124
    %10592 = vmatpush.bf16.msra.mxu0 %v10123
    %10593 = vmatpush.bf16.msra.mxu0 %v10122
    %10594 = vmatpush.bf16.msra.mxu0 %v10121
    %10595 = vmatpush.bf16.msra.mxu0 %v10120
    %10596 = vmatpush.bf16.msra.mxu0 %v10119
    %10597 = vmatpush.bf16.msra.mxu0 %v10118
    %10598 = vmatmul.bf16.gmra.mxu0 %v9630
    %v10599 = vpop.f32.mrf.mxu0
    %v10600 = vadd.f32 %v10551, %v10599
    %v10601 = vpop.f32.mrf.mxu0
    %v10602 = vadd.f32 %v10553, %v10601
    %10603 = vmatmul.bf16.gmra.mxu0 %v9639
    %v10604 = vpop.f32.mrf.mxu0
    %v10605 = vadd.f32 %v10556, %v10604
    %v10606 = vpop.f32.mrf.mxu0
    %v10607 = vadd.f32 %v10558, %v10606
    %10608 = vmatmul.bf16.gmra.mxu0 %v9648
    %v10609 = vpop.f32.mrf.mxu0
    %v10610 = vadd.f32 %v10561, %v10609
    %v10611 = vpop.f32.mrf.mxu0
    %v10612 = vadd.f32 %v10563, %v10611
    %10613 = vmatmul.bf16.gmra.mxu0 %v9657
    %v10614 = vpop.f32.mrf.mxu0
    %v10615 = vadd.f32 %v10566, %v10614
    %v10616 = vpop.f32.mrf.mxu0
    %v10617 = vadd.f32 %v10568, %v10616
    %10618 = vmatmul.bf16.gmra.mxu0 %v9666
    %v10619 = vpop.f32.mrf.mxu0
    %v10620 = vadd.f32 %v10571, %v10619
    %v10621 = vpop.f32.mrf.mxu0
    %v10622 = vadd.f32 %v10573, %v10621
    %10623 = vmatmul.bf16.gmra.mxu0 %v9675
    %v10624 = vpop.f32.mrf.mxu0
    %v10625 = vadd.f32 %v10576, %v10624
    %v10626 = vpop.f32.mrf.mxu0
    %v10627 = vadd.f32 %v10578, %v10626
    %10628 = vmatmul.bf16.gmra.mxu0 %v9684
    %v10629 = vpop.f32.mrf.mxu0
    %v10630 = vadd.f32 %v10581, %v10629
    %v10631 = vpop.f32.mrf.mxu0
    %v10632 = vadd.f32 %v10583, %v10631
    %10633 = vmatmul.bf16.gmra.mxu0 %v9693
    %v10634 = vpop.f32.mrf.mxu0
    %v10635 = vadd.f32 %v10586, %v10634
    %v10636 = vpop.f32.mrf.mxu0
    %v10637 = vadd.f32 %v10588, %v10636
    %10638 = vdwg.mxu0
    %10639 = vst [vmem:[#allocation4 + $0x100] sm:$0xff] %v10600
    %10640 = vst [vmem:[#allocation4 + $0x108] sm:$0xff] %v10602
    %10641 = vst [vmem:[#allocation4 + $0x110] sm:$0xff] %v10605
    %10642 = vst [vmem:[#allocation4 + $0x118] sm:$0xff] %v10607
    %10643 = vst [vmem:[#allocation4 + $0x120] sm:$0xff] %v10610
    %10644 = vst [vmem:[#allocation4 + $0x128] sm:$0xff] %v10612
    %10645 = vst [vmem:[#allocation4 + $0x130] sm:$0xff] %v10615
    %10646 = vst [vmem:[#allocation4 + $0x138] sm:$0xff] %v10617
    %10647 = vst [vmem:[#allocation4 + $0x140] sm:$0xff] %v10620
    %10648 = vst [vmem:[#allocation4 + $0x148] sm:$0xff] %v10622
    %10649 = vst [vmem:[#allocation4 + $0x150] sm:$0xff] %v10625
    %10650 = vst [vmem:[#allocation4 + $0x158] sm:$0xff] %v10627
    %10651 = vst [vmem:[#allocation4 + $0x160] sm:$0xff] %v10630
    %10652 = vst [vmem:[#allocation4 + $0x168] sm:$0xff] %v10632
    %10653 = vst [vmem:[#allocation4 + $0x170] sm:$0xff] %v10635
    %10654 = vst [vmem:[#allocation4 + $0x178] sm:$0xff] %v10637
    %v10655 = vadd.f32 %v10600, %v10602
    %v10656 = vadd.f32 %v10655, %v10605
    %v10657 = vadd.f32 %v10656, %v10607
    %v10658 = vadd.f32 %v10657, %v10610
    %v10659 = vadd.f32 %v10658, %v10612
    %v10660 = vadd.f32 %v10659, %v10615
    %v10661 = vadd.f32 %v10660, %v10617
    %v10662 = vadd.f32 %v10661, %v10620
    %v10663 = vadd.f32 %v10662, %v10622
    %v10664 = vadd.f32 %v10663, %v10625
    %v10665 = vadd.f32 %v10664, %v10627
    %v10666 = vadd.f32 %v10665, %v10630
    %v10667 = vadd.f32 %v10666, %v10632
    %v10668 = vadd.f32 %v10667, %v10635
    %v10669 = vadd.f32 %v10668, %v10637
    %v10670 = vrot.slane %v10669, 4
    %v10671 = vadd.f32 %v10669, %v10670
    %v10672 = vrot.slane %v10671, 2
    %v10673 = vadd.f32 %v10671, %v10672
    %v10674 = vrot.slane %v10673, 1
    %v10675 = vadd.f32 %v10673, %v10674
    %v10676 = vadd.f32 %v9135, %v10675
    %v10677 = vmul.f32 %v10600, %v10600
    %v10678 = vmul.f32 %v10602, %v10602
    %v10679 = vmul.f32 %v10605, %v10605
    %v10680 = vmul.f32 %v10607, %v10607
    %v10681 = vmul.f32 %v10610, %v10610
    %v10682 = vmul.f32 %v10612, %v10612
    %v10683 = vmul.f32 %v10615, %v10615
    %v10684 = vmul.f32 %v10617, %v10617
    %v10685 = vmul.f32 %v10620, %v10620
    %v10686 = vmul.f32 %v10622, %v10622
    %v10687 = vmul.f32 %v10625, %v10625
    %v10688 = vmul.f32 %v10627, %v10627
    %v10689 = vmul.f32 %v10630, %v10630
    %v10690 = vmul.f32 %v10632, %v10632
    %v10691 = vmul.f32 %v10635, %v10635
    %v10692 = vmul.f32 %v10637, %v10637
    %v10693 = vadd.f32 %v10677, %v10678
    %v10694 = vadd.f32 %v10693, %v10679
    %v10695 = vadd.f32 %v10694, %v10680
    %v10696 = vadd.f32 %v10695, %v10681
    %v10697 = vadd.f32 %v10696, %v10682
    %v10698 = vadd.f32 %v10697, %v10683
    %v10699 = vadd.f32 %v10698, %v10684
    %v10700 = vadd.f32 %v10699, %v10685
    %v10701 = vadd.f32 %v10700, %v10686
    %v10702 = vadd.f32 %v10701, %v10687
    %v10703 = vadd.f32 %v10702, %v10688
    %v10704 = vadd.f32 %v10703, %v10689
    %v10705 = vadd.f32 %v10704, %v10690
    %v10706 = vadd.f32 %v10705, %v10691
    %v10707 = vadd.f32 %v10706, %v10692
    %v10708 = vrot.slane %v10707, 4
    %v10709 = vadd.f32 %v10707, %v10708
    %v10710 = vrot.slane %v10709, 2
    %v10711 = vadd.f32 %v10709, %v10710
    %v10712 = vrot.slane %v10711, 1
    %v10713 = vadd.f32 %v10711, %v10712
    %v10714 = vadd.f32 %v9173, %v10713
    %v10715 = vld [vmem:[#allocation3 + $0x6c0] sm:$0xff]
    %v10716 = vld [vmem:[#allocation3 + $0x6c8] sm:$0xff]
    %v10717 = vld [vmem:[#allocation3 + $0x6d0] sm:$0xff]
    %v10718 = vld [vmem:[#allocation3 + $0x6d8] sm:$0xff]
    %v10719 = vld [vmem:[#allocation3 + $0x6e0] sm:$0xf]
    %v10720 = vld [vmem:[#allocation3 + $0x6e4] sm:$0xff]
    %v10721 = vld [vmem:[#allocation3 + $0x6ec] sm:$0xff]
    %v10722 = vld [vmem:[#allocation3 + $0x6f4] sm:$0xff]
    %v10723 = vld [vmem:[#allocation3 + $0x6fc] sm:$0xff]
    %v10724 = vld [vmem:[#allocation3 + $0x704] sm:$0xf]
    %v10725 = vld [vmem:[#allocation3 + $0x708] sm:$0xff]
    %v10726 = vld [vmem:[#allocation3 + $0x710] sm:$0xff]
    %v10727 = vld [vmem:[#allocation3 + $0x718] sm:$0xff]
    %v10728 = vld [vmem:[#allocation3 + $0x720] sm:$0xff]
    %v10729 = vld [vmem:[#allocation3 + $0x728] sm:$0xf]
    %v10730 = vld [vmem:[#allocation3 + $0x72c] sm:$0xff]
    %v10731 = vld [vmem:[#allocation3 + $0x734] sm:$0xff]
    %v10732 = vld [vmem:[#allocation3 + $0x73c] sm:$0xff]
    %v10733 = vld [vmem:[#allocation3 + $0x744] sm:$0xff]
    %v10734 = vld [vmem:[#allocation3 + $0x74c] sm:$0xf]
    %v10735 = vld [vmem:[#allocation3 + $0x750] sm:$0xff]
    %v10736 = vld [vmem:[#allocation3 + $0x758] sm:$0xff]
    %v10737 = vld [vmem:[#allocation3 + $0x760] sm:$0xff]
    %v10738 = vld [vmem:[#allocation3 + $0x768] sm:$0xff]
    %v10739 = vld [vmem:[#allocation3 + $0x770] sm:$0xf]
    %v10740 = vld [vmem:[#allocation3 + $0x774] sm:$0xff]
    %v10741 = vld [vmem:[#allocation3 + $0x77c] sm:$0xff]
    %v10742 = vld [vmem:[#allocation3 + $0x784] sm:$0xff]
    %v10743 = vld [vmem:[#allocation3 + $0x78c] sm:$0xff]
    %v10744 = vld [vmem:[#allocation3 + $0x794] sm:$0xf]
    %v10745 = vld [vmem:[#allocation3 + $0x798] sm:$0xff]
    %v10746 = vld [vmem:[#allocation3 + $0x7a0] sm:$0xff]
    %v10747 = vld [vmem:[#allocation3 + $0x7a8] sm:$0xff]
    %v10748 = vld [vmem:[#allocation3 + $0x7b0] sm:$0xff]
    %v10749 = vld [vmem:[#allocation3 + $0x7b8] sm:$0xf]
    %v10750 = vld [vmem:[#allocation3 + $0x7bc] sm:$0xff]
    %v10751 = vld [vmem:[#allocation3 + $0x7c4] sm:$0xff]
    %v10752 = vld [vmem:[#allocation3 + $0x7cc] sm:$0xff]
    %v10753 = vld [vmem:[#allocation3 + $0x7d4] sm:$0xff]
    %v10754 = vld [vmem:[#allocation3 + $0x7dc] sm:$0xf]
    %v10755 = vld [vmem:[#allocation3 + $0x7e0] sm:$0xff]
    %v10756 = vld [vmem:[#allocation3 + $0x7e8] sm:$0xff]
    %v10757 = vld [vmem:[#allocation3 + $0x7f0] sm:$0xff]
    %v10758 = vld [vmem:[#allocation3 + $0x7f8] sm:$0xff]
    %v10759 = vld [vmem:[#allocation3 + $0x800] sm:$0xf]
    %v10760 = vld [vmem:[#allocation3 + $0x804] sm:$0xff]
    %v10761 = vld [vmem:[#allocation3 + $0x80c] sm:$0xff]
    %v10762 = vld [vmem:[#allocation3 + $0x814] sm:$0xff]
    %v10763 = vld [vmem:[#allocation3 + $0x81c] sm:$0xff]
    %v10764 = vld [vmem:[#allocation3 + $0x824] sm:$0xf]
    %v10765 = vld [vmem:[#allocation3 + $0x828] sm:$0xff]
    %v10766 = vld [vmem:[#allocation3 + $0x830] sm:$0xff]
    %v10767 = vld [vmem:[#allocation3 + $0x838] sm:$0xff]
    %v10768 = vld [vmem:[#allocation3 + $0x840] sm:$0xff]
    %v10769 = vld [vmem:[#allocation3 + $0x848] sm:$0xf]
    %v10770 = vld [vmem:[#allocation3 + $0x84c] sm:$0xff]
    %v10771 = vld [vmem:[#allocation3 + $0x854] sm:$0xff]
    %v10772 = vld [vmem:[#allocation3 + $0x85c] sm:$0xff]
    %v10773 = vld [vmem:[#allocation3 + $0x864] sm:$0xff]
    %v10774 = vld [vmem:[#allocation3 + $0x86c] sm:$0xf]
    %v10775 = vld [vmem:[#allocation3 + $0x870] sm:$0xff]
    %v10776 = vld [vmem:[#allocation3 + $0x878] sm:$0xff]
    %v10777 = vld [vmem:[#allocation3 + $0x880] sm:$0xff]
    %v10778 = vld [vmem:[#allocation3 + $0x888] sm:$0xff]
    %v10779 = vld [vmem:[#allocation3 + $0x890] sm:$0xf]
    %v10780 = vld [vmem:[#allocation3 + $0x894] sm:$0xff]
    %v10781 = vld [vmem:[#allocation3 + $0x89c] sm:$0xff]
    %v10782 = vld [vmem:[#allocation3 + $0x8a4] sm:$0xff]
    %v10783 = vld [vmem:[#allocation3 + $0x8ac] sm:$0xff]
    %v10784 = vld [vmem:[#allocation3 + $0x8b4] sm:$0xf]
    %v10785 = vld [vmem:[#allocation3 + $0x8b8] sm:$0xff]
    %v10786 = vld [vmem:[#allocation3 + $0x8c0] sm:$0xff]
    %v10787 = vld [vmem:[#allocation3 + $0x8c8] sm:$0xff]
    %v10788 = vld [vmem:[#allocation3 + $0x8d0] sm:$0xff]
    %v10789 = vld [vmem:[#allocation3 + $0x8d8] sm:$0xf]
    %v10790 = vld [vmem:[#allocation3 + $0x8dc] sm:$0xff]
    %v10791 = vld [vmem:[#allocation3 + $0x8e4] sm:$0xff]
    %v10792 = vld [vmem:[#allocation3 + $0x8ec] sm:$0xff]
    %v10793 = vld [vmem:[#allocation3 + $0x8f4] sm:$0xff]
    %v10794 = vld [vmem:[#allocation3 + $0x8fc] sm:$0xf]
    %v10795 = vld [vmem:[#allocation8] sm:$0xf]
    %v10796 = vld [vmem:[#allocation8 + $0x4] sm:$0xf]
    %v10797 = vld [vmem:[#allocation8 + $0x8] sm:$0xf]
    %v10798 = vld [vmem:[#allocation8 + $0xc] sm:$0xf]
    %v10799 = vld [vmem:[#allocation8 + $0x10] sm:$0xf]
    %v10800 = vld [vmem:[#allocation8 + $0x14] sm:$0xf]
    %v10801 = vld [vmem:[#allocation8 + $0x18] sm:$0xf]
    %v10802 = vld [vmem:[#allocation8 + $0x1c] sm:$0xf]
    %v10803 = vld [vmem:[#allocation8 + $0x20] sm:$0xf]
    %v10804 = vld [vmem:[#allocation8 + $0x24] sm:$0xf]
    %v10805 = vld [vmem:[#allocation8 + $0x28] sm:$0xf]
    %v10806 = vld [vmem:[#allocation8 + $0x2c] sm:$0xf]
    %v10807 = vld [vmem:[#allocation8 + $0x30] sm:$0xf]
    %v10808 = vld [vmem:[#allocation8 + $0x34] sm:$0xf]
    %v10809 = vld [vmem:[#allocation8 + $0x38] sm:$0xf]
    %v10810 = vld [vmem:[#allocation8 + $0x3c] sm:$0xf]
    %v10811 = vld [vmem:[#allocation8 + $0x40] sm:$0xf]
    %v10812 = vld [vmem:[#allocation8 + $0x44] sm:$0xf]
    %v10813 = vld [vmem:[#allocation8 + $0x48] sm:$0xf]
    %v10814 = vld [vmem:[#allocation8 + $0x4c] sm:$0xf]
    %v10815 = vld [vmem:[#allocation8 + $0x50] sm:$0xf]
    %v10816 = vld [vmem:[#allocation8 + $0x54] sm:$0xf]
    %v10817 = vld [vmem:[#allocation8 + $0x58] sm:$0xf]
    %v10818 = vld [vmem:[#allocation8 + $0x5c] sm:$0xf]
    %v10819 = vld [vmem:[#allocation8 + $0x60] sm:$0xf]
    %v10820 = vld [vmem:[#allocation8 + $0x64] sm:$0xf]
    %v10821 = vld [vmem:[#allocation8 + $0x68] sm:$0xf]
    %v10822 = vld [vmem:[#allocation8 + $0x6c] sm:$0xf]
    %v10823 = vld [vmem:[#allocation8 + $0x70] sm:$0xf]
    %v10824 = vld [vmem:[#allocation8 + $0x74] sm:$0xf]
    %v10825 = vld [vmem:[#allocation8 + $0x78] sm:$0xf]
    %v10826 = vld [vmem:[#allocation8 + $0x7c] sm:$0xf]
    %v10827 = vld [vmem:[#allocation8 + $0x80] sm:$0xf]
    %v10828 = vld [vmem:[#allocation8 + $0x84] sm:$0xf]
    %v10829 = vld [vmem:[#allocation8 + $0x88] sm:$0xf]
    %v10830 = vld [vmem:[#allocation8 + $0x8c] sm:$0xf]
    %v10831 = vld [vmem:[#allocation8 + $0x90] sm:$0xf]
    %v10832 = vld [vmem:[#allocation8 + $0x94] sm:$0xf]
    %v10833 = vld [vmem:[#allocation8 + $0x98] sm:$0xf]
    %v10834 = vld [vmem:[#allocation8 + $0x9c] sm:$0xf]
    %v10835 = vld [vmem:[#allocation8 + $0xa0] sm:$0xf]
    %v10836 = vld [vmem:[#allocation8 + $0xa4] sm:$0xf]
    %v10837 = vld [vmem:[#allocation8 + $0xa8] sm:$0xf]
    %v10838 = vld [vmem:[#allocation8 + $0xac] sm:$0xf]
    %v10839 = vld [vmem:[#allocation8 + $0xb0] sm:$0xf]
    %v10840 = vld [vmem:[#allocation8 + $0xb4] sm:$0xf]
    %v10841 = vld [vmem:[#allocation8 + $0xb8] sm:$0xf]
    %v10842 = vld [vmem:[#allocation8 + $0xbc] sm:$0xf]
    %v10843 = vld [vmem:[#allocation8 + $0xc0] sm:$0xf]
    %v10844 = vld [vmem:[#allocation8 + $0xc4] sm:$0xf]
    %v10845 = vld [vmem:[#allocation8 + $0xc8] sm:$0xf]
    %v10846 = vld [vmem:[#allocation8 + $0xcc] sm:$0xf]
    %v10847 = vld [vmem:[#allocation8 + $0xd0] sm:$0xf]
    %v10848 = vld [vmem:[#allocation8 + $0xd4] sm:$0xf]
    %v10849 = vld [vmem:[#allocation8 + $0xd8] sm:$0xf]
    %v10850 = vld [vmem:[#allocation8 + $0xdc] sm:$0xf]
    %v10851 = vld [vmem:[#allocation8 + $0xe0] sm:$0xf]
    %v10852 = vld [vmem:[#allocation8 + $0xe4] sm:$0xf]
    %v10853 = vld [vmem:[#allocation8 + $0xe8] sm:$0xf]
    %v10854 = vld [vmem:[#allocation8 + $0xec] sm:$0xf]
    %v10855 = vld [vmem:[#allocation8 + $0xf0] sm:$0xf]
    %v10856 = vld [vmem:[#allocation8 + $0xf4] sm:$0xf]
    %v10857 = vld [vmem:[#allocation8 + $0xf8] sm:$0xf]
    %v10858 = vld [vmem:[#allocation8 + $0xfc] sm:$0xf]
    %v10859 = vld [vmem:[#allocation8 + $0x100] sm:$0xf]
    %v10860 = vld [vmem:[#allocation8 + $0x104] sm:$0xf]
    %v10861 = vld [vmem:[#allocation8 + $0x108] sm:$0xf]
    %v10862 = vld [vmem:[#allocation8 + $0x10c] sm:$0xf]
    %v10863 = vld [vmem:[#allocation8 + $0x110] sm:$0xf]
    %v10864 = vld [vmem:[#allocation8 + $0x114] sm:$0xf]
    %v10865 = vld [vmem:[#allocation8 + $0x118] sm:$0xf]
    %v10866 = vld [vmem:[#allocation8 + $0x11c] sm:$0xf]
    %v10867 = vld [vmem:[#allocation8 + $0x120] sm:$0xf]
    %v10868 = vld [vmem:[#allocation8 + $0x124] sm:$0xf]
    %v10869 = vld [vmem:[#allocation8 + $0x128] sm:$0xf]
    %v10870 = vld [vmem:[#allocation8 + $0x12c] sm:$0xf]
    %v10871 = vld [vmem:[#allocation8 + $0x130] sm:$0xf]
    %v10872 = vld [vmem:[#allocation8 + $0x134] sm:$0xf]
    %v10873 = vld [vmem:[#allocation8 + $0x138] sm:$0xf]
    %v10874 = vld [vmem:[#allocation8 + $0x13c] sm:$0xf]
    %v10875 = vld [vmem:[#allocation8 + $0x140] sm:$0xf]
    %v10876 = vld [vmem:[#allocation8 + $0x144] sm:$0xf]
    %v10877 = vld [vmem:[#allocation8 + $0x148] sm:$0xf]
    %v10878 = vld [vmem:[#allocation8 + $0x14c] sm:$0xf]
    %v10879 = vld [vmem:[#allocation8 + $0x150] sm:$0xf]
    %v10880 = vld [vmem:[#allocation8 + $0x154] sm:$0xf]
    %v10881 = vld [vmem:[#allocation8 + $0x158] sm:$0xf]
    %v10882 = vld [vmem:[#allocation8 + $0x15c] sm:$0xf]
    %v10883 = vld [vmem:[#allocation8 + $0x160] sm:$0xf]
    %v10884 = vld [vmem:[#allocation8 + $0x164] sm:$0xf]
    %v10885 = vld [vmem:[#allocation8 + $0x168] sm:$0xf]
    %v10886 = vld [vmem:[#allocation8 + $0x16c] sm:$0xf]
    %v10887 = vld [vmem:[#allocation8 + $0x170] sm:$0xf]
    %v10888 = vld [vmem:[#allocation8 + $0x174] sm:$0xf]
    %v10889 = vld [vmem:[#allocation8 + $0x178] sm:$0xf]
    %v10890 = vld [vmem:[#allocation8 + $0x17c] sm:$0xf]
    %v10891 = vld [vmem:[#allocation8 + $0x180] sm:$0xf]
    %v10892 = vld [vmem:[#allocation8 + $0x184] sm:$0xf]
    %v10893 = vld [vmem:[#allocation8 + $0x188] sm:$0xf]
    %v10894 = vld [vmem:[#allocation8 + $0x18c] sm:$0xf]
    %v10895 = vld [vmem:[#allocation8 + $0x190] sm:$0xf]
    %v10896 = vld [vmem:[#allocation8 + $0x194] sm:$0xf]
    %v10897 = vld [vmem:[#allocation8 + $0x198] sm:$0xf]
    %v10898 = vld [vmem:[#allocation8 + $0x19c] sm:$0xf]
    %v10899 = vld [vmem:[#allocation8 + $0x1a0] sm:$0xf]
    %v10900 = vld [vmem:[#allocation8 + $0x1a4] sm:$0xf]
    %v10901 = vld [vmem:[#allocation8 + $0x1a8] sm:$0xf]
    %v10902 = vld [vmem:[#allocation8 + $0x1ac] sm:$0xf]
    %v10903 = vld [vmem:[#allocation8 + $0x1b0] sm:$0xf]
    %v10904 = vld [vmem:[#allocation8 + $0x1b4] sm:$0xf]
    %v10905 = vld [vmem:[#allocation8 + $0x1b8] sm:$0xf]
    %v10906 = vld [vmem:[#allocation8 + $0x1bc] sm:$0xf]
    %v10907 = vld [vmem:[#allocation8 + $0x1c0] sm:$0xf]
    %v10908 = vld [vmem:[#allocation8 + $0x1c4] sm:$0xf]
    %v10909 = vld [vmem:[#allocation8 + $0x1c8] sm:$0xf]
    %v10910 = vld [vmem:[#allocation8 + $0x1cc] sm:$0xf]
    %v10911 = vld [vmem:[#allocation8 + $0x1d0] sm:$0xf]
    %v10912 = vld [vmem:[#allocation8 + $0x1d4] sm:$0xf]
    %v10913 = vld [vmem:[#allocation8 + $0x1d8] sm:$0xf]
    %v10914 = vld [vmem:[#allocation8 + $0x1dc] sm:$0xf]
    %v10915 = vld [vmem:[#allocation8 + $0x1e0] sm:$0xf]
    %v10916 = vld [vmem:[#allocation8 + $0x1e4] sm:$0xf]
    %v10917 = vld [vmem:[#allocation8 + $0x1e8] sm:$0xf]
    %v10918 = vld [vmem:[#allocation8 + $0x1ec] sm:$0xf]
    %v10919 = vld [vmem:[#allocation8 + $0x1f0] sm:$0xf]
    %v10920 = vld [vmem:[#allocation8 + $0x1f4] sm:$0xf]
    %v10921 = vld [vmem:[#allocation8 + $0x1f8] sm:$0xf]
    %v10922 = vld [vmem:[#allocation8 + $0x1fc] sm:$0xf]
    %v10923 = vld [vmem:[#allocation8 + $0x200] sm:$0xf]
    %v10924 = vld [vmem:[#allocation8 + $0x204] sm:$0xf]
    %v10925 = vld [vmem:[#allocation8 + $0x208] sm:$0xf]
    %v10926 = vld [vmem:[#allocation8 + $0x20c] sm:$0xf]
    %v10927 = vld [vmem:[#allocation8 + $0x210] sm:$0xf]
    %v10928 = vld [vmem:[#allocation8 + $0x214] sm:$0xf]
    %v10929 = vld [vmem:[#allocation8 + $0x218] sm:$0xf]
    %v10930 = vld [vmem:[#allocation8 + $0x21c] sm:$0xf]
    %v10931 = vld [vmem:[#allocation8 + $0x220] sm:$0xf]
    %v10932 = vld [vmem:[#allocation8 + $0x224] sm:$0xf]
    %v10933 = vld [vmem:[#allocation8 + $0x228] sm:$0xf]
    %v10934 = vld [vmem:[#allocation8 + $0x22c] sm:$0xf]
    %v10935 = vld [vmem:[#allocation8 + $0x230] sm:$0xf]
    %v10936 = vld [vmem:[#allocation8 + $0x234] sm:$0xf]
    %v10937 = vld [vmem:[#allocation8 + $0x238] sm:$0xf]
    %v10938 = vld [vmem:[#allocation8 + $0x23c] sm:$0xf]
    %v11019 = vunpack.c.l.b16 %v10715
    %v11020 = vunpack.c.h.b16 %v10715
    %v11021 = vunpack.c.l.b16 %v10716
    %v11022 = vunpack.c.h.b16 %v10716
    %v11023 = vunpack.c.l.b16 %v10717
    %v11024 = vunpack.c.h.b16 %v10717
    %v11025 = vunpack.c.l.b16 %v10718
    %v11026 = vunpack.c.h.b16 %v10718
    %v11027 = vunpack.c.l.b16 %v10719
    %v11028 = vunpack.c.l.b16 %v10720
    %v11029 = vunpack.c.h.b16 %v10720
    %v11030 = vunpack.c.l.b16 %v10721
    %v11031 = vunpack.c.h.b16 %v10721
    %v11032 = vunpack.c.l.b16 %v10722
    %v11033 = vunpack.c.h.b16 %v10722
    %v11034 = vunpack.c.l.b16 %v10723
    %v11035 = vunpack.c.h.b16 %v10723
    %v11036 = vunpack.c.l.b16 %v10724
    %v11037 = vunpack.c.l.b16 %v10725
    %v11038 = vunpack.c.h.b16 %v10725
    %v11039 = vunpack.c.l.b16 %v10726
    %v11040 = vunpack.c.h.b16 %v10726
    %v11041 = vunpack.c.l.b16 %v10727
    %v11042 = vunpack.c.h.b16 %v10727
    %v11043 = vunpack.c.l.b16 %v10728
    %v11044 = vunpack.c.h.b16 %v10728
    %v11045 = vunpack.c.l.b16 %v10729
    %v11046 = vunpack.c.l.b16 %v10730
    %v11047 = vunpack.c.h.b16 %v10730
    %v11048 = vunpack.c.l.b16 %v10731
    %v11049 = vunpack.c.h.b16 %v10731
    %v11050 = vunpack.c.l.b16 %v10732
    %v11051 = vunpack.c.h.b16 %v10732
    %v11052 = vunpack.c.l.b16 %v10733
    %v11053 = vunpack.c.h.b16 %v10733
    %v11054 = vunpack.c.l.b16 %v10734
    %v11055 = vunpack.c.l.b16 %v10735
    %v11056 = vunpack.c.h.b16 %v10735
    %v11057 = vunpack.c.l.b16 %v10736
    %v11058 = vunpack.c.h.b16 %v10736
    %v11059 = vunpack.c.l.b16 %v10737
    %v11060 = vunpack.c.h.b16 %v10737
    %v11061 = vunpack.c.l.b16 %v10738
    %v11062 = vunpack.c.h.b16 %v10738
    %v11063 = vunpack.c.l.b16 %v10739
    %v11064 = vunpack.c.l.b16 %v10740
    %v11065 = vunpack.c.h.b16 %v10740
    %v11066 = vunpack.c.l.b16 %v10741
    %v11067 = vunpack.c.h.b16 %v10741
    %v11068 = vunpack.c.l.b16 %v10742
    %v11069 = vunpack.c.h.b16 %v10742
    %v11070 = vunpack.c.l.b16 %v10743
    %v11071 = vunpack.c.h.b16 %v10743
    %v11072 = vunpack.c.l.b16 %v10744
    %v11073 = vunpack.c.l.b16 %v10745
    %v11074 = vunpack.c.h.b16 %v10745
    %v11075 = vunpack.c.l.b16 %v10746
    %v11076 = vunpack.c.h.b16 %v10746
    %v11077 = vunpack.c.l.b16 %v10747
    %v11078 = vunpack.c.h.b16 %v10747
    %v11079 = vunpack.c.l.b16 %v10748
    %v11080 = vunpack.c.h.b16 %v10748
    %v11081 = vunpack.c.l.b16 %v10749
    %v11082 = vunpack.c.l.b16 %v10750
    %v11083 = vunpack.c.h.b16 %v10750
    %v11084 = vunpack.c.l.b16 %v10751
    %v11085 = vunpack.c.h.b16 %v10751
    %v11086 = vunpack.c.l.b16 %v10752
    %v11087 = vunpack.c.h.b16 %v10752
    %v11088 = vunpack.c.l.b16 %v10753
    %v11089 = vunpack.c.h.b16 %v10753
    %v11090 = vunpack.c.l.b16 %v10754
    %v11091 = vunpack.c.l.b16 %v10755
    %v11092 = vunpack.c.h.b16 %v10755
    %v11093 = vunpack.c.l.b16 %v10756
    %v11094 = vunpack.c.h.b16 %v10756
    %v11095 = vunpack.c.l.b16 %v10757
    %v11096 = vunpack.c.h.b16 %v10757
    %v11097 = vunpack.c.l.b16 %v10758
    %v11098 = vunpack.c.h.b16 %v10758
    %v11099 = vunpack.c.l.b16 %v10759
    %v11100 = vunpack.c.l.b16 %v10760
    %v11101 = vunpack.c.h.b16 %v10760
    %v11102 = vunpack.c.l.b16 %v10761
    %v11103 = vunpack.c.h.b16 %v10761
    %v11104 = vunpack.c.l.b16 %v10762
    %v11105 = vunpack.c.h.b16 %v10762
    %v11106 = vunpack.c.l.b16 %v10763
    %v11107 = vunpack.c.h.b16 %v10763
    %v11108 = vunpack.c.l.b16 %v10764
    %v11109 = vunpack.c.l.b16 %v10765
    %v11110 = vunpack.c.h.b16 %v10765
    %v11111 = vunpack.c.l.b16 %v10766
    %v11112 = vunpack.c.h.b16 %v10766
    %v11113 = vunpack.c.l.b16 %v10767
    %v11114 = vunpack.c.h.b16 %v10767
    %v11115 = vunpack.c.l.b16 %v10768
    %v11116 = vunpack.c.h.b16 %v10768
    %v11117 = vunpack.c.l.b16 %v10769
    %v11118 = vunpack.c.l.b16 %v10770
    %v11119 = vunpack.c.h.b16 %v10770
    %v11120 = vunpack.c.l.b16 %v10771
    %v11121 = vunpack.c.h.b16 %v10771
    %v11122 = vunpack.c.l.b16 %v10772
    %v11123 = vunpack.c.h.b16 %v10772
    %v11124 = vunpack.c.l.b16 %v10773
    %v11125 = vunpack.c.h.b16 %v10773
    %v11126 = vunpack.c.l.b16 %v10774
    %v11127 = vunpack.c.l.b16 %v10775
    %v11128 = vunpack.c.h.b16 %v10775
    %v11129 = vunpack.c.l.b16 %v10776
    %v11130 = vunpack.c.h.b16 %v10776
    %v11131 = vunpack.c.l.b16 %v10777
    %v11132 = vunpack.c.h.b16 %v10777
    %v11133 = vunpack.c.l.b16 %v10778
    %v11134 = vunpack.c.h.b16 %v10778
    %v11135 = vunpack.c.l.b16 %v10779
    %v11136 = vunpack.c.l.b16 %v10780
    %v11137 = vunpack.c.h.b16 %v10780
    %v11138 = vunpack.c.l.b16 %v10781
    %v11139 = vunpack.c.h.b16 %v10781
    %v11140 = vunpack.c.l.b16 %v10782
    %v11141 = vunpack.c.h.b16 %v10782
    %v11142 = vunpack.c.l.b16 %v10783
    %v11143 = vunpack.c.h.b16 %v10783
    %v11144 = vunpack.c.l.b16 %v10784
    %v11145 = vunpack.c.l.b16 %v10785
    %v11146 = vunpack.c.h.b16 %v10785
    %v11147 = vunpack.c.l.b16 %v10786
    %v11148 = vunpack.c.h.b16 %v10786
    %v11149 = vunpack.c.l.b16 %v10787
    %v11150 = vunpack.c.h.b16 %v10787
    %v11151 = vunpack.c.l.b16 %v10788
    %v11152 = vunpack.c.h.b16 %v10788
    %v11153 = vunpack.c.l.b16 %v10789
    %v11154 = vunpack.c.l.b16 %v10790
    %v11155 = vunpack.c.h.b16 %v10790
    %v11156 = vunpack.c.l.b16 %v10791
    %v11157 = vunpack.c.h.b16 %v10791
    %v11158 = vunpack.c.l.b16 %v10792
    %v11159 = vunpack.c.h.b16 %v10792
    %v11160 = vunpack.c.l.b16 %v10793
    %v11161 = vunpack.c.h.b16 %v10793
    %v11162 = vunpack.c.l.b16 %v10794
    %v11163 = vpack.c.b16 %v11028, %v11019
    %v11164 = vpack.c.b16 %v11029, %v11020
    %v11165 = vpack.c.b16 %v11030, %v11021
    %v11166 = vpack.c.b16 %v11031, %v11022
    %v11167 = vpack.c.b16 %v11032, %v11023
    %v11168 = vpack.c.b16 %v11033, %v11024
    %v11169 = vpack.c.b16 %v11034, %v11025
    %v11170 = vpack.c.b16 %v11035, %v11026
    %v11171 = vpack.c.b16 %v11036, %v11027
    %v11172 = vpack.c.b16 %v11046, %v11037
    %v11173 = vpack.c.b16 %v11047, %v11038
    %v11174 = vpack.c.b16 %v11048, %v11039
    %v11175 = vpack.c.b16 %v11049, %v11040
    %v11176 = vpack.c.b16 %v11050, %v11041
    %v11177 = vpack.c.b16 %v11051, %v11042
    %v11178 = vpack.c.b16 %v11052, %v11043
    %v11179 = vpack.c.b16 %v11053, %v11044
    %v11180 = vpack.c.b16 %v11054, %v11045
    %v11181 = vpack.c.b16 %v11064, %v11055
    %v11182 = vpack.c.b16 %v11065, %v11056
    %v11183 = vpack.c.b16 %v11066, %v11057
    %v11184 = vpack.c.b16 %v11067, %v11058
    %v11185 = vpack.c.b16 %v11068, %v11059
    %v11186 = vpack.c.b16 %v11069, %v11060
    %v11187 = vpack.c.b16 %v11070, %v11061
    %v11188 = vpack.c.b16 %v11071, %v11062
    %v11189 = vpack.c.b16 %v11072, %v11063
    %v11190 = vpack.c.b16 %v11082, %v11073
    %v11191 = vpack.c.b16 %v11083, %v11074
    %v11192 = vpack.c.b16 %v11084, %v11075
    %v11193 = vpack.c.b16 %v11085, %v11076
    %v11194 = vpack.c.b16 %v11086, %v11077
    %v11195 = vpack.c.b16 %v11087, %v11078
    %v11196 = vpack.c.b16 %v11088, %v11079
    %v11197 = vpack.c.b16 %v11089, %v11080
    %v11198 = vpack.c.b16 %v11090, %v11081
    %v11199 = vpack.c.b16 %v11100, %v11091
    %v11200 = vpack.c.b16 %v11101, %v11092
    %v11201 = vpack.c.b16 %v11102, %v11093
    %v11202 = vpack.c.b16 %v11103, %v11094
    %v11203 = vpack.c.b16 %v11104, %v11095
    %v11204 = vpack.c.b16 %v11105, %v11096
    %v11205 = vpack.c.b16 %v11106, %v11097
    %v11206 = vpack.c.b16 %v11107, %v11098
    %v11207 = vpack.c.b16 %v11108, %v11099
    %v11208 = vpack.c.b16 %v11118, %v11109
    %v11209 = vpack.c.b16 %v11119, %v11110
    %v11210 = vpack.c.b16 %v11120, %v11111
    %v11211 = vpack.c.b16 %v11121, %v11112
    %v11212 = vpack.c.b16 %v11122, %v11113
    %v11213 = vpack.c.b16 %v11123, %v11114
    %v11214 = vpack.c.b16 %v11124, %v11115
    %v11215 = vpack.c.b16 %v11125, %v11116
    %v11216 = vpack.c.b16 %v11126, %v11117
    %v11217 = vpack.c.b16 %v11136, %v11127
    %v11218 = vpack.c.b16 %v11137, %v11128
    %v11219 = vpack.c.b16 %v11138, %v11129
    %v11220 = vpack.c.b16 %v11139, %v11130
    %v11221 = vpack.c.b16 %v11140, %v11131
    %v11222 = vpack.c.b16 %v11141, %v11132
    %v11223 = vpack.c.b16 %v11142, %v11133
    %v11224 = vpack.c.b16 %v11143, %v11134
    %v11225 = vpack.c.b16 %v11144, %v11135
    %v11226 = vpack.c.b16 %v11154, %v11145
    %v11227 = vpack.c.b16 %v11155, %v11146
    %v11228 = vpack.c.b16 %v11156, %v11147
    %v11229 = vpack.c.b16 %v11157, %v11148
    %v11230 = vpack.c.b16 %v11158, %v11149
    %v11231 = vpack.c.b16 %v11159, %v11150
    %v11232 = vpack.c.b16 %v11160, %v11151
    %v11233 = vpack.c.b16 %v11161, %v11152
    %v11234 = vpack.c.b16 %v11162, %v11153
    %v11451 = vunpack.c.l.b16 %v10795
    %v11452 = vunpack.c.l.b16 %v10796
    %v11453 = vunpack.c.l.b16 %v10797
    %v11454 = vunpack.c.l.b16 %v10798
    %v11455 = vunpack.c.l.b16 %v10799
    %v11456 = vunpack.c.l.b16 %v10800
    %v11457 = vunpack.c.l.b16 %v10801
    %v11458 = vunpack.c.l.b16 %v10802
    %v11459 = vunpack.c.l.b16 %v10803
    %v11460 = vunpack.c.l.b16 %v10804
    %v11461 = vunpack.c.l.b16 %v10805
    %v11462 = vunpack.c.l.b16 %v10806
    %v11463 = vunpack.c.l.b16 %v10807
    %v11464 = vunpack.c.l.b16 %v10808
    %v11465 = vunpack.c.l.b16 %v10809
    %v11466 = vunpack.c.l.b16 %v10810
    %v11467 = vunpack.c.l.b16 %v10811
    %v11468 = vunpack.c.l.b16 %v10812
    %v11469 = vunpack.c.l.b16 %v10813
    %v11470 = vunpack.c.l.b16 %v10814
    %v11471 = vunpack.c.l.b16 %v10815
    %v11472 = vunpack.c.l.b16 %v10816
    %v11473 = vunpack.c.l.b16 %v10817
    %v11474 = vunpack.c.l.b16 %v10818
    %v11475 = vunpack.c.l.b16 %v10819
    %v11476 = vunpack.c.l.b16 %v10820
    %v11477 = vunpack.c.l.b16 %v10821
    %v11478 = vunpack.c.l.b16 %v10822
    %v11479 = vunpack.c.l.b16 %v10823
    %v11480 = vunpack.c.l.b16 %v10824
    %v11481 = vunpack.c.l.b16 %v10825
    %v11482 = vunpack.c.l.b16 %v10826
    %v11483 = vunpack.c.l.b16 %v10827
    %v11484 = vunpack.c.l.b16 %v10828
    %v11485 = vunpack.c.l.b16 %v10829
    %v11486 = vunpack.c.l.b16 %v10830
    %v11487 = vunpack.c.l.b16 %v10831
    %v11488 = vunpack.c.l.b16 %v10832
    %v11489 = vunpack.c.l.b16 %v10833
    %v11490 = vunpack.c.l.b16 %v10834
    %v11491 = vunpack.c.l.b16 %v10835
    %v11492 = vunpack.c.l.b16 %v10836
    %v11493 = vunpack.c.l.b16 %v10837
    %v11494 = vunpack.c.l.b16 %v10838
    %v11495 = vunpack.c.l.b16 %v10839
    %v11496 = vunpack.c.l.b16 %v10840
    %v11497 = vunpack.c.l.b16 %v10841
    %v11498 = vunpack.c.l.b16 %v10842
    %v11499 = vunpack.c.l.b16 %v10843
    %v11500 = vunpack.c.l.b16 %v10844
    %v11501 = vunpack.c.l.b16 %v10845
    %v11502 = vunpack.c.l.b16 %v10846
    %v11503 = vunpack.c.l.b16 %v10847
    %v11504 = vunpack.c.l.b16 %v10848
    %v11505 = vunpack.c.l.b16 %v10849
    %v11506 = vunpack.c.l.b16 %v10850
    %v11507 = vunpack.c.l.b16 %v10851
    %v11508 = vunpack.c.l.b16 %v10852
    %v11509 = vunpack.c.l.b16 %v10853
    %v11510 = vunpack.c.l.b16 %v10854
    %v11511 = vunpack.c.l.b16 %v10855
    %v11512 = vunpack.c.l.b16 %v10856
    %v11513 = vunpack.c.l.b16 %v10857
    %v11514 = vunpack.c.l.b16 %v10858
    %v11515 = vunpack.c.l.b16 %v10859
    %v11516 = vunpack.c.l.b16 %v10860
    %v11517 = vunpack.c.l.b16 %v10861
    %v11518 = vunpack.c.l.b16 %v10862
    %v11519 = vunpack.c.l.b16 %v10863
    %v11520 = vunpack.c.l.b16 %v10864
    %v11521 = vunpack.c.l.b16 %v10865
    %v11522 = vunpack.c.l.b16 %v10866
    %v11523 = vunpack.c.l.b16 %v10867
    %v11524 = vunpack.c.l.b16 %v10868
    %v11525 = vunpack.c.l.b16 %v10869
    %v11526 = vunpack.c.l.b16 %v10870
    %v11527 = vunpack.c.l.b16 %v10871
    %v11528 = vunpack.c.l.b16 %v10872
    %v11529 = vunpack.c.l.b16 %v10873
    %v11530 = vunpack.c.l.b16 %v10874
    %v11531 = vunpack.c.l.b16 %v10875
    %v11532 = vunpack.c.l.b16 %v10876
    %v11533 = vunpack.c.l.b16 %v10877
    %v11534 = vunpack.c.l.b16 %v10878
    %v11535 = vunpack.c.l.b16 %v10879
    %v11536 = vunpack.c.l.b16 %v10880
    %v11537 = vunpack.c.l.b16 %v10881
    %v11538 = vunpack.c.l.b16 %v10882
    %v11539 = vunpack.c.l.b16 %v10883
    %v11540 = vunpack.c.l.b16 %v10884
    %v11541 = vunpack.c.l.b16 %v10885
    %v11542 = vunpack.c.l.b16 %v10886
    %v11543 = vunpack.c.l.b16 %v10887
    %v11544 = vunpack.c.l.b16 %v10888
    %v11545 = vunpack.c.l.b16 %v10889
    %v11546 = vunpack.c.l.b16 %v10890
    %v11547 = vunpack.c.l.b16 %v10891
    %v11548 = vunpack.c.l.b16 %v10892
    %v11549 = vunpack.c.l.b16 %v10893
    %v11550 = vunpack.c.l.b16 %v10894
    %v11551 = vunpack.c.l.b16 %v10895
    %v11552 = vunpack.c.l.b16 %v10896
    %v11553 = vunpack.c.l.b16 %v10897
    %v11554 = vunpack.c.l.b16 %v10898
    %v11555 = vunpack.c.l.b16 %v10899
    %v11556 = vunpack.c.l.b16 %v10900
    %v11557 = vunpack.c.l.b16 %v10901
    %v11558 = vunpack.c.l.b16 %v10902
    %v11559 = vunpack.c.l.b16 %v10903
    %v11560 = vunpack.c.l.b16 %v10904
    %v11561 = vunpack.c.l.b16 %v10905
    %v11562 = vunpack.c.l.b16 %v10906
    %v11563 = vunpack.c.l.b16 %v10907
    %v11564 = vunpack.c.l.b16 %v10908
    %v11565 = vunpack.c.l.b16 %v10909
    %v11566 = vunpack.c.l.b16 %v10910
    %v11567 = vunpack.c.l.b16 %v10911
    %v11568 = vunpack.c.l.b16 %v10912
    %v11569 = vunpack.c.l.b16 %v10913
    %v11570 = vunpack.c.l.b16 %v10914
    %v11571 = vunpack.c.l.b16 %v10915
    %v11572 = vunpack.c.l.b16 %v10916
    %v11573 = vunpack.c.l.b16 %v10917
    %v11574 = vunpack.c.l.b16 %v10918
    %v11575 = vunpack.c.l.b16 %v10919
    %v11576 = vunpack.c.l.b16 %v10920
    %v11577 = vunpack.c.l.b16 %v10921
    %v11578 = vunpack.c.l.b16 %v10922
    %v11579 = vunpack.c.l.b16 %v10923
    %v11580 = vunpack.c.l.b16 %v10924
    %v11581 = vunpack.c.l.b16 %v10925
    %v11582 = vunpack.c.l.b16 %v10926
    %v11583 = vunpack.c.l.b16 %v10927
    %v11584 = vunpack.c.l.b16 %v10928
    %v11585 = vunpack.c.l.b16 %v10929
    %v11586 = vunpack.c.l.b16 %v10930
    %v11587 = vunpack.c.l.b16 %v10931
    %v11588 = vunpack.c.l.b16 %v10932
    %v11589 = vunpack.c.l.b16 %v10933
    %v11590 = vunpack.c.l.b16 %v10934
    %v11591 = vunpack.c.l.b16 %v10935
    %v11592 = vunpack.c.l.b16 %v10936
    %v11593 = vunpack.c.l.b16 %v10937
    %v11594 = vunpack.c.l.b16 %v10938
    %v11595 = vpack.c.b16 %v11452, %v11451
    %v11596 = vpack.c.b16 %v11454, %v11453
    %v11597 = vpack.c.b16 %v11456, %v11455
    %v11598 = vpack.c.b16 %v11458, %v11457
    %v11599 = vpack.c.b16 %v11460, %v11459
    %v11600 = vpack.c.b16 %v11462, %v11461
    %v11601 = vpack.c.b16 %v11464, %v11463
    %v11602 = vpack.c.b16 %v11466, %v11465
    %v11603 = vpack.c.b16 %v11468, %v11467
    %v11604 = vpack.c.b16 %v11470, %v11469
    %v11605 = vpack.c.b16 %v11472, %v11471
    %v11606 = vpack.c.b16 %v11474, %v11473
    %v11607 = vpack.c.b16 %v11476, %v11475
    %v11608 = vpack.c.b16 %v11478, %v11477
    %v11609 = vpack.c.b16 %v11480, %v11479
    %v11610 = vpack.c.b16 %v11482, %v11481
    %v11611 = vpack.c.b16 %v11484, %v11483
    %v11612 = vpack.c.b16 %v11486, %v11485
    %v11613 = vpack.c.b16 %v11488, %v11487
    %v11614 = vpack.c.b16 %v11490, %v11489
    %v11615 = vpack.c.b16 %v11492, %v11491
    %v11616 = vpack.c.b16 %v11494, %v11493
    %v11617 = vpack.c.b16 %v11496, %v11495
    %v11618 = vpack.c.b16 %v11498, %v11497
    %v11619 = vpack.c.b16 %v11500, %v11499
    %v11620 = vpack.c.b16 %v11502, %v11501
    %v11621 = vpack.c.b16 %v11504, %v11503
    %v11622 = vpack.c.b16 %v11506, %v11505
    %v11623 = vpack.c.b16 %v11508, %v11507
    %v11624 = vpack.c.b16 %v11510, %v11509
    %v11625 = vpack.c.b16 %v11512, %v11511
    %v11626 = vpack.c.b16 %v11514, %v11513
    %v11627 = vpack.c.b16 %v11516, %v11515
    %v11628 = vpack.c.b16 %v11518, %v11517
    %v11629 = vpack.c.b16 %v11520, %v11519
    %v11630 = vpack.c.b16 %v11522, %v11521
    %v11631 = vpack.c.b16 %v11524, %v11523
    %v11632 = vpack.c.b16 %v11526, %v11525
    %v11633 = vpack.c.b16 %v11528, %v11527
    %v11634 = vpack.c.b16 %v11530, %v11529
    %v11635 = vpack.c.b16 %v11532, %v11531
    %v11636 = vpack.c.b16 %v11534, %v11533
    %v11637 = vpack.c.b16 %v11536, %v11535
    %v11638 = vpack.c.b16 %v11538, %v11537
    %v11639 = vpack.c.b16 %v11540, %v11539
    %v11640 = vpack.c.b16 %v11542, %v11541
    %v11641 = vpack.c.b16 %v11544, %v11543
    %v11642 = vpack.c.b16 %v11546, %v11545
    %v11643 = vpack.c.b16 %v11548, %v11547
    %v11644 = vpack.c.b16 %v11550, %v11549
    %v11645 = vpack.c.b16 %v11552, %v11551
    %v11646 = vpack.c.b16 %v11554, %v11553
    %v11647 = vpack.c.b16 %v11556, %v11555
    %v11648 = vpack.c.b16 %v11558, %v11557
    %v11649 = vpack.c.b16 %v11560, %v11559
    %v11650 = vpack.c.b16 %v11562, %v11561
    %v11651 = vpack.c.b16 %v11564, %v11563
    %v11652 = vpack.c.b16 %v11566, %v11565
    %v11653 = vpack.c.b16 %v11568, %v11567
    %v11654 = vpack.c.b16 %v11570, %v11569
    %v11655 = vpack.c.b16 %v11572, %v11571
    %v11656 = vpack.c.b16 %v11574, %v11573
    %v11657 = vpack.c.b16 %v11576, %v11575
    %v11658 = vpack.c.b16 %v11578, %v11577
    %v11659 = vpack.c.b16 %v11580, %v11579
    %v11660 = vpack.c.b16 %v11582, %v11581
    %v11661 = vpack.c.b16 %v11584, %v11583
    %v11662 = vpack.c.b16 %v11586, %v11585
    %v11663 = vpack.c.b16 %v11588, %v11587
    %v11664 = vpack.c.b16 %v11590, %v11589
    %v11665 = vpack.c.b16 %v11592, %v11591
    %v11666 = vpack.c.b16 %v11594, %v11593
    %11739 = vmatpush.bf16.msra.mxu0 %v11602
    %11740 = vmatpush.bf16.msra.mxu0 %v11601
    %11741 = vmatpush.bf16.msra.mxu0 %v11600
    %11742 = vmatpush.bf16.msra.mxu0 %v11599
    %11743 = vmatpush.bf16.msra.mxu0 %v11598
    %11744 = vmatpush.bf16.msra.mxu0 %v11597
    %11745 = vmatpush.bf16.msra.mxu0 %v11596
    %11746 = vmatpush.bf16.msra.mxu0 %v11595
    %11747 = vmatmul.bf16.gmra.mxu0 %v11163
    %v11748 = vpop.f32.mrf.mxu0
    %v11749 = vadd.f32 0.0, %v11748
    %v11750 = vpop.f32.mrf.mxu0
    %v11751 = vadd.f32 0.0, %v11750
    %11752 = vmatmul.bf16.gmra.mxu0 %v11172
    %v11753 = vpop.f32.mrf.mxu0
    %v11754 = vadd.f32 0.0, %v11753
    %v11755 = vpop.f32.mrf.mxu0
    %v11756 = vadd.f32 0.0, %v11755
    %11757 = vmatmul.bf16.gmra.mxu0 %v11181
    %v11758 = vpop.f32.mrf.mxu0
    %v11759 = vadd.f32 0.0, %v11758
    %v11760 = vpop.f32.mrf.mxu0
    %v11761 = vadd.f32 0.0, %v11760
    %11762 = vmatmul.bf16.gmra.mxu0 %v11190
    %v11763 = vpop.f32.mrf.mxu0
    %v11764 = vadd.f32 0.0, %v11763
    %v11765 = vpop.f32.mrf.mxu0
    %v11766 = vadd.f32 0.0, %v11765
    %11767 = vmatmul.bf16.gmra.mxu0 %v11199
    %v11768 = vpop.f32.mrf.mxu0
    %v11769 = vadd.f32 0.0, %v11768
    %v11770 = vpop.f32.mrf.mxu0
    %v11771 = vadd.f32 0.0, %v11770
    %11772 = vmatmul.bf16.gmra.mxu0 %v11208
    %v11773 = vpop.f32.mrf.mxu0
    %v11774 = vadd.f32 0.0, %v11773
    %v11775 = vpop.f32.mrf.mxu0
    %v11776 = vadd.f32 0.0, %v11775
    %11777 = vmatmul.bf16.gmra.mxu0 %v11217
    %v11778 = vpop.f32.mrf.mxu0
    %v11779 = vadd.f32 0.0, %v11778
    %v11780 = vpop.f32.mrf.mxu0
    %v11781 = vadd.f32 0.0, %v11780
    %11782 = vmatmul.bf16.gmra.mxu0 %v11226
    %v11783 = vpop.f32.mrf.mxu0
    %v11784 = vadd.f32 0.0, %v11783
    %v11785 = vpop.f32.mrf.mxu0
    %v11786 = vadd.f32 0.0, %v11785
    %11787 = vdwg.mxu0
    %11788 = vmatpush.bf16.msra.mxu0 %v11610
    %11789 = vmatpush.bf16.msra.mxu0 %v11609
    %11790 = vmatpush.bf16.msra.mxu0 %v11608
    %11791 = vmatpush.bf16.msra.mxu0 %v11607
    %11792 = vmatpush.bf16.msra.mxu0 %v11606
    %11793 = vmatpush.bf16.msra.mxu0 %v11605
    %11794 = vmatpush.bf16.msra.mxu0 %v11604
    %11795 = vmatpush.bf16.msra.mxu0 %v11603
    %11796 = vmatmul.bf16.gmra.mxu0 %v11164
    %v11797 = vpop.f32.mrf.mxu0
    %v11798 = vadd.f32 %v11749, %v11797
    %v11799 = vpop.f32.mrf.mxu0
    %v11800 = vadd.f32 %v11751, %v11799
    %11801 = vmatmul.bf16.gmra.mxu0 %v11173
    %v11802 = vpop.f32.mrf.mxu0
    %v11803 = vadd.f32 %v11754, %v11802
    %v11804 = vpop.f32.mrf.mxu0
    %v11805 = vadd.f32 %v11756, %v11804
    %11806 = vmatmul.bf16.gmra.mxu0 %v11182
    %v11807 = vpop.f32.mrf.mxu0
    %v11808 = vadd.f32 %v11759, %v11807
    %v11809 = vpop.f32.mrf.mxu0
    %v11810 = vadd.f32 %v11761, %v11809
    %11811 = vmatmul.bf16.gmra.mxu0 %v11191
    %v11812 = vpop.f32.mrf.mxu0
    %v11813 = vadd.f32 %v11764, %v11812
    %v11814 = vpop.f32.mrf.mxu0
    %v11815 = vadd.f32 %v11766, %v11814
    %11816 = vmatmul.bf16.gmra.mxu0 %v11200
    %v11817 = vpop.f32.mrf.mxu0
    %v11818 = vadd.f32 %v11769, %v11817
    %v11819 = vpop.f32.mrf.mxu0
    %v11820 = vadd.f32 %v11771, %v11819
    %11821 = vmatmul.bf16.gmra.mxu0 %v11209
    %v11822 = vpop.f32.mrf.mxu0
    %v11823 = vadd.f32 %v11774, %v11822
    %v11824 = vpop.f32.mrf.mxu0
    %v11825 = vadd.f32 %v11776, %v11824
    %11826 = vmatmul.bf16.gmra.mxu0 %v11218
    %v11827 = vpop.f32.mrf.mxu0
    %v11828 = vadd.f32 %v11779, %v11827
    %v11829 = vpop.f32.mrf.mxu0
    %v11830 = vadd.f32 %v11781, %v11829
    %11831 = vmatmul.bf16.gmra.mxu0 %v11227
    %v11832 = vpop.f32.mrf.mxu0
    %v11833 = vadd.f32 %v11784, %v11832
    %v11834 = vpop.f32.mrf.mxu0
    %v11835 = vadd.f32 %v11786, %v11834
    %11836 = vdwg.mxu0
    %11837 = vmatpush.bf16.msra.mxu0 %v11618
    %11838 = vmatpush.bf16.msra.mxu0 %v11617
    %11839 = vmatpush.bf16.msra.mxu0 %v11616
    %11840 = vmatpush.bf16.msra.mxu0 %v11615
    %11841 = vmatpush.bf16.msra.mxu0 %v11614
    %11842 = vmatpush.bf16.msra.mxu0 %v11613
    %11843 = vmatpush.bf16.msra.mxu0 %v11612
    %11844 = vmatpush.bf16.msra.mxu0 %v11611
    %11845 = vmatmul.bf16.gmra.mxu0 %v11165
    %v11846 = vpop.f32.mrf.mxu0
    %v11847 = vadd.f32 %v11798, %v11846
    %v11848 = vpop.f32.mrf.mxu0
    %v11849 = vadd.f32 %v11800, %v11848
    %11850 = vmatmul.bf16.gmra.mxu0 %v11174
    %v11851 = vpop.f32.mrf.mxu0
    %v11852 = vadd.f32 %v11803, %v11851
    %v11853 = vpop.f32.mrf.mxu0
    %v11854 = vadd.f32 %v11805, %v11853
    %11855 = vmatmul.bf16.gmra.mxu0 %v11183
    %v11856 = vpop.f32.mrf.mxu0
    %v11857 = vadd.f32 %v11808, %v11856
    %v11858 = vpop.f32.mrf.mxu0
    %v11859 = vadd.f32 %v11810, %v11858
    %11860 = vmatmul.bf16.gmra.mxu0 %v11192
    %v11861 = vpop.f32.mrf.mxu0
    %v11862 = vadd.f32 %v11813, %v11861
    %v11863 = vpop.f32.mrf.mxu0
    %v11864 = vadd.f32 %v11815, %v11863
    %11865 = vmatmul.bf16.gmra.mxu0 %v11201
    %v11866 = vpop.f32.mrf.mxu0
    %v11867 = vadd.f32 %v11818, %v11866
    %v11868 = vpop.f32.mrf.mxu0
    %v11869 = vadd.f32 %v11820, %v11868
    %11870 = vmatmul.bf16.gmra.mxu0 %v11210
    %v11871 = vpop.f32.mrf.mxu0
    %v11872 = vadd.f32 %v11823, %v11871
    %v11873 = vpop.f32.mrf.mxu0
    %v11874 = vadd.f32 %v11825, %v11873
    %11875 = vmatmul.bf16.gmra.mxu0 %v11219
    %v11876 = vpop.f32.mrf.mxu0
    %v11877 = vadd.f32 %v11828, %v11876
    %v11878 = vpop.f32.mrf.mxu0
    %v11879 = vadd.f32 %v11830, %v11878
    %11880 = vmatmul.bf16.gmra.mxu0 %v11228
    %v11881 = vpop.f32.mrf.mxu0
    %v11882 = vadd.f32 %v11833, %v11881
    %v11883 = vpop.f32.mrf.mxu0
    %v11884 = vadd.f32 %v11835, %v11883
    %11885 = vdwg.mxu0
    %11886 = vmatpush.bf16.msra.mxu0 %v11626
    %11887 = vmatpush.bf16.msra.mxu0 %v11625
    %11888 = vmatpush.bf16.msra.mxu0 %v11624
    %11889 = vmatpush.bf16.msra.mxu0 %v11623
    %11890 = vmatpush.bf16.msra.mxu0 %v11622
    %11891 = vmatpush.bf16.msra.mxu0 %v11621
    %11892 = vmatpush.bf16.msra.mxu0 %v11620
    %11893 = vmatpush.bf16.msra.mxu0 %v11619
    %11894 = vmatmul.bf16.gmra.mxu0 %v11166
    %v11895 = vpop.f32.mrf.mxu0
    %v11896 = vadd.f32 %v11847, %v11895
    %v11897 = vpop.f32.mrf.mxu0
    %v11898 = vadd.f32 %v11849, %v11897
    %11899 = vmatmul.bf16.gmra.mxu0 %v11175
    %v11900 = vpop.f32.mrf.mxu0
    %v11901 = vadd.f32 %v11852, %v11900
    %v11902 = vpop.f32.mrf.mxu0
    %v11903 = vadd.f32 %v11854, %v11902
    %11904 = vmatmul.bf16.gmra.mxu0 %v11184
    %v11905 = vpop.f32.mrf.mxu0
    %v11906 = vadd.f32 %v11857, %v11905
    %v11907 = vpop.f32.mrf.mxu0
    %v11908 = vadd.f32 %v11859, %v11907
    %11909 = vmatmul.bf16.gmra.mxu0 %v11193
    %v11910 = vpop.f32.mrf.mxu0
    %v11911 = vadd.f32 %v11862, %v11910
    %v11912 = vpop.f32.mrf.mxu0
    %v11913 = vadd.f32 %v11864, %v11912
    %11914 = vmatmul.bf16.gmra.mxu0 %v11202
    %v11915 = vpop.f32.mrf.mxu0
    %v11916 = vadd.f32 %v11867, %v11915
    %v11917 = vpop.f32.mrf.mxu0
    %v11918 = vadd.f32 %v11869, %v11917
    %11919 = vmatmul.bf16.gmra.mxu0 %v11211
    %v11920 = vpop.f32.mrf.mxu0
    %v11921 = vadd.f32 %v11872, %v11920
    %v11922 = vpop.f32.mrf.mxu0
    %v11923 = vadd.f32 %v11874, %v11922
    %11924 = vmatmul.bf16.gmra.mxu0 %v11220
    %v11925 = vpop.f32.mrf.mxu0
    %v11926 = vadd.f32 %v11877, %v11925
    %v11927 = vpop.f32.mrf.mxu0
    %v11928 = vadd.f32 %v11879, %v11927
    %11929 = vmatmul.bf16.gmra.mxu0 %v11229
    %v11930 = vpop.f32.mrf.mxu0
    %v11931 = vadd.f32 %v11882, %v11930
    %v11932 = vpop.f32.mrf.mxu0
    %v11933 = vadd.f32 %v11884, %v11932
    %11934 = vdwg.mxu0
    %11935 = vmatpush.bf16.msra.mxu0 %v11634
    %11936 = vmatpush.bf16.msra.mxu0 %v11633
    %11937 = vmatpush.bf16.msra.mxu0 %v11632
    %11938 = vmatpush.bf16.msra.mxu0 %v11631
    %11939 = vmatpush.bf16.msra.mxu0 %v11630
    %11940 = vmatpush.bf16.msra.mxu0 %v11629
    %11941 = vmatpush.bf16.msra.mxu0 %v11628
    %11942 = vmatpush.bf16.msra.mxu0 %v11627
    %11943 = vmatmul.bf16.gmra.mxu0 %v11167
    %v11944 = vpop.f32.mrf.mxu0
    %v11945 = vadd.f32 %v11896, %v11944
    %v11946 = vpop.f32.mrf.mxu0
    %v11947 = vadd.f32 %v11898, %v11946
    %11948 = vmatmul.bf16.gmra.mxu0 %v11176
    %v11949 = vpop.f32.mrf.mxu0
    %v11950 = vadd.f32 %v11901, %v11949
    %v11951 = vpop.f32.mrf.mxu0
    %v11952 = vadd.f32 %v11903, %v11951
    %11953 = vmatmul.bf16.gmra.mxu0 %v11185
    %v11954 = vpop.f32.mrf.mxu0
    %v11955 = vadd.f32 %v11906, %v11954
    %v11956 = vpop.f32.mrf.mxu0
    %v11957 = vadd.f32 %v11908, %v11956
    %11958 = vmatmul.bf16.gmra.mxu0 %v11194
    %v11959 = vpop.f32.mrf.mxu0
    %v11960 = vadd.f32 %v11911, %v11959
    %v11961 = vpop.f32.mrf.mxu0
    %v11962 = vadd.f32 %v11913, %v11961
    %11963 = vmatmul.bf16.gmra.mxu0 %v11203
    %v11964 = vpop.f32.mrf.mxu0
    %v11965 = vadd.f32 %v11916, %v11964
    %v11966 = vpop.f32.mrf.mxu0
    %v11967 = vadd.f32 %v11918, %v11966
    %11968 = vmatmul.bf16.gmra.mxu0 %v11212
    %v11969 = vpop.f32.mrf.mxu0
    %v11970 = vadd.f32 %v11921, %v11969
    %v11971 = vpop.f32.mrf.mxu0
    %v11972 = vadd.f32 %v11923, %v11971
    %11973 = vmatmul.bf16.gmra.mxu0 %v11221
    %v11974 = vpop.f32.mrf.mxu0
    %v11975 = vadd.f32 %v11926, %v11974
    %v11976 = vpop.f32.mrf.mxu0
    %v11977 = vadd.f32 %v11928, %v11976
    %11978 = vmatmul.bf16.gmra.mxu0 %v11230
    %v11979 = vpop.f32.mrf.mxu0
    %v11980 = vadd.f32 %v11931, %v11979
    %v11981 = vpop.f32.mrf.mxu0
    %v11982 = vadd.f32 %v11933, %v11981
    %11983 = vdwg.mxu0
    %11984 = vmatpush.bf16.msra.mxu0 %v11642
    %11985 = vmatpush.bf16.msra.mxu0 %v11641
    %11986 = vmatpush.bf16.msra.mxu0 %v11640
    %11987 = vmatpush.bf16.msra.mxu0 %v11639
    %11988 = vmatpush.bf16.msra.mxu0 %v11638
    %11989 = vmatpush.bf16.msra.mxu0 %v11637
    %11990 = vmatpush.bf16.msra.mxu0 %v11636
    %11991 = vmatpush.bf16.msra.mxu0 %v11635
    %11992 = vmatmul.bf16.gmra.mxu0 %v11168
    %v11993 = vpop.f32.mrf.mxu0
    %v11994 = vadd.f32 %v11945, %v11993
    %v11995 = vpop.f32.mrf.mxu0
    %v11996 = vadd.f32 %v11947, %v11995
    %11997 = vmatmul.bf16.gmra.mxu0 %v11177
    %v11998 = vpop.f32.mrf.mxu0
    %v11999 = vadd.f32 %v11950, %v11998
    %v12000 = vpop.f32.mrf.mxu0
    %v12001 = vadd.f32 %v11952, %v12000
    %12002 = vmatmul.bf16.gmra.mxu0 %v11186
    %v12003 = vpop.f32.mrf.mxu0
    %v12004 = vadd.f32 %v11955, %v12003
    %v12005 = vpop.f32.mrf.mxu0
    %v12006 = vadd.f32 %v11957, %v12005
    %12007 = vmatmul.bf16.gmra.mxu0 %v11195
    %v12008 = vpop.f32.mrf.mxu0
    %v12009 = vadd.f32 %v11960, %v12008
    %v12010 = vpop.f32.mrf.mxu0
    %v12011 = vadd.f32 %v11962, %v12010
    %12012 = vmatmul.bf16.gmra.mxu0 %v11204
    %v12013 = vpop.f32.mrf.mxu0
    %v12014 = vadd.f32 %v11965, %v12013
    %v12015 = vpop.f32.mrf.mxu0
    %v12016 = vadd.f32 %v11967, %v12015
    %12017 = vmatmul.bf16.gmra.mxu0 %v11213
    %v12018 = vpop.f32.mrf.mxu0
    %v12019 = vadd.f32 %v11970, %v12018
    %v12020 = vpop.f32.mrf.mxu0
    %v12021 = vadd.f32 %v11972, %v12020
    %12022 = vmatmul.bf16.gmra.mxu0 %v11222
    %v12023 = vpop.f32.mrf.mxu0
    %v12024 = vadd.f32 %v11975, %v12023
    %v12025 = vpop.f32.mrf.mxu0
    %v12026 = vadd.f32 %v11977, %v12025
    %12027 = vmatmul.bf16.gmra.mxu0 %v11231
    %v12028 = vpop.f32.mrf.mxu0
    %v12029 = vadd.f32 %v11980, %v12028
    %v12030 = vpop.f32.mrf.mxu0
    %v12031 = vadd.f32 %v11982, %v12030
    %12032 = vdwg.mxu0
    %12033 = vmatpush.bf16.msra.mxu0 %v11650
    %12034 = vmatpush.bf16.msra.mxu0 %v11649
    %12035 = vmatpush.bf16.msra.mxu0 %v11648
    %12036 = vmatpush.bf16.msra.mxu0 %v11647
    %12037 = vmatpush.bf16.msra.mxu0 %v11646
    %12038 = vmatpush.bf16.msra.mxu0 %v11645
    %12039 = vmatpush.bf16.msra.mxu0 %v11644
    %12040 = vmatpush.bf16.msra.mxu0 %v11643
    %12041 = vmatmul.bf16.gmra.mxu0 %v11169
    %v12042 = vpop.f32.mrf.mxu0
    %v12043 = vadd.f32 %v11994, %v12042
    %v12044 = vpop.f32.mrf.mxu0
    %v12045 = vadd.f32 %v11996, %v12044
    %12046 = vmatmul.bf16.gmra.mxu0 %v11178
    %v12047 = vpop.f32.mrf.mxu0
    %v12048 = vadd.f32 %v11999, %v12047
    %v12049 = vpop.f32.mrf.mxu0
    %v12050 = vadd.f32 %v12001, %v12049
    %12051 = vmatmul.bf16.gmra.mxu0 %v11187
    %v12052 = vpop.f32.mrf.mxu0
    %v12053 = vadd.f32 %v12004, %v12052
    %v12054 = vpop.f32.mrf.mxu0
    %v12055 = vadd.f32 %v12006, %v12054
    %12056 = vmatmul.bf16.gmra.mxu0 %v11196
    %v12057 = vpop.f32.mrf.mxu0
    %v12058 = vadd.f32 %v12009, %v12057
    %v12059 = vpop.f32.mrf.mxu0
    %v12060 = vadd.f32 %v12011, %v12059
    %12061 = vmatmul.bf16.gmra.mxu0 %v11205
    %v12062 = vpop.f32.mrf.mxu0
    %v12063 = vadd.f32 %v12014, %v12062
    %v12064 = vpop.f32.mrf.mxu0
    %v12065 = vadd.f32 %v12016, %v12064
    %12066 = vmatmul.bf16.gmra.mxu0 %v11214
    %v12067 = vpop.f32.mrf.mxu0
    %v12068 = vadd.f32 %v12019, %v12067
    %v12069 = vpop.f32.mrf.mxu0
    %v12070 = vadd.f32 %v12021, %v12069
    %12071 = vmatmul.bf16.gmra.mxu0 %v11223
    %v12072 = vpop.f32.mrf.mxu0
    %v12073 = vadd.f32 %v12024, %v12072
    %v12074 = vpop.f32.mrf.mxu0
    %v12075 = vadd.f32 %v12026, %v12074
    %12076 = vmatmul.bf16.gmra.mxu0 %v11232
    %v12077 = vpop.f32.mrf.mxu0
    %v12078 = vadd.f32 %v12029, %v12077
    %v12079 = vpop.f32.mrf.mxu0
    %v12080 = vadd.f32 %v12031, %v12079
    %12081 = vdwg.mxu0
    %12082 = vmatpush.bf16.msra.mxu0 %v11658
    %12083 = vmatpush.bf16.msra.mxu0 %v11657
    %12084 = vmatpush.bf16.msra.mxu0 %v11656
    %12085 = vmatpush.bf16.msra.mxu0 %v11655
    %12086 = vmatpush.bf16.msra.mxu0 %v11654
    %12087 = vmatpush.bf16.msra.mxu0 %v11653
    %12088 = vmatpush.bf16.msra.mxu0 %v11652
    %12089 = vmatpush.bf16.msra.mxu0 %v11651
    %12090 = vmatmul.bf16.gmra.mxu0 %v11170
    %v12091 = vpop.f32.mrf.mxu0
    %v12092 = vadd.f32 %v12043, %v12091
    %v12093 = vpop.f32.mrf.mxu0
    %v12094 = vadd.f32 %v12045, %v12093
    %12095 = vmatmul.bf16.gmra.mxu0 %v11179
    %v12096 = vpop.f32.mrf.mxu0
    %v12097 = vadd.f32 %v12048, %v12096
    %v12098 = vpop.f32.mrf.mxu0
    %v12099 = vadd.f32 %v12050, %v12098
    %12100 = vmatmul.bf16.gmra.mxu0 %v11188
    %v12101 = vpop.f32.mrf.mxu0
    %v12102 = vadd.f32 %v12053, %v12101
    %v12103 = vpop.f32.mrf.mxu0
    %v12104 = vadd.f32 %v12055, %v12103
    %12105 = vmatmul.bf16.gmra.mxu0 %v11197
    %v12106 = vpop.f32.mrf.mxu0
    %v12107 = vadd.f32 %v12058, %v12106
    %v12108 = vpop.f32.mrf.mxu0
    %v12109 = vadd.f32 %v12060, %v12108
    %12110 = vmatmul.bf16.gmra.mxu0 %v11206
    %v12111 = vpop.f32.mrf.mxu0
    %v12112 = vadd.f32 %v12063, %v12111
    %v12113 = vpop.f32.mrf.mxu0
    %v12114 = vadd.f32 %v12065, %v12113
    %12115 = vmatmul.bf16.gmra.mxu0 %v11215
    %v12116 = vpop.f32.mrf.mxu0
    %v12117 = vadd.f32 %v12068, %v12116
    %v12118 = vpop.f32.mrf.mxu0
    %v12119 = vadd.f32 %v12070, %v12118
    %12120 = vmatmul.bf16.gmra.mxu0 %v11224
    %v12121 = vpop.f32.mrf.mxu0
    %v12122 = vadd.f32 %v12073, %v12121
    %v12123 = vpop.f32.mrf.mxu0
    %v12124 = vadd.f32 %v12075, %v12123
    %12125 = vmatmul.bf16.gmra.mxu0 %v11233
    %v12126 = vpop.f32.mrf.mxu0
    %v12127 = vadd.f32 %v12078, %v12126
    %v12128 = vpop.f32.mrf.mxu0
    %v12129 = vadd.f32 %v12080, %v12128
    %12130 = vdwg.mxu0
    %12131 = vmatpush.bf16.msra.mxu0 %v11666
    %12132 = vmatpush.bf16.msra.mxu0 %v11665
    %12133 = vmatpush.bf16.msra.mxu0 %v11664
    %12134 = vmatpush.bf16.msra.mxu0 %v11663
    %12135 = vmatpush.bf16.msra.mxu0 %v11662
    %12136 = vmatpush.bf16.msra.mxu0 %v11661
    %12137 = vmatpush.bf16.msra.mxu0 %v11660
    %12138 = vmatpush.bf16.msra.mxu0 %v11659
    %12139 = vmatmul.bf16.gmra.mxu0 %v11171
    %v12140 = vpop.f32.mrf.mxu0
    %v12141 = vadd.f32 %v12092, %v12140
    %v12142 = vpop.f32.mrf.mxu0
    %v12143 = vadd.f32 %v12094, %v12142
    %12144 = vmatmul.bf16.gmra.mxu0 %v11180
    %v12145 = vpop.f32.mrf.mxu0
    %v12146 = vadd.f32 %v12097, %v12145
    %v12147 = vpop.f32.mrf.mxu0
    %v12148 = vadd.f32 %v12099, %v12147
    %12149 = vmatmul.bf16.gmra.mxu0 %v11189
    %v12150 = vpop.f32.mrf.mxu0
    %v12151 = vadd.f32 %v12102, %v12150
    %v12152 = vpop.f32.mrf.mxu0
    %v12153 = vadd.f32 %v12104, %v12152
    %12154 = vmatmul.bf16.gmra.mxu0 %v11198
    %v12155 = vpop.f32.mrf.mxu0
    %v12156 = vadd.f32 %v12107, %v12155
    %v12157 = vpop.f32.mrf.mxu0
    %v12158 = vadd.f32 %v12109, %v12157
    %12159 = vmatmul.bf16.gmra.mxu0 %v11207
    %v12160 = vpop.f32.mrf.mxu0
    %v12161 = vadd.f32 %v12112, %v12160
    %v12162 = vpop.f32.mrf.mxu0
    %v12163 = vadd.f32 %v12114, %v12162
    %12164 = vmatmul.bf16.gmra.mxu0 %v11216
    %v12165 = vpop.f32.mrf.mxu0
    %v12166 = vadd.f32 %v12117, %v12165
    %v12167 = vpop.f32.mrf.mxu0
    %v12168 = vadd.f32 %v12119, %v12167
    %12169 = vmatmul.bf16.gmra.mxu0 %v11225
    %v12170 = vpop.f32.mrf.mxu0
    %v12171 = vadd.f32 %v12122, %v12170
    %v12172 = vpop.f32.mrf.mxu0
    %v12173 = vadd.f32 %v12124, %v12172
    %12174 = vmatmul.bf16.gmra.mxu0 %v11234
    %v12175 = vpop.f32.mrf.mxu0
    %v12176 = vadd.f32 %v12127, %v12175
    %v12177 = vpop.f32.mrf.mxu0
    %v12178 = vadd.f32 %v12129, %v12177
    %12179 = vdwg.mxu0
    %12180 = vst [vmem:[#allocation4 + $0x180] sm:$0xff] %v12141
    %12181 = vst [vmem:[#allocation4 + $0x188] sm:$0xff] %v12143
    %12182 = vst [vmem:[#allocation4 + $0x190] sm:$0xff] %v12146
    %12183 = vst [vmem:[#allocation4 + $0x198] sm:$0xff] %v12148
    %12184 = vst [vmem:[#allocation4 + $0x1a0] sm:$0xff] %v12151
    %12185 = vst [vmem:[#allocation4 + $0x1a8] sm:$0xff] %v12153
    %12186 = vst [vmem:[#allocation4 + $0x1b0] sm:$0xff] %v12156
    %12187 = vst [vmem:[#allocation4 + $0x1b8] sm:$0xff] %v12158
    %12188 = vst [vmem:[#allocation4 + $0x1c0] sm:$0xff] %v12161
    %12189 = vst [vmem:[#allocation4 + $0x1c8] sm:$0xff] %v12163
    %12190 = vst [vmem:[#allocation4 + $0x1d0] sm:$0xff] %v12166
    %12191 = vst [vmem:[#allocation4 + $0x1d8] sm:$0xff] %v12168
    %12192 = vst [vmem:[#allocation4 + $0x1e0] sm:$0xff] %v12171
    %12193 = vst [vmem:[#allocation4 + $0x1e8] sm:$0xff] %v12173
    %12194 = vst [vmem:[#allocation4 + $0x1f0] sm:$0xff] %v12176
    %12195 = vst [vmem:[#allocation4 + $0x1f8] sm:$0xff] %v12178
    %v12196 = vadd.f32 %v12141, %v12143
    %v12197 = vadd.f32 %v12196, %v12146
    %v12198 = vadd.f32 %v12197, %v12148
    %v12199 = vadd.f32 %v12198, %v12151
    %v12200 = vadd.f32 %v12199, %v12153
    %v12201 = vadd.f32 %v12200, %v12156
    %v12202 = vadd.f32 %v12201, %v12158
    %v12203 = vadd.f32 %v12202, %v12161
    %v12204 = vadd.f32 %v12203, %v12163
    %v12205 = vadd.f32 %v12204, %v12166
    %v12206 = vadd.f32 %v12205, %v12168
    %v12207 = vadd.f32 %v12206, %v12171
    %v12208 = vadd.f32 %v12207, %v12173
    %v12209 = vadd.f32 %v12208, %v12176
    %v12210 = vadd.f32 %v12209, %v12178
    %v12211 = vrot.slane %v12210, 4
    %v12212 = vadd.f32 %v12210, %v12211
    %v12213 = vrot.slane %v12212, 2
    %v12214 = vadd.f32 %v12212, %v12213
    %v12215 = vrot.slane %v12214, 1
    %v12216 = vadd.f32 %v12214, %v12215
    %v12217 = vadd.f32 %v10676, %v12216
    %v12218 = vmul.f32 %v12141, %v12141
    %v12219 = vmul.f32 %v12143, %v12143
    %v12220 = vmul.f32 %v12146, %v12146
    %v12221 = vmul.f32 %v12148, %v12148
    %v12222 = vmul.f32 %v12151, %v12151
    %v12223 = vmul.f32 %v12153, %v12153
    %v12224 = vmul.f32 %v12156, %v12156
    %v12225 = vmul.f32 %v12158, %v12158
    %v12226 = vmul.f32 %v12161, %v12161
    %v12227 = vmul.f32 %v12163, %v12163
    %v12228 = vmul.f32 %v12166, %v12166
    %v12229 = vmul.f32 %v12168, %v12168
    %v12230 = vmul.f32 %v12171, %v12171
    %v12231 = vmul.f32 %v12173, %v12173
    %v12232 = vmul.f32 %v12176, %v12176
    %v12233 = vmul.f32 %v12178, %v12178
    %v12234 = vadd.f32 %v12218, %v12219
    %v12235 = vadd.f32 %v12234, %v12220
    %v12236 = vadd.f32 %v12235, %v12221
    %v12237 = vadd.f32 %v12236, %v12222
    %v12238 = vadd.f32 %v12237, %v12223
    %v12239 = vadd.f32 %v12238, %v12224
    %v12240 = vadd.f32 %v12239, %v12225
    %v12241 = vadd.f32 %v12240, %v12226
    %v12242 = vadd.f32 %v12241, %v12227
    %v12243 = vadd.f32 %v12242, %v12228
    %v12244 = vadd.f32 %v12243, %v12229
    %v12245 = vadd.f32 %v12244, %v12230
    %v12246 = vadd.f32 %v12245, %v12231
    %v12247 = vadd.f32 %v12246, %v12232
    %v12248 = vadd.f32 %v12247, %v12233
    %v12249 = vrot.slane %v12248, 4
    %v12250 = vadd.f32 %v12248, %v12249
    %v12251 = vrot.slane %v12250, 2
    %v12252 = vadd.f32 %v12250, %v12251
    %v12253 = vrot.slane %v12252, 1
    %v12254 = vadd.f32 %v12252, %v12253
    %v12255 = vadd.f32 %v10714, %v12254
    %v12256 = vmul.f32 %v12217, 0.001953125
    %v12257 = vmul.f32 %v12255, 0.001953125
    %v12258 = vmul.f32 %v12256, %v12256
    %v12259 = vsub.f32 %v12257, %v12258
    %v12260 = vadd.f32 %v12259, 1e-05
    %v12261 = vrsqrt.pop %v12260
    %v12262 = vmul.f32 %v12261, %v12260
    %v12263 = vmul.f32 %v12262, %v12261
    %v12264 = vmul.f32 0.5, %v12263
    %v12265 = vsub.f32 1.5, %v12264
    %v12266 = vmul.f32 %v12261, %v12265
    %vm12267 = vweird.f32 %v12260
    %vm12268 = vweird.f32 %v12261
    %vm12269 = vmor %vm12267, %vm12268
    %v12270 = vsel %vm12269, %v12261, %v12266
    %v12271 = vld [vmem:[#allocation4] sm:$0xff]
    %v12272 = vld [vmem:[#allocation4 + $0x8] sm:$0xff]
    %v12273 = vld [vmem:[#allocation4 + $0x10] sm:$0xff]
    %v12274 = vld [vmem:[#allocation4 + $0x18] sm:$0xff]
    %v12275 = vld [vmem:[#allocation4 + $0x20] sm:$0xff]
    %v12276 = vld [vmem:[#allocation4 + $0x28] sm:$0xff]
    %v12277 = vld [vmem:[#allocation4 + $0x30] sm:$0xff]
    %v12278 = vld [vmem:[#allocation4 + $0x38] sm:$0xff]
    %v12279 = vld [vmem:[#allocation4 + $0x40] sm:$0xff]
    %v12280 = vld [vmem:[#allocation4 + $0x48] sm:$0xff]
    %v12281 = vld [vmem:[#allocation4 + $0x50] sm:$0xff]
    %v12282 = vld [vmem:[#allocation4 + $0x58] sm:$0xff]
    %v12283 = vld [vmem:[#allocation4 + $0x60] sm:$0xff]
    %v12284 = vld [vmem:[#allocation4 + $0x68] sm:$0xff]
    %v12285 = vld [vmem:[#allocation4 + $0x70] sm:$0xff]
    %v12286 = vld [vmem:[#allocation4 + $0x78] sm:$0xff]
    %v12287 = vsub.f32 %v12271, %v12256
    %v12288 = vsub.f32 %v12272, %v12256
    %v12289 = vsub.f32 %v12273, %v12256
    %v12290 = vsub.f32 %v12274, %v12256
    %v12291 = vsub.f32 %v12275, %v12256
    %v12292 = vsub.f32 %v12276, %v12256
    %v12293 = vsub.f32 %v12277, %v12256
    %v12294 = vsub.f32 %v12278, %v12256
    %v12295 = vsub.f32 %v12279, %v12256
    %v12296 = vsub.f32 %v12280, %v12256
    %v12297 = vsub.f32 %v12281, %v12256
    %v12298 = vsub.f32 %v12282, %v12256
    %v12299 = vsub.f32 %v12283, %v12256
    %v12300 = vsub.f32 %v12284, %v12256
    %v12301 = vsub.f32 %v12285, %v12256
    %v12302 = vsub.f32 %v12286, %v12256
    %v12303 = vmul.f32 %v12287, %v12270
    %v12304 = vmul.f32 %v12288, %v12270
    %v12305 = vmul.f32 %v12289, %v12270
    %v12306 = vmul.f32 %v12290, %v12270
    %v12307 = vmul.f32 %v12291, %v12270
    %v12308 = vmul.f32 %v12292, %v12270
    %v12309 = vmul.f32 %v12293, %v12270
    %v12310 = vmul.f32 %v12294, %v12270
    %v12311 = vmul.f32 %v12295, %v12270
    %v12312 = vmul.f32 %v12296, %v12270
    %v12313 = vmul.f32 %v12297, %v12270
    %v12314 = vmul.f32 %v12298, %v12270
    %v12315 = vmul.f32 %v12299, %v12270
    %v12316 = vmul.f32 %v12300, %v12270
    %v12317 = vmul.f32 %v12301, %v12270
    %v12318 = vmul.f32 %v12302, %v12270
    %v12319 = vmax.f32 %v12303, 0.0
    %v12320 = vmax.f32 %v12304, 0.0
    %v12321 = vmax.f32 %v12305, 0.0
    %v12322 = vmax.f32 %v12306, 0.0
    %v12323 = vmax.f32 %v12307, 0.0
    %v12324 = vmax.f32 %v12308, 0.0
    %v12325 = vmax.f32 %v12309, 0.0
    %v12326 = vmax.f32 %v12310, 0.0
    %v12327 = vmax.f32 %v12311, 0.0
    %v12328 = vmax.f32 %v12312, 0.0
    %v12329 = vmax.f32 %v12313, 0.0
    %v12330 = vmax.f32 %v12314, 0.0
    %v12331 = vmax.f32 %v12315, 0.0
    %v12332 = vmax.f32 %v12316, 0.0
    %v12333 = vmax.f32 %v12317, 0.0
    %v12334 = vmax.f32 %v12318, 0.0
    %12335 = vst [vmem:[#allocation10] sm:$0xff] %v12319
    %12336 = vst [vmem:[#allocation10 + $0x8] sm:$0xff] %v12320
    %12337 = vst [vmem:[#allocation10 + $0x10] sm:$0xff] %v12321
    %12338 = vst [vmem:[#allocation10 + $0x18] sm:$0xff] %v12322
    %12339 = vst [vmem:[#allocation10 + $0x20] sm:$0xff] %v12323
    %12340 = vst [vmem:[#allocation10 + $0x28] sm:$0xff] %v12324
    %12341 = vst [vmem:[#allocation10 + $0x30] sm:$0xff] %v12325
    %12342 = vst [vmem:[#allocation10 + $0x38] sm:$0xff] %v12326
    %12343 = vst [vmem:[#allocation10 + $0x40] sm:$0xff] %v12327
    %12344 = vst [vmem:[#allocation10 + $0x48] sm:$0xff] %v12328
    %12345 = vst [vmem:[#allocation10 + $0x50] sm:$0xff] %v12329
    %12346 = vst [vmem:[#allocation10 + $0x58] sm:$0xff] %v12330
    %12347 = vst [vmem:[#allocation10 + $0x60] sm:$0xff] %v12331
    %12348 = vst [vmem:[#allocation10 + $0x68] sm:$0xff] %v12332
    %12349 = vst [vmem:[#allocation10 + $0x70] sm:$0xff] %v12333
    %12350 = vst [vmem:[#allocation10 + $0x78] sm:$0xff] %v12334
    %v12351 = vld [vmem:[#allocation4 + $0x80] sm:$0xff]
    %v12352 = vld [vmem:[#allocation4 + $0x88] sm:$0xff]
    %v12353 = vld [vmem:[#allocation4 + $0x90] sm:$0xff]
    %v12354 = vld [vmem:[#allocation4 + $0x98] sm:$0xff]
    %v12355 = vld [vmem:[#allocation4 + $0xa0] sm:$0xff]
    %v12356 = vld [vmem:[#allocation4 + $0xa8] sm:$0xff]
    %v12357 = vld [vmem:[#allocation4 + $0xb0] sm:$0xff]
    %v12358 = vld [vmem:[#allocation4 + $0xb8] sm:$0xff]
    %v12359 = vld [vmem:[#allocation4 + $0xc0] sm:$0xff]
    %v12360 = vld [vmem:[#allocation4 + $0xc8] sm:$0xff]
    %v12361 = vld [vmem:[#allocation4 + $0xd0] sm:$0xff]
    %v12362 = vld [vmem:[#allocation4 + $0xd8] sm:$0xff]
    %v12363 = vld [vmem:[#allocation4 + $0xe0] sm:$0xff]
    %v12364 = vld [vmem:[#allocation4 + $0xe8] sm:$0xff]
    %v12365 = vld [vmem:[#allocation4 + $0xf0] sm:$0xff]
    %v12366 = vld [vmem:[#allocation4 + $0xf8] sm:$0xff]
    %v12367 = vsub.f32 %v12351, %v12256
    %v12368 = vsub.f32 %v12352, %v12256
    %v12369 = vsub.f32 %v12353, %v12256
    %v12370 = vsub.f32 %v12354, %v12256
    %v12371 = vsub.f32 %v12355, %v12256
    %v12372 = vsub.f32 %v12356, %v12256
    %v12373 = vsub.f32 %v12357, %v12256
    %v12374 = vsub.f32 %v12358, %v12256
    %v12375 = vsub.f32 %v12359, %v12256
    %v12376 = vsub.f32 %v12360, %v12256
    %v12377 = vsub.f32 %v12361, %v12256
    %v12378 = vsub.f32 %v12362, %v12256
    %v12379 = vsub.f32 %v12363, %v12256
    %v12380 = vsub.f32 %v12364, %v12256
    %v12381 = vsub.f32 %v12365, %v12256
    %v12382 = vsub.f32 %v12366, %v12256
    %v12383 = vmul.f32 %v12367, %v12270
    %v12384 = vmul.f32 %v12368, %v12270
    %v12385 = vmul.f32 %v12369, %v12270
    %v12386 = vmul.f32 %v12370, %v12270
    %v12387 = vmul.f32 %v12371, %v12270
    %v12388 = vmul.f32 %v12372, %v12270
    %v12389 = vmul.f32 %v12373, %v12270
    %v12390 = vmul.f32 %v12374, %v12270
    %v12391 = vmul.f32 %v12375, %v12270
    %v12392 = vmul.f32 %v12376, %v12270
    %v12393 = vmul.f32 %v12377, %v12270
    %v12394 = vmul.f32 %v12378, %v12270
    %v12395 = vmul.f32 %v12379, %v12270
    %v12396 = vmul.f32 %v12380, %v12270
    %v12397 = vmul.f32 %v12381, %v12270
    %v12398 = vmul.f32 %v12382, %v12270
    %v12399 = vmax.f32 %v12383, 0.0
    %v12400 = vmax.f32 %v12384, 0.0
    %v12401 = vmax.f32 %v12385, 0.0
    %v12402 = vmax.f32 %v12386, 0.0
    %v12403 = vmax.f32 %v12387, 0.0
    %v12404 = vmax.f32 %v12388, 0.0
    %v12405 = vmax.f32 %v12389, 0.0
    %v12406 = vmax.f32 %v12390, 0.0
    %v12407 = vmax.f32 %v12391, 0.0
    %v12408 = vmax.f32 %v12392, 0.0
    %v12409 = vmax.f32 %v12393, 0.0
    %v12410 = vmax.f32 %v12394, 0.0
    %v12411 = vmax.f32 %v12395, 0.0
    %v12412 = vmax.f32 %v12396, 0.0
    %v12413 = vmax.f32 %v12397, 0.0
    %v12414 = vmax.f32 %v12398, 0.0
    %12415 = vst [vmem:[#allocation10 + $0x80] sm:$0xff] %v12399
    %12416 = vst [vmem:[#allocation10 + $0x88] sm:$0xff] %v12400
    %12417 = vst [vmem:[#allocation10 + $0x90] sm:$0xff] %v12401
    %12418 = vst [vmem:[#allocation10 + $0x98] sm:$0xff] %v12402
    %12419 = vst [vmem:[#allocation10 + $0xa0] sm:$0xff] %v12403
    %12420 = vst [vmem:[#allocation10 + $0xa8] sm:$0xff] %v12404
    %12421 = vst [vmem:[#allocation10 + $0xb0] sm:$0xff] %v12405
    %12422 = vst [vmem:[#allocation10 + $0xb8] sm:$0xff] %v12406
    %12423 = vst [vmem:[#allocation10 + $0xc0] sm:$0xff] %v12407
    %12424 = vst [vmem:[#allocation10 + $0xc8] sm:$0xff] %v12408
    %12425 = vst [vmem:[#allocation10 + $0xd0] sm:$0xff] %v12409
    %12426 = vst [vmem:[#allocation10 + $0xd8] sm:$0xff] %v12410
    %12427 = vst [vmem:[#allocation10 + $0xe0] sm:$0xff] %v12411
    %12428 = vst [vmem:[#allocation10 + $0xe8] sm:$0xff] %v12412
    %12429 = vst [vmem:[#allocation10 + $0xf0] sm:$0xff] %v12413
    %12430 = vst [vmem:[#allocation10 + $0xf8] sm:$0xff] %v12414
    %v12431 = vld [vmem:[#allocation4 + $0x100] sm:$0xff]
    %v12432 = vld [vmem:[#allocation4 + $0x108] sm:$0xff]
    %v12433 = vld [vmem:[#allocation4 + $0x110] sm:$0xff]
    %v12434 = vld [vmem:[#allocation4 + $0x118] sm:$0xff]
    %v12435 = vld [vmem:[#allocation4 + $0x120] sm:$0xff]
    %v12436 = vld [vmem:[#allocation4 + $0x128] sm:$0xff]
    %v12437 = vld [vmem:[#allocation4 + $0x130] sm:$0xff]
    %v12438 = vld [vmem:[#allocation4 + $0x138] sm:$0xff]
    %v12439 = vld [vmem:[#allocation4 + $0x140] sm:$0xff]
    %v12440 = vld [vmem:[#allocation4 + $0x148] sm:$0xff]
    %v12441 = vld [vmem:[#allocation4 + $0x150] sm:$0xff]
    %v12442 = vld [vmem:[#allocation4 + $0x158] sm:$0xff]
    %v12443 = vld [vmem:[#allocation4 + $0x160] sm:$0xff]
    %v12444 = vld [vmem:[#allocation4 + $0x168] sm:$0xff]
    %v12445 = vld [vmem:[#allocation4 + $0x170] sm:$0xff]
    %v12446 = vld [vmem:[#allocation4 + $0x178] sm:$0xff]
    %v12447 = vsub.f32 %v12431, %v12256
    %v12448 = vsub.f32 %v12432, %v12256
    %v12449 = vsub.f32 %v12433, %v12256
    %v12450 = vsub.f32 %v12434, %v12256
    %v12451 = vsub.f32 %v12435, %v12256
    %v12452 = vsub.f32 %v12436, %v12256
    %v12453 = vsub.f32 %v12437, %v12256
    %v12454 = vsub.f32 %v12438, %v12256
    %v12455 = vsub.f32 %v12439, %v12256
    %v12456 = vsub.f32 %v12440, %v12256
    %v12457 = vsub.f32 %v12441, %v12256
    %v12458 = vsub.f32 %v12442, %v12256
    %v12459 = vsub.f32 %v12443, %v12256
    %v12460 = vsub.f32 %v12444, %v12256
    %v12461 = vsub.f32 %v12445, %v12256
    %v12462 = vsub.f32 %v12446, %v12256
    %v12463 = vmul.f32 %v12447, %v12270
    %v12464 = vmul.f32 %v12448, %v12270
    %v12465 = vmul.f32 %v12449, %v12270
    %v12466 = vmul.f32 %v12450, %v12270
    %v12467 = vmul.f32 %v12451, %v12270
    %v12468 = vmul.f32 %v12452, %v12270
    %v12469 = vmul.f32 %v12453, %v12270
    %v12470 = vmul.f32 %v12454, %v12270
    %v12471 = vmul.f32 %v12455, %v12270
    %v12472 = vmul.f32 %v12456, %v12270
    %v12473 = vmul.f32 %v12457, %v12270
    %v12474 = vmul.f32 %v12458, %v12270
    %v12475 = vmul.f32 %v12459, %v12270
    %v12476 = vmul.f32 %v12460, %v12270
    %v12477 = vmul.f32 %v12461, %v12270
    %v12478 = vmul.f32 %v12462, %v12270
    %v12479 = vmax.f32 %v12463, 0.0
    %v12480 = vmax.f32 %v12464, 0.0
    %v12481 = vmax.f32 %v12465, 0.0
    %v12482 = vmax.f32 %v12466, 0.0
    %v12483 = vmax.f32 %v12467, 0.0
    %v12484 = vmax.f32 %v12468, 0.0
    %v12485 = vmax.f32 %v12469, 0.0
    %v12486 = vmax.f32 %v12470, 0.0
    %v12487 = vmax.f32 %v12471, 0.0
    %v12488 = vmax.f32 %v12472, 0.0
    %v12489 = vmax.f32 %v12473, 0.0
    %v12490 = vmax.f32 %v12474, 0.0
    %v12491 = vmax.f32 %v12475, 0.0
    %v12492 = vmax.f32 %v12476, 0.0
    %v12493 = vmax.f32 %v12477, 0.0
    %v12494 = vmax.f32 %v12478, 0.0
    %12495 = vst [vmem:[#allocation10 + $0x100] sm:$0xff] %v12479
    %12496 = vst [vmem:[#allocation10 + $0x108] sm:$0xff] %v12480
    %12497 = vst [vmem:[#allocation10 + $0x110] sm:$0xff] %v12481
    %12498 = vst [vmem:[#allocation10 + $0x118] sm:$0xff] %v12482
    %12499 = vst [vmem:[#allocation10 + $0x120] sm:$0xff] %v12483
    %12500 = vst [vmem:[#allocation10 + $0x128] sm:$0xff] %v12484
    %12501 = vst [vmem:[#allocation10 + $0x130] sm:$0xff] %v12485
    %12502 = vst [vmem:[#allocation10 + $0x138] sm:$0xff] %v12486
    %12503 = vst [vmem:[#allocation10 + $0x140] sm:$0xff] %v12487
    %12504 = vst [vmem:[#allocation10 + $0x148] sm:$0xff] %v12488
    %12505 = vst [vmem:[#allocation10 + $0x150] sm:$0xff] %v12489
    %12506 = vst [vmem:[#allocation10 + $0x158] sm:$0xff] %v12490
    %12507 = vst [vmem:[#allocation10 + $0x160] sm:$0xff] %v12491
    %12508 = vst [vmem:[#allocation10 + $0x168] sm:$0xff] %v12492
    %12509 = vst [vmem:[#allocation10 + $0x170] sm:$0xff] %v12493
    %12510 = vst [vmem:[#allocation10 + $0x178] sm:$0xff] %v12494
    %v12511 = vld [vmem:[#allocation4 + $0x180] sm:$0xff]
    %v12512 = vld [vmem:[#allocation4 + $0x188] sm:$0xff]
    %v12513 = vld [vmem:[#allocation4 + $0x190] sm:$0xff]
    %v12514 = vld [vmem:[#allocation4 + $0x198] sm:$0xff]
    %v12515 = vld [vmem:[#allocation4 + $0x1a0] sm:$0xff]
    %v12516 = vld [vmem:[#allocation4 + $0x1a8] sm:$0xff]
    %v12517 = vld [vmem:[#allocation4 + $0x1b0] sm:$0xff]
    %v12518 = vld [vmem:[#allocation4 + $0x1b8] sm:$0xff]
    %v12519 = vld [vmem:[#allocation4 + $0x1c0] sm:$0xff]
    %v12520 = vld [vmem:[#allocation4 + $0x1c8] sm:$0xff]
    %v12521 = vld [vmem:[#allocation4 + $0x1d0] sm:$0xff]
    %v12522 = vld [vmem:[#allocation4 + $0x1d8] sm:$0xff]
    %v12523 = vld [vmem:[#allocation4 + $0x1e0] sm:$0xff]
    %v12524 = vld [vmem:[#allocation4 + $0x1e8] sm:$0xff]
    %v12525 = vld [vmem:[#allocation4 + $0x1f0] sm:$0xff]
    %v12526 = vld [vmem:[#allocation4 + $0x1f8] sm:$0xff]
    %v12527 = vsub.f32 %v12511, %v12256
    %v12528 = vsub.f32 %v12512, %v12256
    %v12529 = vsub.f32 %v12513, %v12256
    %v12530 = vsub.f32 %v12514, %v12256
    %v12531 = vsub.f32 %v12515, %v12256
    %v12532 = vsub.f32 %v12516, %v12256
    %v12533 = vsub.f32 %v12517, %v12256
    %v12534 = vsub.f32 %v12518, %v12256
    %v12535 = vsub.f32 %v12519, %v12256
    %v12536 = vsub.f32 %v12520, %v12256
    %v12537 = vsub.f32 %v12521, %v12256
    %v12538 = vsub.f32 %v12522, %v12256
    %v12539 = vsub.f32 %v12523, %v12256
    %v12540 = vsub.f32 %v12524, %v12256
    %v12541 = vsub.f32 %v12525, %v12256
    %v12542 = vsub.f32 %v12526, %v12256
    %v12543 = vmul.f32 %v12527, %v12270
    %v12544 = vmul.f32 %v12528, %v12270
    %v12545 = vmul.f32 %v12529, %v12270
    %v12546 = vmul.f32 %v12530, %v12270
    %v12547 = vmul.f32 %v12531, %v12270
    %v12548 = vmul.f32 %v12532, %v12270
    %v12549 = vmul.f32 %v12533, %v12270
    %v12550 = vmul.f32 %v12534, %v12270
    %v12551 = vmul.f32 %v12535, %v12270
    %v12552 = vmul.f32 %v12536, %v12270
    %v12553 = vmul.f32 %v12537, %v12270
    %v12554 = vmul.f32 %v12538, %v12270
    %v12555 = vmul.f32 %v12539, %v12270
    %v12556 = vmul.f32 %v12540, %v12270
    %v12557 = vmul.f32 %v12541, %v12270
    %v12558 = vmul.f32 %v12542, %v12270
    %v12559 = vmax.f32 %v12543, 0.0
    %v12560 = vmax.f32 %v12544, 0.0
    %v12561 = vmax.f32 %v12545, 0.0
    %v12562 = vmax.f32 %v12546, 0.0
    %v12563 = vmax.f32 %v12547, 0.0
    %v12564 = vmax.f32 %v12548, 0.0
    %v12565 = vmax.f32 %v12549, 0.0
    %v12566 = vmax.f32 %v12550, 0.0
    %v12567 = vmax.f32 %v12551, 0.0
    %v12568 = vmax.f32 %v12552, 0.0
    %v12569 = vmax.f32 %v12553, 0.0
    %v12570 = vmax.f32 %v12554, 0.0
    %v12571 = vmax.f32 %v12555, 0.0
    %v12572 = vmax.f32 %v12556, 0.0
    %v12573 = vmax.f32 %v12557, 0.0
    %v12574 = vmax.f32 %v12558, 0.0
    %12575 = vst [vmem:[#allocation10 + $0x180] sm:$0xff] %v12559
    %12576 = vst [vmem:[#allocation10 + $0x188] sm:$0xff] %v12560
    %12577 = vst [vmem:[#allocation10 + $0x190] sm:$0xff] %v12561
    %12578 = vst [vmem:[#allocation10 + $0x198] sm:$0xff] %v12562
    %12579 = vst [vmem:[#allocation10 + $0x1a0] sm:$0xff] %v12563
    %12580 = vst [vmem:[#allocation10 + $0x1a8] sm:$0xff] %v12564
    %12581 = vst [vmem:[#allocation10 + $0x1b0] sm:$0xff] %v12565
    %12582 = vst [vmem:[#allocation10 + $0x1b8] sm:$0xff] %v12566
    %12583 = vst [vmem:[#allocation10 + $0x1c0] sm:$0xff] %v12567
    %12584 = vst [vmem:[#allocation10 + $0x1c8] sm:$0xff] %v12568
    %12585 = vst [vmem:[#allocation10 + $0x1d0] sm:$0xff] %v12569
    %12586 = vst [vmem:[#allocation10 + $0x1d8] sm:$0xff] %v12570
    %12587 = vst [vmem:[#allocation10 + $0x1e0] sm:$0xff] %v12571
    %12588 = vst [vmem:[#allocation10 + $0x1e8] sm:$0xff] %v12572
    %12589 = vst [vmem:[#allocation10 + $0x1f0] sm:$0xff] %v12573
    %12590 = vst [vmem:[#allocation10 + $0x1f8] sm:$0xff] %v12574
    // Predicated region
    $region18: #{tpu_custom_call.1} parent=1 // pred_check
      _
    $region19: #{tpu_custom_call.1} parent=1 // pred_check_branch
      %12592 = sbr.rel (0) target = $region21
    $region20: #{tpu_custom_call.1} parent=1 // pred_region
      %12594 = vsyncadd [#allocation7], 0
      %s12595 = sshll.u32 [#allocation10], 4
      %s12596 = int_to_ptr.vmem [resolvable:$true] %s12595
      %s12597 = sshll.u32 %s2, 4
      %s12598 = int_to_ptr.hbm [resolvable:$true] %s12597
      %12603 = dma.vmem_to_hbm [thread:$0]  %s12596, 8192, %s12598, [#allocation7], 128, 128, 8
    $region21: #{tpu_custom_call.1} parent=1 // pred_fallthru
      _
    // Predicated region
    $region22: #{tpu_custom_call.1} parent=1 // pred_check
      _
    $region23: #{tpu_custom_call.1} parent=1 // pred_check_branch
      %12605 = sbr.rel (0) target = $region25
    $region24: #{tpu_custom_call.1} parent=1 // pred_region
      %12607 = dma.done [#allocation7], 8192
    $region25: #{tpu_custom_call.1} parent=1 // pred_fallthru
      _
    %12608 = vsyncpa [#allocation6], 1
    %12609 = vsyncpa [#allocation9], 1
    %12610 = vsyncpa [#allocation7], 1

</llo_original>
